<compile_context>
chip_gen: v6e
topology: v6e:2x2x1
jax: 0.10.0
libtpu: 0.0.40
codegen_flags: <defaults>
</compile_context>

<pallas_src>
import functools
import math

import jax
import jax.numpy as jnp
from jax.experimental import pallas as pl
from jax.experimental.pallas import tpu as pltpu


# ----------------------------------------------------------------------------
# Host-side helper: one-hot permutation implementing PatchMerging's
# view -> permute -> view regroup.  Row p*M + m selects flat source row
# (2*(m // W2) + p//2) * W + 2*(m % W2) + p%2, i.e. piece order
# [(0,0), (0,1), (1,0), (1,1)] matching the 4C column blocks of the reference.
# ----------------------------------------------------------------------------
def _merge_perm(H, W, dtype=jnp.bfloat16):
    H2, W2 = H // 2, W // 2
    M, N = H2 * W2, H * W
    r = jnp.arange(4 * M)
    p, m = r // M, r % M
    h2, w2 = m // W2, m % W2
    src = (2 * h2 + p // 2) * W + 2 * w2 + p % 2
    return (src[:, None] == jnp.arange(N)[None, :]).astype(dtype)


# ----------------------------------------------------------------------------
# The fused kernel: 3 x (self-attention -> skip write -> patch merge).
# One grid step per batch element.
# ----------------------------------------------------------------------------
def _encoder_kernel(*refs, dims, eps):
    n_stage = len(dims)
    x_ref = refs[0]
    prefs = refs[1:1 + 7 * n_stage]
    skip_refs = refs[1 + 7 * n_stage:1 + 8 * n_stage]
    out_ref = refs[1 + 8 * n_stage]

    x = x_ref[0]                                            # (N0, C0) bf16
    x_next = None
    for s in range(n_stage):
        Hs, Ws, C = dims[s]
        M = (Hs // 2) * (Ws // 2)
        wqkv, bqkv, wo, bo, perm, wred, bred = prefs[7 * s:7 * s + 7]

        # ---- attention (full softmax; relative_bias provably zero) --------
        # 1/sqrt(C) softmax scale was folded into Wq AND bq at init (exact).
        q = (jnp.dot(x, wqkv[0], preferred_element_type=jnp.float32)
             + bqkv[0]).astype(jnp.bfloat16)
        k = (jnp.dot(x, wqkv[1], preferred_element_type=jnp.float32)
             + bqkv[1]).astype(jnp.bfloat16)
        v = (jnp.dot(x, wqkv[2], preferred_element_type=jnp.float32)
             + bqkv[2]).astype(jnp.bfloat16)

        scores = jax.lax.dot_general(q, k, (((1,), (1,)), ((), ())),
                                     preferred_element_type=jnp.float32)
        scores = scores - jnp.max(scores, axis=-1, keepdims=True)
        pexp = jnp.exp(scores)                              # f32 (N, N)
        denom = jnp.sum(pexp, axis=-1, keepdims=True)       # f32 (N, 1)
        att = jnp.dot(pexp.astype(jnp.bfloat16), v,
                      preferred_element_type=jnp.float32) / denom
        y = jnp.dot(att.astype(jnp.bfloat16), wo[...],
                    preferred_element_type=jnp.float32) + bo[...]   # (N, C) f32
        skip_refs[s][0] = y                                 # skip output

        # ---- PatchMerging: perm matmul + decomposed LN + chunked reduce ----
        yb = y.astype(jnp.bfloat16)
        yp = jnp.dot(perm[...], yb,
                     preferred_element_type=jnp.float32)    # (4M, C) gather
        wred_v = wred[...]                                  # (4C, 2C), gamma folded
        colsum = jnp.sum(wred_v.astype(jnp.float32), axis=0, keepdims=True)

        ssum = jnp.zeros((M, 1), jnp.float32)
        ssq = jnp.zeros((M, 1), jnp.float32)
        z = jnp.zeros((M, 2 * C), jnp.float32)
        for pc in range(4):                                 # static, unrolled
            piece = yp[pc * M:(pc + 1) * M, :]              # (M, C)
            ssum = ssum + jnp.sum(piece, axis=-1, keepdims=True)
            ssq = ssq + jnp.sum(piece * piece, axis=-1, keepdims=True)
            z = z + jnp.dot(piece.astype(jnp.bfloat16),
                            wred_v[pc * C:(pc + 1) * C, :],
                            preferred_element_type=jnp.float32)

        inv_d = 1.0 / (4 * C)
        mu = ssum * inv_d
        var = ssq * inv_d - mu * mu
        inv_std = jax.lax.rsqrt(var + eps)
        # LN(x4) @ W == inv_std * (x4 @ Wg - mu * (1 @ Wg)) + beta @ W
        x_next = inv_std * (z - mu * colsum) + bred[...]    # (M, 2C) f32
        x = x_next.astype(jnp.bfloat16)

    out_ref[0] = x_next                                     # final merged x


# ----------------------------------------------------------------------------
# Wrapper: builds the single fused pallas_call.
# ----------------------------------------------------------------------------
def encoder_forward(x, params, partioned_ip_res):
    B, N, C0 = x.shape
    H, W = partioned_ip_res
    assert N == H * W
    n_stage = len(params)

    dims = []
    h, w, c = H, W, C0
    for _ in range(n_stage):
        assert h % 2 == 0 and w % 2 == 0
        dims.append((h, w, c))
        h, w, c = h // 2, w // 2, 2 * c
    dims = tuple(dims)
    Mf, Cf2 = h * w, c                      # shape after the final merge

    def const_spec(shape):
        nd = len(shape)
        return pl.BlockSpec(shape, lambda b, _n=nd: (0,) * _n)

    inputs = [x.astype(jnp.bfloat16)]
    in_specs = [pl.BlockSpec((1, N, C0), lambda b: (b, 0, 0))]
    for (hh, ww, cc), p in zip(dims, params):
        perm = _merge_perm(hh, ww)
        for arr in (p["w_qkv"], p["b_qkv"], p["w_o"], p["b_o"],
                    perm, p["w_red"], p["b_red"]):
            inputs.append(arr)
            in_specs.append(const_spec(arr.shape))

    out_shape = tuple(
        [jax.ShapeDtypeStruct((B, hh * ww, cc), jnp.float32)
         for hh, ww, cc in dims]
        + [jax.ShapeDtypeStruct((B, Mf, Cf2), jnp.float32)])
    out_specs = tuple(
        [pl.BlockSpec((1, hh * ww, cc), lambda b: (b, 0, 0))
         for hh, ww, cc in dims]
        + [pl.BlockSpec((1, Mf, Cf2), lambda b: (b, 0, 0))])

    kernel = functools.partial(_encoder_kernel, dims=dims, eps=1e-5)
    outs = pl.pallas_call(
        kernel,
        out_shape=out_shape,
        grid=(B,),
        in_specs=in_specs,
        out_specs=out_specs,
        compiler_params=pltpu.CompilerParams(
            dimension_semantics=("parallel",)),
    )(*inputs)

    skip_conn_ftrs = list(outs[:n_stage])
    return outs[n_stage], skip_conn_ftrs


# ----------------------------------------------------------------------------
# Parameter init (deterministic).  Linear weights stored pre-transposed
# (in, out); softmax scale folded into Wq/bq; LN affine folded into w_red.
# ----------------------------------------------------------------------------
def init_encoder_params(key, C):
    params = []
    for d in (C, 2 * C, 4 * C):
        key, *ks = jax.random.split(key, 12)
        sd = 1.0 / math.sqrt(d)
        wq = jax.random.normal(ks[0], (d, d), jnp.float32) * sd
        bq = jax.random.normal(ks[1], (1, d), jnp.float32) * 0.01
        wk = jax.random.normal(ks[2], (d, d), jnp.float32) * sd
        bk = jax.random.normal(ks[3], (1, d), jnp.float32) * 0.01
        wv = jax.random.normal(ks[4], (d, d), jnp.float32) * sd
        bv = jax.random.normal(ks[5], (1, d), jnp.float32) * 0.01
        wo = jax.random.normal(ks[6], (d, d), jnp.float32) * sd
        bo = jax.random.normal(ks[7], (1, d), jnp.float32) * 0.01
        gamma = 1.0 + 0.1 * jax.random.normal(ks[8], (1, 4 * d), jnp.float32)
        beta = 0.1 * jax.random.normal(ks[9], (1, 4 * d), jnp.float32)
        w_red = (jax.random.normal(ks[10], (4 * d, 2 * d), jnp.float32)
                 / math.sqrt(4 * d))

        # Fold the 1/sqrt(dim) attention scale into BOTH Wq and bq:
        # ((x Wq + bq) * s) K^T == (x (Wq s) + (bq s)) K^T  -- exact.
        scale = 1.0 / math.sqrt(d)
        params.append({
            "w_qkv": jnp.stack([wq * scale, wk, wv]).astype(jnp.bfloat16),
            "b_qkv": jnp.stack([bq * scale, bk, bv]),        # (3, 1, d) f32
            "w_o": wo.astype(jnp.bfloat16),
            "b_o": bo,
            # (xn * gamma + beta) @ W == xn @ (gamma[:,None]*W) + beta @ W
            "w_red": (gamma.reshape(-1, 1) * w_red).astype(jnp.bfloat16),
            "b_red": beta @ w_red,
        })
    return params


if __name__ == "__main__":
    B, C = 2, 8
    H, W = 16, 16
    key = jax.random.PRNGKey(0)
    kx, kp = jax.random.split(key)
    x = jax.random.normal(kx, (B, H * W, C), jnp.float32)
    params = init_encoder_params(kp, C)

    fwd = jax.jit(lambda xx: encoder_forward(xx, params, (H, W)))
    out, skips = fwd(x)
    jax.block_until_ready(out)
    for s in skips:
        jax.block_until_ready(s)

    assert out.shape == (B, (H // 8) * (W // 8), 8 * C)
    assert skips[0].shape == (B, H * W, C)
    assert skips[1].shape == (B, (H // 2) * (W // 2), 2 * C)
    assert skips[2].shape == (B, (H // 4) * (W // 4), 4 * C)
    assert bool(jnp.all(jnp.isfinite(out)))
    print("KERNEL_OK")
</pallas_src>

<mosaic_0001>
module attributes {stable_mosaic.version = 11 : i64} {
  func.func @_encoder_kernel(%arg0: i32, %arg1: memref<1x256x8xbf16, #tpu.memory_space<vmem>>, %arg2: memref<3x8x8xbf16, #tpu.memory_space<vmem>>, %arg3: memref<3x1x8xf32, #tpu.memory_space<vmem>>, %arg4: memref<8x8xbf16, #tpu.memory_space<vmem>>, %arg5: memref<1x8xf32, #tpu.memory_space<vmem>>, %arg6: memref<256x256xbf16, #tpu.memory_space<vmem>>, %arg7: memref<32x16xbf16, #tpu.memory_space<vmem>>, %arg8: memref<1x16xf32, #tpu.memory_space<vmem>>, %arg9: memref<3x16x16xbf16, #tpu.memory_space<vmem>>, %arg10: memref<3x1x16xf32, #tpu.memory_space<vmem>>, %arg11: memref<16x16xbf16, #tpu.memory_space<vmem>>, %arg12: memref<1x16xf32, #tpu.memory_space<vmem>>, %arg13: memref<64x64xbf16, #tpu.memory_space<vmem>>, %arg14: memref<64x32xbf16, #tpu.memory_space<vmem>>, %arg15: memref<1x32xf32, #tpu.memory_space<vmem>>, %arg16: memref<3x32x32xbf16, #tpu.memory_space<vmem>>, %arg17: memref<3x1x32xf32, #tpu.memory_space<vmem>>, %arg18: memref<32x32xbf16, #tpu.memory_space<vmem>>, %arg19: memref<1x32xf32, #tpu.memory_space<vmem>>, %arg20: memref<16x16xbf16, #tpu.memory_space<vmem>>, %arg21: memref<128x64xbf16, #tpu.memory_space<vmem>>, %arg22: memref<1x64xf32, #tpu.memory_space<vmem>>, %arg23: memref<1x256x8xf32, #tpu.memory_space<vmem>>, %arg24: memref<1x64x16xf32, #tpu.memory_space<vmem>>, %arg25: memref<1x16x32xf32, #tpu.memory_space<vmem>>, %arg26: memref<1x4x64xf32, #tpu.memory_space<vmem>>) attributes {dimension_semantics = [#tpu.dimension_semantics<parallel>], iteration_bounds = array<i64: 2>, scalar_prefetch = 0 : i64, scratch_operands = 0 : i64, tpu.core_type = #tpu.core_type<tc>, window_params = [{transform_indices = @transform_0, window_bounds = array<i64: 1, 256, 8>}, {pipeline_mode = #tpu.pipeline_mode<synchronous>, transform_indices = @transform_1, window_bounds = array<i64: 3, 8, 8>}, {pipeline_mode = #tpu.pipeline_mode<synchronous>, transform_indices = @transform_2, window_bounds = array<i64: 3, 1, 8>}, {pipeline_mode = #tpu.pipeline_mode<synchronous>, transform_indices = @transform_3, window_bounds = array<i64: 8, 8>}, {pipeline_mode = #tpu.pipeline_mode<synchronous>, transform_indices = @transform_4, window_bounds = array<i64: 1, 8>}, {pipeline_mode = #tpu.pipeline_mode<synchronous>, transform_indices = @transform_5, window_bounds = array<i64: 256, 256>}, {pipeline_mode = #tpu.pipeline_mode<synchronous>, transform_indices = @transform_6, window_bounds = array<i64: 32, 16>}, {pipeline_mode = #tpu.pipeline_mode<synchronous>, transform_indices = @transform_7, window_bounds = array<i64: 1, 16>}, {pipeline_mode = #tpu.pipeline_mode<synchronous>, transform_indices = @transform_8, window_bounds = array<i64: 3, 16, 16>}, {pipeline_mode = #tpu.pipeline_mode<synchronous>, transform_indices = @transform_9, window_bounds = array<i64: 3, 1, 16>}, {pipeline_mode = #tpu.pipeline_mode<synchronous>, transform_indices = @transform_10, window_bounds = array<i64: 16, 16>}, {pipeline_mode = #tpu.pipeline_mode<synchronous>, transform_indices = @transform_11, window_bounds = array<i64: 1, 16>}, {pipeline_mode = #tpu.pipeline_mode<synchronous>, transform_indices = @transform_12, window_bounds = array<i64: 64, 64>}, {pipeline_mode = #tpu.pipeline_mode<synchronous>, transform_indices = @transform_13, window_bounds = array<i64: 64, 32>}, {pipeline_mode = #tpu.pipeline_mode<synchronous>, transform_indices = @transform_14, window_bounds = array<i64: 1, 32>}, {pipeline_mode = #tpu.pipeline_mode<synchronous>, transform_indices = @transform_15, window_bounds = array<i64: 3, 32, 32>}, {pipeline_mode = #tpu.pipeline_mode<synchronous>, transform_indices = @transform_16, window_bounds = array<i64: 3, 1, 32>}, {pipeline_mode = #tpu.pipeline_mode<synchronous>, transform_indices = @transform_17, window_bounds = array<i64: 32, 32>}, {pipeline_mode = #tpu.pipeline_mode<synchronous>, transform_indices = @transform_18, window_bounds = array<i64: 1, 32>}, {pipeline_mode = #tpu.pipeline_mode<synchronous>, transform_indices = @transform_19, window_bounds = array<i64: 16, 16>}, {pipeline_mode = #tpu.pipeline_mode<synchronous>, transform_indices = @transform_20, window_bounds = array<i64: 128, 64>}, {pipeline_mode = #tpu.pipeline_mode<synchronous>, transform_indices = @transform_21, window_bounds = array<i64: 1, 64>}, {transform_indices = @transform_22, window_bounds = array<i64: 1, 256, 8>}, {transform_indices = @transform_23, window_bounds = array<i64: 1, 64, 16>}, {transform_indices = @transform_24, window_bounds = array<i64: 1, 16, 32>}, {transform_indices = @transform_25, window_bounds = array<i64: 1, 4, 64>}]} {
    %c0 = arith.constant 0 : index
    %c0_0 = arith.constant 0 : index
    %c0_1 = arith.constant 0 : index
    %0 = vector.load %arg1[%c0, %c0_0, %c0_1] : memref<1x256x8xbf16, #tpu.memory_space<vmem>>, vector<1x256x8xbf16>
    %1 = vector.shape_cast %0 : vector<1x256x8xbf16> to vector<256x8xbf16>
    %c0_2 = arith.constant 0 : index
    %c0_3 = arith.constant 0 : index
    %c0_4 = arith.constant 0 : index
    %2 = vector.load %arg2[%c0_2, %c0_3, %c0_4] : memref<3x8x8xbf16, #tpu.memory_space<vmem>>, vector<1x8x8xbf16>
    %3 = vector.shape_cast %2 : vector<1x8x8xbf16> to vector<8x8xbf16>
    %cst = arith.constant dense<0.000000e+00> : vector<256x8xf32>
    %4 = tpu.matmul %1, %3, %cst {dimension_numbers = #tpu.dot_dimension_numbers<[1], [0], [0], [1], [0, 0, 1, 1], [], []>} : vector<256x8xbf16>, vector<8x8xbf16>, vector<256x8xf32> -> vector<256x8xf32>
    %c0_5 = arith.constant 0 : index
    %c0_6 = arith.constant 0 : index
    %c0_7 = arith.constant 0 : index
    %5 = vector.load %arg3[%c0_5, %c0_6, %c0_7] : memref<3x1x8xf32, #tpu.memory_space<vmem>>, vector<1x1x8xf32>
    %6 = vector.shape_cast %5 : vector<1x1x8xf32> to vector<1x8xf32>
    %7 = vector.broadcast %6 : vector<1x8xf32> to vector<256x8xf32>
    %8 = arith.addf %4, %7 : vector<256x8xf32>
    %9 = arith.truncf %8 : vector<256x8xf32> to vector<256x8xbf16>
    %c1 = arith.constant 1 : index
    %c0_8 = arith.constant 0 : index
    %c0_9 = arith.constant 0 : index
    %10 = vector.load %arg2[%c1, %c0_8, %c0_9] : memref<3x8x8xbf16, #tpu.memory_space<vmem>>, vector<1x8x8xbf16>
    %11 = vector.shape_cast %10 : vector<1x8x8xbf16> to vector<8x8xbf16>
    %cst_10 = arith.constant dense<0.000000e+00> : vector<256x8xf32>
    %12 = tpu.matmul %1, %11, %cst_10 {dimension_numbers = #tpu.dot_dimension_numbers<[1], [0], [0], [1], [0, 0, 1, 1], [], []>} : vector<256x8xbf16>, vector<8x8xbf16>, vector<256x8xf32> -> vector<256x8xf32>
    %c1_11 = arith.constant 1 : index
    %c0_12 = arith.constant 0 : index
    %c0_13 = arith.constant 0 : index
    %13 = vector.load %arg3[%c1_11, %c0_12, %c0_13] : memref<3x1x8xf32, #tpu.memory_space<vmem>>, vector<1x1x8xf32>
    %14 = vector.shape_cast %13 : vector<1x1x8xf32> to vector<1x8xf32>
    %15 = vector.broadcast %14 : vector<1x8xf32> to vector<256x8xf32>
    %16 = arith.addf %12, %15 : vector<256x8xf32>
    %17 = arith.truncf %16 : vector<256x8xf32> to vector<256x8xbf16>
    %c2 = arith.constant 2 : index
    %c0_14 = arith.constant 0 : index
    %c0_15 = arith.constant 0 : index
    %18 = vector.load %arg2[%c2, %c0_14, %c0_15] : memref<3x8x8xbf16, #tpu.memory_space<vmem>>, vector<1x8x8xbf16>
    %19 = vector.shape_cast %18 : vector<1x8x8xbf16> to vector<8x8xbf16>
    %cst_16 = arith.constant dense<0.000000e+00> : vector<256x8xf32>
    %20 = tpu.matmul %1, %19, %cst_16 {dimension_numbers = #tpu.dot_dimension_numbers<[1], [0], [0], [1], [0, 0, 1, 1], [], []>} : vector<256x8xbf16>, vector<8x8xbf16>, vector<256x8xf32> -> vector<256x8xf32>
    %c2_17 = arith.constant 2 : index
    %c0_18 = arith.constant 0 : index
    %c0_19 = arith.constant 0 : index
    %21 = vector.load %arg3[%c2_17, %c0_18, %c0_19] : memref<3x1x8xf32, #tpu.memory_space<vmem>>, vector<1x1x8xf32>
    %22 = vector.shape_cast %21 : vector<1x1x8xf32> to vector<1x8xf32>
    %23 = vector.broadcast %22 : vector<1x8xf32> to vector<256x8xf32>
    %24 = arith.addf %20, %23 : vector<256x8xf32>
    %25 = arith.truncf %24 : vector<256x8xf32> to vector<256x8xbf16>
    %cst_20 = arith.constant dense<0.000000e+00> : vector<256x256xf32>
    %26 = tpu.matmul %9, %17, %cst_20 {dimension_numbers = #tpu.dot_dimension_numbers<[1], [1], [0], [0], [0, 0, 1, 0], [], []>} : vector<256x8xbf16>, vector<256x8xbf16>, vector<256x256xf32> -> vector<256x256xf32>
    %cst_21 = arith.constant dense<0xFF800000> : vector<256xf32>
    %27 = vector.multi_reduction <maximumf>, %26, %cst_21 [1] : vector<256x256xf32> to vector<256xf32>
    %28 = vector.shape_cast %27 : vector<256xf32> to vector<256x1xf32>
    %29 = vector.broadcast %28 : vector<256x1xf32> to vector<256x256xf32>
    %30 = arith.subf %26, %29 : vector<256x256xf32>
    %31 = math.exp %30 : vector<256x256xf32>
    %cst_22 = arith.constant dense<0.000000e+00> : vector<256xf32>
    %32 = vector.multi_reduction <add>, %31, %cst_22 [1] : vector<256x256xf32> to vector<256xf32>
    %33 = vector.shape_cast %32 : vector<256xf32> to vector<256x1xf32>
    %34 = arith.truncf %31 : vector<256x256xf32> to vector<256x256xbf16>
    %cst_23 = arith.constant dense<0.000000e+00> : vector<256x8xf32>
    %35 = tpu.matmul %34, %25, %cst_23 {dimension_numbers = #tpu.dot_dimension_numbers<[1], [0], [0], [1], [0, 0, 1, 1], [], []>} : vector<256x256xbf16>, vector<256x8xbf16>, vector<256x8xf32> -> vector<256x8xf32>
    %36 = vector.broadcast %33 : vector<256x1xf32> to vector<256x8xf32>
    %37 = arith.divf %35, %36 : vector<256x8xf32>
    %38 = arith.truncf %37 : vector<256x8xf32> to vector<256x8xbf16>
    %c0_24 = arith.constant 0 : index
    %c0_25 = arith.constant 0 : index
    %39 = vector.load %arg4[%c0_24, %c0_25] : memref<8x8xbf16, #tpu.memory_space<vmem>>, vector<8x8xbf16>
    %cst_26 = arith.constant dense<0.000000e+00> : vector<256x8xf32>
    %40 = tpu.matmul %38, %39, %cst_26 {dimension_numbers = #tpu.dot_dimension_numbers<[1], [0], [0], [1], [0, 0, 1, 1], [], []>} : vector<256x8xbf16>, vector<8x8xbf16>, vector<256x8xf32> -> vector<256x8xf32>
    %c0_27 = arith.constant 0 : index
    %c0_28 = arith.constant 0 : index
    %41 = vector.load %arg5[%c0_27, %c0_28] : memref<1x8xf32, #tpu.memory_space<vmem>>, vector<1x8xf32>
    %42 = vector.broadcast %41 : vector<1x8xf32> to vector<256x8xf32>
    %43 = arith.addf %40, %42 : vector<256x8xf32>
    %c0_29 = arith.constant 0 : index
    %c0_30 = arith.constant 0 : index
    %c0_31 = arith.constant 0 : index
    %44 = vector.load %arg23[%c0_29, %c0_30, %c0_31] : memref<1x256x8xf32, #tpu.memory_space<vmem>>, vector<1x256x8xf32>
    %45 = vector.shape_cast %44 : vector<1x256x8xf32> to vector<256x8xf32>
    %46 = vector.shape_cast %43 : vector<256x8xf32> to vector<1x256x8xf32>
    tpu.vector_store %arg23[%c0_29, %c0_30, %c0_31], %46 {strides = array<i32>} : memref<1x256x8xf32, #tpu.memory_space<vmem>>, vector<1x256x8xf32>,
    %47 = arith.truncf %43 : vector<256x8xf32> to vector<256x8xbf16>
    %c0_32 = arith.constant 0 : index
    %c0_33 = arith.constant 0 : index
    %48 = vector.load %arg6[%c0_32, %c0_33] : memref<256x256xbf16, #tpu.memory_space<vmem>>, vector<256x256xbf16>
    %cst_34 = arith.constant dense<0.000000e+00> : vector<256x8xf32>
    %49 = tpu.matmul %48, %47, %cst_34 {dimension_numbers = #tpu.dot_dimension_numbers<[1], [0], [0], [1], [0, 0, 1, 1], [], []>} : vector<256x256xbf16>, vector<256x8xbf16>, vector<256x8xf32> -> vector<256x8xf32>
    %c0_35 = arith.constant 0 : index
    %c0_36 = arith.constant 0 : index
    %50 = vector.load %arg7[%c0_35, %c0_36] : memref<32x16xbf16, #tpu.memory_space<vmem>>, vector<32x16xbf16>
    %51 = arith.extf %50 : vector<32x16xbf16> to vector<32x16xf32>
    %cst_37 = arith.constant dense<0.000000e+00> : vector<16xf32>
    %52 = vector.multi_reduction <add>, %51, %cst_37 [0] : vector<32x16xf32> to vector<16xf32>
    %53 = vector.shape_cast %52 : vector<16xf32> to vector<1x16xf32>
    %cst_38 = arith.constant 0.000000e+00 : f32
    %54 = vector.broadcast %cst_38 : f32 to vector<64x1xf32>
    %cst_39 = arith.constant 0.000000e+00 : f32
    %55 = vector.broadcast %cst_39 : f32 to vector<64x1xf32>
    %cst_40 = arith.constant 0.000000e+00 : f32
    %56 = vector.broadcast %cst_40 : f32 to vector<64x16xf32>
    %57 = vector.extract_strided_slice %49 {offsets = [0, 0], sizes = [64, 8], strides = [1, 1]} : vector<256x8xf32> to vector<64x8xf32>
    %cst_41 = arith.constant dense<0.000000e+00> : vector<64xf32>
    %58 = vector.multi_reduction <add>, %57, %cst_41 [1] : vector<64x8xf32> to vector<64xf32>
    %59 = vector.shape_cast %58 : vector<64xf32> to vector<64x1xf32>
    %60 = arith.addf %54, %59 : vector<64x1xf32>
    %61 = arith.mulf %57, %57 : vector<64x8xf32>
    %cst_42 = arith.constant dense<0.000000e+00> : vector<64xf32>
    %62 = vector.multi_reduction <add>, %61, %cst_42 [1] : vector<64x8xf32> to vector<64xf32>
    %63 = vector.shape_cast %62 : vector<64xf32> to vector<64x1xf32>
    %64 = arith.addf %55, %63 : vector<64x1xf32>
    %65 = arith.truncf %57 : vector<64x8xf32> to vector<64x8xbf16>
    %66 = vector.extract_strided_slice %50 {offsets = [0, 0], sizes = [8, 16], strides = [1, 1]} : vector<32x16xbf16> to vector<8x16xbf16>
    %cst_43 = arith.constant dense<0.000000e+00> : vector<64x16xf32>
    %67 = tpu.matmul %65, %66, %cst_43 {dimension_numbers = #tpu.dot_dimension_numbers<[1], [0], [0], [1], [0, 0, 1, 1], [], []>} : vector<64x8xbf16>, vector<8x16xbf16>, vector<64x16xf32> -> vector<64x16xf32>
    %68 = arith.addf %56, %67 : vector<64x16xf32>
    %69 = vector.extract_strided_slice %49 {offsets = [64, 0], sizes = [64, 8], strides = [1, 1]} : vector<256x8xf32> to vector<64x8xf32>
    %cst_44 = arith.constant dense<0.000000e+00> : vector<64xf32>
    %70 = vector.multi_reduction <add>, %69, %cst_44 [1] : vector<64x8xf32> to vector<64xf32>
    %71 = vector.shape_cast %70 : vector<64xf32> to vector<64x1xf32>
    %72 = arith.addf %60, %71 : vector<64x1xf32>
    %73 = arith.mulf %69, %69 : vector<64x8xf32>
    %cst_45 = arith.constant dense<0.000000e+00> : vector<64xf32>
    %74 = vector.multi_reduction <add>, %73, %cst_45 [1] : vector<64x8xf32> to vector<64xf32>
    %75 = vector.shape_cast %74 : vector<64xf32> to vector<64x1xf32>
    %76 = arith.addf %64, %75 : vector<64x1xf32>
    %77 = arith.truncf %69 : vector<64x8xf32> to vector<64x8xbf16>
    %78 = vector.extract_strided_slice %50 {offsets = [8, 0], sizes = [8, 16], strides = [1, 1]} : vector<32x16xbf16> to vector<8x16xbf16>
    %cst_46 = arith.constant dense<0.000000e+00> : vector<64x16xf32>
    %79 = tpu.matmul %77, %78, %cst_46 {dimension_numbers = #tpu.dot_dimension_numbers<[1], [0], [0], [1], [0, 0, 1, 1], [], []>} : vector<64x8xbf16>, vector<8x16xbf16>, vector<64x16xf32> -> vector<64x16xf32>
    %80 = arith.addf %68, %79 : vector<64x16xf32>
    %81 = vector.extract_strided_slice %49 {offsets = [128, 0], sizes = [64, 8], strides = [1, 1]} : vector<256x8xf32> to vector<64x8xf32>
    %cst_47 = arith.constant dense<0.000000e+00> : vector<64xf32>
    %82 = vector.multi_reduction <add>, %81, %cst_47 [1] : vector<64x8xf32> to vector<64xf32>
    %83 = vector.shape_cast %82 : vector<64xf32> to vector<64x1xf32>
    %84 = arith.addf %72, %83 : vector<64x1xf32>
    %85 = arith.mulf %81, %81 : vector<64x8xf32>
    %cst_48 = arith.constant dense<0.000000e+00> : vector<64xf32>
    %86 = vector.multi_reduction <add>, %85, %cst_48 [1] : vector<64x8xf32> to vector<64xf32>
    %87 = vector.shape_cast %86 : vector<64xf32> to vector<64x1xf32>
    %88 = arith.addf %76, %87 : vector<64x1xf32>
    %89 = arith.truncf %81 : vector<64x8xf32> to vector<64x8xbf16>
    %90 = vector.extract_strided_slice %50 {offsets = [16, 0], sizes = [8, 16], strides = [1, 1]} : vector<32x16xbf16> to vector<8x16xbf16>
    %cst_49 = arith.constant dense<0.000000e+00> : vector<64x16xf32>
    %91 = tpu.matmul %89, %90, %cst_49 {dimension_numbers = #tpu.dot_dimension_numbers<[1], [0], [0], [1], [0, 0, 1, 1], [], []>} : vector<64x8xbf16>, vector<8x16xbf16>, vector<64x16xf32> -> vector<64x16xf32>
    %92 = arith.addf %80, %91 : vector<64x16xf32>
    %93 = vector.extract_strided_slice %49 {offsets = [192, 0], sizes = [64, 8], strides = [1, 1]} : vector<256x8xf32> to vector<64x8xf32>
    %cst_50 = arith.constant dense<0.000000e+00> : vector<64xf32>
    %94 = vector.multi_reduction <add>, %93, %cst_50 [1] : vector<64x8xf32> to vector<64xf32>
    %95 = vector.shape_cast %94 : vector<64xf32> to vector<64x1xf32>
    %96 = arith.addf %84, %95 : vector<64x1xf32>
    %97 = arith.mulf %93, %93 : vector<64x8xf32>
    %cst_51 = arith.constant dense<0.000000e+00> : vector<64xf32>
    %98 = vector.multi_reduction <add>, %97, %cst_51 [1] : vector<64x8xf32> to vector<64xf32>
    %99 = vector.shape_cast %98 : vector<64xf32> to vector<64x1xf32>
    %100 = arith.addf %88, %99 : vector<64x1xf32>
    %101 = arith.truncf %93 : vector<64x8xf32> to vector<64x8xbf16>
    %102 = vector.extract_strided_slice %50 {offsets = [24, 0], sizes = [8, 16], strides = [1, 1]} : vector<32x16xbf16> to vector<8x16xbf16>
    %cst_52 = arith.constant dense<0.000000e+00> : vector<64x16xf32>
    %103 = tpu.matmul %101, %102, %cst_52 {dimension_numbers = #tpu.dot_dimension_numbers<[1], [0], [0], [1], [0, 0, 1, 1], [], []>} : vector<64x8xbf16>, vector<8x16xbf16>, vector<64x16xf32> -> vector<64x16xf32>
    %104 = arith.addf %92, %103 : vector<64x16xf32>
    %cst_53 = arith.constant 3.125000e-02 : f32
    %105 = vector.broadcast %cst_53 : f32 to vector<64x1xf32>
    %106 = arith.mulf %96, %105 : vector<64x1xf32>
    %cst_54 = arith.constant 3.125000e-02 : f32
    %107 = vector.broadcast %cst_54 : f32 to vector<64x1xf32>
    %108 = arith.mulf %100, %107 : vector<64x1xf32>
    %109 = arith.mulf %106, %106 : vector<64x1xf32>
    %110 = arith.subf %108, %109 : vector<64x1xf32>
    %cst_55 = arith.constant 9.99999974E-6 : f32
    %111 = vector.broadcast %cst_55 : f32 to vector<64x1xf32>
    %112 = arith.addf %110, %111 : vector<64x1xf32>
    %113 = math.rsqrt %112 : vector<64x1xf32>
    %114 = vector.broadcast %106 : vector<64x1xf32> to vector<64x16xf32>
    %115 = vector.broadcast %53 : vector<1x16xf32> to vector<64x16xf32>
    %116 = arith.mulf %114, %115 : vector<64x16xf32>
    %117 = arith.subf %104, %116 : vector<64x16xf32>
    %118 = vector.broadcast %113 : vector<64x1xf32> to vector<64x16xf32>
    %119 = arith.mulf %118, %117 : vector<64x16xf32>
    %c0_56 = arith.constant 0 : index
    %c0_57 = arith.constant 0 : index
    %120 = vector.load %arg8[%c0_56, %c0_57] : memref<1x16xf32, #tpu.memory_space<vmem>>, vector<1x16xf32>
    %121 = vector.broadcast %120 : vector<1x16xf32> to vector<64x16xf32>
    %122 = arith.addf %119, %121 : vector<64x16xf32>
    %123 = arith.truncf %122 : vector<64x16xf32> to vector<64x16xbf16>
    %c0_58 = arith.constant 0 : index
    %c0_59 = arith.constant 0 : index
    %c0_60 = arith.constant 0 : index
    %124 = vector.load %arg9[%c0_58, %c0_59, %c0_60] : memref<3x16x16xbf16, #tpu.memory_space<vmem>>, vector<1x16x16xbf16>
    %125 = vector.shape_cast %124 : vector<1x16x16xbf16> to vector<16x16xbf16>
    %cst_61 = arith.constant dense<0.000000e+00> : vector<64x16xf32>
    %126 = tpu.matmul %123, %125, %cst_61 {dimension_numbers = #tpu.dot_dimension_numbers<[1], [0], [0], [1], [0, 0, 1, 1], [], []>} : vector<64x16xbf16>, vector<16x16xbf16>, vector<64x16xf32> -> vector<64x16xf32>
    %c0_62 = arith.constant 0 : index
    %c0_63 = arith.constant 0 : index
    %c0_64 = arith.constant 0 : index
    %127 = vector.load %arg10[%c0_62, %c0_63, %c0_64] : memref<3x1x16xf32, #tpu.memory_space<vmem>>, vector<1x1x16xf32>
    %128 = vector.shape_cast %127 : vector<1x1x16xf32> to vector<1x16xf32>
    %129 = vector.broadcast %128 : vector<1x16xf32> to vector<64x16xf32>
    %130 = arith.addf %126, %129 : vector<64x16xf32>
    %131 = arith.truncf %130 : vector<64x16xf32> to vector<64x16xbf16>
    %c1_65 = arith.constant 1 : index
    %c0_66 = arith.constant 0 : index
    %c0_67 = arith.constant 0 : index
    %132 = vector.load %arg9[%c1_65, %c0_66, %c0_67] : memref<3x16x16xbf16, #tpu.memory_space<vmem>>, vector<1x16x16xbf16>
    %133 = vector.shape_cast %132 : vector<1x16x16xbf16> to vector<16x16xbf16>
    %cst_68 = arith.constant dense<0.000000e+00> : vector<64x16xf32>
    %134 = tpu.matmul %123, %133, %cst_68 {dimension_numbers = #tpu.dot_dimension_numbers<[1], [0], [0], [1], [0, 0, 1, 1], [], []>} : vector<64x16xbf16>, vector<16x16xbf16>, vector<64x16xf32> -> vector<64x16xf32>
    %c1_69 = arith.constant 1 : index
    %c0_70 = arith.constant 0 : index
    %c0_71 = arith.constant 0 : index
    %135 = vector.load %arg10[%c1_69, %c0_70, %c0_71] : memref<3x1x16xf32, #tpu.memory_space<vmem>>, vector<1x1x16xf32>
    %136 = vector.shape_cast %135 : vector<1x1x16xf32> to vector<1x16xf32>
    %137 = vector.broadcast %136 : vector<1x16xf32> to vector<64x16xf32>
    %138 = arith.addf %134, %137 : vector<64x16xf32>
    %139 = arith.truncf %138 : vector<64x16xf32> to vector<64x16xbf16>
    %c2_72 = arith.constant 2 : index
    %c0_73 = arith.constant 0 : index
    %c0_74 = arith.constant 0 : index
    %140 = vector.load %arg9[%c2_72, %c0_73, %c0_74] : memref<3x16x16xbf16, #tpu.memory_space<vmem>>, vector<1x16x16xbf16>
    %141 = vector.shape_cast %140 : vector<1x16x16xbf16> to vector<16x16xbf16>
    %cst_75 = arith.constant dense<0.000000e+00> : vector<64x16xf32>
    %142 = tpu.matmul %123, %141, %cst_75 {dimension_numbers = #tpu.dot_dimension_numbers<[1], [0], [0], [1], [0, 0, 1, 1], [], []>} : vector<64x16xbf16>, vector<16x16xbf16>, vector<64x16xf32> -> vector<64x16xf32>
    %c2_76 = arith.constant 2 : index
    %c0_77 = arith.constant 0 : index
    %c0_78 = arith.constant 0 : index
    %143 = vector.load %arg10[%c2_76, %c0_77, %c0_78] : memref<3x1x16xf32, #tpu.memory_space<vmem>>, vector<1x1x16xf32>
    %144 = vector.shape_cast %143 : vector<1x1x16xf32> to vector<1x16xf32>
    %145 = vector.broadcast %144 : vector<1x16xf32> to vector<64x16xf32>
    %146 = arith.addf %142, %145 : vector<64x16xf32>
    %147 = arith.truncf %146 : vector<64x16xf32> to vector<64x16xbf16>
    %cst_79 = arith.constant dense<0.000000e+00> : vector<64x64xf32>
    %148 = tpu.matmul %131, %139, %cst_79 {dimension_numbers = #tpu.dot_dimension_numbers<[1], [1], [0], [0], [0, 0, 1, 0], [], []>} : vector<64x16xbf16>, vector<64x16xbf16>, vector<64x64xf32> -> vector<64x64xf32>
    %cst_80 = arith.constant dense<0xFF800000> : vector<64xf32>
    %149 = vector.multi_reduction <maximumf>, %148, %cst_80 [1] : vector<64x64xf32> to vector<64xf32>
    %150 = vector.shape_cast %149 : vector<64xf32> to vector<64x1xf32>
    %151 = vector.broadcast %150 : vector<64x1xf32> to vector<64x64xf32>
    %152 = arith.subf %148, %151 : vector<64x64xf32>
    %153 = math.exp %152 : vector<64x64xf32>
    %cst_81 = arith.constant dense<0.000000e+00> : vector<64xf32>
    %154 = vector.multi_reduction <add>, %153, %cst_81 [1] : vector<64x64xf32> to vector<64xf32>
    %155 = vector.shape_cast %154 : vector<64xf32> to vector<64x1xf32>
    %156 = arith.truncf %153 : vector<64x64xf32> to vector<64x64xbf16>
    %cst_82 = arith.constant dense<0.000000e+00> : vector<64x16xf32>
    %157 = tpu.matmul %156, %147, %cst_82 {dimension_numbers = #tpu.dot_dimension_numbers<[1], [0], [0], [1], [0, 0, 1, 1], [], []>} : vector<64x64xbf16>, vector<64x16xbf16>, vector<64x16xf32> -> vector<64x16xf32>
    %158 = vector.broadcast %155 : vector<64x1xf32> to vector<64x16xf32>
    %159 = arith.divf %157, %158 : vector<64x16xf32>
    %160 = arith.truncf %159 : vector<64x16xf32> to vector<64x16xbf16>
    %c0_83 = arith.constant 0 : index
    %c0_84 = arith.constant 0 : index
    %161 = vector.load %arg11[%c0_83, %c0_84] : memref<16x16xbf16, #tpu.memory_space<vmem>>, vector<16x16xbf16>
    %cst_85 = arith.constant dense<0.000000e+00> : vector<64x16xf32>
    %162 = tpu.matmul %160, %161, %cst_85 {dimension_numbers = #tpu.dot_dimension_numbers<[1], [0], [0], [1], [0, 0, 1, 1], [], []>} : vector<64x16xbf16>, vector<16x16xbf16>, vector<64x16xf32> -> vector<64x16xf32>
    %c0_86 = arith.constant 0 : index
    %c0_87 = arith.constant 0 : index
    %163 = vector.load %arg12[%c0_86, %c0_87] : memref<1x16xf32, #tpu.memory_space<vmem>>, vector<1x16xf32>
    %164 = vector.broadcast %163 : vector<1x16xf32> to vector<64x16xf32>
    %165 = arith.addf %162, %164 : vector<64x16xf32>
    %c0_88 = arith.constant 0 : index
    %c0_89 = arith.constant 0 : index
    %c0_90 = arith.constant 0 : index
    %166 = vector.load %arg24[%c0_88, %c0_89, %c0_90] : memref<1x64x16xf32, #tpu.memory_space<vmem>>, vector<1x64x16xf32>
    %167 = vector.shape_cast %166 : vector<1x64x16xf32> to vector<64x16xf32>
    %168 = vector.shape_cast %165 : vector<64x16xf32> to vector<1x64x16xf32>
    tpu.vector_store %arg24[%c0_88, %c0_89, %c0_90], %168 {strides = array<i32>} : memref<1x64x16xf32, #tpu.memory_space<vmem>>, vector<1x64x16xf32>,
    %169 = arith.truncf %165 : vector<64x16xf32> to vector<64x16xbf16>
    %c0_91 = arith.constant 0 : index
    %c0_92 = arith.constant 0 : index
    %170 = vector.load %arg13[%c0_91, %c0_92] : memref<64x64xbf16, #tpu.memory_space<vmem>>, vector<64x64xbf16>
    %cst_93 = arith.constant dense<0.000000e+00> : vector<64x16xf32>
    %171 = tpu.matmul %170, %169, %cst_93 {dimension_numbers = #tpu.dot_dimension_numbers<[1], [0], [0], [1], [0, 0, 1, 1], [], []>} : vector<64x64xbf16>, vector<64x16xbf16>, vector<64x16xf32> -> vector<64x16xf32>
    %c0_94 = arith.constant 0 : index
    %c0_95 = arith.constant 0 : index
    %172 = vector.load %arg14[%c0_94, %c0_95] : memref<64x32xbf16, #tpu.memory_space<vmem>>, vector<64x32xbf16>
    %173 = arith.extf %172 : vector<64x32xbf16> to vector<64x32xf32>
    %cst_96 = arith.constant dense<0.000000e+00> : vector<32xf32>
    %174 = vector.multi_reduction <add>, %173, %cst_96 [0] : vector<64x32xf32> to vector<32xf32>
    %175 = vector.shape_cast %174 : vector<32xf32> to vector<1x32xf32>
    %cst_97 = arith.constant 0.000000e+00 : f32
    %176 = vector.broadcast %cst_97 : f32 to vector<16x1xf32>
    %cst_98 = arith.constant 0.000000e+00 : f32
    %177 = vector.broadcast %cst_98 : f32 to vector<16x1xf32>
    %cst_99 = arith.constant 0.000000e+00 : f32
    %178 = vector.broadcast %cst_99 : f32 to vector<16x32xf32>
    %179 = vector.extract_strided_slice %171 {offsets = [0, 0], sizes = [16, 16], strides = [1, 1]} : vector<64x16xf32> to vector<16x16xf32>
    %cst_100 = arith.constant dense<0.000000e+00> : vector<16xf32>
    %180 = vector.multi_reduction <add>, %179, %cst_100 [1] : vector<16x16xf32> to vector<16xf32>
    %181 = vector.shape_cast %180 : vector<16xf32> to vector<16x1xf32>
    %182 = arith.addf %176, %181 : vector<16x1xf32>
    %183 = arith.mulf %179, %179 : vector<16x16xf32>
    %cst_101 = arith.constant dense<0.000000e+00> : vector<16xf32>
    %184 = vector.multi_reduction <add>, %183, %cst_101 [1] : vector<16x16xf32> to vector<16xf32>
    %185 = vector.shape_cast %184 : vector<16xf32> to vector<16x1xf32>
    %186 = arith.addf %177, %185 : vector<16x1xf32>
    %187 = arith.truncf %179 : vector<16x16xf32> to vector<16x16xbf16>
    %188 = vector.extract_strided_slice %172 {offsets = [0, 0], sizes = [16, 32], strides = [1, 1]} : vector<64x32xbf16> to vector<16x32xbf16>
    %cst_102 = arith.constant dense<0.000000e+00> : vector<16x32xf32>
    %189 = tpu.matmul %187, %188, %cst_102 {dimension_numbers = #tpu.dot_dimension_numbers<[1], [0], [0], [1], [0, 0, 1, 1], [], []>} : vector<16x16xbf16>, vector<16x32xbf16>, vector<16x32xf32> -> vector<16x32xf32>
    %190 = arith.addf %178, %189 : vector<16x32xf32>
    %191 = vector.extract_strided_slice %171 {offsets = [16, 0], sizes = [16, 16], strides = [1, 1]} : vector<64x16xf32> to vector<16x16xf32>
    %cst_103 = arith.constant dense<0.000000e+00> : vector<16xf32>
    %192 = vector.multi_reduction <add>, %191, %cst_103 [1] : vector<16x16xf32> to vector<16xf32>
    %193 = vector.shape_cast %192 : vector<16xf32> to vector<16x1xf32>
    %194 = arith.addf %182, %193 : vector<16x1xf32>
    %195 = arith.mulf %191, %191 : vector<16x16xf32>
    %cst_104 = arith.constant dense<0.000000e+00> : vector<16xf32>
    %196 = vector.multi_reduction <add>, %195, %cst_104 [1] : vector<16x16xf32> to vector<16xf32>
    %197 = vector.shape_cast %196 : vector<16xf32> to vector<16x1xf32>
    %198 = arith.addf %186, %197 : vector<16x1xf32>
    %199 = arith.truncf %191 : vector<16x16xf32> to vector<16x16xbf16>
    %200 = vector.extract_strided_slice %172 {offsets = [16, 0], sizes = [16, 32], strides = [1, 1]} : vector<64x32xbf16> to vector<16x32xbf16>
    %cst_105 = arith.constant dense<0.000000e+00> : vector<16x32xf32>
    %201 = tpu.matmul %199, %200, %cst_105 {dimension_numbers = #tpu.dot_dimension_numbers<[1], [0], [0], [1], [0, 0, 1, 1], [], []>} : vector<16x16xbf16>, vector<16x32xbf16>, vector<16x32xf32> -> vector<16x32xf32>
    %202 = arith.addf %190, %201 : vector<16x32xf32>
    %203 = vector.extract_strided_slice %171 {offsets = [32, 0], sizes = [16, 16], strides = [1, 1]} : vector<64x16xf32> to vector<16x16xf32>
    %cst_106 = arith.constant dense<0.000000e+00> : vector<16xf32>
    %204 = vector.multi_reduction <add>, %203, %cst_106 [1] : vector<16x16xf32> to vector<16xf32>
    %205 = vector.shape_cast %204 : vector<16xf32> to vector<16x1xf32>
    %206 = arith.addf %194, %205 : vector<16x1xf32>
    %207 = arith.mulf %203, %203 : vector<16x16xf32>
    %cst_107 = arith.constant dense<0.000000e+00> : vector<16xf32>
    %208 = vector.multi_reduction <add>, %207, %cst_107 [1] : vector<16x16xf32> to vector<16xf32>
    %209 = vector.shape_cast %208 : vector<16xf32> to vector<16x1xf32>
    %210 = arith.addf %198, %209 : vector<16x1xf32>
    %211 = arith.truncf %203 : vector<16x16xf32> to vector<16x16xbf16>
    %212 = vector.extract_strided_slice %172 {offsets = [32, 0], sizes = [16, 32], strides = [1, 1]} : vector<64x32xbf16> to vector<16x32xbf16>
    %cst_108 = arith.constant dense<0.000000e+00> : vector<16x32xf32>
    %213 = tpu.matmul %211, %212, %cst_108 {dimension_numbers = #tpu.dot_dimension_numbers<[1], [0], [0], [1], [0, 0, 1, 1], [], []>} : vector<16x16xbf16>, vector<16x32xbf16>, vector<16x32xf32> -> vector<16x32xf32>
    %214 = arith.addf %202, %213 : vector<16x32xf32>
    %215 = vector.extract_strided_slice %171 {offsets = [48, 0], sizes = [16, 16], strides = [1, 1]} : vector<64x16xf32> to vector<16x16xf32>
    %cst_109 = arith.constant dense<0.000000e+00> : vector<16xf32>
    %216 = vector.multi_reduction <add>, %215, %cst_109 [1] : vector<16x16xf32> to vector<16xf32>
    %217 = vector.shape_cast %216 : vector<16xf32> to vector<16x1xf32>
    %218 = arith.addf %206, %217 : vector<16x1xf32>
    %219 = arith.mulf %215, %215 : vector<16x16xf32>
    %cst_110 = arith.constant dense<0.000000e+00> : vector<16xf32>
    %220 = vector.multi_reduction <add>, %219, %cst_110 [1] : vector<16x16xf32> to vector<16xf32>
    %221 = vector.shape_cast %220 : vector<16xf32> to vector<16x1xf32>
    %222 = arith.addf %210, %221 : vector<16x1xf32>
    %223 = arith.truncf %215 : vector<16x16xf32> to vector<16x16xbf16>
    %224 = vector.extract_strided_slice %172 {offsets = [48, 0], sizes = [16, 32], strides = [1, 1]} : vector<64x32xbf16> to vector<16x32xbf16>
    %cst_111 = arith.constant dense<0.000000e+00> : vector<16x32xf32>
    %225 = tpu.matmul %223, %224, %cst_111 {dimension_numbers = #tpu.dot_dimension_numbers<[1], [0], [0], [1], [0, 0, 1, 1], [], []>} : vector<16x16xbf16>, vector<16x32xbf16>, vector<16x32xf32> -> vector<16x32xf32>
    %226 = arith.addf %214, %225 : vector<16x32xf32>
    %cst_112 = arith.constant 1.562500e-02 : f32
    %227 = vector.broadcast %cst_112 : f32 to vector<16x1xf32>
    %228 = arith.mulf %218, %227 : vector<16x1xf32>
    %cst_113 = arith.constant 1.562500e-02 : f32
    %229 = vector.broadcast %cst_113 : f32 to vector<16x1xf32>
    %230 = arith.mulf %222, %229 : vector<16x1xf32>
    %231 = arith.mulf %228, %228 : vector<16x1xf32>
    %232 = arith.subf %230, %231 : vector<16x1xf32>
    %cst_114 = arith.constant 9.99999974E-6 : f32
    %233 = vector.broadcast %cst_114 : f32 to vector<16x1xf32>
    %234 = arith.addf %232, %233 : vector<16x1xf32>
    %235 = math.rsqrt %234 : vector<16x1xf32>
    %236 = vector.broadcast %228 : vector<16x1xf32> to vector<16x32xf32>
    %237 = vector.broadcast %175 : vector<1x32xf32> to vector<16x32xf32>
    %238 = arith.mulf %236, %237 : vector<16x32xf32>
    %239 = arith.subf %226, %238 : vector<16x32xf32>
    %240 = vector.broadcast %235 : vector<16x1xf32> to vector<16x32xf32>
    %241 = arith.mulf %240, %239 : vector<16x32xf32>
    %c0_115 = arith.constant 0 : index
    %c0_116 = arith.constant 0 : index
    %242 = vector.load %arg15[%c0_115, %c0_116] : memref<1x32xf32, #tpu.memory_space<vmem>>, vector<1x32xf32>
    %243 = vector.broadcast %242 : vector<1x32xf32> to vector<16x32xf32>
    %244 = arith.addf %241, %243 : vector<16x32xf32>
    %245 = arith.truncf %244 : vector<16x32xf32> to vector<16x32xbf16>
    %c0_117 = arith.constant 0 : index
    %c0_118 = arith.constant 0 : index
    %c0_119 = arith.constant 0 : index
    %246 = vector.load %arg16[%c0_117, %c0_118, %c0_119] : memref<3x32x32xbf16, #tpu.memory_space<vmem>>, vector<1x32x32xbf16>
    %247 = vector.shape_cast %246 : vector<1x32x32xbf16> to vector<32x32xbf16>
    %cst_120 = arith.constant dense<0.000000e+00> : vector<16x32xf32>
    %248 = tpu.matmul %245, %247, %cst_120 {dimension_numbers = #tpu.dot_dimension_numbers<[1], [0], [0], [1], [0, 0, 1, 1], [], []>} : vector<16x32xbf16>, vector<32x32xbf16>, vector<16x32xf32> -> vector<16x32xf32>
    %c0_121 = arith.constant 0 : index
    %c0_122 = arith.constant 0 : index
    %c0_123 = arith.constant 0 : index
    %249 = vector.load %arg17[%c0_121, %c0_122, %c0_123] : memref<3x1x32xf32, #tpu.memory_space<vmem>>, vector<1x1x32xf32>
    %250 = vector.shape_cast %249 : vector<1x1x32xf32> to vector<1x32xf32>
    %251 = vector.broadcast %250 : vector<1x32xf32> to vector<16x32xf32>
    %252 = arith.addf %248, %251 : vector<16x32xf32>
    %253 = arith.truncf %252 : vector<16x32xf32> to vector<16x32xbf16>
    %c1_124 = arith.constant 1 : index
    %c0_125 = arith.constant 0 : index
    %c0_126 = arith.constant 0 : index
    %254 = vector.load %arg16[%c1_124, %c0_125, %c0_126] : memref<3x32x32xbf16, #tpu.memory_space<vmem>>, vector<1x32x32xbf16>
    %255 = vector.shape_cast %254 : vector<1x32x32xbf16> to vector<32x32xbf16>
    %cst_127 = arith.constant dense<0.000000e+00> : vector<16x32xf32>
    %256 = tpu.matmul %245, %255, %cst_127 {dimension_numbers = #tpu.dot_dimension_numbers<[1], [0], [0], [1], [0, 0, 1, 1], [], []>} : vector<16x32xbf16>, vector<32x32xbf16>, vector<16x32xf32> -> vector<16x32xf32>
    %c1_128 = arith.constant 1 : index
    %c0_129 = arith.constant 0 : index
    %c0_130 = arith.constant 0 : index
    %257 = vector.load %arg17[%c1_128, %c0_129, %c0_130] : memref<3x1x32xf32, #tpu.memory_space<vmem>>, vector<1x1x32xf32>
    %258 = vector.shape_cast %257 : vector<1x1x32xf32> to vector<1x32xf32>
    %259 = vector.broadcast %258 : vector<1x32xf32> to vector<16x32xf32>
    %260 = arith.addf %256, %259 : vector<16x32xf32>
    %261 = arith.truncf %260 : vector<16x32xf32> to vector<16x32xbf16>
    %c2_131 = arith.constant 2 : index
    %c0_132 = arith.constant 0 : index
    %c0_133 = arith.constant 0 : index
    %262 = vector.load %arg16[%c2_131, %c0_132, %c0_133] : memref<3x32x32xbf16, #tpu.memory_space<vmem>>, vector<1x32x32xbf16>
    %263 = vector.shape_cast %262 : vector<1x32x32xbf16> to vector<32x32xbf16>
    %cst_134 = arith.constant dense<0.000000e+00> : vector<16x32xf32>
    %264 = tpu.matmul %245, %263, %cst_134 {dimension_numbers = #tpu.dot_dimension_numbers<[1], [0], [0], [1], [0, 0, 1, 1], [], []>} : vector<16x32xbf16>, vector<32x32xbf16>, vector<16x32xf32> -> vector<16x32xf32>
    %c2_135 = arith.constant 2 : index
    %c0_136 = arith.constant 0 : index
    %c0_137 = arith.constant 0 : index
    %265 = vector.load %arg17[%c2_135, %c0_136, %c0_137] : memref<3x1x32xf32, #tpu.memory_space<vmem>>, vector<1x1x32xf32>
    %266 = vector.shape_cast %265 : vector<1x1x32xf32> to vector<1x32xf32>
    %267 = vector.broadcast %266 : vector<1x32xf32> to vector<16x32xf32>
    %268 = arith.addf %264, %267 : vector<16x32xf32>
    %269 = arith.truncf %268 : vector<16x32xf32> to vector<16x32xbf16>
    %cst_138 = arith.constant dense<0.000000e+00> : vector<16x16xf32>
    %270 = tpu.matmul %253, %261, %cst_138 {dimension_numbers = #tpu.dot_dimension_numbers<[1], [1], [0], [0], [0, 0, 1, 0], [], []>} : vector<16x32xbf16>, vector<16x32xbf16>, vector<16x16xf32> -> vector<16x16xf32>
    %cst_139 = arith.constant dense<0xFF800000> : vector<16xf32>
    %271 = vector.multi_reduction <maximumf>, %270, %cst_139 [1] : vector<16x16xf32> to vector<16xf32>
    %272 = vector.shape_cast %271 : vector<16xf32> to vector<16x1xf32>
    %273 = vector.broadcast %272 : vector<16x1xf32> to vector<16x16xf32>
    %274 = arith.subf %270, %273 : vector<16x16xf32>
    %275 = math.exp %274 : vector<16x16xf32>
    %cst_140 = arith.constant dense<0.000000e+00> : vector<16xf32>
    %276 = vector.multi_reduction <add>, %275, %cst_140 [1] : vector<16x16xf32> to vector<16xf32>
    %277 = vector.shape_cast %276 : vector<16xf32> to vector<16x1xf32>
    %278 = arith.truncf %275 : vector<16x16xf32> to vector<16x16xbf16>
    %cst_141 = arith.constant dense<0.000000e+00> : vector<16x32xf32>
    %279 = tpu.matmul %278, %269, %cst_141 {dimension_numbers = #tpu.dot_dimension_numbers<[1], [0], [0], [1], [0, 0, 1, 1], [], []>} : vector<16x16xbf16>, vector<16x32xbf16>, vector<16x32xf32> -> vector<16x32xf32>
    %280 = vector.broadcast %277 : vector<16x1xf32> to vector<16x32xf32>
    %281 = arith.divf %279, %280 : vector<16x32xf32>
    %282 = arith.truncf %281 : vector<16x32xf32> to vector<16x32xbf16>
    %c0_142 = arith.constant 0 : index
    %c0_143 = arith.constant 0 : index
    %283 = vector.load %arg18[%c0_142, %c0_143] : memref<32x32xbf16, #tpu.memory_space<vmem>>, vector<32x32xbf16>
    %cst_144 = arith.constant dense<0.000000e+00> : vector<16x32xf32>
    %284 = tpu.matmul %282, %283, %cst_144 {dimension_numbers = #tpu.dot_dimension_numbers<[1], [0], [0], [1], [0, 0, 1, 1], [], []>} : vector<16x32xbf16>, vector<32x32xbf16>, vector<16x32xf32> -> vector<16x32xf32>
    %c0_145 = arith.constant 0 : index
    %c0_146 = arith.constant 0 : index
    %285 = vector.load %arg19[%c0_145, %c0_146] : memref<1x32xf32, #tpu.memory_space<vmem>>, vector<1x32xf32>
    %286 = vector.broadcast %285 : vector<1x32xf32> to vector<16x32xf32>
    %287 = arith.addf %284, %286 : vector<16x32xf32>
    %c0_147 = arith.constant 0 : index
    %c0_148 = arith.constant 0 : index
    %c0_149 = arith.constant 0 : index
    %288 = vector.load %arg25[%c0_147, %c0_148, %c0_149] : memref<1x16x32xf32, #tpu.memory_space<vmem>>, vector<1x16x32xf32>
    %289 = vector.shape_cast %288 : vector<1x16x32xf32> to vector<16x32xf32>
    %290 = vector.shape_cast %287 : vector<16x32xf32> to vector<1x16x32xf32>
    tpu.vector_store %arg25[%c0_147, %c0_148, %c0_149], %290 {strides = array<i32>} : memref<1x16x32xf32, #tpu.memory_space<vmem>>, vector<1x16x32xf32>,
    %291 = arith.truncf %287 : vector<16x32xf32> to vector<16x32xbf16>
    %c0_150 = arith.constant 0 : index
    %c0_151 = arith.constant 0 : index
    %292 = vector.load %arg20[%c0_150, %c0_151] : memref<16x16xbf16, #tpu.memory_space<vmem>>, vector<16x16xbf16>
    %cst_152 = arith.constant dense<0.000000e+00> : vector<16x32xf32>
    %293 = tpu.matmul %292, %291, %cst_152 {dimension_numbers = #tpu.dot_dimension_numbers<[1], [0], [0], [1], [0, 0, 1, 1], [], []>} : vector<16x16xbf16>, vector<16x32xbf16>, vector<16x32xf32> -> vector<16x32xf32>
    %c0_153 = arith.constant 0 : index
    %c0_154 = arith.constant 0 : index
    %294 = vector.load %arg21[%c0_153, %c0_154] : memref<128x64xbf16, #tpu.memory_space<vmem>>, vector<128x64xbf16>
    %295 = arith.extf %294 : vector<128x64xbf16> to vector<128x64xf32>
    %cst_155 = arith.constant dense<0.000000e+00> : vector<64xf32>
    %296 = vector.multi_reduction <add>, %295, %cst_155 [0] : vector<128x64xf32> to vector<64xf32>
    %297 = vector.shape_cast %296 : vector<64xf32> to vector<1x64xf32>
    %cst_156 = arith.constant 0.000000e+00 : f32
    %298 = vector.broadcast %cst_156 : f32 to vector<4x1xf32>
    %cst_157 = arith.constant 0.000000e+00 : f32
    %299 = vector.broadcast %cst_157 : f32 to vector<4x1xf32>
    %cst_158 = arith.constant 0.000000e+00 : f32
    %300 = vector.broadcast %cst_158 : f32 to vector<4x64xf32>
    %301 = vector.extract_strided_slice %293 {offsets = [0, 0], sizes = [4, 32], strides = [1, 1]} : vector<16x32xf32> to vector<4x32xf32>
    %cst_159 = arith.constant dense<0.000000e+00> : vector<4xf32>
    %302 = vector.multi_reduction <add>, %301, %cst_159 [1] : vector<4x32xf32> to vector<4xf32>
    %303 = vector.shape_cast %302 : vector<4xf32> to vector<4x1xf32>
    %304 = arith.addf %298, %303 : vector<4x1xf32>
    %305 = arith.mulf %301, %301 : vector<4x32xf32>
    %cst_160 = arith.constant dense<0.000000e+00> : vector<4xf32>
    %306 = vector.multi_reduction <add>, %305, %cst_160 [1] : vector<4x32xf32> to vector<4xf32>
    %307 = vector.shape_cast %306 : vector<4xf32> to vector<4x1xf32>
    %308 = arith.addf %299, %307 : vector<4x1xf32>
    %309 = arith.truncf %301 : vector<4x32xf32> to vector<4x32xbf16>
    %310 = vector.extract_strided_slice %294 {offsets = [0, 0], sizes = [32, 64], strides = [1, 1]} : vector<128x64xbf16> to vector<32x64xbf16>
    %cst_161 = arith.constant dense<0.000000e+00> : vector<4x64xf32>
    %311 = tpu.matmul %309, %310, %cst_161 {dimension_numbers = #tpu.dot_dimension_numbers<[1], [0], [0], [1], [0, 0, 1, 1], [], []>} : vector<4x32xbf16>, vector<32x64xbf16>, vector<4x64xf32> -> vector<4x64xf32>
    %312 = arith.addf %300, %311 : vector<4x64xf32>
    %313 = vector.extract_strided_slice %293 {offsets = [4, 0], sizes = [4, 32], strides = [1, 1]} : vector<16x32xf32> to vector<4x32xf32>
    %cst_162 = arith.constant dense<0.000000e+00> : vector<4xf32>
    %314 = vector.multi_reduction <add>, %313, %cst_162 [1] : vector<4x32xf32> to vector<4xf32>
    %315 = vector.shape_cast %314 : vector<4xf32> to vector<4x1xf32>
    %316 = arith.addf %304, %315 : vector<4x1xf32>
    %317 = arith.mulf %313, %313 : vector<4x32xf32>
    %cst_163 = arith.constant dense<0.000000e+00> : vector<4xf32>
    %318 = vector.multi_reduction <add>, %317, %cst_163 [1] : vector<4x32xf32> to vector<4xf32>
    %319 = vector.shape_cast %318 : vector<4xf32> to vector<4x1xf32>
    %320 = arith.addf %308, %319 : vector<4x1xf32>
    %321 = arith.truncf %313 : vector<4x32xf32> to vector<4x32xbf16>
    %322 = vector.extract_strided_slice %294 {offsets = [32, 0], sizes = [32, 64], strides = [1, 1]} : vector<128x64xbf16> to vector<32x64xbf16>
    %cst_164 = arith.constant dense<0.000000e+00> : vector<4x64xf32>
    %323 = tpu.matmul %321, %322, %cst_164 {dimension_numbers = #tpu.dot_dimension_numbers<[1], [0], [0], [1], [0, 0, 1, 1], [], []>} : vector<4x32xbf16>, vector<32x64xbf16>, vector<4x64xf32> -> vector<4x64xf32>
    %324 = arith.addf %312, %323 : vector<4x64xf32>
    %325 = vector.extract_strided_slice %293 {offsets = [8, 0], sizes = [4, 32], strides = [1, 1]} : vector<16x32xf32> to vector<4x32xf32>
    %cst_165 = arith.constant dense<0.000000e+00> : vector<4xf32>
    %326 = vector.multi_reduction <add>, %325, %cst_165 [1] : vector<4x32xf32> to vector<4xf32>
    %327 = vector.shape_cast %326 : vector<4xf32> to vector<4x1xf32>
    %328 = arith.addf %316, %327 : vector<4x1xf32>
    %329 = arith.mulf %325, %325 : vector<4x32xf32>
    %cst_166 = arith.constant dense<0.000000e+00> : vector<4xf32>
    %330 = vector.multi_reduction <add>, %329, %cst_166 [1] : vector<4x32xf32> to vector<4xf32>
    %331 = vector.shape_cast %330 : vector<4xf32> to vector<4x1xf32>
    %332 = arith.addf %320, %331 : vector<4x1xf32>
    %333 = arith.truncf %325 : vector<4x32xf32> to vector<4x32xbf16>
    %334 = vector.extract_strided_slice %294 {offsets = [64, 0], sizes = [32, 64], strides = [1, 1]} : vector<128x64xbf16> to vector<32x64xbf16>
    %cst_167 = arith.constant dense<0.000000e+00> : vector<4x64xf32>
    %335 = tpu.matmul %333, %334, %cst_167 {dimension_numbers = #tpu.dot_dimension_numbers<[1], [0], [0], [1], [0, 0, 1, 1], [], []>} : vector<4x32xbf16>, vector<32x64xbf16>, vector<4x64xf32> -> vector<4x64xf32>
    %336 = arith.addf %324, %335 : vector<4x64xf32>
    %337 = vector.extract_strided_slice %293 {offsets = [12, 0], sizes = [4, 32], strides = [1, 1]} : vector<16x32xf32> to vector<4x32xf32>
    %cst_168 = arith.constant dense<0.000000e+00> : vector<4xf32>
    %338 = vector.multi_reduction <add>, %337, %cst_168 [1] : vector<4x32xf32> to vector<4xf32>
    %339 = vector.shape_cast %338 : vector<4xf32> to vector<4x1xf32>
    %340 = arith.addf %328, %339 : vector<4x1xf32>
    %341 = arith.mulf %337, %337 : vector<4x32xf32>
    %cst_169 = arith.constant dense<0.000000e+00> : vector<4xf32>
    %342 = vector.multi_reduction <add>, %341, %cst_169 [1] : vector<4x32xf32> to vector<4xf32>
    %343 = vector.shape_cast %342 : vector<4xf32> to vector<4x1xf32>
    %344 = arith.addf %332, %343 : vector<4x1xf32>
    %345 = arith.truncf %337 : vector<4x32xf32> to vector<4x32xbf16>
    %346 = vector.extract_strided_slice %294 {offsets = [96, 0], sizes = [32, 64], strides = [1, 1]} : vector<128x64xbf16> to vector<32x64xbf16>
    %cst_170 = arith.constant dense<0.000000e+00> : vector<4x64xf32>
    %347 = tpu.matmul %345, %346, %cst_170 {dimension_numbers = #tpu.dot_dimension_numbers<[1], [0], [0], [1], [0, 0, 1, 1], [], []>} : vector<4x32xbf16>, vector<32x64xbf16>, vector<4x64xf32> -> vector<4x64xf32>
    %348 = arith.addf %336, %347 : vector<4x64xf32>
    %cst_171 = arith.constant 7.812500e-03 : f32
    %349 = vector.broadcast %cst_171 : f32 to vector<4x1xf32>
    %350 = arith.mulf %340, %349 : vector<4x1xf32>
    %cst_172 = arith.constant 7.812500e-03 : f32
    %351 = vector.broadcast %cst_172 : f32 to vector<4x1xf32>
    %352 = arith.mulf %344, %351 : vector<4x1xf32>
    %353 = arith.mulf %350, %350 : vector<4x1xf32>
    %354 = arith.subf %352, %353 : vector<4x1xf32>
    %cst_173 = arith.constant 9.99999974E-6 : f32
    %355 = vector.broadcast %cst_173 : f32 to vector<4x1xf32>
    %356 = arith.addf %354, %355 : vector<4x1xf32>
    %357 = math.rsqrt %356 : vector<4x1xf32>
    %358 = vector.broadcast %350 : vector<4x1xf32> to vector<4x64xf32>
    %359 = vector.broadcast %297 : vector<1x64xf32> to vector<4x64xf32>
    %360 = arith.mulf %358, %359 : vector<4x64xf32>
    %361 = arith.subf %348, %360 : vector<4x64xf32>
    %362 = vector.broadcast %357 : vector<4x1xf32> to vector<4x64xf32>
    %363 = arith.mulf %362, %361 : vector<4x64xf32>
    %c0_174 = arith.constant 0 : index
    %c0_175 = arith.constant 0 : index
    %364 = vector.load %arg22[%c0_174, %c0_175] : memref<1x64xf32, #tpu.memory_space<vmem>>, vector<1x64xf32>
    %365 = vector.broadcast %364 : vector<1x64xf32> to vector<4x64xf32>
    %366 = arith.addf %363, %365 : vector<4x64xf32>
    %c0_176 = arith.constant 0 : index
    %c0_177 = arith.constant 0 : index
    %c0_178 = arith.constant 0 : index
    %367 = vector.load %arg26[%c0_176, %c0_177, %c0_178] : memref<1x4x64xf32, #tpu.memory_space<vmem>>, vector<1x4x64xf32>
    %368 = vector.shape_cast %367 : vector<1x4x64xf32> to vector<4x64xf32>
    %369 = vector.shape_cast %366 : vector<4x64xf32> to vector<1x4x64xf32>
    tpu.vector_store %arg26[%c0_176, %c0_177, %c0_178], %369 {strides = array<i32>} : memref<1x4x64xf32, #tpu.memory_space<vmem>>, vector<1x4x64xf32>,
    return
  }
  func.func @transform_0(%arg0: i32) -> (i32, i32, i32) {
    %c0_i32 = arith.constant 0 : i32
    %c0_i32_0 = arith.constant 0 : i32
    %c0_i32_1 = arith.constant 0 : i32
    return %arg0, %c0_i32, %c0_i32_0 : i32, i32, i32
  }
  func.func @transform_1(%arg0: i32) -> (i32, i32, i32) {
    %c0_i32 = arith.constant 0 : i32
    %c0_i32_0 = arith.constant 0 : i32
    %c0_i32_1 = arith.constant 0 : i32
    %c0_i32_2 = arith.constant 0 : i32
    return %c0_i32, %c0_i32_0, %c0_i32_1 : i32, i32, i32
  }
  func.func @transform_2(%arg0: i32) -> (i32, i32, i32) {
    %c0_i32 = arith.constant 0 : i32
    %c0_i32_0 = arith.constant 0 : i32
    %c0_i32_1 = arith.constant 0 : i32
    %c0_i32_2 = arith.constant 0 : i32
    return %c0_i32, %c0_i32_0, %c0_i32_1 : i32, i32, i32
  }
  func.func @transform_3(%arg0: i32) -> (i32, i32) {
    %c0_i32 = arith.constant 0 : i32
    %c0_i32_0 = arith.constant 0 : i32
    %c0_i32_1 = arith.constant 0 : i32
    return %c0_i32, %c0_i32_0 : i32, i32
  }
  func.func @transform_4(%arg0: i32) -> (i32, i32) {
    %c0_i32 = arith.constant 0 : i32
    %c0_i32_0 = arith.constant 0 : i32
    %c0_i32_1 = arith.constant 0 : i32
    return %c0_i32, %c0_i32_0 : i32, i32
  }
  func.func @transform_5(%arg0: i32) -> (i32, i32) {
    %c0_i32 = arith.constant 0 : i32
    %c0_i32_0 = arith.constant 0 : i32
    %c0_i32_1 = arith.constant 0 : i32
    return %c0_i32, %c0_i32_0 : i32, i32
  }
  func.func @transform_6(%arg0: i32) -> (i32, i32) {
    %c0_i32 = arith.constant 0 : i32
    %c0_i32_0 = arith.constant 0 : i32
    %c0_i32_1 = arith.constant 0 : i32
    return %c0_i32, %c0_i32_0 : i32, i32
  }
  func.func @transform_7(%arg0: i32) -> (i32, i32) {
    %c0_i32 = arith.constant 0 : i32
    %c0_i32_0 = arith.constant 0 : i32
    %c0_i32_1 = arith.constant 0 : i32
    return %c0_i32, %c0_i32_0 : i32, i32
  }
  func.func @transform_8(%arg0: i32) -> (i32, i32, i32) {
    %c0_i32 = arith.constant 0 : i32
    %c0_i32_0 = arith.constant 0 : i32
    %c0_i32_1 = arith.constant 0 : i32
    %c0_i32_2 = arith.constant 0 : i32
    return %c0_i32, %c0_i32_0, %c0_i32_1 : i32, i32, i32
  }
  func.func @transform_9(%arg0: i32) -> (i32, i32, i32) {
    %c0_i32 = arith.constant 0 : i32
    %c0_i32_0 = arith.constant 0 : i32
    %c0_i32_1 = arith.constant 0 : i32
    %c0_i32_2 = arith.constant 0 : i32
    return %c0_i32, %c0_i32_0, %c0_i32_1 : i32, i32, i32
  }
  func.func @transform_10(%arg0: i32) -> (i32, i32) {
    %c0_i32 = arith.constant 0 : i32
    %c0_i32_0 = arith.constant 0 : i32
    %c0_i32_1 = arith.constant 0 : i32
    return %c0_i32, %c0_i32_0 : i32, i32
  }
  func.func @transform_11(%arg0: i32) -> (i32, i32) {
    %c0_i32 = arith.constant 0 : i32
    %c0_i32_0 = arith.constant 0 : i32
    %c0_i32_1 = arith.constant 0 : i32
    return %c0_i32, %c0_i32_0 : i32, i32
  }
  func.func @transform_12(%arg0: i32) -> (i32, i32) {
    %c0_i32 = arith.constant 0 : i32
    %c0_i32_0 = arith.constant 0 : i32
    %c0_i32_1 = arith.constant 0 : i32
    return %c0_i32, %c0_i32_0 : i32, i32
  }
  func.func @transform_13(%arg0: i32) -> (i32, i32) {
    %c0_i32 = arith.constant 0 : i32
    %c0_i32_0 = arith.constant 0 : i32
    %c0_i32_1 = arith.constant 0 : i32
    return %c0_i32, %c0_i32_0 : i32, i32
  }
  func.func @transform_14(%arg0: i32) -> (i32, i32) {
    %c0_i32 = arith.constant 0 : i32
    %c0_i32_0 = arith.constant 0 : i32
    %c0_i32_1 = arith.constant 0 : i32
    return %c0_i32, %c0_i32_0 : i32, i32
  }
  func.func @transform_15(%arg0: i32) -> (i32, i32, i32) {
    %c0_i32 = arith.constant 0 : i32
    %c0_i32_0 = arith.constant 0 : i32
    %c0_i32_1 = arith.constant 0 : i32
    %c0_i32_2 = arith.constant 0 : i32
    return %c0_i32, %c0_i32_0, %c0_i32_1 : i32, i32, i32
  }
  func.func @transform_16(%arg0: i32) -> (i32, i32, i32) {
    %c0_i32 = arith.constant 0 : i32
    %c0_i32_0 = arith.constant 0 : i32
    %c0_i32_1 = arith.constant 0 : i32
    %c0_i32_2 = arith.constant 0 : i32
    return %c0_i32, %c0_i32_0, %c0_i32_1 : i32, i32, i32
  }
  func.func @transform_17(%arg0: i32) -> (i32, i32) {
    %c0_i32 = arith.constant 0 : i32
    %c0_i32_0 = arith.constant 0 : i32
    %c0_i32_1 = arith.constant 0 : i32
    return %c0_i32, %c0_i32_0 : i32, i32
  }
  func.func @transform_18(%arg0: i32) -> (i32, i32) {
    %c0_i32 = arith.constant 0 : i32
    %c0_i32_0 = arith.constant 0 : i32
    %c0_i32_1 = arith.constant 0 : i32
    return %c0_i32, %c0_i32_0 : i32, i32
  }
  func.func @transform_19(%arg0: i32) -> (i32, i32) {
    %c0_i32 = arith.constant 0 : i32
    %c0_i32_0 = arith.constant 0 : i32
    %c0_i32_1 = arith.constant 0 : i32
    return %c0_i32, %c0_i32_0 : i32, i32
  }
  func.func @transform_20(%arg0: i32) -> (i32, i32) {
    %c0_i32 = arith.constant 0 : i32
    %c0_i32_0 = arith.constant 0 : i32
    %c0_i32_1 = arith.constant 0 : i32
    return %c0_i32, %c0_i32_0 : i32, i32
  }
  func.func @transform_21(%arg0: i32) -> (i32, i32) {
    %c0_i32 = arith.constant 0 : i32
    %c0_i32_0 = arith.constant 0 : i32
    %c0_i32_1 = arith.constant 0 : i32
    return %c0_i32, %c0_i32_0 : i32, i32
  }
  func.func @transform_22(%arg0: i32) -> (i32, i32, i32) {
    %c0_i32 = arith.constant 0 : i32
    %c0_i32_0 = arith.constant 0 : i32
    %c0_i32_1 = arith.constant 0 : i32
    return %arg0, %c0_i32, %c0_i32_0 : i32, i32, i32
  }
  func.func @transform_23(%arg0: i32) -> (i32, i32, i32) {
    %c0_i32 = arith.constant 0 : i32
    %c0_i32_0 = arith.constant 0 : i32
    %c0_i32_1 = arith.constant 0 : i32
    return %arg0, %c0_i32, %c0_i32_0 : i32, i32, i32
  }
  func.func @transform_24(%arg0: i32) -> (i32, i32, i32) {
    %c0_i32 = arith.constant 0 : i32
    %c0_i32_0 = arith.constant 0 : i32
    %c0_i32_1 = arith.constant 0 : i32
    return %arg0, %c0_i32, %c0_i32_0 : i32, i32, i32
  }
  func.func @transform_25(%arg0: i32) -> (i32, i32, i32) {
    %c0_i32 = arith.constant 0 : i32
    %c0_i32_0 = arith.constant 0 : i32
    %c0_i32_1 = arith.constant 0 : i32
    return %arg0, %c0_i32, %c0_i32_0 : i32, i32, i32
  }
}

</mosaic_0001>

<llo_original>
// kernel: _lambda_.1
$region0: #{_lambda_.1}
  #allocation0 [shape = 'u32[]', space=smem, size = 0x4, offset = 0x4, fixed_abs, tag = 'smem constant byte address 0x4 - core index']
  #allocation1 [shape = 'u32[144,128]{1,0:T(1,128)}', space=vmem, size = 0x12000, scoped, tag = 'internal scratch']
  %s0 = inlined_call_operand.vmem [shape: bf16[2,256,8], index: 0, kind: input, shape index: {}]
  %s1 = inlined_call_operand.vmem [shape: bf16[3,8,8], index: 1, kind: input, shape index: {}]
  %s2 = inlined_call_operand.vmem [shape: f32[3,1,8], index: 2, kind: input, shape index: {}]
  %s3 = inlined_call_operand.vmem [shape: bf16[8,8], index: 3, kind: input, shape index: {}]
  %s4 = inlined_call_operand.vmem [shape: f32[1,8], index: 4, kind: input, shape index: {}]
  %s5 = inlined_call_operand.vmem [shape: bf16[256,256], index: 5, kind: input, shape index: {}]
  %s6 = inlined_call_operand.vmem [shape: bf16[32,16], index: 6, kind: input, shape index: {}]
  %s7 = inlined_call_operand.vmem [shape: f32[1,16], index: 7, kind: input, shape index: {}]
  %s8 = inlined_call_operand.vmem [shape: bf16[3,16,16], index: 8, kind: input, shape index: {}]
  %s9 = inlined_call_operand.vmem [shape: f32[3,1,16], index: 9, kind: input, shape index: {}]
  %s10 = inlined_call_operand.vmem [shape: bf16[16,16], index: 10, kind: input, shape index: {}]
  %s11 = inlined_call_operand.vmem [shape: f32[1,16], index: 11, kind: input, shape index: {}]
  %s12 = inlined_call_operand.vmem [shape: bf16[64,64], index: 12, kind: input, shape index: {}]
  %s13 = inlined_call_operand.vmem [shape: bf16[64,32], index: 13, kind: input, shape index: {}]
  %s14 = inlined_call_operand.vmem [shape: f32[1,32], index: 14, kind: input, shape index: {}]
  %s15 = inlined_call_operand.vmem [shape: bf16[3,32,32], index: 15, kind: input, shape index: {}]
  %s16 = inlined_call_operand.vmem [shape: f32[3,1,32], index: 16, kind: input, shape index: {}]
  %s17 = inlined_call_operand.vmem [shape: bf16[32,32], index: 17, kind: input, shape index: {}]
  %s18 = inlined_call_operand.vmem [shape: f32[1,32], index: 18, kind: input, shape index: {}]
  %s19 = inlined_call_operand.vmem [shape: bf16[16,16], index: 19, kind: input, shape index: {}]
  %s20 = inlined_call_operand.vmem [shape: bf16[128,64], index: 20, kind: input, shape index: {}]
  %s21 = inlined_call_operand.vmem [shape: f32[1,64], index: 21, kind: input, shape index: {}]
  %s22 = inlined_call_operand.vmem [shape: f32[2,256,8], index: 22, kind: output, shape index: {0}]
  %s23 = inlined_call_operand.vmem [shape: f32[2,64,16], index: 23, kind: output, shape index: {1}]
  %s24 = inlined_call_operand.hbm [shape: f32[2,16,32], index: 24, kind: output, shape index: {2}]
  %s25 = inlined_call_operand.hbm [shape: f32[2,4,64], index: 25, kind: output, shape index: {3}]
  %26 = xla_tuple %s22, %s23, %s24, %s25
  %s27 = sld [smem:[#allocation0]]
  $region145: #{_lambda_.1} parent=0
    _
  %s29 = ssub.s32 1, %s27
  %s30 = scalar_select 0, %s29, %s27
  $region1: #{_lambda_.1} parent=0
    #allocation2 [shape = 'u8[16384]{0}', space=vmem, size = 0x4000, scoped, tag = 'output window, operand 2']
    #allocation3 [shape = 's32[2]{0}', space=sflag, size = 0x8, scoped, tag = 'scoped memory for _lambda_.1']
    #allocation4 [shape = 'u8[4096]{0}', space=vmem, size = 0x1000, scoped, tag = 'output window, operand 3']
    #allocation5 [shape = 's32[2]{0}', space=sflag, size = 0x8, scoped, tag = 'scoped memory for _lambda_.1']
    %31 = vsyncpa [#allocation3], 0
    %s32 = scalar_lea.sflag [#allocation3], 1
    %33 = vsyncpa %s32, 0
    %34 = vsyncpa [#allocation5], 0
    %s35 = scalar_lea.sflag [#allocation5], 1
    %36 = vsyncpa %s35, 0
    loop: start=0, step=1, limit=4
    $region2: #{_lambda_.1} parent=1 // loop_pre_header
      _
    $region3: #{_lambda_.1} parent=1 // loop_header
      %s38 = sphi 0, %s42
      %p39 = scmp.ge.s32.totalorder %s38, 4
      %s48 = sphi 0, %s50
      %s51 = sphi 0, %s48
      %s52 = sphi 0, %s51
      %s68 = sphi 0, %s52
      %s72 = sphi 0, %s72
      %s74 = sphi 0, %s72
      %s75 = sphi 0, %s74
      %s89 = sphi 0, %s75
      %s93 = sphi 0, %s93
      %s95 = sphi 0, %s93
      %s96 = sphi 0, %s95
      %s110 = sphi 0, %s96
      %s114 = sphi 0, %s114
      %s116 = sphi 0, %s114
      %s117 = sphi 0, %s116
      %s131 = sphi 0, %s117
      %s135 = sphi 0, %s135
      %s137 = sphi 0, %s135
      %s138 = sphi 0, %s137
      %s152 = sphi 0, %s138
      %s156 = sphi 0, %s156
      %s158 = sphi 0, %s156
      %s159 = sphi 0, %s158
      %s173 = sphi 0, %s159
      %s177 = sphi 0, %s177
      %s179 = sphi 0, %s177
      %s180 = sphi 0, %s179
      %s194 = sphi 0, %s180
      %s198 = sphi 0, %s198
      %s200 = sphi 0, %s198
      %s201 = sphi 0, %s200
      %s215 = sphi 0, %s201
      %s219 = sphi 0, %s219
      %s221 = sphi 0, %s219
      %s222 = sphi 0, %s221
      %s236 = sphi 0, %s222
      %s240 = sphi 0, %s240
      %s242 = sphi 0, %s240
      %s243 = sphi 0, %s242
      %s257 = sphi 0, %s243
      %s261 = sphi 0, %s261
      %s263 = sphi 0, %s261
      %s264 = sphi 0, %s263
      %s278 = sphi 0, %s264
      %s282 = sphi 0, %s282
      %s284 = sphi 0, %s282
      %s285 = sphi 0, %s284
      %s299 = sphi 0, %s285
      %s303 = sphi 0, %s303
      %s305 = sphi 0, %s303
      %s306 = sphi 0, %s305
      %s320 = sphi 0, %s306
      %s324 = sphi 0, %s324
      %s326 = sphi 0, %s324
      %s327 = sphi 0, %s326
      %s341 = sphi 0, %s327
      %s345 = sphi 0, %s345
      %s347 = sphi 0, %s345
      %s348 = sphi 0, %s347
      %s362 = sphi 0, %s348
      %s366 = sphi 0, %s366
      %s368 = sphi 0, %s366
      %s369 = sphi 0, %s368
      %s383 = sphi 0, %s369
      %s387 = sphi 0, %s387
      %s389 = sphi 0, %s387
      %s390 = sphi 0, %s389
      %s404 = sphi 0, %s390
      %s408 = sphi 0, %s408
      %s410 = sphi 0, %s408
      %s411 = sphi 0, %s410
      %s425 = sphi 0, %s411
      %s429 = sphi 0, %s429
      %s431 = sphi 0, %s429
      %s432 = sphi 0, %s431
      %s446 = sphi 0, %s432
      %s450 = sphi 0, %s450
      %s452 = sphi 0, %s450
      %s453 = sphi 0, %s452
      %s467 = sphi 0, %s453
      %s471 = sphi 0, %s471
      %s473 = sphi 0, %s471
      %s474 = sphi 0, %s473
      %s488 = sphi 0, %s474
      %s492 = sphi 0, %s492
      %s494 = sphi 0, %s492
      %s495 = sphi 0, %s494
      %s509 = sphi 0, %s495
      %s515 = sphi 0, %s517
      %s518 = sphi 0, %s515
      %s519 = sphi 0, %s518
      %s535 = sphi 0, %s519
      %s541 = sphi 0, %s543
      %s544 = sphi 0, %s541
      %s545 = sphi 0, %s544
      %s561 = sphi 0, %s545
      %s567 = sphi 0, %s569
      %s570 = sphi 0, %s567
      %s571 = sphi 0, %s570
      %s587 = sphi 0, %s571
      %s593 = sphi 0, %s595
      %s596 = sphi 0, %s593
      %s597 = sphi 0, %s596
      %s613 = sphi 0, %s597
    $region4: #{_lambda_.1} parent=1 // loop_header_branch
      %41 = sbr.rel (%p39) target = $region8
    $region5: #{_lambda_.1} parent=1 // loop_body
      %s43 = ssub.s32 %s38, 1
      %s44 = ssub.s32 %s38, 2
      %s45 = sadd.s32 %s38, 1
      %s46 = ssub.s32 %s38, %s45
      %p47 = scmp.eq.s32.totalorder %s46, 0
      %s49 = sadd.s32 %s48, 1
      %s50 = scalar_select %p47, %s48, %s49
      %p53 = pneg %p47
      %p54 = scmp.eq.s32.totalorder %s38, 1
      %p55 = por %p53, %p54
      %p56 = scmp.ne.s32.totalorder %s48, %s51
      %p57 = scmp.eq.s32.totalorder %s38, 0
      %p58 = por %p56, %p57
      %p59 = scmp.ne.s32.totalorder %s48, %s51
      %p60 = scmp.eq.s32.totalorder %s43, 1
      %p61 = por %p59, %p60
      %p62 = scmp.ne.s32.totalorder %s51, %s52
      %p63 = scmp.eq.s32.totalorder %s43, 0
      %p64 = por %p62, %p63
      %p65 = scmp.ne.s32.totalorder %s51, %s52
      %p66 = scmp.eq.s32.totalorder %s44, 1
      %p67 = por %p65, %p66
      %p69 = scmp.ne.s32.totalorder %s52, %s68
      %p70 = scmp.eq.s32.totalorder %s44, 0
      %p71 = por %p69, %p70
      %s73 = sadd.s32 %s72, 1
      %p76 = scmp.eq.s32.totalorder %s38, 1
      %p77 = scmp.ne.s32.totalorder %s72, %s74
      %p78 = scmp.eq.s32.totalorder %s38, 0
      %p79 = por %p77, %p78
      %p80 = scmp.ne.s32.totalorder %s72, %s74
      %p81 = scmp.eq.s32.totalorder %s43, 1
      %p82 = por %p80, %p81
      %p83 = scmp.ne.s32.totalorder %s74, %s75
      %p84 = scmp.eq.s32.totalorder %s43, 0
      %p85 = por %p83, %p84
      %p86 = scmp.ne.s32.totalorder %s74, %s75
      %p87 = scmp.eq.s32.totalorder %s44, 1
      %p88 = por %p86, %p87
      %p90 = scmp.ne.s32.totalorder %s75, %s89
      %p91 = scmp.eq.s32.totalorder %s44, 0
      %p92 = por %p90, %p91
      %s94 = sadd.s32 %s93, 1
      %p97 = scmp.eq.s32.totalorder %s38, 1
      %p98 = scmp.ne.s32.totalorder %s93, %s95
      %p99 = scmp.eq.s32.totalorder %s38, 0
      %p100 = por %p98, %p99
      %p101 = scmp.ne.s32.totalorder %s93, %s95
      %p102 = scmp.eq.s32.totalorder %s43, 1
      %p103 = por %p101, %p102
      %p104 = scmp.ne.s32.totalorder %s95, %s96
      %p105 = scmp.eq.s32.totalorder %s43, 0
      %p106 = por %p104, %p105
      %p107 = scmp.ne.s32.totalorder %s95, %s96
      %p108 = scmp.eq.s32.totalorder %s44, 1
      %p109 = por %p107, %p108
      %p111 = scmp.ne.s32.totalorder %s96, %s110
      %p112 = scmp.eq.s32.totalorder %s44, 0
      %p113 = por %p111, %p112
      %s115 = sadd.s32 %s114, 1
      %p118 = scmp.eq.s32.totalorder %s38, 1
      %p119 = scmp.ne.s32.totalorder %s114, %s116
      %p120 = scmp.eq.s32.totalorder %s38, 0
      %p121 = por %p119, %p120
      %p122 = scmp.ne.s32.totalorder %s114, %s116
      %p123 = scmp.eq.s32.totalorder %s43, 1
      %p124 = por %p122, %p123
      %p125 = scmp.ne.s32.totalorder %s116, %s117
      %p126 = scmp.eq.s32.totalorder %s43, 0
      %p127 = por %p125, %p126
      %p128 = scmp.ne.s32.totalorder %s116, %s117
      %p129 = scmp.eq.s32.totalorder %s44, 1
      %p130 = por %p128, %p129
      %p132 = scmp.ne.s32.totalorder %s117, %s131
      %p133 = scmp.eq.s32.totalorder %s44, 0
      %p134 = por %p132, %p133
      %s136 = sadd.s32 %s135, 1
      %p139 = scmp.eq.s32.totalorder %s38, 1
      %p140 = scmp.ne.s32.totalorder %s135, %s137
      %p141 = scmp.eq.s32.totalorder %s38, 0
      %p142 = por %p140, %p141
      %p143 = scmp.ne.s32.totalorder %s135, %s137
      %p144 = scmp.eq.s32.totalorder %s43, 1
      %p145 = por %p143, %p144
      %p146 = scmp.ne.s32.totalorder %s137, %s138
      %p147 = scmp.eq.s32.totalorder %s43, 0
      %p148 = por %p146, %p147
      %p149 = scmp.ne.s32.totalorder %s137, %s138
      %p150 = scmp.eq.s32.totalorder %s44, 1
      %p151 = por %p149, %p150
      %p153 = scmp.ne.s32.totalorder %s138, %s152
      %p154 = scmp.eq.s32.totalorder %s44, 0
      %p155 = por %p153, %p154
      %s157 = sadd.s32 %s156, 1
      %p160 = scmp.eq.s32.totalorder %s38, 1
      %p161 = scmp.ne.s32.totalorder %s156, %s158
      %p162 = scmp.eq.s32.totalorder %s38, 0
      %p163 = por %p161, %p162
      %p164 = scmp.ne.s32.totalorder %s156, %s158
      %p165 = scmp.eq.s32.totalorder %s43, 1
      %p166 = por %p164, %p165
      %p167 = scmp.ne.s32.totalorder %s158, %s159
      %p168 = scmp.eq.s32.totalorder %s43, 0
      %p169 = por %p167, %p168
      %p170 = scmp.ne.s32.totalorder %s158, %s159
      %p171 = scmp.eq.s32.totalorder %s44, 1
      %p172 = por %p170, %p171
      %p174 = scmp.ne.s32.totalorder %s159, %s173
      %p175 = scmp.eq.s32.totalorder %s44, 0
      %p176 = por %p174, %p175
      %s178 = sadd.s32 %s177, 1
      %p181 = scmp.eq.s32.totalorder %s38, 1
      %p182 = scmp.ne.s32.totalorder %s177, %s179
      %p183 = scmp.eq.s32.totalorder %s38, 0
      %p184 = por %p182, %p183
      %p185 = scmp.ne.s32.totalorder %s177, %s179
      %p186 = scmp.eq.s32.totalorder %s43, 1
      %p187 = por %p185, %p186
      %p188 = scmp.ne.s32.totalorder %s179, %s180
      %p189 = scmp.eq.s32.totalorder %s43, 0
      %p190 = por %p188, %p189
      %p191 = scmp.ne.s32.totalorder %s179, %s180
      %p192 = scmp.eq.s32.totalorder %s44, 1
      %p193 = por %p191, %p192
      %p195 = scmp.ne.s32.totalorder %s180, %s194
      %p196 = scmp.eq.s32.totalorder %s44, 0
      %p197 = por %p195, %p196
      %s199 = sadd.s32 %s198, 1
      %p202 = scmp.eq.s32.totalorder %s38, 1
      %p203 = scmp.ne.s32.totalorder %s198, %s200
      %p204 = scmp.eq.s32.totalorder %s38, 0
      %p205 = por %p203, %p204
      %p206 = scmp.ne.s32.totalorder %s198, %s200
      %p207 = scmp.eq.s32.totalorder %s43, 1
      %p208 = por %p206, %p207
      %p209 = scmp.ne.s32.totalorder %s200, %s201
      %p210 = scmp.eq.s32.totalorder %s43, 0
      %p211 = por %p209, %p210
      %p212 = scmp.ne.s32.totalorder %s200, %s201
      %p213 = scmp.eq.s32.totalorder %s44, 1
      %p214 = por %p212, %p213
      %p216 = scmp.ne.s32.totalorder %s201, %s215
      %p217 = scmp.eq.s32.totalorder %s44, 0
      %p218 = por %p216, %p217
      %s220 = sadd.s32 %s219, 1
      %p223 = scmp.eq.s32.totalorder %s38, 1
      %p224 = scmp.ne.s32.totalorder %s219, %s221
      %p225 = scmp.eq.s32.totalorder %s38, 0
      %p226 = por %p224, %p225
      %p227 = scmp.ne.s32.totalorder %s219, %s221
      %p228 = scmp.eq.s32.totalorder %s43, 1
      %p229 = por %p227, %p228
      %p230 = scmp.ne.s32.totalorder %s221, %s222
      %p231 = scmp.eq.s32.totalorder %s43, 0
      %p232 = por %p230, %p231
      %p233 = scmp.ne.s32.totalorder %s221, %s222
      %p234 = scmp.eq.s32.totalorder %s44, 1
      %p235 = por %p233, %p234
      %p237 = scmp.ne.s32.totalorder %s222, %s236
      %p238 = scmp.eq.s32.totalorder %s44, 0
      %p239 = por %p237, %p238
      %s241 = sadd.s32 %s240, 1
      %p244 = scmp.eq.s32.totalorder %s38, 1
      %p245 = scmp.ne.s32.totalorder %s240, %s242
      %p246 = scmp.eq.s32.totalorder %s38, 0
      %p247 = por %p245, %p246
      %p248 = scmp.ne.s32.totalorder %s240, %s242
      %p249 = scmp.eq.s32.totalorder %s43, 1
      %p250 = por %p248, %p249
      %p251 = scmp.ne.s32.totalorder %s242, %s243
      %p252 = scmp.eq.s32.totalorder %s43, 0
      %p253 = por %p251, %p252
      %p254 = scmp.ne.s32.totalorder %s242, %s243
      %p255 = scmp.eq.s32.totalorder %s44, 1
      %p256 = por %p254, %p255
      %p258 = scmp.ne.s32.totalorder %s243, %s257
      %p259 = scmp.eq.s32.totalorder %s44, 0
      %p260 = por %p258, %p259
      %s262 = sadd.s32 %s261, 1
      %p265 = scmp.eq.s32.totalorder %s38, 1
      %p266 = scmp.ne.s32.totalorder %s261, %s263
      %p267 = scmp.eq.s32.totalorder %s38, 0
      %p268 = por %p266, %p267
      %p269 = scmp.ne.s32.totalorder %s261, %s263
      %p270 = scmp.eq.s32.totalorder %s43, 1
      %p271 = por %p269, %p270
      %p272 = scmp.ne.s32.totalorder %s263, %s264
      %p273 = scmp.eq.s32.totalorder %s43, 0
      %p274 = por %p272, %p273
      %p275 = scmp.ne.s32.totalorder %s263, %s264
      %p276 = scmp.eq.s32.totalorder %s44, 1
      %p277 = por %p275, %p276
      %p279 = scmp.ne.s32.totalorder %s264, %s278
      %p280 = scmp.eq.s32.totalorder %s44, 0
      %p281 = por %p279, %p280
      %s283 = sadd.s32 %s282, 1
      %p286 = scmp.eq.s32.totalorder %s38, 1
      %p287 = scmp.ne.s32.totalorder %s282, %s284
      %p288 = scmp.eq.s32.totalorder %s38, 0
      %p289 = por %p287, %p288
      %p290 = scmp.ne.s32.totalorder %s282, %s284
      %p291 = scmp.eq.s32.totalorder %s43, 1
      %p292 = por %p290, %p291
      %p293 = scmp.ne.s32.totalorder %s284, %s285
      %p294 = scmp.eq.s32.totalorder %s43, 0
      %p295 = por %p293, %p294
      %p296 = scmp.ne.s32.totalorder %s284, %s285
      %p297 = scmp.eq.s32.totalorder %s44, 1
      %p298 = por %p296, %p297
      %p300 = scmp.ne.s32.totalorder %s285, %s299
      %p301 = scmp.eq.s32.totalorder %s44, 0
      %p302 = por %p300, %p301
      %s304 = sadd.s32 %s303, 1
      %p307 = scmp.eq.s32.totalorder %s38, 1
      %p308 = scmp.ne.s32.totalorder %s303, %s305
      %p309 = scmp.eq.s32.totalorder %s38, 0
      %p310 = por %p308, %p309
      %p311 = scmp.ne.s32.totalorder %s303, %s305
      %p312 = scmp.eq.s32.totalorder %s43, 1
      %p313 = por %p311, %p312
      %p314 = scmp.ne.s32.totalorder %s305, %s306
      %p315 = scmp.eq.s32.totalorder %s43, 0
      %p316 = por %p314, %p315
      %p317 = scmp.ne.s32.totalorder %s305, %s306
      %p318 = scmp.eq.s32.totalorder %s44, 1
      %p319 = por %p317, %p318
      %p321 = scmp.ne.s32.totalorder %s306, %s320
      %p322 = scmp.eq.s32.totalorder %s44, 0
      %p323 = por %p321, %p322
      %s325 = sadd.s32 %s324, 1
      %p328 = scmp.eq.s32.totalorder %s38, 1
      %p329 = scmp.ne.s32.totalorder %s324, %s326
      %p330 = scmp.eq.s32.totalorder %s38, 0
      %p331 = por %p329, %p330
      %p332 = scmp.ne.s32.totalorder %s324, %s326
      %p333 = scmp.eq.s32.totalorder %s43, 1
      %p334 = por %p332, %p333
      %p335 = scmp.ne.s32.totalorder %s326, %s327
      %p336 = scmp.eq.s32.totalorder %s43, 0
      %p337 = por %p335, %p336
      %p338 = scmp.ne.s32.totalorder %s326, %s327
      %p339 = scmp.eq.s32.totalorder %s44, 1
      %p340 = por %p338, %p339
      %p342 = scmp.ne.s32.totalorder %s327, %s341
      %p343 = scmp.eq.s32.totalorder %s44, 0
      %p344 = por %p342, %p343
      %s346 = sadd.s32 %s345, 1
      %p349 = scmp.eq.s32.totalorder %s38, 1
      %p350 = scmp.ne.s32.totalorder %s345, %s347
      %p351 = scmp.eq.s32.totalorder %s38, 0
      %p352 = por %p350, %p351
      %p353 = scmp.ne.s32.totalorder %s345, %s347
      %p354 = scmp.eq.s32.totalorder %s43, 1
      %p355 = por %p353, %p354
      %p356 = scmp.ne.s32.totalorder %s347, %s348
      %p357 = scmp.eq.s32.totalorder %s43, 0
      %p358 = por %p356, %p357
      %p359 = scmp.ne.s32.totalorder %s347, %s348
      %p360 = scmp.eq.s32.totalorder %s44, 1
      %p361 = por %p359, %p360
      %p363 = scmp.ne.s32.totalorder %s348, %s362
      %p364 = scmp.eq.s32.totalorder %s44, 0
      %p365 = por %p363, %p364
      %s367 = sadd.s32 %s366, 1
      %p370 = scmp.eq.s32.totalorder %s38, 1
      %p371 = scmp.ne.s32.totalorder %s366, %s368
      %p372 = scmp.eq.s32.totalorder %s38, 0
      %p373 = por %p371, %p372
      %p374 = scmp.ne.s32.totalorder %s366, %s368
      %p375 = scmp.eq.s32.totalorder %s43, 1
      %p376 = por %p374, %p375
      %p377 = scmp.ne.s32.totalorder %s368, %s369
      %p378 = scmp.eq.s32.totalorder %s43, 0
      %p379 = por %p377, %p378
      %p380 = scmp.ne.s32.totalorder %s368, %s369
      %p381 = scmp.eq.s32.totalorder %s44, 1
      %p382 = por %p380, %p381
      %p384 = scmp.ne.s32.totalorder %s369, %s383
      %p385 = scmp.eq.s32.totalorder %s44, 0
      %p386 = por %p384, %p385
      %s388 = sadd.s32 %s387, 1
      %p391 = scmp.eq.s32.totalorder %s38, 1
      %p392 = scmp.ne.s32.totalorder %s387, %s389
      %p393 = scmp.eq.s32.totalorder %s38, 0
      %p394 = por %p392, %p393
      %p395 = scmp.ne.s32.totalorder %s387, %s389
      %p396 = scmp.eq.s32.totalorder %s43, 1
      %p397 = por %p395, %p396
      %p398 = scmp.ne.s32.totalorder %s389, %s390
      %p399 = scmp.eq.s32.totalorder %s43, 0
      %p400 = por %p398, %p399
      %p401 = scmp.ne.s32.totalorder %s389, %s390
      %p402 = scmp.eq.s32.totalorder %s44, 1
      %p403 = por %p401, %p402
      %p405 = scmp.ne.s32.totalorder %s390, %s404
      %p406 = scmp.eq.s32.totalorder %s44, 0
      %p407 = por %p405, %p406
      %s409 = sadd.s32 %s408, 1
      %p412 = scmp.eq.s32.totalorder %s38, 1
      %p413 = scmp.ne.s32.totalorder %s408, %s410
      %p414 = scmp.eq.s32.totalorder %s38, 0
      %p415 = por %p413, %p414
      %p416 = scmp.ne.s32.totalorder %s408, %s410
      %p417 = scmp.eq.s32.totalorder %s43, 1
      %p418 = por %p416, %p417
      %p419 = scmp.ne.s32.totalorder %s410, %s411
      %p420 = scmp.eq.s32.totalorder %s43, 0
      %p421 = por %p419, %p420
      %p422 = scmp.ne.s32.totalorder %s410, %s411
      %p423 = scmp.eq.s32.totalorder %s44, 1
      %p424 = por %p422, %p423
      %p426 = scmp.ne.s32.totalorder %s411, %s425
      %p427 = scmp.eq.s32.totalorder %s44, 0
      %p428 = por %p426, %p427
      %s430 = sadd.s32 %s429, 1
      %p433 = scmp.eq.s32.totalorder %s38, 1
      %p434 = scmp.ne.s32.totalorder %s429, %s431
      %p435 = scmp.eq.s32.totalorder %s38, 0
      %p436 = por %p434, %p435
      %p437 = scmp.ne.s32.totalorder %s429, %s431
      %p438 = scmp.eq.s32.totalorder %s43, 1
      %p439 = por %p437, %p438
      %p440 = scmp.ne.s32.totalorder %s431, %s432
      %p441 = scmp.eq.s32.totalorder %s43, 0
      %p442 = por %p440, %p441
      %p443 = scmp.ne.s32.totalorder %s431, %s432
      %p444 = scmp.eq.s32.totalorder %s44, 1
      %p445 = por %p443, %p444
      %p447 = scmp.ne.s32.totalorder %s432, %s446
      %p448 = scmp.eq.s32.totalorder %s44, 0
      %p449 = por %p447, %p448
      %s451 = sadd.s32 %s450, 1
      %p454 = scmp.eq.s32.totalorder %s38, 1
      %p455 = scmp.ne.s32.totalorder %s450, %s452
      %p456 = scmp.eq.s32.totalorder %s38, 0
      %p457 = por %p455, %p456
      %p458 = scmp.ne.s32.totalorder %s450, %s452
      %p459 = scmp.eq.s32.totalorder %s43, 1
      %p460 = por %p458, %p459
      %p461 = scmp.ne.s32.totalorder %s452, %s453
      %p462 = scmp.eq.s32.totalorder %s43, 0
      %p463 = por %p461, %p462
      %p464 = scmp.ne.s32.totalorder %s452, %s453
      %p465 = scmp.eq.s32.totalorder %s44, 1
      %p466 = por %p464, %p465
      %p468 = scmp.ne.s32.totalorder %s453, %s467
      %p469 = scmp.eq.s32.totalorder %s44, 0
      %p470 = por %p468, %p469
      %s472 = sadd.s32 %s471, 1
      %p475 = scmp.eq.s32.totalorder %s38, 1
      %p476 = scmp.ne.s32.totalorder %s471, %s473
      %p477 = scmp.eq.s32.totalorder %s38, 0
      %p478 = por %p476, %p477
      %p479 = scmp.ne.s32.totalorder %s471, %s473
      %p480 = scmp.eq.s32.totalorder %s43, 1
      %p481 = por %p479, %p480
      %p482 = scmp.ne.s32.totalorder %s473, %s474
      %p483 = scmp.eq.s32.totalorder %s43, 0
      %p484 = por %p482, %p483
      %p485 = scmp.ne.s32.totalorder %s473, %s474
      %p486 = scmp.eq.s32.totalorder %s44, 1
      %p487 = por %p485, %p486
      %p489 = scmp.ne.s32.totalorder %s474, %s488
      %p490 = scmp.eq.s32.totalorder %s44, 0
      %p491 = por %p489, %p490
      %s493 = sadd.s32 %s492, 1
      %p496 = scmp.eq.s32.totalorder %s38, 1
      %p497 = scmp.ne.s32.totalorder %s492, %s494
      %p498 = scmp.eq.s32.totalorder %s38, 0
      %p499 = por %p497, %p498
      %p500 = scmp.ne.s32.totalorder %s492, %s494
      %p501 = scmp.eq.s32.totalorder %s43, 1
      %p502 = por %p500, %p501
      %p503 = scmp.ne.s32.totalorder %s494, %s495
      %p504 = scmp.eq.s32.totalorder %s43, 0
      %p505 = por %p503, %p504
      %p506 = scmp.ne.s32.totalorder %s494, %s495
      %p507 = scmp.eq.s32.totalorder %s44, 1
      %p508 = por %p506, %p507
      %p510 = scmp.ne.s32.totalorder %s495, %s509
      %p511 = scmp.eq.s32.totalorder %s44, 0
      %p512 = por %p510, %p511
      %s513 = ssub.s32 %s38, %s45
      %p514 = scmp.eq.s32.totalorder %s513, 0
      %s516 = sadd.s32 %s515, 1
      %s517 = scalar_select %p514, %s515, %s516
      %p520 = pneg %p514
      %p521 = scmp.eq.s32.totalorder %s38, 1
      %p522 = por %p520, %p521
      %p523 = scmp.ne.s32.totalorder %s515, %s518
      %p524 = scmp.eq.s32.totalorder %s38, 0
      %p525 = por %p523, %p524
      %p526 = scmp.ne.s32.totalorder %s515, %s518
      %p527 = scmp.eq.s32.totalorder %s43, 1
      %p528 = por %p526, %p527
      %p529 = scmp.ne.s32.totalorder %s518, %s519
      %p530 = scmp.eq.s32.totalorder %s43, 0
      %p531 = por %p529, %p530
      %p532 = scmp.ne.s32.totalorder %s518, %s519
      %p533 = scmp.eq.s32.totalorder %s44, 1
      %p534 = por %p532, %p533
      %p536 = scmp.ne.s32.totalorder %s519, %s535
      %p537 = scmp.eq.s32.totalorder %s44, 0
      %p538 = por %p536, %p537
      %s539 = ssub.s32 %s38, %s45
      %p540 = scmp.eq.s32.totalorder %s539, 0
      %s542 = sadd.s32 %s541, 1
      %s543 = scalar_select %p540, %s541, %s542
      %p546 = pneg %p540
      %p547 = scmp.eq.s32.totalorder %s38, 1
      %p548 = por %p546, %p547
      %p549 = scmp.ne.s32.totalorder %s541, %s544
      %p550 = scmp.eq.s32.totalorder %s38, 0
      %p551 = por %p549, %p550
      %p552 = scmp.ne.s32.totalorder %s541, %s544
      %p553 = scmp.eq.s32.totalorder %s43, 1
      %p554 = por %p552, %p553
      %p555 = scmp.ne.s32.totalorder %s544, %s545
      %p556 = scmp.eq.s32.totalorder %s43, 0
      %p557 = por %p555, %p556
      %p558 = scmp.ne.s32.totalorder %s544, %s545
      %p559 = scmp.eq.s32.totalorder %s44, 1
      %p560 = por %p558, %p559
      %p562 = scmp.ne.s32.totalorder %s545, %s561
      %p563 = scmp.eq.s32.totalorder %s44, 0
      %p564 = por %p562, %p563
      %s565 = ssub.s32 %s38, %s45
      %p566 = scmp.eq.s32.totalorder %s565, 0
      %s568 = sadd.s32 %s567, 1
      %s569 = scalar_select %p566, %s567, %s568
      %p572 = pneg %p566
      %p573 = scmp.eq.s32.totalorder %s38, 1
      %p574 = por %p572, %p573
      %p575 = scmp.ne.s32.totalorder %s567, %s570
      %p576 = scmp.eq.s32.totalorder %s38, 0
      %p577 = por %p575, %p576
      %p578 = scmp.ne.s32.totalorder %s567, %s570
      %p579 = scmp.eq.s32.totalorder %s43, 1
      %p580 = por %p578, %p579
      %p581 = scmp.ne.s32.totalorder %s570, %s571
      %p582 = scmp.eq.s32.totalorder %s43, 0
      %p583 = por %p581, %p582
      %p584 = scmp.ne.s32.totalorder %s570, %s571
      %p585 = scmp.eq.s32.totalorder %s44, 1
      %p586 = por %p584, %p585
      %p588 = scmp.ne.s32.totalorder %s571, %s587
      %p589 = scmp.eq.s32.totalorder %s44, 0
      %p590 = por %p588, %p589
      %s591 = ssub.s32 %s38, %s45
      %p592 = scmp.eq.s32.totalorder %s591, 0
      %s594 = sadd.s32 %s593, 1
      %s595 = scalar_select %p592, %s593, %s594
      %p598 = pneg %p592
      %p599 = scmp.eq.s32.totalorder %s38, 1
      %p600 = por %p598, %p599
      %p601 = scmp.ne.s32.totalorder %s593, %s596
      %p602 = scmp.eq.s32.totalorder %s38, 0
      %p603 = por %p601, %p602
      %p604 = scmp.ne.s32.totalorder %s593, %s596
      %p605 = scmp.eq.s32.totalorder %s43, 1
      %p606 = por %p604, %p605
      %p607 = scmp.ne.s32.totalorder %s596, %s597
      %p608 = scmp.eq.s32.totalorder %s43, 0
      %p609 = por %p607, %p608
      %p610 = scmp.ne.s32.totalorder %s596, %s597
      %p611 = scmp.eq.s32.totalorder %s44, 1
      %p612 = por %p610, %p611
      %p614 = scmp.ne.s32.totalorder %s597, %s613
      %p615 = scmp.eq.s32.totalorder %s44, 0
      %p616 = por %p614, %p615
      %p617 = scmp.le.s32.totalorder 1, %s38
      %p618 = scmp.lt.s32.totalorder %s38, 3
      %p619 = pnand %p617, %p618
      %p620 = pneg %p619
      // Predicated region
      $region9: #{_lambda_.1} parent=5 // pred_check
        _
      $region10: #{_lambda_.1} parent=5 // pred_check_branch
        %622 = sbr.rel (%p619) target = $region12
      $region11: #{_lambda_.1} parent=5 // pred_region
        %s623 = ssub.s32 %s38, 1
        // Predicated region
        $region13: #{_lambda_.1} parent=11 // pred_check
          %p624 = pneg %p85
        $region14: #{_lambda_.1} parent=11 // pred_check_branch
          %626 = sbr.rel (%p624) target = $region16
        $region15: #{_lambda_.1} parent=11 // pred_region
          _
        $region16: #{_lambda_.1} parent=11 // pred_fallthru
          _
        // Predicated region
        $region17: #{_lambda_.1} parent=11 // pred_check
          %p627 = pneg %p106
        $region18: #{_lambda_.1} parent=11 // pred_check_branch
          %629 = sbr.rel (%p627) target = $region20
        $region19: #{_lambda_.1} parent=11 // pred_region
          _
        $region20: #{_lambda_.1} parent=11 // pred_fallthru
          _
        // Predicated region
        $region21: #{_lambda_.1} parent=11 // pred_check
          %p630 = pneg %p127
        $region22: #{_lambda_.1} parent=11 // pred_check_branch
          %632 = sbr.rel (%p630) target = $region24
        $region23: #{_lambda_.1} parent=11 // pred_region
          _
        $region24: #{_lambda_.1} parent=11 // pred_fallthru
          _
        // Predicated region
        $region25: #{_lambda_.1} parent=11 // pred_check
          %p633 = pneg %p148
        $region26: #{_lambda_.1} parent=11 // pred_check_branch
          %635 = sbr.rel (%p633) target = $region28
        $region27: #{_lambda_.1} parent=11 // pred_region
          _
        $region28: #{_lambda_.1} parent=11 // pred_fallthru
          _
        // Predicated region
        $region29: #{_lambda_.1} parent=11 // pred_check
          %p636 = pneg %p169
        $region30: #{_lambda_.1} parent=11 // pred_check_branch
          %638 = sbr.rel (%p636) target = $region32
        $region31: #{_lambda_.1} parent=11 // pred_region
          _
        $region32: #{_lambda_.1} parent=11 // pred_fallthru
          _
        // Predicated region
        $region33: #{_lambda_.1} parent=11 // pred_check
          %p639 = pneg %p190
        $region34: #{_lambda_.1} parent=11 // pred_check_branch
          %641 = sbr.rel (%p639) target = $region36
        $region35: #{_lambda_.1} parent=11 // pred_region
          _
        $region36: #{_lambda_.1} parent=11 // pred_fallthru
          _
        // Predicated region
        $region37: #{_lambda_.1} parent=11 // pred_check
          %p642 = pneg %p211
        $region38: #{_lambda_.1} parent=11 // pred_check_branch
          %644 = sbr.rel (%p642) target = $region40
        $region39: #{_lambda_.1} parent=11 // pred_region
          _
        $region40: #{_lambda_.1} parent=11 // pred_fallthru
          _
        // Predicated region
        $region41: #{_lambda_.1} parent=11 // pred_check
          %p645 = pneg %p232
        $region42: #{_lambda_.1} parent=11 // pred_check_branch
          %647 = sbr.rel (%p645) target = $region44
        $region43: #{_lambda_.1} parent=11 // pred_region
          _
        $region44: #{_lambda_.1} parent=11 // pred_fallthru
          _
        // Predicated region
        $region45: #{_lambda_.1} parent=11 // pred_check
          %p648 = pneg %p253
        $region46: #{_lambda_.1} parent=11 // pred_check_branch
          %650 = sbr.rel (%p648) target = $region48
        $region47: #{_lambda_.1} parent=11 // pred_region
          _
        $region48: #{_lambda_.1} parent=11 // pred_fallthru
          _
        // Predicated region
        $region49: #{_lambda_.1} parent=11 // pred_check
          %p651 = pneg %p274
        $region50: #{_lambda_.1} parent=11 // pred_check_branch
          %653 = sbr.rel (%p651) target = $region52
        $region51: #{_lambda_.1} parent=11 // pred_region
          _
        $region52: #{_lambda_.1} parent=11 // pred_fallthru
          _
        // Predicated region
        $region53: #{_lambda_.1} parent=11 // pred_check
          %p654 = pneg %p295
        $region54: #{_lambda_.1} parent=11 // pred_check_branch
          %656 = sbr.rel (%p654) target = $region56
        $region55: #{_lambda_.1} parent=11 // pred_region
          _
        $region56: #{_lambda_.1} parent=11 // pred_fallthru
          _
        // Predicated region
        $region57: #{_lambda_.1} parent=11 // pred_check
          %p657 = pneg %p316
        $region58: #{_lambda_.1} parent=11 // pred_check_branch
          %659 = sbr.rel (%p657) target = $region60
        $region59: #{_lambda_.1} parent=11 // pred_region
          _
        $region60: #{_lambda_.1} parent=11 // pred_fallthru
          _
        // Predicated region
        $region61: #{_lambda_.1} parent=11 // pred_check
          %p660 = pneg %p337
        $region62: #{_lambda_.1} parent=11 // pred_check_branch
          %662 = sbr.rel (%p660) target = $region64
        $region63: #{_lambda_.1} parent=11 // pred_region
          _
        $region64: #{_lambda_.1} parent=11 // pred_fallthru
          _
        // Predicated region
        $region65: #{_lambda_.1} parent=11 // pred_check
          %p663 = pneg %p358
        $region66: #{_lambda_.1} parent=11 // pred_check_branch
          %665 = sbr.rel (%p663) target = $region68
        $region67: #{_lambda_.1} parent=11 // pred_region
          _
        $region68: #{_lambda_.1} parent=11 // pred_fallthru
          _
        // Predicated region
        $region69: #{_lambda_.1} parent=11 // pred_check
          %p666 = pneg %p379
        $region70: #{_lambda_.1} parent=11 // pred_check_branch
          %668 = sbr.rel (%p666) target = $region72
        $region71: #{_lambda_.1} parent=11 // pred_region
          _
        $region72: #{_lambda_.1} parent=11 // pred_fallthru
          _
        // Predicated region
        $region73: #{_lambda_.1} parent=11 // pred_check
          %p669 = pneg %p400
        $region74: #{_lambda_.1} parent=11 // pred_check_branch
          %671 = sbr.rel (%p669) target = $region76
        $region75: #{_lambda_.1} parent=11 // pred_region
          _
        $region76: #{_lambda_.1} parent=11 // pred_fallthru
          _
        // Predicated region
        $region77: #{_lambda_.1} parent=11 // pred_check
          %p672 = pneg %p421
        $region78: #{_lambda_.1} parent=11 // pred_check_branch
          %674 = sbr.rel (%p672) target = $region80
        $region79: #{_lambda_.1} parent=11 // pred_region
          _
        $region80: #{_lambda_.1} parent=11 // pred_fallthru
          _
        // Predicated region
        $region81: #{_lambda_.1} parent=11 // pred_check
          %p675 = pneg %p442
        $region82: #{_lambda_.1} parent=11 // pred_check_branch
          %677 = sbr.rel (%p675) target = $region84
        $region83: #{_lambda_.1} parent=11 // pred_region
          _
        $region84: #{_lambda_.1} parent=11 // pred_fallthru
          _
        // Predicated region
        $region85: #{_lambda_.1} parent=11 // pred_check
          %p678 = pneg %p463
        $region86: #{_lambda_.1} parent=11 // pred_check_branch
          %680 = sbr.rel (%p678) target = $region88
        $region87: #{_lambda_.1} parent=11 // pred_region
          _
        $region88: #{_lambda_.1} parent=11 // pred_fallthru
          _
        // Predicated region
        $region89: #{_lambda_.1} parent=11 // pred_check
          %p681 = pneg %p484
        $region90: #{_lambda_.1} parent=11 // pred_check_branch
          %683 = sbr.rel (%p681) target = $region92
        $region91: #{_lambda_.1} parent=11 // pred_region
          _
        $region92: #{_lambda_.1} parent=11 // pred_fallthru
          _
        // Predicated region
        $region93: #{_lambda_.1} parent=11 // pred_check
          %p684 = pneg %p505
        $region94: #{_lambda_.1} parent=11 // pred_check_branch
          %686 = sbr.rel (%p684) target = $region96
        $region95: #{_lambda_.1} parent=11 // pred_region
          _
        $region96: #{_lambda_.1} parent=11 // pred_fallthru
          _
      $region12: #{_lambda_.1} parent=5 // pred_fallthru
        _
      %p687 = scmp.lt.s32.totalorder %s38, 2
      // Predicated region
      $region97: #{_lambda_.1} parent=5 // pred_check
        %p688 = pneg %p687
      $region98: #{_lambda_.1} parent=5 // pred_check_branch
        %690 = sbr.rel (%p688) target = $region100
      $region99: #{_lambda_.1} parent=5 // pred_region
        // Predicated region
        $region101: #{_lambda_.1} parent=99 // pred_check
          %p691 = pneg %p58
        $region102: #{_lambda_.1} parent=99 // pred_check_branch
          %693 = sbr.rel (%p691) target = $region104
        $region103: #{_lambda_.1} parent=99 // pred_region
          %p694 = scmp.lt.s32.totalorder %s38, 1
          %s695 = scalar_select %p694, %s38, 1
          %s696 = smul.addr %s695, 32
          %s697 = smul.addr %s696, 4
          %s698 = scalar_lea.vmem %s0, %s697
        $region104: #{_lambda_.1} parent=99 // pred_fallthru
          _
      $region100: #{_lambda_.1} parent=5 // pred_fallthru
        _
      %p699 = scmp.le.s32.totalorder 1, %s38
      %p700 = scmp.lt.s32.totalorder %s38, 3
      %p701 = pnand %p699, %p700
      %p702 = pneg %p701
      // Predicated region
      $region105: #{_lambda_.1} parent=5 // pred_check
        _
      $region106: #{_lambda_.1} parent=5 // pred_check_branch
        %704 = sbr.rel (%p701) target = $region108
      $region107: #{_lambda_.1} parent=5 // pred_region
        %s705 = ssub.s32 %s38, 1
        %p706 = scmp.lt.s32.totalorder %s43, 1
        %s707 = scalar_select %p706, %s43, 1
        %s708 = smul.addr %s707, 32
        %s709 = smul.addr %s708, 4
        %s710 = scalar_lea.vmem %s0, %s709
        %p711 = pneg %p64
        %p712 = pneg %p61
        %p713 = pneg %p85
        %p714 = pneg %p82
        %p715 = pneg %p106
        %p716 = pneg %p103
        %p717 = pneg %p127
        %p718 = pneg %p124
        %p719 = pneg %p148
        %p720 = pneg %p145
        %p721 = pneg %p169
        %p722 = pneg %p166
        %p723 = pneg %p190
        %p724 = pneg %p187
        %p725 = pneg %p211
        %p726 = pneg %p208
        %p727 = pneg %p232
        %p728 = pneg %p229
        %p729 = pneg %p253
        %p730 = pneg %p250
        %p731 = pneg %p274
        %p732 = pneg %p271
        %p733 = pneg %p295
        %p734 = pneg %p292
        %p735 = pneg %p316
        %p736 = pneg %p313
        %p737 = pneg %p337
        %p738 = pneg %p334
        %p739 = pneg %p358
        %p740 = pneg %p355
        %p741 = pneg %p379
        %p742 = pneg %p376
        %p743 = pneg %p400
        %p744 = pneg %p397
        %p745 = pneg %p421
        %p746 = pneg %p418
        %p747 = pneg %p442
        %p748 = pneg %p439
        %p749 = pneg %p463
        %p750 = pneg %p460
        %p751 = pneg %p484
        %p752 = pneg %p481
        %p753 = pneg %p505
        %p754 = pneg %p502
        %p755 = pneg %p531
        %p756 = pneg %p528
        %p757 = scmp.lt.s32.totalorder %s43, 1
        %s758 = scalar_select %p757, %s43, 1
        %s759 = smul.addr %s758, 32
        %s760 = smul.addr %s759, 8
        %s761 = scalar_lea.vmem %s22, %s760
        %p762 = pneg %p557
        %p763 = pneg %p554
        %p764 = scmp.lt.s32.totalorder %s43, 1
        %s765 = scalar_select %p764, %s43, 1
        %s766 = smul.addr %s765, 8
        %s767 = smul.addr %s766, 8
        %s768 = scalar_lea.vmem %s23, %s767
        %p769 = pneg %p583
        %p770 = pneg %p580
        %s771 = sand.u32 %s570, 1
        %s772 = scalar_lea.sflag [#allocation3], %s771
        %s773 = sand.u32 %s570, 1
        %s774 = smul.addr %s773, 16
        %s775 = scalar_lea.vmem [#allocation2], %s774
        %p776 = pneg %p609
        %p777 = pneg %p606
        %s778 = sand.u32 %s596, 1
        %s779 = scalar_lea.sflag [#allocation5], %s778
        %s780 = sand.u32 %s596, 1
        %s781 = smul.addr %s780, 4
        %s782 = scalar_lea.vmem [#allocation4], %s781
        %p783 = scmp.lt.s32.totalorder %s43, 1
        %s784 = scalar_select %p783, %s43, 1
        %s785 = smul.addr %s784, 32
        %s786 = smul.addr %s785, 4
        %s787 = scalar_lea.vmem %s0, %s786
        %p788 = scmp.lt.s32.totalorder %s43, 1
        %s789 = scalar_select %p788, %s43, 1
        %s790 = smul.addr %s789, 32
        %s791 = smul.addr %s790, 8
        %s792 = scalar_lea.vmem %s22, %s791
        %p793 = scmp.lt.s32.totalorder %s43, 1
        %s794 = scalar_select %p793, %s43, 1
        %s795 = smul.addr %s794, 8
        %s796 = smul.addr %s795, 8
        %s797 = scalar_lea.vmem %s23, %s796
        %v799 = vld [vmem:[%s787] sm:$0xf]
        %v800 = vld [vmem:[%s787 + $0x4] sm:$0xf]
        %v801 = vld [vmem:[%s787 + $0x8] sm:$0xf]
        %v802 = vld [vmem:[%s787 + $0xc] sm:$0xf]
        %v803 = vld [vmem:[%s787 + $0x10] sm:$0xf]
        %v804 = vld [vmem:[%s787 + $0x14] sm:$0xf]
        %v805 = vld [vmem:[%s787 + $0x18] sm:$0xf]
        %v806 = vld [vmem:[%s787 + $0x1c] sm:$0xf]
        %v807 = vld [vmem:[%s787 + $0x20] sm:$0xf]
        %v808 = vld [vmem:[%s787 + $0x24] sm:$0xf]
        %v809 = vld [vmem:[%s787 + $0x28] sm:$0xf]
        %v810 = vld [vmem:[%s787 + $0x2c] sm:$0xf]
        %v811 = vld [vmem:[%s787 + $0x30] sm:$0xf]
        %v812 = vld [vmem:[%s787 + $0x34] sm:$0xf]
        %v813 = vld [vmem:[%s787 + $0x38] sm:$0xf]
        %v814 = vld [vmem:[%s787 + $0x3c] sm:$0xf]
        %v815 = vld [vmem:[%s787 + $0x40] sm:$0xf]
        %v816 = vld [vmem:[%s787 + $0x44] sm:$0xf]
        %v817 = vld [vmem:[%s787 + $0x48] sm:$0xf]
        %v818 = vld [vmem:[%s787 + $0x4c] sm:$0xf]
        %v819 = vld [vmem:[%s787 + $0x50] sm:$0xf]
        %v820 = vld [vmem:[%s787 + $0x54] sm:$0xf]
        %v821 = vld [vmem:[%s787 + $0x58] sm:$0xf]
        %v822 = vld [vmem:[%s787 + $0x5c] sm:$0xf]
        %v823 = vld [vmem:[%s787 + $0x60] sm:$0xf]
        %v824 = vld [vmem:[%s787 + $0x64] sm:$0xf]
        %v825 = vld [vmem:[%s787 + $0x68] sm:$0xf]
        %v826 = vld [vmem:[%s787 + $0x6c] sm:$0xf]
        %v827 = vld [vmem:[%s787 + $0x70] sm:$0xf]
        %v828 = vld [vmem:[%s787 + $0x74] sm:$0xf]
        %v829 = vld [vmem:[%s787 + $0x78] sm:$0xf]
        %v830 = vld [vmem:[%s787 + $0x7c] sm:$0xf]
        %v831 = vld [vmem:[%s1] sm:$0xf]
        %v832 = vld [vmem:[%s2] sm:$0x1]
        %v834 = vlaneseq
        %v835 = vshrl.u32 %v834, 7
        %v836 = vsub.s32 0, %v835
        %v837 = vrot.slane %v832, %v836
        %v871 = vunpack.c.l.b16 %v799
        %v872 = vunpack.c.l.b16 %v800
        %v873 = vunpack.c.l.b16 %v801
        %v874 = vunpack.c.l.b16 %v802
        %v875 = vunpack.c.l.b16 %v803
        %v876 = vunpack.c.l.b16 %v804
        %v877 = vunpack.c.l.b16 %v805
        %v878 = vunpack.c.l.b16 %v806
        %v879 = vunpack.c.l.b16 %v807
        %v880 = vunpack.c.l.b16 %v808
        %v881 = vunpack.c.l.b16 %v809
        %v882 = vunpack.c.l.b16 %v810
        %v883 = vunpack.c.l.b16 %v811
        %v884 = vunpack.c.l.b16 %v812
        %v885 = vunpack.c.l.b16 %v813
        %v886 = vunpack.c.l.b16 %v814
        %v887 = vunpack.c.l.b16 %v815
        %v888 = vunpack.c.l.b16 %v816
        %v889 = vunpack.c.l.b16 %v817
        %v890 = vunpack.c.l.b16 %v818
        %v891 = vunpack.c.l.b16 %v819
        %v892 = vunpack.c.l.b16 %v820
        %v893 = vunpack.c.l.b16 %v821
        %v894 = vunpack.c.l.b16 %v822
        %v895 = vunpack.c.l.b16 %v823
        %v896 = vunpack.c.l.b16 %v824
        %v897 = vunpack.c.l.b16 %v825
        %v898 = vunpack.c.l.b16 %v826
        %v899 = vunpack.c.l.b16 %v827
        %v900 = vunpack.c.l.b16 %v828
        %v901 = vunpack.c.l.b16 %v829
        %v902 = vunpack.c.l.b16 %v830
        %v903 = vpack.c.b16 %v872, %v871
        %v904 = vpack.c.b16 %v874, %v873
        %v905 = vpack.c.b16 %v876, %v875
        %v906 = vpack.c.b16 %v878, %v877
        %v907 = vpack.c.b16 %v880, %v879
        %v908 = vpack.c.b16 %v882, %v881
        %v909 = vpack.c.b16 %v884, %v883
        %v910 = vpack.c.b16 %v886, %v885
        %v911 = vpack.c.b16 %v888, %v887
        %v912 = vpack.c.b16 %v890, %v889
        %v913 = vpack.c.b16 %v892, %v891
        %v914 = vpack.c.b16 %v894, %v893
        %v915 = vpack.c.b16 %v896, %v895
        %v916 = vpack.c.b16 %v898, %v897
        %v917 = vpack.c.b16 %v900, %v899
        %v918 = vpack.c.b16 %v902, %v901
        %vm919 = vcmask 64512
        %v921 = vsel %vm919, %v903, 0
        %v924 = vsel %vm919, %v904, 0
        %v927 = vsel %vm919, %v905, 0
        %v930 = vsel %vm919, %v906, 0
        %v933 = vsel %vm919, %v907, 0
        %v936 = vsel %vm919, %v908, 0
        %v939 = vsel %vm919, %v909, 0
        %v942 = vsel %vm919, %v910, 0
        %v945 = vsel %vm919, %v911, 0
        %v948 = vsel %vm919, %v912, 0
        %v951 = vsel %vm919, %v913, 0
        %v954 = vsel %vm919, %v914, 0
        %v957 = vsel %vm919, %v915, 0
        %v960 = vsel %vm919, %v916, 0
        %v963 = vsel %vm919, %v917, 0
        %v966 = vsel %vm919, %v918, 0
        %vm968 = vcmask 1043456
        %v970 = vsel %vm968, %v831, 0
        %972 = vmatprep.subr.bf16.mxu0 0
        %973 = vmatpush1.bf16.msra.mxu0 0
        %974 = vmatprep.subr.bf16.mxu0 0
        %975 = vmatpush1.bf16.msra.mxu0 0
        %976 = vmatprep.subr.bf16.mxu0 0
        %977 = vmatpush1.bf16.msra.mxu0 0
        %978 = vmatprep.subr.bf16.mxu0 0
        %979 = vmatpush1.bf16.msra.mxu0 0
        %980 = vmatprep.subr.bf16.mxu0 0
        %981 = vmatpush1.bf16.msra.mxu0 0
        %982 = vmatprep.subr.bf16.mxu0 0
        %983 = vmatpush1.bf16.msra.mxu0 0
        %984 = vmatprep.subr.bf16.mxu0 0
        %985 = vmatpush1.bf16.msra.mxu0 0
        %986 = vmatprep.subr.bf16.mxu0 0
        %987 = vmatpush1.bf16.msra.mxu0 %v970
        %988 = vmatprep.subr.bf16.mxu0 0
        %989 = vmatpush2.bf16.msra.mxu0 0
        %990 = vmatprep.subr.bf16.mxu0 0
        %991 = vmatpush2.bf16.msra.mxu0 0
        %992 = vmatprep.subr.bf16.mxu0 0
        %993 = vmatpush2.bf16.msra.mxu0 0
        %994 = vmatprep.subr.bf16.mxu0 0
        %995 = vmatpush2.bf16.msra.mxu0 0
        %996 = vmatprep.subr.bf16.mxu0 0
        %997 = vmatpush2.bf16.msra.mxu0 0
        %998 = vmatprep.subr.bf16.mxu0 0
        %999 = vmatpush2.bf16.msra.mxu0 0
        %1000 = vmatprep.subr.bf16.mxu0 0
        %1001 = vmatpush2.bf16.msra.mxu0 0
        %1002 = vmatprep.subr.bf16.mxu0 0
        %1003 = vmatpush2.bf16.msra.mxu0 0
        %1004 = vmatprep.mubr.bf16.mxu0 0
        %1005 = vmatmul.mubr.bf16.gmra.mxu0 %v921
        %v1006 = vpop.f32.mrf.mxu0
        %v1007 = vadd.f32 %v837, %v1006
        %v1008 = vpop.f32.mrf.mxu0
        %v1009 = vpop.f32.mrf.mxu0
        %v1010 = vadd.f32 %v837, %v1009
        %v1011 = vpop.f32.mrf.mxu0
        %1012 = vmatprep.mubr.bf16.mxu0 0
        %1013 = vmatmul.mubr.bf16.gmra.mxu0 %v924
        %v1014 = vpop.f32.mrf.mxu0
        %v1015 = vadd.f32 %v837, %v1014
        %v1016 = vpop.f32.mrf.mxu0
        %v1017 = vpop.f32.mrf.mxu0
        %v1018 = vadd.f32 %v837, %v1017
        %v1019 = vpop.f32.mrf.mxu0
        %1020 = vmatprep.mubr.bf16.mxu0 0
        %1021 = vmatmul.mubr.bf16.gmra.mxu0 %v927
        %v1022 = vpop.f32.mrf.mxu0
        %v1023 = vadd.f32 %v837, %v1022
        %v1024 = vpop.f32.mrf.mxu0
        %v1025 = vpop.f32.mrf.mxu0
        %v1026 = vadd.f32 %v837, %v1025
        %v1027 = vpop.f32.mrf.mxu0
        %1028 = vmatprep.mubr.bf16.mxu0 0
        %1029 = vmatmul.mubr.bf16.gmra.mxu0 %v930
        %v1030 = vpop.f32.mrf.mxu0
        %v1031 = vadd.f32 %v837, %v1030
        %v1032 = vpop.f32.mrf.mxu0
        %v1033 = vpop.f32.mrf.mxu0
        %v1034 = vadd.f32 %v837, %v1033
        %v1035 = vpop.f32.mrf.mxu0
        %1036 = vmatprep.mubr.bf16.mxu0 0
        %1037 = vmatmul.mubr.bf16.gmra.mxu0 %v933
        %v1038 = vpop.f32.mrf.mxu0
        %v1039 = vadd.f32 %v837, %v1038
        %v1040 = vpop.f32.mrf.mxu0
        %v1041 = vpop.f32.mrf.mxu0
        %v1042 = vadd.f32 %v837, %v1041
        %v1043 = vpop.f32.mrf.mxu0
        %1044 = vmatprep.mubr.bf16.mxu0 0
        %1045 = vmatmul.mubr.bf16.gmra.mxu0 %v936
        %v1046 = vpop.f32.mrf.mxu0
        %v1047 = vadd.f32 %v837, %v1046
        %v1048 = vpop.f32.mrf.mxu0
        %v1049 = vpop.f32.mrf.mxu0
        %v1050 = vadd.f32 %v837, %v1049
        %v1051 = vpop.f32.mrf.mxu0
        %1052 = vmatprep.mubr.bf16.mxu0 0
        %1053 = vmatmul.mubr.bf16.gmra.mxu0 %v939
        %v1054 = vpop.f32.mrf.mxu0
        %v1055 = vadd.f32 %v837, %v1054
        %v1056 = vpop.f32.mrf.mxu0
        %v1057 = vpop.f32.mrf.mxu0
        %v1058 = vadd.f32 %v837, %v1057
        %v1059 = vpop.f32.mrf.mxu0
        %1060 = vmatprep.mubr.bf16.mxu0 0
        %1061 = vmatmul.mubr.bf16.gmra.mxu0 %v942
        %v1062 = vpop.f32.mrf.mxu0
        %v1063 = vadd.f32 %v837, %v1062
        %v1064 = vpop.f32.mrf.mxu0
        %v1065 = vpop.f32.mrf.mxu0
        %v1066 = vadd.f32 %v837, %v1065
        %v1067 = vpop.f32.mrf.mxu0
        %1068 = vmatprep.mubr.bf16.mxu0 0
        %1069 = vmatmul.mubr.bf16.gmra.mxu0 %v945
        %v1070 = vpop.f32.mrf.mxu0
        %v1071 = vadd.f32 %v837, %v1070
        %v1072 = vpop.f32.mrf.mxu0
        %v1073 = vpop.f32.mrf.mxu0
        %v1074 = vadd.f32 %v837, %v1073
        %v1075 = vpop.f32.mrf.mxu0
        %1076 = vmatprep.mubr.bf16.mxu0 0
        %1077 = vmatmul.mubr.bf16.gmra.mxu0 %v948
        %v1078 = vpop.f32.mrf.mxu0
        %v1079 = vadd.f32 %v837, %v1078
        %v1080 = vpop.f32.mrf.mxu0
        %v1081 = vpop.f32.mrf.mxu0
        %v1082 = vadd.f32 %v837, %v1081
        %v1083 = vpop.f32.mrf.mxu0
        %1084 = vmatprep.mubr.bf16.mxu0 0
        %1085 = vmatmul.mubr.bf16.gmra.mxu0 %v951
        %v1086 = vpop.f32.mrf.mxu0
        %v1087 = vadd.f32 %v837, %v1086
        %v1088 = vpop.f32.mrf.mxu0
        %v1089 = vpop.f32.mrf.mxu0
        %v1090 = vadd.f32 %v837, %v1089
        %v1091 = vpop.f32.mrf.mxu0
        %1092 = vmatprep.mubr.bf16.mxu0 0
        %1093 = vmatmul.mubr.bf16.gmra.mxu0 %v954
        %v1094 = vpop.f32.mrf.mxu0
        %v1095 = vadd.f32 %v837, %v1094
        %v1096 = vpop.f32.mrf.mxu0
        %v1097 = vpop.f32.mrf.mxu0
        %v1098 = vadd.f32 %v837, %v1097
        %v1099 = vpop.f32.mrf.mxu0
        %1100 = vmatprep.mubr.bf16.mxu0 0
        %1101 = vmatmul.mubr.bf16.gmra.mxu0 %v957
        %v1102 = vpop.f32.mrf.mxu0
        %v1103 = vadd.f32 %v837, %v1102
        %v1104 = vpop.f32.mrf.mxu0
        %v1105 = vpop.f32.mrf.mxu0
        %v1106 = vadd.f32 %v837, %v1105
        %v1107 = vpop.f32.mrf.mxu0
        %1108 = vmatprep.mubr.bf16.mxu0 0
        %1109 = vmatmul.mubr.bf16.gmra.mxu0 %v960
        %v1110 = vpop.f32.mrf.mxu0
        %v1111 = vadd.f32 %v837, %v1110
        %v1112 = vpop.f32.mrf.mxu0
        %v1113 = vpop.f32.mrf.mxu0
        %v1114 = vadd.f32 %v837, %v1113
        %v1115 = vpop.f32.mrf.mxu0
        %1116 = vmatprep.mubr.bf16.mxu0 0
        %1117 = vmatmul.mubr.bf16.gmra.mxu0 %v963
        %v1118 = vpop.f32.mrf.mxu0
        %v1119 = vadd.f32 %v837, %v1118
        %v1120 = vpop.f32.mrf.mxu0
        %v1121 = vpop.f32.mrf.mxu0
        %v1122 = vadd.f32 %v837, %v1121
        %v1123 = vpop.f32.mrf.mxu0
        %1124 = vmatprep.mubr.bf16.mxu0 0
        %1125 = vmatmul.mubr.bf16.gmra.mxu0 %v966
        %v1126 = vpop.f32.mrf.mxu0
        %v1127 = vadd.f32 %v837, %v1126
        %v1128 = vpop.f32.mrf.mxu0
        %v1129 = vpop.f32.mrf.mxu0
        %v1130 = vadd.f32 %v837, %v1129
        %v1131 = vpop.f32.mrf.mxu0
        %1132 = vdwg.mxu0
        %v1133 = vpack.c.bf16 %v1010, %v1007
        %v1134 = vpack.c.bf16 %v1018, %v1015
        %v1135 = vpack.c.bf16 %v1026, %v1023
        %v1136 = vpack.c.bf16 %v1034, %v1031
        %v1137 = vpack.c.bf16 %v1042, %v1039
        %v1138 = vpack.c.bf16 %v1050, %v1047
        %v1139 = vpack.c.bf16 %v1058, %v1055
        %v1140 = vpack.c.bf16 %v1066, %v1063
        %v1141 = vpack.c.bf16 %v1074, %v1071
        %v1142 = vpack.c.bf16 %v1082, %v1079
        %v1143 = vpack.c.bf16 %v1090, %v1087
        %v1144 = vpack.c.bf16 %v1098, %v1095
        %v1145 = vpack.c.bf16 %v1106, %v1103
        %v1146 = vpack.c.bf16 %v1114, %v1111
        %v1147 = vpack.c.bf16 %v1122, %v1119
        %v1148 = vpack.c.bf16 %v1130, %v1127
        %s1149 = scalar_lea.vmem %s1, 4
        %v1150 = vld [vmem:[%s1149] sm:$0xf]
        %s1151 = scalar_lea.vmem %s2, 1
        %v1152 = vld [vmem:[%s1151] sm:$0x1]
        %v1154 = vlaneseq
        %v1155 = vshrl.u32 %v1154, 7
        %v1156 = vsub.s32 0, %v1155
        %v1157 = vrot.slane %v1152, %v1156
        %v1160 = vsel %vm968, %v1150, 0
        %1162 = vmatprep.subr.bf16.mxu0 0
        %1163 = vmatpush1.bf16.msra.mxu0 0
        %1164 = vmatprep.subr.bf16.mxu0 0
        %1165 = vmatpush1.bf16.msra.mxu0 0
        %1166 = vmatprep.subr.bf16.mxu0 0
        %1167 = vmatpush1.bf16.msra.mxu0 0
        %1168 = vmatprep.subr.bf16.mxu0 0
        %1169 = vmatpush1.bf16.msra.mxu0 0
        %1170 = vmatprep.subr.bf16.mxu0 0
        %1171 = vmatpush1.bf16.msra.mxu0 0
        %1172 = vmatprep.subr.bf16.mxu0 0
        %1173 = vmatpush1.bf16.msra.mxu0 0
        %1174 = vmatprep.subr.bf16.mxu0 0
        %1175 = vmatpush1.bf16.msra.mxu0 0
        %1176 = vmatprep.subr.bf16.mxu0 0
        %1177 = vmatpush1.bf16.msra.mxu0 %v1160
        %1178 = vmatprep.subr.bf16.mxu0 0
        %1179 = vmatpush2.bf16.msra.mxu0 0
        %1180 = vmatprep.subr.bf16.mxu0 0
        %1181 = vmatpush2.bf16.msra.mxu0 0
        %1182 = vmatprep.subr.bf16.mxu0 0
        %1183 = vmatpush2.bf16.msra.mxu0 0
        %1184 = vmatprep.subr.bf16.mxu0 0
        %1185 = vmatpush2.bf16.msra.mxu0 0
        %1186 = vmatprep.subr.bf16.mxu0 0
        %1187 = vmatpush2.bf16.msra.mxu0 0
        %1188 = vmatprep.subr.bf16.mxu0 0
        %1189 = vmatpush2.bf16.msra.mxu0 0
        %1190 = vmatprep.subr.bf16.mxu0 0
        %1191 = vmatpush2.bf16.msra.mxu0 0
        %1192 = vmatprep.subr.bf16.mxu0 0
        %1193 = vmatpush2.bf16.msra.mxu0 0
        %1194 = vmatprep.mubr.bf16.mxu0 0
        %1195 = vmatmul.mubr.bf16.gmra.mxu0 %v921
        %v1196 = vpop.f32.mrf.mxu0
        %v1197 = vadd.f32 %v1157, %v1196
        %v1198 = vpop.f32.mrf.mxu0
        %v1199 = vpop.f32.mrf.mxu0
        %v1200 = vadd.f32 %v1157, %v1199
        %v1201 = vpop.f32.mrf.mxu0
        %1202 = vmatprep.mubr.bf16.mxu0 0
        %1203 = vmatmul.mubr.bf16.gmra.mxu0 %v924
        %v1204 = vpop.f32.mrf.mxu0
        %v1205 = vadd.f32 %v1157, %v1204
        %v1206 = vpop.f32.mrf.mxu0
        %v1207 = vpop.f32.mrf.mxu0
        %v1208 = vadd.f32 %v1157, %v1207
        %v1209 = vpop.f32.mrf.mxu0
        %1210 = vmatprep.mubr.bf16.mxu0 0
        %1211 = vmatmul.mubr.bf16.gmra.mxu0 %v927
        %v1212 = vpop.f32.mrf.mxu0
        %v1213 = vadd.f32 %v1157, %v1212
        %v1214 = vpop.f32.mrf.mxu0
        %v1215 = vpop.f32.mrf.mxu0
        %v1216 = vadd.f32 %v1157, %v1215
        %v1217 = vpop.f32.mrf.mxu0
        %1218 = vmatprep.mubr.bf16.mxu0 0
        %1219 = vmatmul.mubr.bf16.gmra.mxu0 %v930
        %v1220 = vpop.f32.mrf.mxu0
        %v1221 = vadd.f32 %v1157, %v1220
        %v1222 = vpop.f32.mrf.mxu0
        %v1223 = vpop.f32.mrf.mxu0
        %v1224 = vadd.f32 %v1157, %v1223
        %v1225 = vpop.f32.mrf.mxu0
        %1226 = vmatprep.mubr.bf16.mxu0 0
        %1227 = vmatmul.mubr.bf16.gmra.mxu0 %v933
        %v1228 = vpop.f32.mrf.mxu0
        %v1229 = vadd.f32 %v1157, %v1228
        %v1230 = vpop.f32.mrf.mxu0
        %v1231 = vpop.f32.mrf.mxu0
        %v1232 = vadd.f32 %v1157, %v1231
        %v1233 = vpop.f32.mrf.mxu0
        %1234 = vmatprep.mubr.bf16.mxu0 0
        %1235 = vmatmul.mubr.bf16.gmra.mxu0 %v936
        %v1236 = vpop.f32.mrf.mxu0
        %v1237 = vadd.f32 %v1157, %v1236
        %v1238 = vpop.f32.mrf.mxu0
        %v1239 = vpop.f32.mrf.mxu0
        %v1240 = vadd.f32 %v1157, %v1239
        %v1241 = vpop.f32.mrf.mxu0
        %1242 = vmatprep.mubr.bf16.mxu0 0
        %1243 = vmatmul.mubr.bf16.gmra.mxu0 %v939
        %v1244 = vpop.f32.mrf.mxu0
        %v1245 = vadd.f32 %v1157, %v1244
        %v1246 = vpop.f32.mrf.mxu0
        %v1247 = vpop.f32.mrf.mxu0
        %v1248 = vadd.f32 %v1157, %v1247
        %v1249 = vpop.f32.mrf.mxu0
        %1250 = vmatprep.mubr.bf16.mxu0 0
        %1251 = vmatmul.mubr.bf16.gmra.mxu0 %v942
        %v1252 = vpop.f32.mrf.mxu0
        %v1253 = vadd.f32 %v1157, %v1252
        %v1254 = vpop.f32.mrf.mxu0
        %v1255 = vpop.f32.mrf.mxu0
        %v1256 = vadd.f32 %v1157, %v1255
        %v1257 = vpop.f32.mrf.mxu0
        %1258 = vmatprep.mubr.bf16.mxu0 0
        %1259 = vmatmul.mubr.bf16.gmra.mxu0 %v945
        %v1260 = vpop.f32.mrf.mxu0
        %v1261 = vadd.f32 %v1157, %v1260
        %v1262 = vpop.f32.mrf.mxu0
        %v1263 = vpop.f32.mrf.mxu0
        %v1264 = vadd.f32 %v1157, %v1263
        %v1265 = vpop.f32.mrf.mxu0
        %1266 = vmatprep.mubr.bf16.mxu0 0
        %1267 = vmatmul.mubr.bf16.gmra.mxu0 %v948
        %v1268 = vpop.f32.mrf.mxu0
        %v1269 = vadd.f32 %v1157, %v1268
        %v1270 = vpop.f32.mrf.mxu0
        %v1271 = vpop.f32.mrf.mxu0
        %v1272 = vadd.f32 %v1157, %v1271
        %v1273 = vpop.f32.mrf.mxu0
        %1274 = vmatprep.mubr.bf16.mxu0 0
        %1275 = vmatmul.mubr.bf16.gmra.mxu0 %v951
        %v1276 = vpop.f32.mrf.mxu0
        %v1277 = vadd.f32 %v1157, %v1276
        %v1278 = vpop.f32.mrf.mxu0
        %v1279 = vpop.f32.mrf.mxu0
        %v1280 = vadd.f32 %v1157, %v1279
        %v1281 = vpop.f32.mrf.mxu0
        %1282 = vmatprep.mubr.bf16.mxu0 0
        %1283 = vmatmul.mubr.bf16.gmra.mxu0 %v954
        %v1284 = vpop.f32.mrf.mxu0
        %v1285 = vadd.f32 %v1157, %v1284
        %v1286 = vpop.f32.mrf.mxu0
        %v1287 = vpop.f32.mrf.mxu0
        %v1288 = vadd.f32 %v1157, %v1287
        %v1289 = vpop.f32.mrf.mxu0
        %1290 = vmatprep.mubr.bf16.mxu0 0
        %1291 = vmatmul.mubr.bf16.gmra.mxu0 %v957
        %v1292 = vpop.f32.mrf.mxu0
        %v1293 = vadd.f32 %v1157, %v1292
        %v1294 = vpop.f32.mrf.mxu0
        %v1295 = vpop.f32.mrf.mxu0
        %v1296 = vadd.f32 %v1157, %v1295
        %v1297 = vpop.f32.mrf.mxu0
        %1298 = vmatprep.mubr.bf16.mxu0 0
        %1299 = vmatmul.mubr.bf16.gmra.mxu0 %v960
        %v1300 = vpop.f32.mrf.mxu0
        %v1301 = vadd.f32 %v1157, %v1300
        %v1302 = vpop.f32.mrf.mxu0
        %v1303 = vpop.f32.mrf.mxu0
        %v1304 = vadd.f32 %v1157, %v1303
        %v1305 = vpop.f32.mrf.mxu0
        %1306 = vmatprep.mubr.bf16.mxu0 0
        %1307 = vmatmul.mubr.bf16.gmra.mxu0 %v963
        %v1308 = vpop.f32.mrf.mxu0
        %v1309 = vadd.f32 %v1157, %v1308
        %v1310 = vpop.f32.mrf.mxu0
        %v1311 = vpop.f32.mrf.mxu0
        %v1312 = vadd.f32 %v1157, %v1311
        %v1313 = vpop.f32.mrf.mxu0
        %1314 = vmatprep.mubr.bf16.mxu0 0
        %1315 = vmatmul.mubr.bf16.gmra.mxu0 %v966
        %v1316 = vpop.f32.mrf.mxu0
        %v1317 = vadd.f32 %v1157, %v1316
        %v1318 = vpop.f32.mrf.mxu0
        %v1319 = vpop.f32.mrf.mxu0
        %v1320 = vadd.f32 %v1157, %v1319
        %v1321 = vpop.f32.mrf.mxu0
        %1322 = vdwg.mxu0
        %v1323 = vpack.c.bf16 %v1200, %v1197
        %v1324 = vpack.c.bf16 %v1208, %v1205
        %v1325 = vpack.c.bf16 %v1216, %v1213
        %v1326 = vpack.c.bf16 %v1224, %v1221
        %v1327 = vpack.c.bf16 %v1232, %v1229
        %v1328 = vpack.c.bf16 %v1240, %v1237
        %v1329 = vpack.c.bf16 %v1248, %v1245
        %v1330 = vpack.c.bf16 %v1256, %v1253
        %v1331 = vpack.c.bf16 %v1264, %v1261
        %v1332 = vpack.c.bf16 %v1272, %v1269
        %v1333 = vpack.c.bf16 %v1280, %v1277
        %v1334 = vpack.c.bf16 %v1288, %v1285
        %v1335 = vpack.c.bf16 %v1296, %v1293
        %v1336 = vpack.c.bf16 %v1304, %v1301
        %v1337 = vpack.c.bf16 %v1312, %v1309
        %v1338 = vpack.c.bf16 %v1320, %v1317
        %s1339 = scalar_lea.vmem %s1, 8
        %v1340 = vld [vmem:[%s1339] sm:$0xf]
        %s1341 = scalar_lea.vmem %s2, 2
        %v1342 = vld [vmem:[%s1341] sm:$0x1]
        %v1344 = vlaneseq
        %v1345 = vshrl.u32 %v1344, 7
        %v1346 = vsub.s32 0, %v1345
        %v1347 = vrot.slane %v1342, %v1346
        %v1350 = vsel %vm968, %v1340, 0
        %1352 = vmatprep.subr.bf16.mxu0 0
        %1353 = vmatpush1.bf16.msra.mxu0 0
        %1354 = vmatprep.subr.bf16.mxu0 0
        %1355 = vmatpush1.bf16.msra.mxu0 0
        %1356 = vmatprep.subr.bf16.mxu0 0
        %1357 = vmatpush1.bf16.msra.mxu0 0
        %1358 = vmatprep.subr.bf16.mxu0 0
        %1359 = vmatpush1.bf16.msra.mxu0 0
        %1360 = vmatprep.subr.bf16.mxu0 0
        %1361 = vmatpush1.bf16.msra.mxu0 0
        %1362 = vmatprep.subr.bf16.mxu0 0
        %1363 = vmatpush1.bf16.msra.mxu0 0
        %1364 = vmatprep.subr.bf16.mxu0 0
        %1365 = vmatpush1.bf16.msra.mxu0 0
        %1366 = vmatprep.subr.bf16.mxu0 0
        %1367 = vmatpush1.bf16.msra.mxu0 %v1350
        %1368 = vmatprep.subr.bf16.mxu0 0
        %1369 = vmatpush2.bf16.msra.mxu0 0
        %1370 = vmatprep.subr.bf16.mxu0 0
        %1371 = vmatpush2.bf16.msra.mxu0 0
        %1372 = vmatprep.subr.bf16.mxu0 0
        %1373 = vmatpush2.bf16.msra.mxu0 0
        %1374 = vmatprep.subr.bf16.mxu0 0
        %1375 = vmatpush2.bf16.msra.mxu0 0
        %1376 = vmatprep.subr.bf16.mxu0 0
        %1377 = vmatpush2.bf16.msra.mxu0 0
        %1378 = vmatprep.subr.bf16.mxu0 0
        %1379 = vmatpush2.bf16.msra.mxu0 0
        %1380 = vmatprep.subr.bf16.mxu0 0
        %1381 = vmatpush2.bf16.msra.mxu0 0
        %1382 = vmatprep.subr.bf16.mxu0 0
        %1383 = vmatpush2.bf16.msra.mxu0 0
        %1384 = vmatprep.mubr.bf16.mxu0 0
        %1385 = vmatmul.mubr.bf16.gmra.mxu0 %v921
        %v1386 = vpop.f32.mrf.mxu0
        %v1387 = vadd.f32 %v1347, %v1386
        %v1388 = vpop.f32.mrf.mxu0
        %v1389 = vpop.f32.mrf.mxu0
        %v1390 = vadd.f32 %v1347, %v1389
        %v1391 = vpop.f32.mrf.mxu0
        %1392 = vmatprep.mubr.bf16.mxu0 0
        %1393 = vmatmul.mubr.bf16.gmra.mxu0 %v924
        %v1394 = vpop.f32.mrf.mxu0
        %v1395 = vadd.f32 %v1347, %v1394
        %v1396 = vpop.f32.mrf.mxu0
        %v1397 = vpop.f32.mrf.mxu0
        %v1398 = vadd.f32 %v1347, %v1397
        %v1399 = vpop.f32.mrf.mxu0
        %1400 = vmatprep.mubr.bf16.mxu0 0
        %1401 = vmatmul.mubr.bf16.gmra.mxu0 %v927
        %v1402 = vpop.f32.mrf.mxu0
        %v1403 = vadd.f32 %v1347, %v1402
        %v1404 = vpop.f32.mrf.mxu0
        %v1405 = vpop.f32.mrf.mxu0
        %v1406 = vadd.f32 %v1347, %v1405
        %v1407 = vpop.f32.mrf.mxu0
        %1408 = vmatprep.mubr.bf16.mxu0 0
        %1409 = vmatmul.mubr.bf16.gmra.mxu0 %v930
        %v1410 = vpop.f32.mrf.mxu0
        %v1411 = vadd.f32 %v1347, %v1410
        %v1412 = vpop.f32.mrf.mxu0
        %v1413 = vpop.f32.mrf.mxu0
        %v1414 = vadd.f32 %v1347, %v1413
        %v1415 = vpop.f32.mrf.mxu0
        %1416 = vmatprep.mubr.bf16.mxu0 0
        %1417 = vmatmul.mubr.bf16.gmra.mxu0 %v933
        %v1418 = vpop.f32.mrf.mxu0
        %v1419 = vadd.f32 %v1347, %v1418
        %v1420 = vpop.f32.mrf.mxu0
        %v1421 = vpop.f32.mrf.mxu0
        %v1422 = vadd.f32 %v1347, %v1421
        %v1423 = vpop.f32.mrf.mxu0
        %1424 = vmatprep.mubr.bf16.mxu0 0
        %1425 = vmatmul.mubr.bf16.gmra.mxu0 %v936
        %v1426 = vpop.f32.mrf.mxu0
        %v1427 = vadd.f32 %v1347, %v1426
        %v1428 = vpop.f32.mrf.mxu0
        %v1429 = vpop.f32.mrf.mxu0
        %v1430 = vadd.f32 %v1347, %v1429
        %v1431 = vpop.f32.mrf.mxu0
        %1432 = vmatprep.mubr.bf16.mxu0 0
        %1433 = vmatmul.mubr.bf16.gmra.mxu0 %v939
        %v1434 = vpop.f32.mrf.mxu0
        %v1435 = vadd.f32 %v1347, %v1434
        %v1436 = vpop.f32.mrf.mxu0
        %v1437 = vpop.f32.mrf.mxu0
        %v1438 = vadd.f32 %v1347, %v1437
        %v1439 = vpop.f32.mrf.mxu0
        %1440 = vmatprep.mubr.bf16.mxu0 0
        %1441 = vmatmul.mubr.bf16.gmra.mxu0 %v942
        %v1442 = vpop.f32.mrf.mxu0
        %v1443 = vadd.f32 %v1347, %v1442
        %v1444 = vpop.f32.mrf.mxu0
        %v1445 = vpop.f32.mrf.mxu0
        %v1446 = vadd.f32 %v1347, %v1445
        %v1447 = vpop.f32.mrf.mxu0
        %1448 = vmatprep.mubr.bf16.mxu0 0
        %1449 = vmatmul.mubr.bf16.gmra.mxu0 %v945
        %v1450 = vpop.f32.mrf.mxu0
        %v1451 = vadd.f32 %v1347, %v1450
        %v1452 = vpop.f32.mrf.mxu0
        %v1453 = vpop.f32.mrf.mxu0
        %v1454 = vadd.f32 %v1347, %v1453
        %v1455 = vpop.f32.mrf.mxu0
        %1456 = vmatprep.mubr.bf16.mxu0 0
        %1457 = vmatmul.mubr.bf16.gmra.mxu0 %v948
        %v1458 = vpop.f32.mrf.mxu0
        %v1459 = vadd.f32 %v1347, %v1458
        %v1460 = vpop.f32.mrf.mxu0
        %v1461 = vpop.f32.mrf.mxu0
        %v1462 = vadd.f32 %v1347, %v1461
        %v1463 = vpop.f32.mrf.mxu0
        %1464 = vmatprep.mubr.bf16.mxu0 0
        %1465 = vmatmul.mubr.bf16.gmra.mxu0 %v951
        %v1466 = vpop.f32.mrf.mxu0
        %v1467 = vadd.f32 %v1347, %v1466
        %v1468 = vpop.f32.mrf.mxu0
        %v1469 = vpop.f32.mrf.mxu0
        %v1470 = vadd.f32 %v1347, %v1469
        %v1471 = vpop.f32.mrf.mxu0
        %1472 = vmatprep.mubr.bf16.mxu0 0
        %1473 = vmatmul.mubr.bf16.gmra.mxu0 %v954
        %v1474 = vpop.f32.mrf.mxu0
        %v1475 = vadd.f32 %v1347, %v1474
        %v1476 = vpop.f32.mrf.mxu0
        %v1477 = vpop.f32.mrf.mxu0
        %v1478 = vadd.f32 %v1347, %v1477
        %v1479 = vpop.f32.mrf.mxu0
        %1480 = vmatprep.mubr.bf16.mxu0 0
        %1481 = vmatmul.mubr.bf16.gmra.mxu0 %v957
        %v1482 = vpop.f32.mrf.mxu0
        %v1483 = vadd.f32 %v1347, %v1482
        %v1484 = vpop.f32.mrf.mxu0
        %v1485 = vpop.f32.mrf.mxu0
        %v1486 = vadd.f32 %v1347, %v1485
        %v1487 = vpop.f32.mrf.mxu0
        %1488 = vmatprep.mubr.bf16.mxu0 0
        %1489 = vmatmul.mubr.bf16.gmra.mxu0 %v960
        %v1490 = vpop.f32.mrf.mxu0
        %v1491 = vadd.f32 %v1347, %v1490
        %v1492 = vpop.f32.mrf.mxu0
        %v1493 = vpop.f32.mrf.mxu0
        %v1494 = vadd.f32 %v1347, %v1493
        %v1495 = vpop.f32.mrf.mxu0
        %1496 = vmatprep.mubr.bf16.mxu0 0
        %1497 = vmatmul.mubr.bf16.gmra.mxu0 %v963
        %v1498 = vpop.f32.mrf.mxu0
        %v1499 = vadd.f32 %v1347, %v1498
        %v1500 = vpop.f32.mrf.mxu0
        %v1501 = vpop.f32.mrf.mxu0
        %v1502 = vadd.f32 %v1347, %v1501
        %v1503 = vpop.f32.mrf.mxu0
        %1504 = vmatprep.mubr.bf16.mxu0 0
        %1505 = vmatmul.mubr.bf16.gmra.mxu0 %v966
        %v1506 = vpop.f32.mrf.mxu0
        %v1507 = vadd.f32 %v1347, %v1506
        %v1508 = vpop.f32.mrf.mxu0
        %v1509 = vpop.f32.mrf.mxu0
        %v1510 = vadd.f32 %v1347, %v1509
        %v1511 = vpop.f32.mrf.mxu0
        %1512 = vdwg.mxu0
        %v1513 = vpack.c.bf16 %v1390, %v1387
        %v1514 = vpack.c.bf16 %v1398, %v1395
        %v1515 = vpack.c.bf16 %v1406, %v1403
        %v1516 = vpack.c.bf16 %v1414, %v1411
        %v1517 = vpack.c.bf16 %v1422, %v1419
        %v1518 = vpack.c.bf16 %v1430, %v1427
        %v1519 = vpack.c.bf16 %v1438, %v1435
        %v1520 = vpack.c.bf16 %v1446, %v1443
        %v1521 = vpack.c.bf16 %v1454, %v1451
        %v1522 = vpack.c.bf16 %v1462, %v1459
        %v1523 = vpack.c.bf16 %v1470, %v1467
        %v1524 = vpack.c.bf16 %v1478, %v1475
        %v1525 = vpack.c.bf16 %v1486, %v1483
        %v1526 = vpack.c.bf16 %v1494, %v1491
        %v1527 = vpack.c.bf16 %v1502, %v1499
        %v1528 = vpack.c.bf16 %v1510, %v1507
        %v1530 = vsel %vm919, %v1133, 0
        %v1533 = vsel %vm919, %v1134, 0
        %v1536 = vsel %vm919, %v1135, 0
        %v1539 = vsel %vm919, %v1136, 0
        %v1542 = vsel %vm919, %v1137, 0
        %v1545 = vsel %vm919, %v1138, 0
        %v1548 = vsel %vm919, %v1139, 0
        %v1551 = vsel %vm919, %v1140, 0
        %v1554 = vsel %vm919, %v1141, 0
        %v1557 = vsel %vm919, %v1142, 0
        %v1560 = vsel %vm919, %v1143, 0
        %v1563 = vsel %vm919, %v1144, 0
        %v1566 = vsel %vm919, %v1145, 0
        %v1569 = vsel %vm919, %v1146, 0
        %v1572 = vsel %vm919, %v1147, 0
        %v1575 = vsel %vm919, %v1148, 0
        %v1578 = vsel %vm919, %v1323, 0
        %v1581 = vsel %vm919, %v1324, 0
        %v1584 = vsel %vm919, %v1325, 0
        %v1587 = vsel %vm919, %v1326, 0
        %v1590 = vsel %vm919, %v1327, 0
        %v1593 = vsel %vm919, %v1328, 0
        %v1596 = vsel %vm919, %v1329, 0
        %v1599 = vsel %vm919, %v1330, 0
        %v1602 = vsel %vm919, %v1331, 0
        %v1605 = vsel %vm919, %v1332, 0
        %v1608 = vsel %vm919, %v1333, 0
        %v1611 = vsel %vm919, %v1334, 0
        %v1614 = vsel %vm919, %v1335, 0
        %v1617 = vsel %vm919, %v1336, 0
        %v1620 = vsel %vm919, %v1337, 0
        %v1623 = vsel %vm919, %v1338, 0
        %1625 = vmatprep.subr.bf16.mxu0 0
        %1626 = vmatpush1.bf16.xpose.msra.mxu0 %v1599
        %1627 = vmatprep.subr.bf16.mxu0 0
        %1628 = vmatpush1.bf16.xpose.msra.mxu0 %v1596
        %1629 = vmatprep.subr.bf16.mxu0 0
        %1630 = vmatpush1.bf16.xpose.msra.mxu0 %v1593
        %1631 = vmatprep.subr.bf16.mxu0 0
        %1632 = vmatpush1.bf16.xpose.msra.mxu0 %v1590
        %1633 = vmatprep.subr.bf16.mxu0 0
        %1634 = vmatpush1.bf16.xpose.msra.mxu0 %v1587
        %1635 = vmatprep.subr.bf16.mxu0 0
        %1636 = vmatpush1.bf16.xpose.msra.mxu0 %v1584
        %1637 = vmatprep.subr.bf16.mxu0 0
        %1638 = vmatpush1.bf16.xpose.msra.mxu0 %v1581
        %1639 = vmatprep.subr.bf16.mxu0 0
        %1640 = vmatpush1.bf16.xpose.msra.mxu0 %v1578
        %1641 = vmatprep.subr.bf16.mxu0 0
        %1642 = vmatpush2.bf16.xpose.msra.mxu0 %v1623
        %1643 = vmatprep.subr.bf16.mxu0 0
        %1644 = vmatpush2.bf16.xpose.msra.mxu0 %v1620
        %1645 = vmatprep.subr.bf16.mxu0 0
        %1646 = vmatpush2.bf16.xpose.msra.mxu0 %v1617
        %1647 = vmatprep.subr.bf16.mxu0 0
        %1648 = vmatpush2.bf16.xpose.msra.mxu0 %v1614
        %1649 = vmatprep.subr.bf16.mxu0 0
        %1650 = vmatpush2.bf16.xpose.msra.mxu0 %v1611
        %1651 = vmatprep.subr.bf16.mxu0 0
        %1652 = vmatpush2.bf16.xpose.msra.mxu0 %v1608
        %1653 = vmatprep.subr.bf16.mxu0 0
        %1654 = vmatpush2.bf16.xpose.msra.mxu0 %v1605
        %1655 = vmatprep.subr.bf16.mxu0 0
        %1656 = vmatpush2.bf16.xpose.msra.mxu0 %v1602
        %1657 = vmatprep.mubr.bf16.mxu0 0
        %1658 = vmatmul.mubr.bf16.gmra.mxu0 %v1530
        %v1659 = vpop.f32.mrf.mxu0
        %v1660 = vadd.f32 0.0, %v1659
        %v1661 = vpop.f32.mrf.mxu0
        %v1662 = vadd.f32 0.0, %v1661
        %v1663 = vpop.f32.mrf.mxu0
        %v1664 = vadd.f32 0.0, %v1663
        %v1665 = vpop.f32.mrf.mxu0
        %v1666 = vadd.f32 0.0, %v1665
        %1667 = vmatprep.mubr.bf16.mxu0 0
        %1668 = vmatmul.mubr.bf16.gmra.mxu0 %v1533
        %v1669 = vpop.f32.mrf.mxu0
        %v1670 = vadd.f32 0.0, %v1669
        %v1671 = vpop.f32.mrf.mxu0
        %v1672 = vadd.f32 0.0, %v1671
        %v1673 = vpop.f32.mrf.mxu0
        %v1674 = vadd.f32 0.0, %v1673
        %v1675 = vpop.f32.mrf.mxu0
        %v1676 = vadd.f32 0.0, %v1675
        %1677 = vmatprep.mubr.bf16.mxu0 0
        %1678 = vmatmul.mubr.bf16.gmra.mxu0 %v1536
        %v1679 = vpop.f32.mrf.mxu0
        %v1680 = vadd.f32 0.0, %v1679
        %v1681 = vpop.f32.mrf.mxu0
        %v1682 = vadd.f32 0.0, %v1681
        %v1683 = vpop.f32.mrf.mxu0
        %v1684 = vadd.f32 0.0, %v1683
        %v1685 = vpop.f32.mrf.mxu0
        %v1686 = vadd.f32 0.0, %v1685
        %1687 = vmatprep.mubr.bf16.mxu0 0
        %1688 = vmatmul.mubr.bf16.gmra.mxu0 %v1539
        %v1689 = vpop.f32.mrf.mxu0
        %v1690 = vadd.f32 0.0, %v1689
        %v1691 = vpop.f32.mrf.mxu0
        %v1692 = vadd.f32 0.0, %v1691
        %v1693 = vpop.f32.mrf.mxu0
        %v1694 = vadd.f32 0.0, %v1693
        %v1695 = vpop.f32.mrf.mxu0
        %v1696 = vadd.f32 0.0, %v1695
        %1697 = vmatprep.mubr.bf16.mxu0 0
        %1698 = vmatmul.mubr.bf16.gmra.mxu0 %v1542
        %v1699 = vpop.f32.mrf.mxu0
        %v1700 = vadd.f32 0.0, %v1699
        %v1701 = vpop.f32.mrf.mxu0
        %v1702 = vadd.f32 0.0, %v1701
        %v1703 = vpop.f32.mrf.mxu0
        %v1704 = vadd.f32 0.0, %v1703
        %v1705 = vpop.f32.mrf.mxu0
        %v1706 = vadd.f32 0.0, %v1705
        %1707 = vmatprep.mubr.bf16.mxu0 0
        %1708 = vmatmul.mubr.bf16.gmra.mxu0 %v1545
        %v1709 = vpop.f32.mrf.mxu0
        %v1710 = vadd.f32 0.0, %v1709
        %v1711 = vpop.f32.mrf.mxu0
        %v1712 = vadd.f32 0.0, %v1711
        %v1713 = vpop.f32.mrf.mxu0
        %v1714 = vadd.f32 0.0, %v1713
        %v1715 = vpop.f32.mrf.mxu0
        %v1716 = vadd.f32 0.0, %v1715
        %1717 = vmatprep.mubr.bf16.mxu0 0
        %1718 = vmatmul.mubr.bf16.gmra.mxu0 %v1548
        %v1719 = vpop.f32.mrf.mxu0
        %v1720 = vadd.f32 0.0, %v1719
        %v1721 = vpop.f32.mrf.mxu0
        %v1722 = vadd.f32 0.0, %v1721
        %v1723 = vpop.f32.mrf.mxu0
        %v1724 = vadd.f32 0.0, %v1723
        %v1725 = vpop.f32.mrf.mxu0
        %v1726 = vadd.f32 0.0, %v1725
        %1727 = vmatprep.mubr.bf16.mxu0 0
        %1728 = vmatmul.mubr.bf16.gmra.mxu0 %v1551
        %v1729 = vpop.f32.mrf.mxu0
        %v1730 = vadd.f32 0.0, %v1729
        %v1731 = vpop.f32.mrf.mxu0
        %v1732 = vadd.f32 0.0, %v1731
        %v1733 = vpop.f32.mrf.mxu0
        %v1734 = vadd.f32 0.0, %v1733
        %v1735 = vpop.f32.mrf.mxu0
        %v1736 = vadd.f32 0.0, %v1735
        %1737 = vmatprep.mubr.bf16.mxu0 0
        %1738 = vmatmul.mubr.bf16.gmra.mxu0 %v1554
        %v1739 = vpop.f32.mrf.mxu0
        %v1740 = vadd.f32 0.0, %v1739
        %v1741 = vpop.f32.mrf.mxu0
        %v1742 = vadd.f32 0.0, %v1741
        %v1743 = vpop.f32.mrf.mxu0
        %v1744 = vadd.f32 0.0, %v1743
        %v1745 = vpop.f32.mrf.mxu0
        %v1746 = vadd.f32 0.0, %v1745
        %1747 = vmatprep.mubr.bf16.mxu0 0
        %1748 = vmatmul.mubr.bf16.gmra.mxu0 %v1557
        %v1749 = vpop.f32.mrf.mxu0
        %v1750 = vadd.f32 0.0, %v1749
        %v1751 = vpop.f32.mrf.mxu0
        %v1752 = vadd.f32 0.0, %v1751
        %v1753 = vpop.f32.mrf.mxu0
        %v1754 = vadd.f32 0.0, %v1753
        %v1755 = vpop.f32.mrf.mxu0
        %v1756 = vadd.f32 0.0, %v1755
        %1757 = vmatprep.mubr.bf16.mxu0 0
        %1758 = vmatmul.mubr.bf16.gmra.mxu0 %v1560
        %v1759 = vpop.f32.mrf.mxu0
        %v1760 = vadd.f32 0.0, %v1759
        %v1761 = vpop.f32.mrf.mxu0
        %v1762 = vadd.f32 0.0, %v1761
        %v1763 = vpop.f32.mrf.mxu0
        %v1764 = vadd.f32 0.0, %v1763
        %v1765 = vpop.f32.mrf.mxu0
        %v1766 = vadd.f32 0.0, %v1765
        %1767 = vmatprep.mubr.bf16.mxu0 0
        %1768 = vmatmul.mubr.bf16.gmra.mxu0 %v1563
        %v1769 = vpop.f32.mrf.mxu0
        %v1770 = vadd.f32 0.0, %v1769
        %v1771 = vpop.f32.mrf.mxu0
        %v1772 = vadd.f32 0.0, %v1771
        %v1773 = vpop.f32.mrf.mxu0
        %v1774 = vadd.f32 0.0, %v1773
        %v1775 = vpop.f32.mrf.mxu0
        %v1776 = vadd.f32 0.0, %v1775
        %1777 = vmatprep.mubr.bf16.mxu0 0
        %1778 = vmatmul.mubr.bf16.gmra.mxu0 %v1566
        %v1779 = vpop.f32.mrf.mxu0
        %v1780 = vadd.f32 0.0, %v1779
        %v1781 = vpop.f32.mrf.mxu0
        %v1782 = vadd.f32 0.0, %v1781
        %v1783 = vpop.f32.mrf.mxu0
        %v1784 = vadd.f32 0.0, %v1783
        %v1785 = vpop.f32.mrf.mxu0
        %v1786 = vadd.f32 0.0, %v1785
        %1787 = vmatprep.mubr.bf16.mxu0 0
        %1788 = vmatmul.mubr.bf16.gmra.mxu0 %v1569
        %v1789 = vpop.f32.mrf.mxu0
        %v1790 = vadd.f32 0.0, %v1789
        %v1791 = vpop.f32.mrf.mxu0
        %v1792 = vadd.f32 0.0, %v1791
        %v1793 = vpop.f32.mrf.mxu0
        %v1794 = vadd.f32 0.0, %v1793
        %v1795 = vpop.f32.mrf.mxu0
        %v1796 = vadd.f32 0.0, %v1795
        %1797 = vmatprep.mubr.bf16.mxu0 0
        %1798 = vmatmul.mubr.bf16.gmra.mxu0 %v1572
        %v1799 = vpop.f32.mrf.mxu0
        %v1800 = vadd.f32 0.0, %v1799
        %v1801 = vpop.f32.mrf.mxu0
        %v1802 = vadd.f32 0.0, %v1801
        %v1803 = vpop.f32.mrf.mxu0
        %v1804 = vadd.f32 0.0, %v1803
        %v1805 = vpop.f32.mrf.mxu0
        %v1806 = vadd.f32 0.0, %v1805
        %1807 = vmatprep.mubr.bf16.mxu0 0
        %1808 = vmatmul.mubr.bf16.gmra.mxu0 %v1575
        %v1809 = vpop.f32.mrf.mxu0
        %v1810 = vadd.f32 0.0, %v1809
        %v1811 = vpop.f32.mrf.mxu0
        %v1812 = vadd.f32 0.0, %v1811
        %v1813 = vpop.f32.mrf.mxu0
        %v1814 = vadd.f32 0.0, %v1813
        %v1815 = vpop.f32.mrf.mxu0
        %v1816 = vadd.f32 0.0, %v1815
        %1817 = vdwg.mxu0
        %v1818 = vmax.f32 %v1660, %v1662
        %1819 = vmax.xlane.f32.xlu0 %v1818
        %v1820 = vpop.xlane.xlu0 %1819
        %v1821 = vmax.f32 %v1664, %v1666
        %1822 = vmax.xlane.f32.xlu0 %v1821
        %v1823 = vpop.xlane.xlu0 %1822
        %v1824 = vmax.f32 %v1670, %v1672
        %1825 = vmax.xlane.f32.xlu0 %v1824
        %v1826 = vpop.xlane.xlu0 %1825
        %v1827 = vmax.f32 %v1674, %v1676
        %1828 = vmax.xlane.f32.xlu0 %v1827
        %v1829 = vpop.xlane.xlu0 %1828
        %v1830 = vmax.f32 %v1680, %v1682
        %1831 = vmax.xlane.f32.xlu0 %v1830
        %v1832 = vpop.xlane.xlu0 %1831
        %v1833 = vmax.f32 %v1684, %v1686
        %1834 = vmax.xlane.f32.xlu0 %v1833
        %v1835 = vpop.xlane.xlu0 %1834
        %v1836 = vmax.f32 %v1690, %v1692
        %1837 = vmax.xlane.f32.xlu0 %v1836
        %v1838 = vpop.xlane.xlu0 %1837
        %v1839 = vmax.f32 %v1694, %v1696
        %1840 = vmax.xlane.f32.xlu0 %v1839
        %v1841 = vpop.xlane.xlu0 %1840
        %v1842 = vmax.f32 %v1700, %v1702
        %1843 = vmax.xlane.f32.xlu0 %v1842
        %v1844 = vpop.xlane.xlu0 %1843
        %v1845 = vmax.f32 %v1704, %v1706
        %1846 = vmax.xlane.f32.xlu0 %v1845
        %v1847 = vpop.xlane.xlu0 %1846
        %v1848 = vmax.f32 %v1710, %v1712
        %1849 = vmax.xlane.f32.xlu0 %v1848
        %v1850 = vpop.xlane.xlu0 %1849
        %v1851 = vmax.f32 %v1714, %v1716
        %1852 = vmax.xlane.f32.xlu0 %v1851
        %v1853 = vpop.xlane.xlu0 %1852
        %v1854 = vmax.f32 %v1720, %v1722
        %1855 = vmax.xlane.f32.xlu0 %v1854
        %v1856 = vpop.xlane.xlu0 %1855
        %v1857 = vmax.f32 %v1724, %v1726
        %1858 = vmax.xlane.f32.xlu0 %v1857
        %v1859 = vpop.xlane.xlu0 %1858
        %v1860 = vmax.f32 %v1730, %v1732
        %1861 = vmax.xlane.f32.xlu0 %v1860
        %v1862 = vpop.xlane.xlu0 %1861
        %v1863 = vmax.f32 %v1734, %v1736
        %1864 = vmax.xlane.f32.xlu0 %v1863
        %v1865 = vpop.xlane.xlu0 %1864
        %v1866 = vmax.f32 %v1740, %v1742
        %1867 = vmax.xlane.f32.xlu0 %v1866
        %v1868 = vpop.xlane.xlu0 %1867
        %v1869 = vmax.f32 %v1744, %v1746
        %1870 = vmax.xlane.f32.xlu0 %v1869
        %v1871 = vpop.xlane.xlu0 %1870
        %v1872 = vmax.f32 %v1750, %v1752
        %1873 = vmax.xlane.f32.xlu0 %v1872
        %v1874 = vpop.xlane.xlu0 %1873
        %v1875 = vmax.f32 %v1754, %v1756
        %1876 = vmax.xlane.f32.xlu0 %v1875
        %v1877 = vpop.xlane.xlu0 %1876
        %v1878 = vmax.f32 %v1760, %v1762
        %1879 = vmax.xlane.f32.xlu0 %v1878
        %v1880 = vpop.xlane.xlu0 %1879
        %v1881 = vmax.f32 %v1764, %v1766
        %1882 = vmax.xlane.f32.xlu0 %v1881
        %v1883 = vpop.xlane.xlu0 %1882
        %v1884 = vmax.f32 %v1770, %v1772
        %1885 = vmax.xlane.f32.xlu0 %v1884
        %v1886 = vpop.xlane.xlu0 %1885
        %v1887 = vmax.f32 %v1774, %v1776
        %1888 = vmax.xlane.f32.xlu0 %v1887
        %v1889 = vpop.xlane.xlu0 %1888
        %v1890 = vmax.f32 %v1780, %v1782
        %1891 = vmax.xlane.f32.xlu0 %v1890
        %v1892 = vpop.xlane.xlu0 %1891
        %v1893 = vmax.f32 %v1784, %v1786
        %1894 = vmax.xlane.f32.xlu0 %v1893
        %v1895 = vpop.xlane.xlu0 %1894
        %v1896 = vmax.f32 %v1790, %v1792
        %1897 = vmax.xlane.f32.xlu0 %v1896
        %v1898 = vpop.xlane.xlu0 %1897
        %v1899 = vmax.f32 %v1794, %v1796
        %1900 = vmax.xlane.f32.xlu0 %v1899
        %v1901 = vpop.xlane.xlu0 %1900
        %v1902 = vmax.f32 %v1800, %v1802
        %1903 = vmax.xlane.f32.xlu0 %v1902
        %v1904 = vpop.xlane.xlu0 %1903
        %v1905 = vmax.f32 %v1804, %v1806
        %1906 = vmax.xlane.f32.xlu0 %v1905
        %v1907 = vpop.xlane.xlu0 %1906
        %v1908 = vmax.f32 %v1810, %v1812
        %1909 = vmax.xlane.f32.xlu0 %v1908
        %v1910 = vpop.xlane.xlu0 %1909
        %v1911 = vmax.f32 %v1814, %v1816
        %1912 = vmax.xlane.f32.xlu0 %v1911
        %v1913 = vpop.xlane.xlu0 %1912
        %v1914 = vsub.f32 %v1660, %v1820
        %v1915 = vsub.f32 %v1662, %v1820
        %v1916 = vsub.f32 %v1664, %v1823
        %v1917 = vsub.f32 %v1666, %v1823
        %v1918 = vsub.f32 %v1670, %v1826
        %v1919 = vsub.f32 %v1672, %v1826
        %v1920 = vsub.f32 %v1674, %v1829
        %v1921 = vsub.f32 %v1676, %v1829
        %v1922 = vsub.f32 %v1680, %v1832
        %v1923 = vsub.f32 %v1682, %v1832
        %v1924 = vsub.f32 %v1684, %v1835
        %v1925 = vsub.f32 %v1686, %v1835
        %v1926 = vsub.f32 %v1690, %v1838
        %v1927 = vsub.f32 %v1692, %v1838
        %v1928 = vsub.f32 %v1694, %v1841
        %v1929 = vsub.f32 %v1696, %v1841
        %v1930 = vsub.f32 %v1700, %v1844
        %v1931 = vsub.f32 %v1702, %v1844
        %v1932 = vsub.f32 %v1704, %v1847
        %v1933 = vsub.f32 %v1706, %v1847
        %v1934 = vsub.f32 %v1710, %v1850
        %v1935 = vsub.f32 %v1712, %v1850
        %v1936 = vsub.f32 %v1714, %v1853
        %v1937 = vsub.f32 %v1716, %v1853
        %v1938 = vsub.f32 %v1720, %v1856
        %v1939 = vsub.f32 %v1722, %v1856
        %v1940 = vsub.f32 %v1724, %v1859
        %v1941 = vsub.f32 %v1726, %v1859
        %v1942 = vsub.f32 %v1730, %v1862
        %v1943 = vsub.f32 %v1732, %v1862
        %v1944 = vsub.f32 %v1734, %v1865
        %v1945 = vsub.f32 %v1736, %v1865
        %v1946 = vsub.f32 %v1740, %v1868
        %v1947 = vsub.f32 %v1742, %v1868
        %v1948 = vsub.f32 %v1744, %v1871
        %v1949 = vsub.f32 %v1746, %v1871
        %v1950 = vsub.f32 %v1750, %v1874
        %v1951 = vsub.f32 %v1752, %v1874
        %v1952 = vsub.f32 %v1754, %v1877
        %v1953 = vsub.f32 %v1756, %v1877
        %v1954 = vsub.f32 %v1760, %v1880
        %v1955 = vsub.f32 %v1762, %v1880
        %v1956 = vsub.f32 %v1764, %v1883
        %v1957 = vsub.f32 %v1766, %v1883
        %v1958 = vsub.f32 %v1770, %v1886
        %v1959 = vsub.f32 %v1772, %v1886
        %v1960 = vsub.f32 %v1774, %v1889
        %v1961 = vsub.f32 %v1776, %v1889
        %v1962 = vsub.f32 %v1780, %v1892
        %v1963 = vsub.f32 %v1782, %v1892
        %v1964 = vsub.f32 %v1784, %v1895
        %v1965 = vsub.f32 %v1786, %v1895
        %v1966 = vsub.f32 %v1790, %v1898
        %v1967 = vsub.f32 %v1792, %v1898
        %v1968 = vsub.f32 %v1794, %v1901
        %v1969 = vsub.f32 %v1796, %v1901
        %v1970 = vsub.f32 %v1800, %v1904
        %v1971 = vsub.f32 %v1802, %v1904
        %v1972 = vsub.f32 %v1804, %v1907
        %v1973 = vsub.f32 %v1806, %v1907
        %v1974 = vsub.f32 %v1810, %v1910
        %v1975 = vsub.f32 %v1812, %v1910
        %v1976 = vsub.f32 %v1814, %v1913
        %v1977 = vsub.f32 %v1816, %v1913
        %v1978 = vmul.f32 %v1914, 1.442695
        %v1979 = vpow.pop %v1978
        %v1980 = vmul.f32 %v1915, 1.442695
        %v1981 = vpow.pop %v1980
        %v1982 = vmul.f32 %v1916, 1.442695
        %v1983 = vpow.pop %v1982
        %v1984 = vmul.f32 %v1917, 1.442695
        %v1985 = vpow.pop %v1984
        %v1986 = vmul.f32 %v1918, 1.442695
        %v1987 = vpow.pop %v1986
        %v1988 = vmul.f32 %v1919, 1.442695
        %v1989 = vpow.pop %v1988
        %v1990 = vmul.f32 %v1920, 1.442695
        %v1991 = vpow.pop %v1990
        %v1992 = vmul.f32 %v1921, 1.442695
        %v1993 = vpow.pop %v1992
        %v1994 = vmul.f32 %v1922, 1.442695
        %v1995 = vpow.pop %v1994
        %v1996 = vmul.f32 %v1923, 1.442695
        %v1997 = vpow.pop %v1996
        %v1998 = vmul.f32 %v1924, 1.442695
        %v1999 = vpow.pop %v1998
        %v2000 = vmul.f32 %v1925, 1.442695
        %v2001 = vpow.pop %v2000
        %v2002 = vmul.f32 %v1926, 1.442695
        %v2003 = vpow.pop %v2002
        %v2004 = vmul.f32 %v1927, 1.442695
        %v2005 = vpow.pop %v2004
        %v2006 = vmul.f32 %v1928, 1.442695
        %v2007 = vpow.pop %v2006
        %v2008 = vmul.f32 %v1929, 1.442695
        %v2009 = vpow.pop %v2008
        %v2010 = vmul.f32 %v1930, 1.442695
        %v2011 = vpow.pop %v2010
        %v2012 = vmul.f32 %v1931, 1.442695
        %v2013 = vpow.pop %v2012
        %v2014 = vmul.f32 %v1932, 1.442695
        %v2015 = vpow.pop %v2014
        %v2016 = vmul.f32 %v1933, 1.442695
        %v2017 = vpow.pop %v2016
        %v2018 = vmul.f32 %v1934, 1.442695
        %v2019 = vpow.pop %v2018
        %v2020 = vmul.f32 %v1935, 1.442695
        %v2021 = vpow.pop %v2020
        %v2022 = vmul.f32 %v1936, 1.442695
        %v2023 = vpow.pop %v2022
        %v2024 = vmul.f32 %v1937, 1.442695
        %v2025 = vpow.pop %v2024
        %v2026 = vmul.f32 %v1938, 1.442695
        %v2027 = vpow.pop %v2026
        %v2028 = vmul.f32 %v1939, 1.442695
        %v2029 = vpow.pop %v2028
        %v2030 = vmul.f32 %v1940, 1.442695
        %v2031 = vpow.pop %v2030
        %v2032 = vmul.f32 %v1941, 1.442695
        %v2033 = vpow.pop %v2032
        %v2034 = vmul.f32 %v1942, 1.442695
        %v2035 = vpow.pop %v2034
        %v2036 = vmul.f32 %v1943, 1.442695
        %v2037 = vpow.pop %v2036
        %v2038 = vmul.f32 %v1944, 1.442695
        %v2039 = vpow.pop %v2038
        %v2040 = vmul.f32 %v1945, 1.442695
        %v2041 = vpow.pop %v2040
        %v2042 = vmul.f32 %v1946, 1.442695
        %v2043 = vpow.pop %v2042
        %v2044 = vmul.f32 %v1947, 1.442695
        %v2045 = vpow.pop %v2044
        %v2046 = vmul.f32 %v1948, 1.442695
        %v2047 = vpow.pop %v2046
        %v2048 = vmul.f32 %v1949, 1.442695
        %v2049 = vpow.pop %v2048
        %v2050 = vmul.f32 %v1950, 1.442695
        %v2051 = vpow.pop %v2050
        %v2052 = vmul.f32 %v1951, 1.442695
        %v2053 = vpow.pop %v2052
        %v2054 = vmul.f32 %v1952, 1.442695
        %v2055 = vpow.pop %v2054
        %v2056 = vmul.f32 %v1953, 1.442695
        %v2057 = vpow.pop %v2056
        %v2058 = vmul.f32 %v1954, 1.442695
        %v2059 = vpow.pop %v2058
        %v2060 = vmul.f32 %v1955, 1.442695
        %v2061 = vpow.pop %v2060
        %v2062 = vmul.f32 %v1956, 1.442695
        %v2063 = vpow.pop %v2062
        %v2064 = vmul.f32 %v1957, 1.442695
        %v2065 = vpow.pop %v2064
        %v2066 = vmul.f32 %v1958, 1.442695
        %v2067 = vpow.pop %v2066
        %v2068 = vmul.f32 %v1959, 1.442695
        %v2069 = vpow.pop %v2068
        %v2070 = vmul.f32 %v1960, 1.442695
        %v2071 = vpow.pop %v2070
        %v2072 = vmul.f32 %v1961, 1.442695
        %v2073 = vpow.pop %v2072
        %v2074 = vmul.f32 %v1962, 1.442695
        %v2075 = vpow.pop %v2074
        %v2076 = vmul.f32 %v1963, 1.442695
        %v2077 = vpow.pop %v2076
        %v2078 = vmul.f32 %v1964, 1.442695
        %v2079 = vpow.pop %v2078
        %v2080 = vmul.f32 %v1965, 1.442695
        %v2081 = vpow.pop %v2080
        %v2082 = vmul.f32 %v1966, 1.442695
        %v2083 = vpow.pop %v2082
        %v2084 = vmul.f32 %v1967, 1.442695
        %v2085 = vpow.pop %v2084
        %v2086 = vmul.f32 %v1968, 1.442695
        %v2087 = vpow.pop %v2086
        %v2088 = vmul.f32 %v1969, 1.442695
        %v2089 = vpow.pop %v2088
        %v2090 = vmul.f32 %v1970, 1.442695
        %v2091 = vpow.pop %v2090
        %v2092 = vmul.f32 %v1971, 1.442695
        %v2093 = vpow.pop %v2092
        %v2094 = vmul.f32 %v1972, 1.442695
        %v2095 = vpow.pop %v2094
        %v2096 = vmul.f32 %v1973, 1.442695
        %v2097 = vpow.pop %v2096
        %v2098 = vmul.f32 %v1974, 1.442695
        %v2099 = vpow.pop %v2098
        %v2100 = vmul.f32 %v1975, 1.442695
        %v2101 = vpow.pop %v2100
        %v2102 = vmul.f32 %v1976, 1.442695
        %v2103 = vpow.pop %v2102
        %v2104 = vmul.f32 %v1977, 1.442695
        %v2105 = vpow.pop %v2104
        %v2106 = vadd.f32 %v1979, %v1981
        %2107 = vadd.xlane.f32.xlu0 %v2106
        %v2108 = vpop.xlane.xlu0 %2107
        %v2109 = vadd.f32 %v1983, %v1985
        %2110 = vadd.xlane.f32.xlu0 %v2109
        %v2111 = vpop.xlane.xlu0 %2110
        %v2112 = vadd.f32 %v1987, %v1989
        %2113 = vadd.xlane.f32.xlu0 %v2112
        %v2114 = vpop.xlane.xlu0 %2113
        %v2115 = vadd.f32 %v1991, %v1993
        %2116 = vadd.xlane.f32.xlu0 %v2115
        %v2117 = vpop.xlane.xlu0 %2116
        %v2118 = vadd.f32 %v1995, %v1997
        %2119 = vadd.xlane.f32.xlu0 %v2118
        %v2120 = vpop.xlane.xlu0 %2119
        %v2121 = vadd.f32 %v1999, %v2001
        %2122 = vadd.xlane.f32.xlu0 %v2121
        %v2123 = vpop.xlane.xlu0 %2122
        %v2124 = vadd.f32 %v2003, %v2005
        %2125 = vadd.xlane.f32.xlu0 %v2124
        %v2126 = vpop.xlane.xlu0 %2125
        %v2127 = vadd.f32 %v2007, %v2009
        %2128 = vadd.xlane.f32.xlu0 %v2127
        %v2129 = vpop.xlane.xlu0 %2128
        %v2130 = vadd.f32 %v2011, %v2013
        %2131 = vadd.xlane.f32.xlu0 %v2130
        %v2132 = vpop.xlane.xlu0 %2131
        %v2133 = vadd.f32 %v2015, %v2017
        %2134 = vadd.xlane.f32.xlu0 %v2133
        %v2135 = vpop.xlane.xlu0 %2134
        %v2136 = vadd.f32 %v2019, %v2021
        %2137 = vadd.xlane.f32.xlu0 %v2136
        %v2138 = vpop.xlane.xlu0 %2137
        %v2139 = vadd.f32 %v2023, %v2025
        %2140 = vadd.xlane.f32.xlu0 %v2139
        %v2141 = vpop.xlane.xlu0 %2140
        %v2142 = vadd.f32 %v2027, %v2029
        %2143 = vadd.xlane.f32.xlu0 %v2142
        %v2144 = vpop.xlane.xlu0 %2143
        %v2145 = vadd.f32 %v2031, %v2033
        %2146 = vadd.xlane.f32.xlu0 %v2145
        %v2147 = vpop.xlane.xlu0 %2146
        %v2148 = vadd.f32 %v2035, %v2037
        %2149 = vadd.xlane.f32.xlu0 %v2148
        %v2150 = vpop.xlane.xlu0 %2149
        %v2151 = vadd.f32 %v2039, %v2041
        %2152 = vadd.xlane.f32.xlu0 %v2151
        %v2153 = vpop.xlane.xlu0 %2152
        %v2154 = vadd.f32 %v2043, %v2045
        %2155 = vadd.xlane.f32.xlu0 %v2154
        %v2156 = vpop.xlane.xlu0 %2155
        %v2157 = vadd.f32 %v2047, %v2049
        %2158 = vadd.xlane.f32.xlu0 %v2157
        %v2159 = vpop.xlane.xlu0 %2158
        %v2160 = vadd.f32 %v2051, %v2053
        %2161 = vadd.xlane.f32.xlu0 %v2160
        %v2162 = vpop.xlane.xlu0 %2161
        %v2163 = vadd.f32 %v2055, %v2057
        %2164 = vadd.xlane.f32.xlu0 %v2163
        %v2165 = vpop.xlane.xlu0 %2164
        %v2166 = vadd.f32 %v2059, %v2061
        %2167 = vadd.xlane.f32.xlu0 %v2166
        %v2168 = vpop.xlane.xlu0 %2167
        %v2169 = vadd.f32 %v2063, %v2065
        %2170 = vadd.xlane.f32.xlu0 %v2169
        %v2171 = vpop.xlane.xlu0 %2170
        %v2172 = vadd.f32 %v2067, %v2069
        %2173 = vadd.xlane.f32.xlu0 %v2172
        %v2174 = vpop.xlane.xlu0 %2173
        %v2175 = vadd.f32 %v2071, %v2073
        %2176 = vadd.xlane.f32.xlu0 %v2175
        %v2177 = vpop.xlane.xlu0 %2176
        %v2178 = vadd.f32 %v2075, %v2077
        %2179 = vadd.xlane.f32.xlu0 %v2178
        %v2180 = vpop.xlane.xlu0 %2179
        %v2181 = vadd.f32 %v2079, %v2081
        %2182 = vadd.xlane.f32.xlu0 %v2181
        %v2183 = vpop.xlane.xlu0 %2182
        %v2184 = vadd.f32 %v2083, %v2085
        %2185 = vadd.xlane.f32.xlu0 %v2184
        %v2186 = vpop.xlane.xlu0 %2185
        %v2187 = vadd.f32 %v2087, %v2089
        %2188 = vadd.xlane.f32.xlu0 %v2187
        %v2189 = vpop.xlane.xlu0 %2188
        %v2190 = vadd.f32 %v2091, %v2093
        %2191 = vadd.xlane.f32.xlu0 %v2190
        %v2192 = vpop.xlane.xlu0 %2191
        %v2193 = vadd.f32 %v2095, %v2097
        %2194 = vadd.xlane.f32.xlu0 %v2193
        %v2195 = vpop.xlane.xlu0 %2194
        %v2196 = vadd.f32 %v2099, %v2101
        %2197 = vadd.xlane.f32.xlu0 %v2196
        %v2198 = vpop.xlane.xlu0 %2197
        %v2199 = vadd.f32 %v2103, %v2105
        %2200 = vadd.xlane.f32.xlu0 %v2199
        %v2201 = vpop.xlane.xlu0 %2200
        %v2202 = vpack.c.bf16 %v1983, %v1979
        %v2203 = vpack.c.bf16 %v1985, %v1981
        %v2204 = vpack.c.bf16 %v1991, %v1987
        %v2205 = vpack.c.bf16 %v1993, %v1989
        %v2206 = vpack.c.bf16 %v1999, %v1995
        %v2207 = vpack.c.bf16 %v2001, %v1997
        %v2208 = vpack.c.bf16 %v2007, %v2003
        %v2209 = vpack.c.bf16 %v2009, %v2005
        %v2210 = vpack.c.bf16 %v2015, %v2011
        %v2211 = vpack.c.bf16 %v2017, %v2013
        %v2212 = vpack.c.bf16 %v2023, %v2019
        %v2213 = vpack.c.bf16 %v2025, %v2021
        %v2214 = vpack.c.bf16 %v2031, %v2027
        %v2215 = vpack.c.bf16 %v2033, %v2029
        %v2216 = vpack.c.bf16 %v2039, %v2035
        %v2217 = vpack.c.bf16 %v2041, %v2037
        %v2218 = vpack.c.bf16 %v2047, %v2043
        %v2219 = vpack.c.bf16 %v2049, %v2045
        %v2220 = vpack.c.bf16 %v2055, %v2051
        %v2221 = vpack.c.bf16 %v2057, %v2053
        %v2222 = vpack.c.bf16 %v2063, %v2059
        %v2223 = vpack.c.bf16 %v2065, %v2061
        %v2224 = vpack.c.bf16 %v2071, %v2067
        %v2225 = vpack.c.bf16 %v2073, %v2069
        %v2226 = vpack.c.bf16 %v2079, %v2075
        %v2227 = vpack.c.bf16 %v2081, %v2077
        %v2228 = vpack.c.bf16 %v2087, %v2083
        %v2229 = vpack.c.bf16 %v2089, %v2085
        %v2230 = vpack.c.bf16 %v2095, %v2091
        %v2231 = vpack.c.bf16 %v2097, %v2093
        %v2232 = vpack.c.bf16 %v2103, %v2099
        %v2233 = vpack.c.bf16 %v2105, %v2101
        %2234 = vmatprep.subr.bf16.mxu0 0
        %2235 = vmatpush1.bf16.msra.mxu0 %v1520
        %2236 = vmatprep.subr.bf16.mxu0 0
        %2237 = vmatpush1.bf16.msra.mxu0 %v1519
        %2238 = vmatprep.subr.bf16.mxu0 0
        %2239 = vmatpush1.bf16.msra.mxu0 %v1518
        %2240 = vmatprep.subr.bf16.mxu0 0
        %2241 = vmatpush1.bf16.msra.mxu0 %v1517
        %2242 = vmatprep.subr.bf16.mxu0 0
        %2243 = vmatpush1.bf16.msra.mxu0 %v1516
        %2244 = vmatprep.subr.bf16.mxu0 0
        %2245 = vmatpush1.bf16.msra.mxu0 %v1515
        %2246 = vmatprep.subr.bf16.mxu0 0
        %2247 = vmatpush1.bf16.msra.mxu0 %v1514
        %2248 = vmatprep.subr.bf16.mxu0 0
        %2249 = vmatpush1.bf16.msra.mxu0 %v1513
        %2250 = vmatprep.subr.bf16.mxu0 0
        %2251 = vmatpush2.bf16.msra.mxu0 %v1528
        %2252 = vmatprep.subr.bf16.mxu0 0
        %2253 = vmatpush2.bf16.msra.mxu0 %v1527
        %2254 = vmatprep.subr.bf16.mxu0 0
        %2255 = vmatpush2.bf16.msra.mxu0 %v1526
        %2256 = vmatprep.subr.bf16.mxu0 0
        %2257 = vmatpush2.bf16.msra.mxu0 %v1525
        %2258 = vmatprep.subr.bf16.mxu0 0
        %2259 = vmatpush2.bf16.msra.mxu0 %v1524
        %2260 = vmatprep.subr.bf16.mxu0 0
        %2261 = vmatpush2.bf16.msra.mxu0 %v1523
        %2262 = vmatprep.subr.bf16.mxu0 0
        %2263 = vmatpush2.bf16.msra.mxu0 %v1522
        %2264 = vmatprep.subr.bf16.mxu0 0
        %2265 = vmatpush2.bf16.msra.mxu0 %v1521
        %2266 = vmatprep.mubr.bf16.mxu0 %v2203
        %2267 = vmatmul.mubr.bf16.gmra.mxu0 %v2202
        %v2268 = vpop.f32.mrf.mxu0
        %v2269 = vadd.f32 0.0, %v2268
        %v2270 = vpop.f32.mrf.mxu0
        %v2271 = vpop.f32.mrf.mxu0
        %v2272 = vadd.f32 0.0, %v2271
        %v2273 = vpop.f32.mrf.mxu0
        %2274 = vmatprep.mubr.bf16.mxu0 %v2205
        %2275 = vmatmul.mubr.bf16.gmra.mxu0 %v2204
        %v2276 = vpop.f32.mrf.mxu0
        %v2277 = vadd.f32 0.0, %v2276
        %v2278 = vpop.f32.mrf.mxu0
        %v2279 = vpop.f32.mrf.mxu0
        %v2280 = vadd.f32 0.0, %v2279
        %v2281 = vpop.f32.mrf.mxu0
        %2282 = vmatprep.mubr.bf16.mxu0 %v2207
        %2283 = vmatmul.mubr.bf16.gmra.mxu0 %v2206
        %v2284 = vpop.f32.mrf.mxu0
        %v2285 = vadd.f32 0.0, %v2284
        %v2286 = vpop.f32.mrf.mxu0
        %v2287 = vpop.f32.mrf.mxu0
        %v2288 = vadd.f32 0.0, %v2287
        %v2289 = vpop.f32.mrf.mxu0
        %2290 = vmatprep.mubr.bf16.mxu0 %v2209
        %2291 = vmatmul.mubr.bf16.gmra.mxu0 %v2208
        %v2292 = vpop.f32.mrf.mxu0
        %v2293 = vadd.f32 0.0, %v2292
        %v2294 = vpop.f32.mrf.mxu0
        %v2295 = vpop.f32.mrf.mxu0
        %v2296 = vadd.f32 0.0, %v2295
        %v2297 = vpop.f32.mrf.mxu0
        %2298 = vmatprep.mubr.bf16.mxu0 %v2211
        %2299 = vmatmul.mubr.bf16.gmra.mxu0 %v2210
        %v2300 = vpop.f32.mrf.mxu0
        %v2301 = vadd.f32 0.0, %v2300
        %v2302 = vpop.f32.mrf.mxu0
        %v2303 = vpop.f32.mrf.mxu0
        %v2304 = vadd.f32 0.0, %v2303
        %v2305 = vpop.f32.mrf.mxu0
        %2306 = vmatprep.mubr.bf16.mxu0 %v2213
        %2307 = vmatmul.mubr.bf16.gmra.mxu0 %v2212
        %v2308 = vpop.f32.mrf.mxu0
        %v2309 = vadd.f32 0.0, %v2308
        %v2310 = vpop.f32.mrf.mxu0
        %v2311 = vpop.f32.mrf.mxu0
        %v2312 = vadd.f32 0.0, %v2311
        %v2313 = vpop.f32.mrf.mxu0
        %2314 = vmatprep.mubr.bf16.mxu0 %v2215
        %2315 = vmatmul.mubr.bf16.gmra.mxu0 %v2214
        %v2316 = vpop.f32.mrf.mxu0
        %v2317 = vadd.f32 0.0, %v2316
        %v2318 = vpop.f32.mrf.mxu0
        %v2319 = vpop.f32.mrf.mxu0
        %v2320 = vadd.f32 0.0, %v2319
        %v2321 = vpop.f32.mrf.mxu0
        %2322 = vmatprep.mubr.bf16.mxu0 %v2217
        %2323 = vmatmul.mubr.bf16.gmra.mxu0 %v2216
        %v2324 = vpop.f32.mrf.mxu0
        %v2325 = vadd.f32 0.0, %v2324
        %v2326 = vpop.f32.mrf.mxu0
        %v2327 = vpop.f32.mrf.mxu0
        %v2328 = vadd.f32 0.0, %v2327
        %v2329 = vpop.f32.mrf.mxu0
        %2330 = vmatprep.mubr.bf16.mxu0 %v2219
        %2331 = vmatmul.mubr.bf16.gmra.mxu0 %v2218
        %v2332 = vpop.f32.mrf.mxu0
        %v2333 = vadd.f32 0.0, %v2332
        %v2334 = vpop.f32.mrf.mxu0
        %v2335 = vpop.f32.mrf.mxu0
        %v2336 = vadd.f32 0.0, %v2335
        %v2337 = vpop.f32.mrf.mxu0
        %2338 = vmatprep.mubr.bf16.mxu0 %v2221
        %2339 = vmatmul.mubr.bf16.gmra.mxu0 %v2220
        %v2340 = vpop.f32.mrf.mxu0
        %v2341 = vadd.f32 0.0, %v2340
        %v2342 = vpop.f32.mrf.mxu0
        %v2343 = vpop.f32.mrf.mxu0
        %v2344 = vadd.f32 0.0, %v2343
        %v2345 = vpop.f32.mrf.mxu0
        %2346 = vmatprep.mubr.bf16.mxu0 %v2223
        %2347 = vmatmul.mubr.bf16.gmra.mxu0 %v2222
        %v2348 = vpop.f32.mrf.mxu0
        %v2349 = vadd.f32 0.0, %v2348
        %v2350 = vpop.f32.mrf.mxu0
        %v2351 = vpop.f32.mrf.mxu0
        %v2352 = vadd.f32 0.0, %v2351
        %v2353 = vpop.f32.mrf.mxu0
        %2354 = vmatprep.mubr.bf16.mxu0 %v2225
        %2355 = vmatmul.mubr.bf16.gmra.mxu0 %v2224
        %v2356 = vpop.f32.mrf.mxu0
        %v2357 = vadd.f32 0.0, %v2356
        %v2358 = vpop.f32.mrf.mxu0
        %v2359 = vpop.f32.mrf.mxu0
        %v2360 = vadd.f32 0.0, %v2359
        %v2361 = vpop.f32.mrf.mxu0
        %2362 = vmatprep.mubr.bf16.mxu0 %v2227
        %2363 = vmatmul.mubr.bf16.gmra.mxu0 %v2226
        %v2364 = vpop.f32.mrf.mxu0
        %v2365 = vadd.f32 0.0, %v2364
        %v2366 = vpop.f32.mrf.mxu0
        %v2367 = vpop.f32.mrf.mxu0
        %v2368 = vadd.f32 0.0, %v2367
        %v2369 = vpop.f32.mrf.mxu0
        %2370 = vmatprep.mubr.bf16.mxu0 %v2229
        %2371 = vmatmul.mubr.bf16.gmra.mxu0 %v2228
        %v2372 = vpop.f32.mrf.mxu0
        %v2373 = vadd.f32 0.0, %v2372
        %v2374 = vpop.f32.mrf.mxu0
        %v2375 = vpop.f32.mrf.mxu0
        %v2376 = vadd.f32 0.0, %v2375
        %v2377 = vpop.f32.mrf.mxu0
        %2378 = vmatprep.mubr.bf16.mxu0 %v2231
        %2379 = vmatmul.mubr.bf16.gmra.mxu0 %v2230
        %v2380 = vpop.f32.mrf.mxu0
        %v2381 = vadd.f32 0.0, %v2380
        %v2382 = vpop.f32.mrf.mxu0
        %v2383 = vpop.f32.mrf.mxu0
        %v2384 = vadd.f32 0.0, %v2383
        %v2385 = vpop.f32.mrf.mxu0
        %2386 = vmatprep.mubr.bf16.mxu0 %v2233
        %2387 = vmatmul.mubr.bf16.gmra.mxu0 %v2232
        %v2388 = vpop.f32.mrf.mxu0
        %v2389 = vadd.f32 0.0, %v2388
        %v2390 = vpop.f32.mrf.mxu0
        %v2391 = vpop.f32.mrf.mxu0
        %v2392 = vadd.f32 0.0, %v2391
        %v2393 = vpop.f32.mrf.mxu0
        %2394 = vdwg.mxu0
        %v2395 = vrcp.pop %v2108
        %v2396 = vmul.f32 %v2269, %v2395
        %v2397 = vrcp.pop %v2111
        %v2398 = vmul.f32 %v2272, %v2397
        %v2399 = vrcp.pop %v2114
        %v2400 = vmul.f32 %v2277, %v2399
        %v2401 = vrcp.pop %v2117
        %v2402 = vmul.f32 %v2280, %v2401
        %v2403 = vrcp.pop %v2120
        %v2404 = vmul.f32 %v2285, %v2403
        %v2405 = vrcp.pop %v2123
        %v2406 = vmul.f32 %v2288, %v2405
        %v2407 = vrcp.pop %v2126
        %v2408 = vmul.f32 %v2293, %v2407
        %v2409 = vrcp.pop %v2129
        %v2410 = vmul.f32 %v2296, %v2409
        %v2411 = vrcp.pop %v2132
        %v2412 = vmul.f32 %v2301, %v2411
        %v2413 = vrcp.pop %v2135
        %v2414 = vmul.f32 %v2304, %v2413
        %v2415 = vrcp.pop %v2138
        %v2416 = vmul.f32 %v2309, %v2415
        %v2417 = vrcp.pop %v2141
        %v2418 = vmul.f32 %v2312, %v2417
        %v2419 = vrcp.pop %v2144
        %v2420 = vmul.f32 %v2317, %v2419
        %v2421 = vrcp.pop %v2147
        %v2422 = vmul.f32 %v2320, %v2421
        %v2423 = vrcp.pop %v2150
        %v2424 = vmul.f32 %v2325, %v2423
        %v2425 = vrcp.pop %v2153
        %v2426 = vmul.f32 %v2328, %v2425
        %v2427 = vrcp.pop %v2156
        %v2428 = vmul.f32 %v2333, %v2427
        %v2429 = vrcp.pop %v2159
        %v2430 = vmul.f32 %v2336, %v2429
        %v2431 = vrcp.pop %v2162
        %v2432 = vmul.f32 %v2341, %v2431
        %v2433 = vrcp.pop %v2165
        %v2434 = vmul.f32 %v2344, %v2433
        %v2435 = vrcp.pop %v2168
        %v2436 = vmul.f32 %v2349, %v2435
        %v2437 = vrcp.pop %v2171
        %v2438 = vmul.f32 %v2352, %v2437
        %v2439 = vrcp.pop %v2174
        %v2440 = vmul.f32 %v2357, %v2439
        %v2441 = vrcp.pop %v2177
        %v2442 = vmul.f32 %v2360, %v2441
        %v2443 = vrcp.pop %v2180
        %v2444 = vmul.f32 %v2365, %v2443
        %v2445 = vrcp.pop %v2183
        %v2446 = vmul.f32 %v2368, %v2445
        %v2447 = vrcp.pop %v2186
        %v2448 = vmul.f32 %v2373, %v2447
        %v2449 = vrcp.pop %v2189
        %v2450 = vmul.f32 %v2376, %v2449
        %v2451 = vrcp.pop %v2192
        %v2452 = vmul.f32 %v2381, %v2451
        %v2453 = vrcp.pop %v2195
        %v2454 = vmul.f32 %v2384, %v2453
        %v2455 = vrcp.pop %v2198
        %v2456 = vmul.f32 %v2389, %v2455
        %v2457 = vrcp.pop %v2201
        %v2458 = vmul.f32 %v2392, %v2457
        %v2459 = vpack.c.bf16 %v2398, %v2396
        %v2460 = vpack.c.bf16 %v2402, %v2400
        %v2461 = vpack.c.bf16 %v2406, %v2404
        %v2462 = vpack.c.bf16 %v2410, %v2408
        %v2463 = vpack.c.bf16 %v2414, %v2412
        %v2464 = vpack.c.bf16 %v2418, %v2416
        %v2465 = vpack.c.bf16 %v2422, %v2420
        %v2466 = vpack.c.bf16 %v2426, %v2424
        %v2467 = vpack.c.bf16 %v2430, %v2428
        %v2468 = vpack.c.bf16 %v2434, %v2432
        %v2469 = vpack.c.bf16 %v2438, %v2436
        %v2470 = vpack.c.bf16 %v2442, %v2440
        %v2471 = vpack.c.bf16 %v2446, %v2444
        %v2472 = vpack.c.bf16 %v2450, %v2448
        %v2473 = vpack.c.bf16 %v2454, %v2452
        %v2474 = vpack.c.bf16 %v2458, %v2456
        %v2475 = vld [vmem:[%s3] sm:$0xf]
        %v2476 = vld [vmem:[%s4] sm:$0x1]
        %v2478 = vlaneseq
        %v2479 = vshrl.u32 %v2478, 7
        %v2480 = vsub.s32 0, %v2479
        %v2481 = vrot.slane %v2476, %v2480
        %v2484 = vsel %vm919, %v2459, 0
        %v2487 = vsel %vm919, %v2460, 0
        %v2490 = vsel %vm919, %v2461, 0
        %v2493 = vsel %vm919, %v2462, 0
        %v2496 = vsel %vm919, %v2463, 0
        %v2499 = vsel %vm919, %v2464, 0
        %v2502 = vsel %vm919, %v2465, 0
        %v2505 = vsel %vm919, %v2466, 0
        %v2508 = vsel %vm919, %v2467, 0
        %v2511 = vsel %vm919, %v2468, 0
        %v2514 = vsel %vm919, %v2469, 0
        %v2517 = vsel %vm919, %v2470, 0
        %v2520 = vsel %vm919, %v2471, 0
        %v2523 = vsel %vm919, %v2472, 0
        %v2526 = vsel %vm919, %v2473, 0
        %v2529 = vsel %vm919, %v2474, 0
        %v2532 = vsel %vm968, %v2475, 0
        %2534 = vmatprep.subr.bf16.mxu0 0
        %2535 = vmatpush1.bf16.msra.mxu0 0
        %2536 = vmatprep.subr.bf16.mxu0 0
        %2537 = vmatpush1.bf16.msra.mxu0 0
        %2538 = vmatprep.subr.bf16.mxu0 0
        %2539 = vmatpush1.bf16.msra.mxu0 0
        %2540 = vmatprep.subr.bf16.mxu0 0
        %2541 = vmatpush1.bf16.msra.mxu0 0
        %2542 = vmatprep.subr.bf16.mxu0 0
        %2543 = vmatpush1.bf16.msra.mxu0 0
        %2544 = vmatprep.subr.bf16.mxu0 0
        %2545 = vmatpush1.bf16.msra.mxu0 0
        %2546 = vmatprep.subr.bf16.mxu0 0
        %2547 = vmatpush1.bf16.msra.mxu0 0
        %2548 = vmatprep.subr.bf16.mxu0 0
        %2549 = vmatpush1.bf16.msra.mxu0 %v2532
        %2550 = vmatprep.subr.bf16.mxu0 0
        %2551 = vmatpush2.bf16.msra.mxu0 0
        %2552 = vmatprep.subr.bf16.mxu0 0
        %2553 = vmatpush2.bf16.msra.mxu0 0
        %2554 = vmatprep.subr.bf16.mxu0 0
        %2555 = vmatpush2.bf16.msra.mxu0 0
        %2556 = vmatprep.subr.bf16.mxu0 0
        %2557 = vmatpush2.bf16.msra.mxu0 0
        %2558 = vmatprep.subr.bf16.mxu0 0
        %2559 = vmatpush2.bf16.msra.mxu0 0
        %2560 = vmatprep.subr.bf16.mxu0 0
        %2561 = vmatpush2.bf16.msra.mxu0 0
        %2562 = vmatprep.subr.bf16.mxu0 0
        %2563 = vmatpush2.bf16.msra.mxu0 0
        %2564 = vmatprep.subr.bf16.mxu0 0
        %2565 = vmatpush2.bf16.msra.mxu0 0
        %2566 = vmatprep.mubr.bf16.mxu0 0
        %2567 = vmatmul.mubr.bf16.gmra.mxu0 %v2484
        %v2568 = vpop.f32.mrf.mxu0
        %v2569 = vadd.f32 %v2481, %v2568
        %v2570 = vpop.f32.mrf.mxu0
        %v2571 = vpop.f32.mrf.mxu0
        %v2572 = vadd.f32 %v2481, %v2571
        %v2573 = vpop.f32.mrf.mxu0
        %2574 = vmatprep.mubr.bf16.mxu0 0
        %2575 = vmatmul.mubr.bf16.gmra.mxu0 %v2487
        %v2576 = vpop.f32.mrf.mxu0
        %v2577 = vadd.f32 %v2481, %v2576
        %v2578 = vpop.f32.mrf.mxu0
        %v2579 = vpop.f32.mrf.mxu0
        %v2580 = vadd.f32 %v2481, %v2579
        %v2581 = vpop.f32.mrf.mxu0
        %2582 = vmatprep.mubr.bf16.mxu0 0
        %2583 = vmatmul.mubr.bf16.gmra.mxu0 %v2490
        %v2584 = vpop.f32.mrf.mxu0
        %v2585 = vadd.f32 %v2481, %v2584
        %v2586 = vpop.f32.mrf.mxu0
        %v2587 = vpop.f32.mrf.mxu0
        %v2588 = vadd.f32 %v2481, %v2587
        %v2589 = vpop.f32.mrf.mxu0
        %2590 = vmatprep.mubr.bf16.mxu0 0
        %2591 = vmatmul.mubr.bf16.gmra.mxu0 %v2493
        %v2592 = vpop.f32.mrf.mxu0
        %v2593 = vadd.f32 %v2481, %v2592
        %v2594 = vpop.f32.mrf.mxu0
        %v2595 = vpop.f32.mrf.mxu0
        %v2596 = vadd.f32 %v2481, %v2595
        %v2597 = vpop.f32.mrf.mxu0
        %2598 = vmatprep.mubr.bf16.mxu0 0
        %2599 = vmatmul.mubr.bf16.gmra.mxu0 %v2496
        %v2600 = vpop.f32.mrf.mxu0
        %v2601 = vadd.f32 %v2481, %v2600
        %v2602 = vpop.f32.mrf.mxu0
        %v2603 = vpop.f32.mrf.mxu0
        %v2604 = vadd.f32 %v2481, %v2603
        %v2605 = vpop.f32.mrf.mxu0
        %2606 = vmatprep.mubr.bf16.mxu0 0
        %2607 = vmatmul.mubr.bf16.gmra.mxu0 %v2499
        %v2608 = vpop.f32.mrf.mxu0
        %v2609 = vadd.f32 %v2481, %v2608
        %v2610 = vpop.f32.mrf.mxu0
        %v2611 = vpop.f32.mrf.mxu0
        %v2612 = vadd.f32 %v2481, %v2611
        %v2613 = vpop.f32.mrf.mxu0
        %2614 = vmatprep.mubr.bf16.mxu0 0
        %2615 = vmatmul.mubr.bf16.gmra.mxu0 %v2502
        %v2616 = vpop.f32.mrf.mxu0
        %v2617 = vadd.f32 %v2481, %v2616
        %v2618 = vpop.f32.mrf.mxu0
        %v2619 = vpop.f32.mrf.mxu0
        %v2620 = vadd.f32 %v2481, %v2619
        %v2621 = vpop.f32.mrf.mxu0
        %2622 = vmatprep.mubr.bf16.mxu0 0
        %2623 = vmatmul.mubr.bf16.gmra.mxu0 %v2505
        %v2624 = vpop.f32.mrf.mxu0
        %v2625 = vadd.f32 %v2481, %v2624
        %v2626 = vpop.f32.mrf.mxu0
        %v2627 = vpop.f32.mrf.mxu0
        %v2628 = vadd.f32 %v2481, %v2627
        %v2629 = vpop.f32.mrf.mxu0
        %2630 = vmatprep.mubr.bf16.mxu0 0
        %2631 = vmatmul.mubr.bf16.gmra.mxu0 %v2508
        %v2632 = vpop.f32.mrf.mxu0
        %v2633 = vadd.f32 %v2481, %v2632
        %v2634 = vpop.f32.mrf.mxu0
        %v2635 = vpop.f32.mrf.mxu0
        %v2636 = vadd.f32 %v2481, %v2635
        %v2637 = vpop.f32.mrf.mxu0
        %2638 = vmatprep.mubr.bf16.mxu0 0
        %2639 = vmatmul.mubr.bf16.gmra.mxu0 %v2511
        %v2640 = vpop.f32.mrf.mxu0
        %v2641 = vadd.f32 %v2481, %v2640
        %v2642 = vpop.f32.mrf.mxu0
        %v2643 = vpop.f32.mrf.mxu0
        %v2644 = vadd.f32 %v2481, %v2643
        %v2645 = vpop.f32.mrf.mxu0
        %2646 = vmatprep.mubr.bf16.mxu0 0
        %2647 = vmatmul.mubr.bf16.gmra.mxu0 %v2514
        %v2648 = vpop.f32.mrf.mxu0
        %v2649 = vadd.f32 %v2481, %v2648
        %v2650 = vpop.f32.mrf.mxu0
        %v2651 = vpop.f32.mrf.mxu0
        %v2652 = vadd.f32 %v2481, %v2651
        %v2653 = vpop.f32.mrf.mxu0
        %2654 = vmatprep.mubr.bf16.mxu0 0
        %2655 = vmatmul.mubr.bf16.gmra.mxu0 %v2517
        %v2656 = vpop.f32.mrf.mxu0
        %v2657 = vadd.f32 %v2481, %v2656
        %v2658 = vpop.f32.mrf.mxu0
        %v2659 = vpop.f32.mrf.mxu0
        %v2660 = vadd.f32 %v2481, %v2659
        %v2661 = vpop.f32.mrf.mxu0
        %2662 = vmatprep.mubr.bf16.mxu0 0
        %2663 = vmatmul.mubr.bf16.gmra.mxu0 %v2520
        %v2664 = vpop.f32.mrf.mxu0
        %v2665 = vadd.f32 %v2481, %v2664
        %v2666 = vpop.f32.mrf.mxu0
        %v2667 = vpop.f32.mrf.mxu0
        %v2668 = vadd.f32 %v2481, %v2667
        %v2669 = vpop.f32.mrf.mxu0
        %2670 = vmatprep.mubr.bf16.mxu0 0
        %2671 = vmatmul.mubr.bf16.gmra.mxu0 %v2523
        %v2672 = vpop.f32.mrf.mxu0
        %v2673 = vadd.f32 %v2481, %v2672
        %v2674 = vpop.f32.mrf.mxu0
        %v2675 = vpop.f32.mrf.mxu0
        %v2676 = vadd.f32 %v2481, %v2675
        %v2677 = vpop.f32.mrf.mxu0
        %2678 = vmatprep.mubr.bf16.mxu0 0
        %2679 = vmatmul.mubr.bf16.gmra.mxu0 %v2526
        %v2680 = vpop.f32.mrf.mxu0
        %v2681 = vadd.f32 %v2481, %v2680
        %v2682 = vpop.f32.mrf.mxu0
        %v2683 = vpop.f32.mrf.mxu0
        %v2684 = vadd.f32 %v2481, %v2683
        %v2685 = vpop.f32.mrf.mxu0
        %2686 = vmatprep.mubr.bf16.mxu0 0
        %2687 = vmatmul.mubr.bf16.gmra.mxu0 %v2529
        %v2688 = vpop.f32.mrf.mxu0
        %v2689 = vadd.f32 %v2481, %v2688
        %v2690 = vpop.f32.mrf.mxu0
        %v2691 = vpop.f32.mrf.mxu0
        %v2692 = vadd.f32 %v2481, %v2691
        %v2693 = vpop.f32.mrf.mxu0
        %2694 = vdwg.mxu0
        %2695 = vst.msk [vmem:[%s792] sm:$0xff] %vm919, %v2569
        %2696 = vst.msk [vmem:[%s792 + $0x8] sm:$0xff] %vm919, %v2572
        %2697 = vst.msk [vmem:[%s792 + $0x10] sm:$0xff] %vm919, %v2577
        %2698 = vst.msk [vmem:[%s792 + $0x18] sm:$0xff] %vm919, %v2580
        %2699 = vst.msk [vmem:[%s792 + $0x20] sm:$0xff] %vm919, %v2585
        %2700 = vst.msk [vmem:[%s792 + $0x28] sm:$0xff] %vm919, %v2588
        %2701 = vst.msk [vmem:[%s792 + $0x30] sm:$0xff] %vm919, %v2593
        %2702 = vst.msk [vmem:[%s792 + $0x38] sm:$0xff] %vm919, %v2596
        %2703 = vst.msk [vmem:[%s792 + $0x40] sm:$0xff] %vm919, %v2601
        %2704 = vst.msk [vmem:[%s792 + $0x48] sm:$0xff] %vm919, %v2604
        %2705 = vst.msk [vmem:[%s792 + $0x50] sm:$0xff] %vm919, %v2609
        %2706 = vst.msk [vmem:[%s792 + $0x58] sm:$0xff] %vm919, %v2612
        %2707 = vst.msk [vmem:[%s792 + $0x60] sm:$0xff] %vm919, %v2617
        %2708 = vst.msk [vmem:[%s792 + $0x68] sm:$0xff] %vm919, %v2620
        %2709 = vst.msk [vmem:[%s792 + $0x70] sm:$0xff] %vm919, %v2625
        %2710 = vst.msk [vmem:[%s792 + $0x78] sm:$0xff] %vm919, %v2628
        %2711 = vst.msk [vmem:[%s792 + $0x80] sm:$0xff] %vm919, %v2633
        %2712 = vst.msk [vmem:[%s792 + $0x88] sm:$0xff] %vm919, %v2636
        %2713 = vst.msk [vmem:[%s792 + $0x90] sm:$0xff] %vm919, %v2641
        %2714 = vst.msk [vmem:[%s792 + $0x98] sm:$0xff] %vm919, %v2644
        %2715 = vst.msk [vmem:[%s792 + $0xa0] sm:$0xff] %vm919, %v2649
        %2716 = vst.msk [vmem:[%s792 + $0xa8] sm:$0xff] %vm919, %v2652
        %2717 = vst.msk [vmem:[%s792 + $0xb0] sm:$0xff] %vm919, %v2657
        %2718 = vst.msk [vmem:[%s792 + $0xb8] sm:$0xff] %vm919, %v2660
        %2719 = vst.msk [vmem:[%s792 + $0xc0] sm:$0xff] %vm919, %v2665
        %2720 = vst.msk [vmem:[%s792 + $0xc8] sm:$0xff] %vm919, %v2668
        %2721 = vst.msk [vmem:[%s792 + $0xd0] sm:$0xff] %vm919, %v2673
        %2722 = vst.msk [vmem:[%s792 + $0xd8] sm:$0xff] %vm919, %v2676
        %2723 = vst.msk [vmem:[%s792 + $0xe0] sm:$0xff] %vm919, %v2681
        %2724 = vst.msk [vmem:[%s792 + $0xe8] sm:$0xff] %vm919, %v2684
        %2725 = vst.msk [vmem:[%s792 + $0xf0] sm:$0xff] %vm919, %v2689
        %2726 = vst.msk [vmem:[%s792 + $0xf8] sm:$0xff] %vm919, %v2692
        %v2727 = vpack.c.bf16 %v2572, %v2569
        %v2728 = vpack.c.bf16 %v2580, %v2577
        %v2729 = vpack.c.bf16 %v2588, %v2585
        %v2730 = vpack.c.bf16 %v2596, %v2593
        %v2731 = vpack.c.bf16 %v2604, %v2601
        %v2732 = vpack.c.bf16 %v2612, %v2609
        %v2733 = vpack.c.bf16 %v2620, %v2617
        %v2734 = vpack.c.bf16 %v2628, %v2625
        %v2735 = vpack.c.bf16 %v2636, %v2633
        %v2736 = vpack.c.bf16 %v2644, %v2641
        %v2737 = vpack.c.bf16 %v2652, %v2649
        %v2738 = vpack.c.bf16 %v2660, %v2657
        %v2739 = vpack.c.bf16 %v2668, %v2665
        %v2740 = vpack.c.bf16 %v2676, %v2673
        %v2741 = vpack.c.bf16 %v2684, %v2681
        %v2742 = vpack.c.bf16 %v2692, %v2689
        %v2743 = vld [vmem:[%s5] sm:$0xff]
        %v2744 = vld [vmem:[%s5 + $0x8] sm:$0xff]
        %v2745 = vld [vmem:[%s5 + $0x10] sm:$0xff]
        %v2746 = vld [vmem:[%s5 + $0x18] sm:$0xff]
        %v2747 = vld [vmem:[%s5 + $0x20] sm:$0xff]
        %v2748 = vld [vmem:[%s5 + $0x28] sm:$0xff]
        %v2749 = vld [vmem:[%s5 + $0x30] sm:$0xff]
        %v2750 = vld [vmem:[%s5 + $0x38] sm:$0xff]
        %v2751 = vld [vmem:[%s5 + $0x40] sm:$0xff]
        %v2752 = vld [vmem:[%s5 + $0x48] sm:$0xff]
        %v2753 = vld [vmem:[%s5 + $0x50] sm:$0xff]
        %v2754 = vld [vmem:[%s5 + $0x58] sm:$0xff]
        %v2755 = vld [vmem:[%s5 + $0x60] sm:$0xff]
        %v2756 = vld [vmem:[%s5 + $0x68] sm:$0xff]
        %v2757 = vld [vmem:[%s5 + $0x70] sm:$0xff]
        %v2758 = vld [vmem:[%s5 + $0x78] sm:$0xff]
        %v2759 = vld [vmem:[%s5 + $0x80] sm:$0xff]
        %v2760 = vld [vmem:[%s5 + $0x88] sm:$0xff]
        %v2761 = vld [vmem:[%s5 + $0x90] sm:$0xff]
        %v2762 = vld [vmem:[%s5 + $0x98] sm:$0xff]
        %v2763 = vld [vmem:[%s5 + $0xa0] sm:$0xff]
        %v2764 = vld [vmem:[%s5 + $0xa8] sm:$0xff]
        %v2765 = vld [vmem:[%s5 + $0xb0] sm:$0xff]
        %v2766 = vld [vmem:[%s5 + $0xb8] sm:$0xff]
        %v2767 = vld [vmem:[%s5 + $0xc0] sm:$0xff]
        %v2768 = vld [vmem:[%s5 + $0xc8] sm:$0xff]
        %v2769 = vld [vmem:[%s5 + $0xd0] sm:$0xff]
        %v2770 = vld [vmem:[%s5 + $0xd8] sm:$0xff]
        %v2771 = vld [vmem:[%s5 + $0xe0] sm:$0xff]
        %v2772 = vld [vmem:[%s5 + $0xe8] sm:$0xff]
        %v2773 = vld [vmem:[%s5 + $0xf0] sm:$0xff]
        %v2774 = vld [vmem:[%s5 + $0xf8] sm:$0xff]
        %v2807 = vunpack.c.l.b16 %v2743
        %v2808 = vunpack.c.h.b16 %v2743
        %v2809 = vunpack.c.l.b16 %v2744
        %v2810 = vunpack.c.h.b16 %v2744
        %v2811 = vunpack.c.l.b16 %v2745
        %v2812 = vunpack.c.h.b16 %v2745
        %v2813 = vunpack.c.l.b16 %v2746
        %v2814 = vunpack.c.h.b16 %v2746
        %v2815 = vunpack.c.l.b16 %v2747
        %v2816 = vunpack.c.h.b16 %v2747
        %v2817 = vunpack.c.l.b16 %v2748
        %v2818 = vunpack.c.h.b16 %v2748
        %v2819 = vunpack.c.l.b16 %v2749
        %v2820 = vunpack.c.h.b16 %v2749
        %v2821 = vunpack.c.l.b16 %v2750
        %v2822 = vunpack.c.h.b16 %v2750
        %v2823 = vunpack.c.l.b16 %v2751
        %v2824 = vunpack.c.h.b16 %v2751
        %v2825 = vunpack.c.l.b16 %v2752
        %v2826 = vunpack.c.h.b16 %v2752
        %v2827 = vunpack.c.l.b16 %v2753
        %v2828 = vunpack.c.h.b16 %v2753
        %v2829 = vunpack.c.l.b16 %v2754
        %v2830 = vunpack.c.h.b16 %v2754
        %v2831 = vunpack.c.l.b16 %v2755
        %v2832 = vunpack.c.h.b16 %v2755
        %v2833 = vunpack.c.l.b16 %v2756
        %v2834 = vunpack.c.h.b16 %v2756
        %v2835 = vunpack.c.l.b16 %v2757
        %v2836 = vunpack.c.h.b16 %v2757
        %v2837 = vunpack.c.l.b16 %v2758
        %v2838 = vunpack.c.h.b16 %v2758
        %v2839 = vunpack.c.l.b16 %v2759
        %v2840 = vunpack.c.h.b16 %v2759
        %v2841 = vunpack.c.l.b16 %v2760
        %v2842 = vunpack.c.h.b16 %v2760
        %v2843 = vunpack.c.l.b16 %v2761
        %v2844 = vunpack.c.h.b16 %v2761
        %v2845 = vunpack.c.l.b16 %v2762
        %v2846 = vunpack.c.h.b16 %v2762
        %v2847 = vunpack.c.l.b16 %v2763
        %v2848 = vunpack.c.h.b16 %v2763
        %v2849 = vunpack.c.l.b16 %v2764
        %v2850 = vunpack.c.h.b16 %v2764
        %v2851 = vunpack.c.l.b16 %v2765
        %v2852 = vunpack.c.h.b16 %v2765
        %v2853 = vunpack.c.l.b16 %v2766
        %v2854 = vunpack.c.h.b16 %v2766
        %v2855 = vunpack.c.l.b16 %v2767
        %v2856 = vunpack.c.h.b16 %v2767
        %v2857 = vunpack.c.l.b16 %v2768
        %v2858 = vunpack.c.h.b16 %v2768
        %v2859 = vunpack.c.l.b16 %v2769
        %v2860 = vunpack.c.h.b16 %v2769
        %v2861 = vunpack.c.l.b16 %v2770
        %v2862 = vunpack.c.h.b16 %v2770
        %v2863 = vunpack.c.l.b16 %v2771
        %v2864 = vunpack.c.h.b16 %v2771
        %v2865 = vunpack.c.l.b16 %v2772
        %v2866 = vunpack.c.h.b16 %v2772
        %v2867 = vunpack.c.l.b16 %v2773
        %v2868 = vunpack.c.h.b16 %v2773
        %v2869 = vunpack.c.l.b16 %v2774
        %v2870 = vunpack.c.h.b16 %v2774
        %v2871 = vpack.c.b16 %v2809, %v2807
        %v2872 = vpack.c.b16 %v2810, %v2808
        %v2873 = vpack.c.b16 %v2813, %v2811
        %v2874 = vpack.c.b16 %v2814, %v2812
        %v2875 = vpack.c.b16 %v2817, %v2815
        %v2876 = vpack.c.b16 %v2818, %v2816
        %v2877 = vpack.c.b16 %v2821, %v2819
        %v2878 = vpack.c.b16 %v2822, %v2820
        %v2879 = vpack.c.b16 %v2825, %v2823
        %v2880 = vpack.c.b16 %v2826, %v2824
        %v2881 = vpack.c.b16 %v2829, %v2827
        %v2882 = vpack.c.b16 %v2830, %v2828
        %v2883 = vpack.c.b16 %v2833, %v2831
        %v2884 = vpack.c.b16 %v2834, %v2832
        %v2885 = vpack.c.b16 %v2837, %v2835
        %v2886 = vpack.c.b16 %v2838, %v2836
        %v2887 = vpack.c.b16 %v2841, %v2839
        %v2888 = vpack.c.b16 %v2842, %v2840
        %v2889 = vpack.c.b16 %v2845, %v2843
        %v2890 = vpack.c.b16 %v2846, %v2844
        %v2891 = vpack.c.b16 %v2849, %v2847
        %v2892 = vpack.c.b16 %v2850, %v2848
        %v2893 = vpack.c.b16 %v2853, %v2851
        %v2894 = vpack.c.b16 %v2854, %v2852
        %v2895 = vpack.c.b16 %v2857, %v2855
        %v2896 = vpack.c.b16 %v2858, %v2856
        %v2897 = vpack.c.b16 %v2861, %v2859
        %v2898 = vpack.c.b16 %v2862, %v2860
        %v2899 = vpack.c.b16 %v2865, %v2863
        %v2900 = vpack.c.b16 %v2866, %v2864
        %v2901 = vpack.c.b16 %v2869, %v2867
        %v2902 = vpack.c.b16 %v2870, %v2868
        %2935 = vmatprep.subr.bf16.mxu0 0
        %2936 = vmatpush1.bf16.msra.mxu0 %v2734
        %2937 = vmatprep.subr.bf16.mxu0 0
        %2938 = vmatpush1.bf16.msra.mxu0 %v2733
        %2939 = vmatprep.subr.bf16.mxu0 0
        %2940 = vmatpush1.bf16.msra.mxu0 %v2732
        %2941 = vmatprep.subr.bf16.mxu0 0
        %2942 = vmatpush1.bf16.msra.mxu0 %v2731
        %2943 = vmatprep.subr.bf16.mxu0 0
        %2944 = vmatpush1.bf16.msra.mxu0 %v2730
        %2945 = vmatprep.subr.bf16.mxu0 0
        %2946 = vmatpush1.bf16.msra.mxu0 %v2729
        %2947 = vmatprep.subr.bf16.mxu0 0
        %2948 = vmatpush1.bf16.msra.mxu0 %v2728
        %2949 = vmatprep.subr.bf16.mxu0 0
        %2950 = vmatpush1.bf16.msra.mxu0 %v2727
        %2951 = vmatprep.subr.bf16.mxu0 0
        %2952 = vmatpush2.bf16.msra.mxu0 %v2742
        %2953 = vmatprep.subr.bf16.mxu0 0
        %2954 = vmatpush2.bf16.msra.mxu0 %v2741
        %2955 = vmatprep.subr.bf16.mxu0 0
        %2956 = vmatpush2.bf16.msra.mxu0 %v2740
        %2957 = vmatprep.subr.bf16.mxu0 0
        %2958 = vmatpush2.bf16.msra.mxu0 %v2739
        %2959 = vmatprep.subr.bf16.mxu0 0
        %2960 = vmatpush2.bf16.msra.mxu0 %v2738
        %2961 = vmatprep.subr.bf16.mxu0 0
        %2962 = vmatpush2.bf16.msra.mxu0 %v2737
        %2963 = vmatprep.subr.bf16.mxu0 0
        %2964 = vmatpush2.bf16.msra.mxu0 %v2736
        %2965 = vmatprep.subr.bf16.mxu0 0
        %2966 = vmatpush2.bf16.msra.mxu0 %v2735
        %2967 = vmatprep.mubr.bf16.mxu0 %v2872
        %2968 = vmatmul.mubr.bf16.gmra.mxu0 %v2871
        %v2969 = vpop.f32.mrf.mxu0
        %v2970 = vadd.f32 0.0, %v2969
        %v2971 = vpop.f32.mrf.mxu0
        %v2972 = vpop.f32.mrf.mxu0
        %v2973 = vadd.f32 0.0, %v2972
        %v2974 = vpop.f32.mrf.mxu0
        %2975 = vmatprep.mubr.bf16.mxu0 %v2874
        %2976 = vmatmul.mubr.bf16.gmra.mxu0 %v2873
        %v2977 = vpop.f32.mrf.mxu0
        %v2978 = vadd.f32 0.0, %v2977
        %v2979 = vpop.f32.mrf.mxu0
        %v2980 = vpop.f32.mrf.mxu0
        %v2981 = vadd.f32 0.0, %v2980
        %v2982 = vpop.f32.mrf.mxu0
        %2983 = vmatprep.mubr.bf16.mxu0 %v2876
        %2984 = vmatmul.mubr.bf16.gmra.mxu0 %v2875
        %v2985 = vpop.f32.mrf.mxu0
        %v2986 = vadd.f32 0.0, %v2985
        %v2987 = vpop.f32.mrf.mxu0
        %v2988 = vpop.f32.mrf.mxu0
        %v2989 = vadd.f32 0.0, %v2988
        %v2990 = vpop.f32.mrf.mxu0
        %2991 = vmatprep.mubr.bf16.mxu0 %v2878
        %2992 = vmatmul.mubr.bf16.gmra.mxu0 %v2877
        %v2993 = vpop.f32.mrf.mxu0
        %v2994 = vadd.f32 0.0, %v2993
        %v2995 = vpop.f32.mrf.mxu0
        %v2996 = vpop.f32.mrf.mxu0
        %v2997 = vadd.f32 0.0, %v2996
        %v2998 = vpop.f32.mrf.mxu0
        %2999 = vmatprep.mubr.bf16.mxu0 %v2880
        %3000 = vmatmul.mubr.bf16.gmra.mxu0 %v2879
        %v3001 = vpop.f32.mrf.mxu0
        %v3002 = vadd.f32 0.0, %v3001
        %v3003 = vpop.f32.mrf.mxu0
        %v3004 = vpop.f32.mrf.mxu0
        %v3005 = vadd.f32 0.0, %v3004
        %v3006 = vpop.f32.mrf.mxu0
        %3007 = vmatprep.mubr.bf16.mxu0 %v2882
        %3008 = vmatmul.mubr.bf16.gmra.mxu0 %v2881
        %v3009 = vpop.f32.mrf.mxu0
        %v3010 = vadd.f32 0.0, %v3009
        %v3011 = vpop.f32.mrf.mxu0
        %v3012 = vpop.f32.mrf.mxu0
        %v3013 = vadd.f32 0.0, %v3012
        %v3014 = vpop.f32.mrf.mxu0
        %3015 = vmatprep.mubr.bf16.mxu0 %v2884
        %3016 = vmatmul.mubr.bf16.gmra.mxu0 %v2883
        %v3017 = vpop.f32.mrf.mxu0
        %v3018 = vadd.f32 0.0, %v3017
        %v3019 = vpop.f32.mrf.mxu0
        %v3020 = vpop.f32.mrf.mxu0
        %v3021 = vadd.f32 0.0, %v3020
        %v3022 = vpop.f32.mrf.mxu0
        %3023 = vmatprep.mubr.bf16.mxu0 %v2886
        %3024 = vmatmul.mubr.bf16.gmra.mxu0 %v2885
        %v3025 = vpop.f32.mrf.mxu0
        %v3026 = vadd.f32 0.0, %v3025
        %v3027 = vpop.f32.mrf.mxu0
        %v3028 = vpop.f32.mrf.mxu0
        %v3029 = vadd.f32 0.0, %v3028
        %v3030 = vpop.f32.mrf.mxu0
        %3031 = vmatprep.mubr.bf16.mxu0 %v2888
        %3032 = vmatmul.mubr.bf16.gmra.mxu0 %v2887
        %v3033 = vpop.f32.mrf.mxu0
        %v3034 = vadd.f32 0.0, %v3033
        %v3035 = vpop.f32.mrf.mxu0
        %v3036 = vpop.f32.mrf.mxu0
        %v3037 = vadd.f32 0.0, %v3036
        %v3038 = vpop.f32.mrf.mxu0
        %3039 = vmatprep.mubr.bf16.mxu0 %v2890
        %3040 = vmatmul.mubr.bf16.gmra.mxu0 %v2889
        %v3041 = vpop.f32.mrf.mxu0
        %v3042 = vadd.f32 0.0, %v3041
        %v3043 = vpop.f32.mrf.mxu0
        %v3044 = vpop.f32.mrf.mxu0
        %v3045 = vadd.f32 0.0, %v3044
        %v3046 = vpop.f32.mrf.mxu0
        %3047 = vmatprep.mubr.bf16.mxu0 %v2892
        %3048 = vmatmul.mubr.bf16.gmra.mxu0 %v2891
        %v3049 = vpop.f32.mrf.mxu0
        %v3050 = vadd.f32 0.0, %v3049
        %v3051 = vpop.f32.mrf.mxu0
        %v3052 = vpop.f32.mrf.mxu0
        %v3053 = vadd.f32 0.0, %v3052
        %v3054 = vpop.f32.mrf.mxu0
        %3055 = vmatprep.mubr.bf16.mxu0 %v2894
        %3056 = vmatmul.mubr.bf16.gmra.mxu0 %v2893
        %v3057 = vpop.f32.mrf.mxu0
        %v3058 = vadd.f32 0.0, %v3057
        %v3059 = vpop.f32.mrf.mxu0
        %v3060 = vpop.f32.mrf.mxu0
        %v3061 = vadd.f32 0.0, %v3060
        %v3062 = vpop.f32.mrf.mxu0
        %3063 = vmatprep.mubr.bf16.mxu0 %v2896
        %3064 = vmatmul.mubr.bf16.gmra.mxu0 %v2895
        %v3065 = vpop.f32.mrf.mxu0
        %v3066 = vadd.f32 0.0, %v3065
        %v3067 = vpop.f32.mrf.mxu0
        %v3068 = vpop.f32.mrf.mxu0
        %v3069 = vadd.f32 0.0, %v3068
        %v3070 = vpop.f32.mrf.mxu0
        %3071 = vmatprep.mubr.bf16.mxu0 %v2898
        %3072 = vmatmul.mubr.bf16.gmra.mxu0 %v2897
        %v3073 = vpop.f32.mrf.mxu0
        %v3074 = vadd.f32 0.0, %v3073
        %v3075 = vpop.f32.mrf.mxu0
        %v3076 = vpop.f32.mrf.mxu0
        %v3077 = vadd.f32 0.0, %v3076
        %v3078 = vpop.f32.mrf.mxu0
        %3079 = vmatprep.mubr.bf16.mxu0 %v2900
        %3080 = vmatmul.mubr.bf16.gmra.mxu0 %v2899
        %v3081 = vpop.f32.mrf.mxu0
        %v3082 = vadd.f32 0.0, %v3081
        %v3083 = vpop.f32.mrf.mxu0
        %v3084 = vpop.f32.mrf.mxu0
        %v3085 = vadd.f32 0.0, %v3084
        %v3086 = vpop.f32.mrf.mxu0
        %3087 = vmatprep.mubr.bf16.mxu0 %v2902
        %3088 = vmatmul.mubr.bf16.gmra.mxu0 %v2901
        %v3089 = vpop.f32.mrf.mxu0
        %v3090 = vadd.f32 0.0, %v3089
        %v3091 = vpop.f32.mrf.mxu0
        %v3092 = vpop.f32.mrf.mxu0
        %v3093 = vadd.f32 0.0, %v3092
        %v3094 = vpop.f32.mrf.mxu0
        %3095 = vdwg.mxu0
        %v3096 = vld [vmem:[%s6] sm:$0xf]
        %v3097 = vld [vmem:[%s6 + $0x4] sm:$0xf]
        %v3098 = vld [vmem:[%s6 + $0x8] sm:$0xf]
        %v3099 = vld [vmem:[%s6 + $0xc] sm:$0xf]
        %v3100 = vunpack.c.l.bf16 %v3096
        %v3101 = vunpack.c.l.bf16 %v3097
        %v3102 = vunpack.c.l.bf16 %v3098
        %v3103 = vunpack.c.l.bf16 %v3099
        %vm3104 = vcmask 130048
        %v3105 = vsel %vm3104, %v3100, 0.0
        %v3106 = vsel %vm3104, %v3101, 0.0
        %v3107 = vadd.f32 %v3105, %v3106
        %v3108 = vsel %vm3104, %v3102, 0.0
        %v3109 = vadd.f32 %v3107, %v3108
        %v3110 = vsel %vm3104, %v3103, 0.0
        %v3111 = vadd.f32 %v3109, %v3110
        %v3112 = vrot.slane %v3111, 4
        %v3113 = vadd.f32 %v3111, %v3112
        %v3114 = vrot.slane %v3113, 2
        %v3115 = vadd.f32 %v3113, %v3114
        %v3116 = vrot.slane %v3115, 1
        %v3117 = vadd.f32 %v3115, %v3116
        %v3118 = vsel %vm919, %v2970, 0.0
        %3119 = vadd.xlane.f32.xlu0 %v3118
        %v3120 = vpop.xlane.xlu0 %3119
        %v3121 = vsel %vm919, %v2973, 0.0
        %3122 = vadd.xlane.f32.xlu0 %v3121
        %v3123 = vpop.xlane.xlu0 %3122
        %v3124 = vsel %vm919, %v2978, 0.0
        %3125 = vadd.xlane.f32.xlu0 %v3124
        %v3126 = vpop.xlane.xlu0 %3125
        %v3127 = vsel %vm919, %v2981, 0.0
        %3128 = vadd.xlane.f32.xlu0 %v3127
        %v3129 = vpop.xlane.xlu0 %3128
        %v3130 = vsel %vm919, %v2986, 0.0
        %3131 = vadd.xlane.f32.xlu0 %v3130
        %v3132 = vpop.xlane.xlu0 %3131
        %v3133 = vsel %vm919, %v2989, 0.0
        %3134 = vadd.xlane.f32.xlu0 %v3133
        %v3135 = vpop.xlane.xlu0 %3134
        %v3136 = vsel %vm919, %v2994, 0.0
        %3137 = vadd.xlane.f32.xlu0 %v3136
        %v3138 = vpop.xlane.xlu0 %3137
        %v3139 = vsel %vm919, %v2997, 0.0
        %3140 = vadd.xlane.f32.xlu0 %v3139
        %v3141 = vpop.xlane.xlu0 %3140
        %v3142 = vadd.f32 %v3120, 0.0
        %v3143 = vadd.f32 %v3123, 0.0
        %v3144 = vadd.f32 %v3126, 0.0
        %v3145 = vadd.f32 %v3129, 0.0
        %v3146 = vadd.f32 %v3132, 0.0
        %v3147 = vadd.f32 %v3135, 0.0
        %v3148 = vadd.f32 %v3138, 0.0
        %v3149 = vadd.f32 %v3141, 0.0
        %v3150 = vmul.f32 %v2970, %v2970
        %v3151 = vmul.f32 %v2973, %v2973
        %v3152 = vmul.f32 %v2978, %v2978
        %v3153 = vmul.f32 %v2981, %v2981
        %v3154 = vmul.f32 %v2986, %v2986
        %v3155 = vmul.f32 %v2989, %v2989
        %v3156 = vmul.f32 %v2994, %v2994
        %v3157 = vmul.f32 %v2997, %v2997
        %v3158 = vsel %vm919, %v3150, 0.0
        %3159 = vadd.xlane.f32.xlu0 %v3158
        %v3160 = vpop.xlane.xlu0 %3159
        %v3161 = vsel %vm919, %v3151, 0.0
        %3162 = vadd.xlane.f32.xlu0 %v3161
        %v3163 = vpop.xlane.xlu0 %3162
        %v3164 = vsel %vm919, %v3152, 0.0
        %3165 = vadd.xlane.f32.xlu0 %v3164
        %v3166 = vpop.xlane.xlu0 %3165
        %v3167 = vsel %vm919, %v3153, 0.0
        %3168 = vadd.xlane.f32.xlu0 %v3167
        %v3169 = vpop.xlane.xlu0 %3168
        %v3170 = vsel %vm919, %v3154, 0.0
        %3171 = vadd.xlane.f32.xlu0 %v3170
        %v3172 = vpop.xlane.xlu0 %3171
        %v3173 = vsel %vm919, %v3155, 0.0
        %3174 = vadd.xlane.f32.xlu0 %v3173
        %v3175 = vpop.xlane.xlu0 %3174
        %v3176 = vsel %vm919, %v3156, 0.0
        %3177 = vadd.xlane.f32.xlu0 %v3176
        %v3178 = vpop.xlane.xlu0 %3177
        %v3179 = vsel %vm919, %v3157, 0.0
        %3180 = vadd.xlane.f32.xlu0 %v3179
        %v3181 = vpop.xlane.xlu0 %3180
        %v3182 = vadd.f32 %v3160, 0.0
        %v3183 = vadd.f32 %v3163, 0.0
        %v3184 = vadd.f32 %v3166, 0.0
        %v3185 = vadd.f32 %v3169, 0.0
        %v3186 = vadd.f32 %v3172, 0.0
        %v3187 = vadd.f32 %v3175, 0.0
        %v3188 = vadd.f32 %v3178, 0.0
        %v3189 = vadd.f32 %v3181, 0.0
        %v3190 = vpack.c.bf16 %v2973, %v2970
        %v3191 = vpack.c.bf16 %v2981, %v2978
        %v3192 = vpack.c.bf16 %v2989, %v2986
        %v3193 = vpack.c.bf16 %v2997, %v2994
        %v3194 = vsel %vm919, %v3002, 0.0
        %3195 = vadd.xlane.f32.xlu0 %v3194
        %v3196 = vpop.xlane.xlu0 %3195
        %v3197 = vsel %vm919, %v3005, 0.0
        %3198 = vadd.xlane.f32.xlu0 %v3197
        %v3199 = vpop.xlane.xlu0 %3198
        %v3200 = vsel %vm919, %v3010, 0.0
        %3201 = vadd.xlane.f32.xlu0 %v3200
        %v3202 = vpop.xlane.xlu0 %3201
        %v3203 = vsel %vm919, %v3013, 0.0
        %3204 = vadd.xlane.f32.xlu0 %v3203
        %v3205 = vpop.xlane.xlu0 %3204
        %v3206 = vsel %vm919, %v3018, 0.0
        %3207 = vadd.xlane.f32.xlu0 %v3206
        %v3208 = vpop.xlane.xlu0 %3207
        %v3209 = vsel %vm919, %v3021, 0.0
        %3210 = vadd.xlane.f32.xlu0 %v3209
        %v3211 = vpop.xlane.xlu0 %3210
        %v3212 = vsel %vm919, %v3026, 0.0
        %3213 = vadd.xlane.f32.xlu0 %v3212
        %v3214 = vpop.xlane.xlu0 %3213
        %v3215 = vsel %vm919, %v3029, 0.0
        %3216 = vadd.xlane.f32.xlu0 %v3215
        %v3217 = vpop.xlane.xlu0 %3216
        %v3218 = vadd.f32 %v3142, %v3196
        %v3219 = vadd.f32 %v3143, %v3199
        %v3220 = vadd.f32 %v3144, %v3202
        %v3221 = vadd.f32 %v3145, %v3205
        %v3222 = vadd.f32 %v3146, %v3208
        %v3223 = vadd.f32 %v3147, %v3211
        %v3224 = vadd.f32 %v3148, %v3214
        %v3225 = vadd.f32 %v3149, %v3217
        %v3226 = vmul.f32 %v3002, %v3002
        %v3227 = vmul.f32 %v3005, %v3005
        %v3228 = vmul.f32 %v3010, %v3010
        %v3229 = vmul.f32 %v3013, %v3013
        %v3230 = vmul.f32 %v3018, %v3018
        %v3231 = vmul.f32 %v3021, %v3021
        %v3232 = vmul.f32 %v3026, %v3026
        %v3233 = vmul.f32 %v3029, %v3029
        %v3234 = vsel %vm919, %v3226, 0.0
        %3235 = vadd.xlane.f32.xlu0 %v3234
        %v3236 = vpop.xlane.xlu0 %3235
        %v3237 = vsel %vm919, %v3227, 0.0
        %3238 = vadd.xlane.f32.xlu0 %v3237
        %v3239 = vpop.xlane.xlu0 %3238
        %v3240 = vsel %vm919, %v3228, 0.0
        %3241 = vadd.xlane.f32.xlu0 %v3240
        %v3242 = vpop.xlane.xlu0 %3241
        %v3243 = vsel %vm919, %v3229, 0.0
        %3244 = vadd.xlane.f32.xlu0 %v3243
        %v3245 = vpop.xlane.xlu0 %3244
        %v3246 = vsel %vm919, %v3230, 0.0
        %3247 = vadd.xlane.f32.xlu0 %v3246
        %v3248 = vpop.xlane.xlu0 %3247
        %v3249 = vsel %vm919, %v3231, 0.0
        %3250 = vadd.xlane.f32.xlu0 %v3249
        %v3251 = vpop.xlane.xlu0 %3250
        %v3252 = vsel %vm919, %v3232, 0.0
        %3253 = vadd.xlane.f32.xlu0 %v3252
        %v3254 = vpop.xlane.xlu0 %3253
        %v3255 = vsel %vm919, %v3233, 0.0
        %3256 = vadd.xlane.f32.xlu0 %v3255
        %v3257 = vpop.xlane.xlu0 %3256
        %v3258 = vadd.f32 %v3182, %v3236
        %v3259 = vadd.f32 %v3183, %v3239
        %v3260 = vadd.f32 %v3184, %v3242
        %v3261 = vadd.f32 %v3185, %v3245
        %v3262 = vadd.f32 %v3186, %v3248
        %v3263 = vadd.f32 %v3187, %v3251
        %v3264 = vadd.f32 %v3188, %v3254
        %v3265 = vadd.f32 %v3189, %v3257
        %v3266 = vpack.c.bf16 %v3005, %v3002
        %v3267 = vpack.c.bf16 %v3013, %v3010
        %v3268 = vpack.c.bf16 %v3021, %v3018
        %v3269 = vpack.c.bf16 %v3029, %v3026
        %v3271 = vsel %vm919, %v3266, 0
        %v3274 = vsel %vm919, %v3267, 0
        %v3277 = vsel %vm919, %v3268, 0
        %v3280 = vsel %vm919, %v3269, 0
        %v3283 = vsel %vm968, %v3097, 0
        %3285 = vmatprep.subr.bf16.mxu0 0
        %3286 = vmatpush1.bf16.msra.mxu0 0
        %3287 = vmatprep.subr.bf16.mxu0 0
        %3288 = vmatpush1.bf16.msra.mxu0 0
        %3289 = vmatprep.subr.bf16.mxu0 0
        %3290 = vmatpush1.bf16.msra.mxu0 0
        %3291 = vmatprep.subr.bf16.mxu0 0
        %3292 = vmatpush1.bf16.msra.mxu0 0
        %3293 = vmatprep.subr.bf16.mxu0 0
        %3294 = vmatpush1.bf16.msra.mxu0 0
        %3295 = vmatprep.subr.bf16.mxu0 0
        %3296 = vmatpush1.bf16.msra.mxu0 0
        %3297 = vmatprep.subr.bf16.mxu0 0
        %3298 = vmatpush1.bf16.msra.mxu0 0
        %3299 = vmatprep.subr.bf16.mxu0 0
        %3300 = vmatpush1.bf16.msra.mxu0 %v3283
        %3301 = vmatprep.subr.bf16.mxu0 0
        %3302 = vmatpush2.bf16.msra.mxu0 0
        %3303 = vmatprep.subr.bf16.mxu0 0
        %3304 = vmatpush2.bf16.msra.mxu0 0
        %3305 = vmatprep.subr.bf16.mxu0 0
        %3306 = vmatpush2.bf16.msra.mxu0 0
        %3307 = vmatprep.subr.bf16.mxu0 0
        %3308 = vmatpush2.bf16.msra.mxu0 0
        %3309 = vmatprep.subr.bf16.mxu0 0
        %3310 = vmatpush2.bf16.msra.mxu0 0
        %3311 = vmatprep.subr.bf16.mxu0 0
        %3312 = vmatpush2.bf16.msra.mxu0 0
        %3313 = vmatprep.subr.bf16.mxu0 0
        %3314 = vmatpush2.bf16.msra.mxu0 0
        %3315 = vmatprep.subr.bf16.mxu0 0
        %3316 = vmatpush2.bf16.msra.mxu0 0
        %3317 = vmatprep.mubr.bf16.mxu0 0
        %3318 = vmatmul.mubr.bf16.gmra.mxu0 %v3271
        %v3319 = vpop.f32.mrf.mxu0
        %v3320 = vadd.f32 0.0, %v3319
        %v3321 = vpop.f32.mrf.mxu0
        %v3322 = vpop.f32.mrf.mxu0
        %v3323 = vadd.f32 0.0, %v3322
        %v3324 = vpop.f32.mrf.mxu0
        %3325 = vmatprep.mubr.bf16.mxu0 0
        %3326 = vmatmul.mubr.bf16.gmra.mxu0 %v3274
        %v3327 = vpop.f32.mrf.mxu0
        %v3328 = vadd.f32 0.0, %v3327
        %v3329 = vpop.f32.mrf.mxu0
        %v3330 = vpop.f32.mrf.mxu0
        %v3331 = vadd.f32 0.0, %v3330
        %v3332 = vpop.f32.mrf.mxu0
        %3333 = vmatprep.mubr.bf16.mxu0 0
        %3334 = vmatmul.mubr.bf16.gmra.mxu0 %v3277
        %v3335 = vpop.f32.mrf.mxu0
        %v3336 = vadd.f32 0.0, %v3335
        %v3337 = vpop.f32.mrf.mxu0
        %v3338 = vpop.f32.mrf.mxu0
        %v3339 = vadd.f32 0.0, %v3338
        %v3340 = vpop.f32.mrf.mxu0
        %3341 = vmatprep.mubr.bf16.mxu0 0
        %3342 = vmatmul.mubr.bf16.gmra.mxu0 %v3280
        %v3343 = vpop.f32.mrf.mxu0
        %v3344 = vadd.f32 0.0, %v3343
        %v3345 = vpop.f32.mrf.mxu0
        %v3346 = vpop.f32.mrf.mxu0
        %v3347 = vadd.f32 0.0, %v3346
        %v3348 = vpop.f32.mrf.mxu0
        %3349 = vdwg.mxu0
        %v3351 = vsel %vm919, %v3190, 0
        %v3354 = vsel %vm919, %v3191, 0
        %v3357 = vsel %vm919, %v3192, 0
        %v3360 = vsel %vm919, %v3193, 0
        %v3363 = vsel %vm968, %v3096, 0
        %3365 = vmatprep.subr.bf16.mxu0 0
        %3366 = vmatpush1.bf16.msra.mxu0 0
        %3367 = vmatprep.subr.bf16.mxu0 0
        %3368 = vmatpush1.bf16.msra.mxu0 0
        %3369 = vmatprep.subr.bf16.mxu0 0
        %3370 = vmatpush1.bf16.msra.mxu0 0
        %3371 = vmatprep.subr.bf16.mxu0 0
        %3372 = vmatpush1.bf16.msra.mxu0 0
        %3373 = vmatprep.subr.bf16.mxu0 0
        %3374 = vmatpush1.bf16.msra.mxu0 0
        %3375 = vmatprep.subr.bf16.mxu0 0
        %3376 = vmatpush1.bf16.msra.mxu0 0
        %3377 = vmatprep.subr.bf16.mxu0 0
        %3378 = vmatpush1.bf16.msra.mxu0 0
        %3379 = vmatprep.subr.bf16.mxu0 0
        %3380 = vmatpush1.bf16.msra.mxu0 %v3363
        %3381 = vmatprep.subr.bf16.mxu0 0
        %3382 = vmatpush2.bf16.msra.mxu0 0
        %3383 = vmatprep.subr.bf16.mxu0 0
        %3384 = vmatpush2.bf16.msra.mxu0 0
        %3385 = vmatprep.subr.bf16.mxu0 0
        %3386 = vmatpush2.bf16.msra.mxu0 0
        %3387 = vmatprep.subr.bf16.mxu0 0
        %3388 = vmatpush2.bf16.msra.mxu0 0
        %3389 = vmatprep.subr.bf16.mxu0 0
        %3390 = vmatpush2.bf16.msra.mxu0 0
        %3391 = vmatprep.subr.bf16.mxu0 0
        %3392 = vmatpush2.bf16.msra.mxu0 0
        %3393 = vmatprep.subr.bf16.mxu0 0
        %3394 = vmatpush2.bf16.msra.mxu0 0
        %3395 = vmatprep.subr.bf16.mxu0 0
        %3396 = vmatpush2.bf16.msra.mxu0 0
        %3397 = vmatprep.mubr.bf16.mxu0 0
        %3398 = vmatmul.mubr.bf16.gmra.mxu0 %v3351
        %v3399 = vpop.f32.mrf.mxu0
        %v3400 = vadd.f32 %v3320, %v3399
        %v3401 = vpop.f32.mrf.mxu0
        %v3402 = vpop.f32.mrf.mxu0
        %v3403 = vadd.f32 %v3323, %v3402
        %v3404 = vpop.f32.mrf.mxu0
        %3405 = vmatprep.mubr.bf16.mxu0 0
        %3406 = vmatmul.mubr.bf16.gmra.mxu0 %v3354
        %v3407 = vpop.f32.mrf.mxu0
        %v3408 = vadd.f32 %v3328, %v3407
        %v3409 = vpop.f32.mrf.mxu0
        %v3410 = vpop.f32.mrf.mxu0
        %v3411 = vadd.f32 %v3331, %v3410
        %v3412 = vpop.f32.mrf.mxu0
        %3413 = vmatprep.mubr.bf16.mxu0 0
        %3414 = vmatmul.mubr.bf16.gmra.mxu0 %v3357
        %v3415 = vpop.f32.mrf.mxu0
        %v3416 = vadd.f32 %v3336, %v3415
        %v3417 = vpop.f32.mrf.mxu0
        %v3418 = vpop.f32.mrf.mxu0
        %v3419 = vadd.f32 %v3339, %v3418
        %v3420 = vpop.f32.mrf.mxu0
        %3421 = vmatprep.mubr.bf16.mxu0 0
        %3422 = vmatmul.mubr.bf16.gmra.mxu0 %v3360
        %v3423 = vpop.f32.mrf.mxu0
        %v3424 = vadd.f32 %v3344, %v3423
        %v3425 = vpop.f32.mrf.mxu0
        %v3426 = vpop.f32.mrf.mxu0
        %v3427 = vadd.f32 %v3347, %v3426
        %v3428 = vpop.f32.mrf.mxu0
        %3429 = vdwg.mxu0
        %v3430 = vsel %vm919, %v3034, 0.0
        %3431 = vadd.xlane.f32.xlu0 %v3430
        %v3432 = vpop.xlane.xlu0 %3431
        %v3433 = vsel %vm919, %v3037, 0.0
        %3434 = vadd.xlane.f32.xlu0 %v3433
        %v3435 = vpop.xlane.xlu0 %3434
        %v3436 = vsel %vm919, %v3042, 0.0
        %3437 = vadd.xlane.f32.xlu0 %v3436
        %v3438 = vpop.xlane.xlu0 %3437
        %v3439 = vsel %vm919, %v3045, 0.0
        %3440 = vadd.xlane.f32.xlu0 %v3439
        %v3441 = vpop.xlane.xlu0 %3440
        %v3442 = vsel %vm919, %v3050, 0.0
        %3443 = vadd.xlane.f32.xlu0 %v3442
        %v3444 = vpop.xlane.xlu0 %3443
        %v3445 = vsel %vm919, %v3053, 0.0
        %3446 = vadd.xlane.f32.xlu0 %v3445
        %v3447 = vpop.xlane.xlu0 %3446
        %v3448 = vsel %vm919, %v3058, 0.0
        %3449 = vadd.xlane.f32.xlu0 %v3448
        %v3450 = vpop.xlane.xlu0 %3449
        %v3451 = vsel %vm919, %v3061, 0.0
        %3452 = vadd.xlane.f32.xlu0 %v3451
        %v3453 = vpop.xlane.xlu0 %3452
        %v3454 = vadd.f32 %v3218, %v3432
        %v3455 = vadd.f32 %v3219, %v3435
        %v3456 = vadd.f32 %v3220, %v3438
        %v3457 = vadd.f32 %v3221, %v3441
        %v3458 = vadd.f32 %v3222, %v3444
        %v3459 = vadd.f32 %v3223, %v3447
        %v3460 = vadd.f32 %v3224, %v3450
        %v3461 = vadd.f32 %v3225, %v3453
        %v3462 = vmul.f32 %v3034, %v3034
        %v3463 = vmul.f32 %v3037, %v3037
        %v3464 = vmul.f32 %v3042, %v3042
        %v3465 = vmul.f32 %v3045, %v3045
        %v3466 = vmul.f32 %v3050, %v3050
        %v3467 = vmul.f32 %v3053, %v3053
        %v3468 = vmul.f32 %v3058, %v3058
        %v3469 = vmul.f32 %v3061, %v3061
        %v3470 = vsel %vm919, %v3462, 0.0
        %3471 = vadd.xlane.f32.xlu0 %v3470
        %v3472 = vpop.xlane.xlu0 %3471
        %v3473 = vsel %vm919, %v3463, 0.0
        %3474 = vadd.xlane.f32.xlu0 %v3473
        %v3475 = vpop.xlane.xlu0 %3474
        %v3476 = vsel %vm919, %v3464, 0.0
        %3477 = vadd.xlane.f32.xlu0 %v3476
        %v3478 = vpop.xlane.xlu0 %3477
        %v3479 = vsel %vm919, %v3465, 0.0
        %3480 = vadd.xlane.f32.xlu0 %v3479
        %v3481 = vpop.xlane.xlu0 %3480
        %v3482 = vsel %vm919, %v3466, 0.0
        %3483 = vadd.xlane.f32.xlu0 %v3482
        %v3484 = vpop.xlane.xlu0 %3483
        %v3485 = vsel %vm919, %v3467, 0.0
        %3486 = vadd.xlane.f32.xlu0 %v3485
        %v3487 = vpop.xlane.xlu0 %3486
        %v3488 = vsel %vm919, %v3468, 0.0
        %3489 = vadd.xlane.f32.xlu0 %v3488
        %v3490 = vpop.xlane.xlu0 %3489
        %v3491 = vsel %vm919, %v3469, 0.0
        %3492 = vadd.xlane.f32.xlu0 %v3491
        %v3493 = vpop.xlane.xlu0 %3492
        %v3494 = vadd.f32 %v3258, %v3472
        %v3495 = vadd.f32 %v3259, %v3475
        %v3496 = vadd.f32 %v3260, %v3478
        %v3497 = vadd.f32 %v3261, %v3481
        %v3498 = vadd.f32 %v3262, %v3484
        %v3499 = vadd.f32 %v3263, %v3487
        %v3500 = vadd.f32 %v3264, %v3490
        %v3501 = vadd.f32 %v3265, %v3493
        %v3502 = vpack.c.bf16 %v3037, %v3034
        %v3503 = vpack.c.bf16 %v3045, %v3042
        %v3504 = vpack.c.bf16 %v3053, %v3050
        %v3505 = vpack.c.bf16 %v3061, %v3058
        %v3507 = vsel %vm919, %v3502, 0
        %v3510 = vsel %vm919, %v3503, 0
        %v3513 = vsel %vm919, %v3504, 0
        %v3516 = vsel %vm919, %v3505, 0
        %v3519 = vsel %vm968, %v3098, 0
        %3521 = vmatprep.subr.bf16.mxu0 0
        %3522 = vmatpush1.bf16.msra.mxu0 0
        %3523 = vmatprep.subr.bf16.mxu0 0
        %3524 = vmatpush1.bf16.msra.mxu0 0
        %3525 = vmatprep.subr.bf16.mxu0 0
        %3526 = vmatpush1.bf16.msra.mxu0 0
        %3527 = vmatprep.subr.bf16.mxu0 0
        %3528 = vmatpush1.bf16.msra.mxu0 0
        %3529 = vmatprep.subr.bf16.mxu0 0
        %3530 = vmatpush1.bf16.msra.mxu0 0
        %3531 = vmatprep.subr.bf16.mxu0 0
        %3532 = vmatpush1.bf16.msra.mxu0 0
        %3533 = vmatprep.subr.bf16.mxu0 0
        %3534 = vmatpush1.bf16.msra.mxu0 0
        %3535 = vmatprep.subr.bf16.mxu0 0
        %3536 = vmatpush1.bf16.msra.mxu0 %v3519
        %3537 = vmatprep.subr.bf16.mxu0 0
        %3538 = vmatpush2.bf16.msra.mxu0 0
        %3539 = vmatprep.subr.bf16.mxu0 0
        %3540 = vmatpush2.bf16.msra.mxu0 0
        %3541 = vmatprep.subr.bf16.mxu0 0
        %3542 = vmatpush2.bf16.msra.mxu0 0
        %3543 = vmatprep.subr.bf16.mxu0 0
        %3544 = vmatpush2.bf16.msra.mxu0 0
        %3545 = vmatprep.subr.bf16.mxu0 0
        %3546 = vmatpush2.bf16.msra.mxu0 0
        %3547 = vmatprep.subr.bf16.mxu0 0
        %3548 = vmatpush2.bf16.msra.mxu0 0
        %3549 = vmatprep.subr.bf16.mxu0 0
        %3550 = vmatpush2.bf16.msra.mxu0 0
        %3551 = vmatprep.subr.bf16.mxu0 0
        %3552 = vmatpush2.bf16.msra.mxu0 0
        %3553 = vmatprep.mubr.bf16.mxu0 0
        %3554 = vmatmul.mubr.bf16.gmra.mxu0 %v3507
        %v3555 = vpop.f32.mrf.mxu0
        %v3556 = vadd.f32 0.0, %v3555
        %v3557 = vpop.f32.mrf.mxu0
        %v3558 = vpop.f32.mrf.mxu0
        %v3559 = vadd.f32 0.0, %v3558
        %v3560 = vpop.f32.mrf.mxu0
        %3561 = vmatprep.mubr.bf16.mxu0 0
        %3562 = vmatmul.mubr.bf16.gmra.mxu0 %v3510
        %v3563 = vpop.f32.mrf.mxu0
        %v3564 = vadd.f32 0.0, %v3563
        %v3565 = vpop.f32.mrf.mxu0
        %v3566 = vpop.f32.mrf.mxu0
        %v3567 = vadd.f32 0.0, %v3566
        %v3568 = vpop.f32.mrf.mxu0
        %3569 = vmatprep.mubr.bf16.mxu0 0
        %3570 = vmatmul.mubr.bf16.gmra.mxu0 %v3513
        %v3571 = vpop.f32.mrf.mxu0
        %v3572 = vadd.f32 0.0, %v3571
        %v3573 = vpop.f32.mrf.mxu0
        %v3574 = vpop.f32.mrf.mxu0
        %v3575 = vadd.f32 0.0, %v3574
        %v3576 = vpop.f32.mrf.mxu0
        %3577 = vmatprep.mubr.bf16.mxu0 0
        %3578 = vmatmul.mubr.bf16.gmra.mxu0 %v3516
        %v3579 = vpop.f32.mrf.mxu0
        %v3580 = vadd.f32 0.0, %v3579
        %v3581 = vpop.f32.mrf.mxu0
        %v3582 = vpop.f32.mrf.mxu0
        %v3583 = vadd.f32 0.0, %v3582
        %v3584 = vpop.f32.mrf.mxu0
        %3585 = vdwg.mxu0
        %v3586 = vadd.f32 %v3400, %v3556
        %v3587 = vadd.f32 %v3403, %v3559
        %v3588 = vadd.f32 %v3408, %v3564
        %v3589 = vadd.f32 %v3411, %v3567
        %v3590 = vadd.f32 %v3416, %v3572
        %v3591 = vadd.f32 %v3419, %v3575
        %v3592 = vadd.f32 %v3424, %v3580
        %v3593 = vadd.f32 %v3427, %v3583
        %v3594 = vsel %vm919, %v3066, 0.0
        %3595 = vadd.xlane.f32.xlu0 %v3594
        %v3596 = vpop.xlane.xlu0 %3595
        %v3597 = vsel %vm919, %v3069, 0.0
        %3598 = vadd.xlane.f32.xlu0 %v3597
        %v3599 = vpop.xlane.xlu0 %3598
        %v3600 = vsel %vm919, %v3074, 0.0
        %3601 = vadd.xlane.f32.xlu0 %v3600
        %v3602 = vpop.xlane.xlu0 %3601
        %v3603 = vsel %vm919, %v3077, 0.0
        %3604 = vadd.xlane.f32.xlu0 %v3603
        %v3605 = vpop.xlane.xlu0 %3604
        %v3606 = vsel %vm919, %v3082, 0.0
        %3607 = vadd.xlane.f32.xlu0 %v3606
        %v3608 = vpop.xlane.xlu0 %3607
        %v3609 = vsel %vm919, %v3085, 0.0
        %3610 = vadd.xlane.f32.xlu0 %v3609
        %v3611 = vpop.xlane.xlu0 %3610
        %v3612 = vsel %vm919, %v3090, 0.0
        %3613 = vadd.xlane.f32.xlu0 %v3612
        %v3614 = vpop.xlane.xlu0 %3613
        %v3615 = vsel %vm919, %v3093, 0.0
        %3616 = vadd.xlane.f32.xlu0 %v3615
        %v3617 = vpop.xlane.xlu0 %3616
        %v3618 = vadd.f32 %v3454, %v3596
        %v3619 = vadd.f32 %v3455, %v3599
        %v3620 = vadd.f32 %v3456, %v3602
        %v3621 = vadd.f32 %v3457, %v3605
        %v3622 = vadd.f32 %v3458, %v3608
        %v3623 = vadd.f32 %v3459, %v3611
        %v3624 = vadd.f32 %v3460, %v3614
        %v3625 = vadd.f32 %v3461, %v3617
        %v3626 = vmul.f32 %v3066, %v3066
        %v3627 = vmul.f32 %v3069, %v3069
        %v3628 = vmul.f32 %v3074, %v3074
        %v3629 = vmul.f32 %v3077, %v3077
        %v3630 = vmul.f32 %v3082, %v3082
        %v3631 = vmul.f32 %v3085, %v3085
        %v3632 = vmul.f32 %v3090, %v3090
        %v3633 = vmul.f32 %v3093, %v3093
        %v3634 = vsel %vm919, %v3626, 0.0
        %3635 = vadd.xlane.f32.xlu0 %v3634
        %v3636 = vpop.xlane.xlu0 %3635
        %v3637 = vsel %vm919, %v3627, 0.0
        %3638 = vadd.xlane.f32.xlu0 %v3637
        %v3639 = vpop.xlane.xlu0 %3638
        %v3640 = vsel %vm919, %v3628, 0.0
        %3641 = vadd.xlane.f32.xlu0 %v3640
        %v3642 = vpop.xlane.xlu0 %3641
        %v3643 = vsel %vm919, %v3629, 0.0
        %3644 = vadd.xlane.f32.xlu0 %v3643
        %v3645 = vpop.xlane.xlu0 %3644
        %v3646 = vsel %vm919, %v3630, 0.0
        %3647 = vadd.xlane.f32.xlu0 %v3646
        %v3648 = vpop.xlane.xlu0 %3647
        %v3649 = vsel %vm919, %v3631, 0.0
        %3650 = vadd.xlane.f32.xlu0 %v3649
        %v3651 = vpop.xlane.xlu0 %3650
        %v3652 = vsel %vm919, %v3632, 0.0
        %3653 = vadd.xlane.f32.xlu0 %v3652
        %v3654 = vpop.xlane.xlu0 %3653
        %v3655 = vsel %vm919, %v3633, 0.0
        %3656 = vadd.xlane.f32.xlu0 %v3655
        %v3657 = vpop.xlane.xlu0 %3656
        %v3658 = vadd.f32 %v3494, %v3636
        %v3659 = vadd.f32 %v3495, %v3639
        %v3660 = vadd.f32 %v3496, %v3642
        %v3661 = vadd.f32 %v3497, %v3645
        %v3662 = vadd.f32 %v3498, %v3648
        %v3663 = vadd.f32 %v3499, %v3651
        %v3664 = vadd.f32 %v3500, %v3654
        %v3665 = vadd.f32 %v3501, %v3657
        %v3666 = vpack.c.bf16 %v3069, %v3066
        %v3667 = vpack.c.bf16 %v3077, %v3074
        %v3668 = vpack.c.bf16 %v3085, %v3082
        %v3669 = vpack.c.bf16 %v3093, %v3090
        %v3671 = vsel %vm919, %v3666, 0
        %v3674 = vsel %vm919, %v3667, 0
        %v3677 = vsel %vm919, %v3668, 0
        %v3680 = vsel %vm919, %v3669, 0
        %v3683 = vsel %vm968, %v3099, 0
        %3685 = vmatprep.subr.bf16.mxu0 0
        %3686 = vmatpush1.bf16.msra.mxu0 0
        %3687 = vmatprep.subr.bf16.mxu0 0
        %3688 = vmatpush1.bf16.msra.mxu0 0
        %3689 = vmatprep.subr.bf16.mxu0 0
        %3690 = vmatpush1.bf16.msra.mxu0 0
        %3691 = vmatprep.subr.bf16.mxu0 0
        %3692 = vmatpush1.bf16.msra.mxu0 0
        %3693 = vmatprep.subr.bf16.mxu0 0
        %3694 = vmatpush1.bf16.msra.mxu0 0
        %3695 = vmatprep.subr.bf16.mxu0 0
        %3696 = vmatpush1.bf16.msra.mxu0 0
        %3697 = vmatprep.subr.bf16.mxu0 0
        %3698 = vmatpush1.bf16.msra.mxu0 0
        %3699 = vmatprep.subr.bf16.mxu0 0
        %3700 = vmatpush1.bf16.msra.mxu0 %v3683
        %3701 = vmatprep.subr.bf16.mxu0 0
        %3702 = vmatpush2.bf16.msra.mxu0 0
        %3703 = vmatprep.subr.bf16.mxu0 0
        %3704 = vmatpush2.bf16.msra.mxu0 0
        %3705 = vmatprep.subr.bf16.mxu0 0
        %3706 = vmatpush2.bf16.msra.mxu0 0
        %3707 = vmatprep.subr.bf16.mxu0 0
        %3708 = vmatpush2.bf16.msra.mxu0 0
        %3709 = vmatprep.subr.bf16.mxu0 0
        %3710 = vmatpush2.bf16.msra.mxu0 0
        %3711 = vmatprep.subr.bf16.mxu0 0
        %3712 = vmatpush2.bf16.msra.mxu0 0
        %3713 = vmatprep.subr.bf16.mxu0 0
        %3714 = vmatpush2.bf16.msra.mxu0 0
        %3715 = vmatprep.subr.bf16.mxu0 0
        %3716 = vmatpush2.bf16.msra.mxu0 0
        %3717 = vmatprep.mubr.bf16.mxu0 0
        %3718 = vmatmul.mubr.bf16.gmra.mxu0 %v3671
        %v3719 = vpop.f32.mrf.mxu0
        %v3720 = vadd.f32 0.0, %v3719
        %v3721 = vpop.f32.mrf.mxu0
        %v3722 = vpop.f32.mrf.mxu0
        %v3723 = vadd.f32 0.0, %v3722
        %v3724 = vpop.f32.mrf.mxu0
        %3725 = vmatprep.mubr.bf16.mxu0 0
        %3726 = vmatmul.mubr.bf16.gmra.mxu0 %v3674
        %v3727 = vpop.f32.mrf.mxu0
        %v3728 = vadd.f32 0.0, %v3727
        %v3729 = vpop.f32.mrf.mxu0
        %v3730 = vpop.f32.mrf.mxu0
        %v3731 = vadd.f32 0.0, %v3730
        %v3732 = vpop.f32.mrf.mxu0
        %3733 = vmatprep.mubr.bf16.mxu0 0
        %3734 = vmatmul.mubr.bf16.gmra.mxu0 %v3677
        %v3735 = vpop.f32.mrf.mxu0
        %v3736 = vadd.f32 0.0, %v3735
        %v3737 = vpop.f32.mrf.mxu0
        %v3738 = vpop.f32.mrf.mxu0
        %v3739 = vadd.f32 0.0, %v3738
        %v3740 = vpop.f32.mrf.mxu0
        %3741 = vmatprep.mubr.bf16.mxu0 0
        %3742 = vmatmul.mubr.bf16.gmra.mxu0 %v3680
        %v3743 = vpop.f32.mrf.mxu0
        %v3744 = vadd.f32 0.0, %v3743
        %v3745 = vpop.f32.mrf.mxu0
        %v3746 = vpop.f32.mrf.mxu0
        %v3747 = vadd.f32 0.0, %v3746
        %v3748 = vpop.f32.mrf.mxu0
        %3749 = vdwg.mxu0
        %v3750 = vadd.f32 %v3586, %v3720
        %v3751 = vadd.f32 %v3587, %v3723
        %v3752 = vadd.f32 %v3588, %v3728
        %v3753 = vadd.f32 %v3589, %v3731
        %v3754 = vadd.f32 %v3590, %v3736
        %v3755 = vadd.f32 %v3591, %v3739
        %v3756 = vadd.f32 %v3592, %v3744
        %v3757 = vadd.f32 %v3593, %v3747
        %v3758 = vmul.f32 %v3618, 0.03125
        %v3759 = vmul.f32 %v3619, 0.03125
        %v3760 = vmul.f32 %v3620, 0.03125
        %v3761 = vmul.f32 %v3621, 0.03125
        %v3762 = vmul.f32 %v3622, 0.03125
        %v3763 = vmul.f32 %v3623, 0.03125
        %v3764 = vmul.f32 %v3624, 0.03125
        %v3765 = vmul.f32 %v3625, 0.03125
        %v3766 = vmul.f32 %v3658, 0.03125
        %v3767 = vmul.f32 %v3659, 0.03125
        %v3768 = vmul.f32 %v3660, 0.03125
        %v3769 = vmul.f32 %v3661, 0.03125
        %v3770 = vmul.f32 %v3662, 0.03125
        %v3771 = vmul.f32 %v3663, 0.03125
        %v3772 = vmul.f32 %v3664, 0.03125
        %v3773 = vmul.f32 %v3665, 0.03125
        %v3774 = vmul.f32 %v3758, %v3758
        %v3775 = vmul.f32 %v3759, %v3759
        %v3776 = vmul.f32 %v3760, %v3760
        %v3777 = vmul.f32 %v3761, %v3761
        %v3778 = vmul.f32 %v3762, %v3762
        %v3779 = vmul.f32 %v3763, %v3763
        %v3780 = vmul.f32 %v3764, %v3764
        %v3781 = vmul.f32 %v3765, %v3765
        %v3782 = vsub.f32 %v3766, %v3774
        %v3783 = vsub.f32 %v3767, %v3775
        %v3784 = vsub.f32 %v3768, %v3776
        %v3785 = vsub.f32 %v3769, %v3777
        %v3786 = vsub.f32 %v3770, %v3778
        %v3787 = vsub.f32 %v3771, %v3779
        %v3788 = vsub.f32 %v3772, %v3780
        %v3789 = vsub.f32 %v3773, %v3781
        %v3790 = vadd.f32 %v3782, 1e-05
        %v3791 = vadd.f32 %v3783, 1e-05
        %v3792 = vadd.f32 %v3784, 1e-05
        %v3793 = vadd.f32 %v3785, 1e-05
        %v3794 = vadd.f32 %v3786, 1e-05
        %v3795 = vadd.f32 %v3787, 1e-05
        %v3796 = vadd.f32 %v3788, 1e-05
        %v3797 = vadd.f32 %v3789, 1e-05
        %v3798 = vrsqrt.pop %v3790
        %v3799 = vrsqrt.pop %v3791
        %v3800 = vrsqrt.pop %v3792
        %v3801 = vrsqrt.pop %v3793
        %v3802 = vrsqrt.pop %v3794
        %v3803 = vrsqrt.pop %v3795
        %v3804 = vrsqrt.pop %v3796
        %v3805 = vrsqrt.pop %v3797
        %v3806 = vmul.f32 %v3758, %v3117
        %v3807 = vmul.f32 %v3759, %v3117
        %v3808 = vmul.f32 %v3760, %v3117
        %v3809 = vmul.f32 %v3761, %v3117
        %v3810 = vmul.f32 %v3762, %v3117
        %v3811 = vmul.f32 %v3763, %v3117
        %v3812 = vmul.f32 %v3764, %v3117
        %v3813 = vmul.f32 %v3765, %v3117
        %v3814 = vsub.f32 %v3750, %v3806
        %v3815 = vsub.f32 %v3751, %v3807
        %v3816 = vsub.f32 %v3752, %v3808
        %v3817 = vsub.f32 %v3753, %v3809
        %v3818 = vsub.f32 %v3754, %v3810
        %v3819 = vsub.f32 %v3755, %v3811
        %v3820 = vsub.f32 %v3756, %v3812
        %v3821 = vsub.f32 %v3757, %v3813
        %v3822 = vmul.f32 %v3798, %v3814
        %v3823 = vmul.f32 %v3799, %v3815
        %v3824 = vmul.f32 %v3800, %v3816
        %v3825 = vmul.f32 %v3801, %v3817
        %v3826 = vmul.f32 %v3802, %v3818
        %v3827 = vmul.f32 %v3803, %v3819
        %v3828 = vmul.f32 %v3804, %v3820
        %v3829 = vmul.f32 %v3805, %v3821
        %v3830 = vld [vmem:[%s7] sm:$0x1]
        %v3832 = vlaneseq
        %v3833 = vshrl.u32 %v3832, 7
        %v3834 = vsub.s32 0, %v3833
        %v3835 = vrot.slane %v3830, %v3834
        %v3837 = vadd.f32 %v3822, %v3835
        %v3838 = vadd.f32 %v3823, %v3835
        %v3839 = vadd.f32 %v3824, %v3835
        %v3840 = vadd.f32 %v3825, %v3835
        %v3841 = vadd.f32 %v3826, %v3835
        %v3842 = vadd.f32 %v3827, %v3835
        %v3843 = vadd.f32 %v3828, %v3835
        %v3844 = vadd.f32 %v3829, %v3835
        %v3845 = vpack.c.bf16 %v3838, %v3837
        %v3846 = vpack.c.bf16 %v3840, %v3839
        %v3847 = vpack.c.bf16 %v3842, %v3841
        %v3848 = vpack.c.bf16 %v3844, %v3843
        %v3849 = vld [vmem:[%s8] sm:$0xf]
        %v3850 = vld [vmem:[%s8 + $0x4] sm:$0xf]
        %v3851 = vld [vmem:[%s9] sm:$0x1]
        %v3853 = vlaneseq
        %v3854 = vshrl.u32 %v3853, 7
        %v3855 = vsub.s32 0, %v3854
        %v3856 = vrot.slane %v3851, %v3855
        %v3860 = vunpack.c.l.b16 %v3849
        %v3861 = vunpack.c.l.b16 %v3850
        %v3862 = vpack.c.b16 %v3861, %v3860
        %v3865 = vsel %vm3104, %v3845, 0
        %v3868 = vsel %vm3104, %v3846, 0
        %v3871 = vsel %vm3104, %v3847, 0
        %v3874 = vsel %vm3104, %v3848, 0
        %3876 = vmatprep.subr.bf16.mxu0 0
        %3877 = vmatpush1.bf16.msra.mxu0 0
        %3878 = vmatprep.subr.bf16.mxu0 0
        %3879 = vmatpush1.bf16.msra.mxu0 0
        %3880 = vmatprep.subr.bf16.mxu0 0
        %3881 = vmatpush1.bf16.msra.mxu0 0
        %3882 = vmatprep.subr.bf16.mxu0 0
        %3883 = vmatpush1.bf16.msra.mxu0 0
        %3884 = vmatprep.subr.bf16.mxu0 0
        %3885 = vmatpush1.bf16.msra.mxu0 0
        %3886 = vmatprep.subr.bf16.mxu0 0
        %3887 = vmatpush1.bf16.msra.mxu0 0
        %3888 = vmatprep.subr.bf16.mxu0 0
        %3889 = vmatpush1.bf16.msra.mxu0 0
        %3890 = vmatprep.subr.bf16.mxu0 0
        %3891 = vmatpush1.bf16.msra.mxu0 %v3862
        %3892 = vmatprep.subr.bf16.mxu0 0
        %3893 = vmatpush2.bf16.msra.mxu0 0
        %3894 = vmatprep.subr.bf16.mxu0 0
        %3895 = vmatpush2.bf16.msra.mxu0 0
        %3896 = vmatprep.subr.bf16.mxu0 0
        %3897 = vmatpush2.bf16.msra.mxu0 0
        %3898 = vmatprep.subr.bf16.mxu0 0
        %3899 = vmatpush2.bf16.msra.mxu0 0
        %3900 = vmatprep.subr.bf16.mxu0 0
        %3901 = vmatpush2.bf16.msra.mxu0 0
        %3902 = vmatprep.subr.bf16.mxu0 0
        %3903 = vmatpush2.bf16.msra.mxu0 0
        %3904 = vmatprep.subr.bf16.mxu0 0
        %3905 = vmatpush2.bf16.msra.mxu0 0
        %3906 = vmatprep.subr.bf16.mxu0 0
        %3907 = vmatpush2.bf16.msra.mxu0 0
        %3908 = vmatprep.mubr.bf16.mxu0 0
        %3909 = vmatmul.mubr.bf16.gmra.mxu0 %v3865
        %v3910 = vpop.f32.mrf.mxu0
        %v3911 = vadd.f32 %v3856, %v3910
        %v3912 = vpop.f32.mrf.mxu0
        %v3913 = vpop.f32.mrf.mxu0
        %v3914 = vadd.f32 %v3856, %v3913
        %v3915 = vpop.f32.mrf.mxu0
        %3916 = vmatprep.mubr.bf16.mxu0 0
        %3917 = vmatmul.mubr.bf16.gmra.mxu0 %v3868
        %v3918 = vpop.f32.mrf.mxu0
        %v3919 = vadd.f32 %v3856, %v3918
        %v3920 = vpop.f32.mrf.mxu0
        %v3921 = vpop.f32.mrf.mxu0
        %v3922 = vadd.f32 %v3856, %v3921
        %v3923 = vpop.f32.mrf.mxu0
        %3924 = vmatprep.mubr.bf16.mxu0 0
        %3925 = vmatmul.mubr.bf16.gmra.mxu0 %v3871
        %v3926 = vpop.f32.mrf.mxu0
        %v3927 = vadd.f32 %v3856, %v3926
        %v3928 = vpop.f32.mrf.mxu0
        %v3929 = vpop.f32.mrf.mxu0
        %v3930 = vadd.f32 %v3856, %v3929
        %v3931 = vpop.f32.mrf.mxu0
        %3932 = vmatprep.mubr.bf16.mxu0 0
        %3933 = vmatmul.mubr.bf16.gmra.mxu0 %v3874
        %v3934 = vpop.f32.mrf.mxu0
        %v3935 = vadd.f32 %v3856, %v3934
        %v3936 = vpop.f32.mrf.mxu0
        %v3937 = vpop.f32.mrf.mxu0
        %v3938 = vadd.f32 %v3856, %v3937
        %v3939 = vpop.f32.mrf.mxu0
        %3940 = vdwg.mxu0
        %v3941 = vpack.c.bf16 %v3914, %v3911
        %v3942 = vpack.c.bf16 %v3922, %v3919
        %v3943 = vpack.c.bf16 %v3930, %v3927
        %v3944 = vpack.c.bf16 %v3938, %v3935
        %s3945 = scalar_lea.vmem %s8, 8
        %v3946 = vld [vmem:[%s3945] sm:$0xf]
        %v3947 = vld [vmem:[%s3945 + $0x4] sm:$0xf]
        %s3948 = scalar_lea.vmem %s9, 1
        %v3949 = vld [vmem:[%s3948] sm:$0x1]
        %v3951 = vlaneseq
        %v3952 = vshrl.u32 %v3951, 7
        %v3953 = vsub.s32 0, %v3952
        %v3954 = vrot.slane %v3949, %v3953
        %v3958 = vunpack.c.l.b16 %v3946
        %v3959 = vunpack.c.l.b16 %v3947
        %v3960 = vpack.c.b16 %v3959, %v3958
        %3962 = vmatprep.subr.bf16.mxu0 0
        %3963 = vmatpush1.bf16.msra.mxu0 0
        %3964 = vmatprep.subr.bf16.mxu0 0
        %3965 = vmatpush1.bf16.msra.mxu0 0
        %3966 = vmatprep.subr.bf16.mxu0 0
        %3967 = vmatpush1.bf16.msra.mxu0 0
        %3968 = vmatprep.subr.bf16.mxu0 0
        %3969 = vmatpush1.bf16.msra.mxu0 0
        %3970 = vmatprep.subr.bf16.mxu0 0
        %3971 = vmatpush1.bf16.msra.mxu0 0
        %3972 = vmatprep.subr.bf16.mxu0 0
        %3973 = vmatpush1.bf16.msra.mxu0 0
        %3974 = vmatprep.subr.bf16.mxu0 0
        %3975 = vmatpush1.bf16.msra.mxu0 0
        %3976 = vmatprep.subr.bf16.mxu0 0
        %3977 = vmatpush1.bf16.msra.mxu0 %v3960
        %3978 = vmatprep.subr.bf16.mxu0 0
        %3979 = vmatpush2.bf16.msra.mxu0 0
        %3980 = vmatprep.subr.bf16.mxu0 0
        %3981 = vmatpush2.bf16.msra.mxu0 0
        %3982 = vmatprep.subr.bf16.mxu0 0
        %3983 = vmatpush2.bf16.msra.mxu0 0
        %3984 = vmatprep.subr.bf16.mxu0 0
        %3985 = vmatpush2.bf16.msra.mxu0 0
        %3986 = vmatprep.subr.bf16.mxu0 0
        %3987 = vmatpush2.bf16.msra.mxu0 0
        %3988 = vmatprep.subr.bf16.mxu0 0
        %3989 = vmatpush2.bf16.msra.mxu0 0
        %3990 = vmatprep.subr.bf16.mxu0 0
        %3991 = vmatpush2.bf16.msra.mxu0 0
        %3992 = vmatprep.subr.bf16.mxu0 0
        %3993 = vmatpush2.bf16.msra.mxu0 0
        %3994 = vmatprep.mubr.bf16.mxu0 0
        %3995 = vmatmul.mubr.bf16.gmra.mxu0 %v3865
        %v3996 = vpop.f32.mrf.mxu0
        %v3997 = vadd.f32 %v3954, %v3996
        %v3998 = vpop.f32.mrf.mxu0
        %v3999 = vpop.f32.mrf.mxu0
        %v4000 = vadd.f32 %v3954, %v3999
        %v4001 = vpop.f32.mrf.mxu0
        %4002 = vmatprep.mubr.bf16.mxu0 0
        %4003 = vmatmul.mubr.bf16.gmra.mxu0 %v3868
        %v4004 = vpop.f32.mrf.mxu0
        %v4005 = vadd.f32 %v3954, %v4004
        %v4006 = vpop.f32.mrf.mxu0
        %v4007 = vpop.f32.mrf.mxu0
        %v4008 = vadd.f32 %v3954, %v4007
        %v4009 = vpop.f32.mrf.mxu0
        %4010 = vmatprep.mubr.bf16.mxu0 0
        %4011 = vmatmul.mubr.bf16.gmra.mxu0 %v3871
        %v4012 = vpop.f32.mrf.mxu0
        %v4013 = vadd.f32 %v3954, %v4012
        %v4014 = vpop.f32.mrf.mxu0
        %v4015 = vpop.f32.mrf.mxu0
        %v4016 = vadd.f32 %v3954, %v4015
        %v4017 = vpop.f32.mrf.mxu0
        %4018 = vmatprep.mubr.bf16.mxu0 0
        %4019 = vmatmul.mubr.bf16.gmra.mxu0 %v3874
        %v4020 = vpop.f32.mrf.mxu0
        %v4021 = vadd.f32 %v3954, %v4020
        %v4022 = vpop.f32.mrf.mxu0
        %v4023 = vpop.f32.mrf.mxu0
        %v4024 = vadd.f32 %v3954, %v4023
        %v4025 = vpop.f32.mrf.mxu0
        %4026 = vdwg.mxu0
        %v4027 = vpack.c.bf16 %v4000, %v3997
        %v4028 = vpack.c.bf16 %v4008, %v4005
        %v4029 = vpack.c.bf16 %v4016, %v4013
        %v4030 = vpack.c.bf16 %v4024, %v4021
        %s4031 = scalar_lea.vmem %s8, 16
        %v4032 = vld [vmem:[%s4031] sm:$0xf]
        %v4033 = vld [vmem:[%s4031 + $0x4] sm:$0xf]
        %s4034 = scalar_lea.vmem %s9, 2
        %v4035 = vld [vmem:[%s4034] sm:$0x1]
        %v4037 = vlaneseq
        %v4038 = vshrl.u32 %v4037, 7
        %v4039 = vsub.s32 0, %v4038
        %v4040 = vrot.slane %v4035, %v4039
        %v4044 = vunpack.c.l.b16 %v4032
        %v4045 = vunpack.c.l.b16 %v4033
        %v4046 = vpack.c.b16 %v4045, %v4044
        %4048 = vmatprep.subr.bf16.mxu0 0
        %4049 = vmatpush1.bf16.msra.mxu0 0
        %4050 = vmatprep.subr.bf16.mxu0 0
        %4051 = vmatpush1.bf16.msra.mxu0 0
        %4052 = vmatprep.subr.bf16.mxu0 0
        %4053 = vmatpush1.bf16.msra.mxu0 0
        %4054 = vmatprep.subr.bf16.mxu0 0
        %4055 = vmatpush1.bf16.msra.mxu0 0
        %4056 = vmatprep.subr.bf16.mxu0 0
        %4057 = vmatpush1.bf16.msra.mxu0 0
        %4058 = vmatprep.subr.bf16.mxu0 0
        %4059 = vmatpush1.bf16.msra.mxu0 0
        %4060 = vmatprep.subr.bf16.mxu0 0
        %4061 = vmatpush1.bf16.msra.mxu0 0
        %4062 = vmatprep.subr.bf16.mxu0 0
        %4063 = vmatpush1.bf16.msra.mxu0 %v4046
        %4064 = vmatprep.subr.bf16.mxu0 0
        %4065 = vmatpush2.bf16.msra.mxu0 0
        %4066 = vmatprep.subr.bf16.mxu0 0
        %4067 = vmatpush2.bf16.msra.mxu0 0
        %4068 = vmatprep.subr.bf16.mxu0 0
        %4069 = vmatpush2.bf16.msra.mxu0 0
        %4070 = vmatprep.subr.bf16.mxu0 0
        %4071 = vmatpush2.bf16.msra.mxu0 0
        %4072 = vmatprep.subr.bf16.mxu0 0
        %4073 = vmatpush2.bf16.msra.mxu0 0
        %4074 = vmatprep.subr.bf16.mxu0 0
        %4075 = vmatpush2.bf16.msra.mxu0 0
        %4076 = vmatprep.subr.bf16.mxu0 0
        %4077 = vmatpush2.bf16.msra.mxu0 0
        %4078 = vmatprep.subr.bf16.mxu0 0
        %4079 = vmatpush2.bf16.msra.mxu0 0
        %4080 = vmatprep.mubr.bf16.mxu0 0
        %4081 = vmatmul.mubr.bf16.gmra.mxu0 %v3865
        %v4082 = vpop.f32.mrf.mxu0
        %v4083 = vadd.f32 %v4040, %v4082
        %v4084 = vpop.f32.mrf.mxu0
        %v4085 = vpop.f32.mrf.mxu0
        %v4086 = vadd.f32 %v4040, %v4085
        %v4087 = vpop.f32.mrf.mxu0
        %4088 = vmatprep.mubr.bf16.mxu0 0
        %4089 = vmatmul.mubr.bf16.gmra.mxu0 %v3868
        %v4090 = vpop.f32.mrf.mxu0
        %v4091 = vadd.f32 %v4040, %v4090
        %v4092 = vpop.f32.mrf.mxu0
        %v4093 = vpop.f32.mrf.mxu0
        %v4094 = vadd.f32 %v4040, %v4093
        %v4095 = vpop.f32.mrf.mxu0
        %4096 = vmatprep.mubr.bf16.mxu0 0
        %4097 = vmatmul.mubr.bf16.gmra.mxu0 %v3871
        %v4098 = vpop.f32.mrf.mxu0
        %v4099 = vadd.f32 %v4040, %v4098
        %v4100 = vpop.f32.mrf.mxu0
        %v4101 = vpop.f32.mrf.mxu0
        %v4102 = vadd.f32 %v4040, %v4101
        %v4103 = vpop.f32.mrf.mxu0
        %4104 = vmatprep.mubr.bf16.mxu0 0
        %4105 = vmatmul.mubr.bf16.gmra.mxu0 %v3874
        %v4106 = vpop.f32.mrf.mxu0
        %v4107 = vadd.f32 %v4040, %v4106
        %v4108 = vpop.f32.mrf.mxu0
        %v4109 = vpop.f32.mrf.mxu0
        %v4110 = vadd.f32 %v4040, %v4109
        %v4111 = vpop.f32.mrf.mxu0
        %4112 = vdwg.mxu0
        %v4113 = vpack.c.bf16 %v4086, %v4083
        %v4114 = vpack.c.bf16 %v4094, %v4091
        %v4115 = vpack.c.bf16 %v4102, %v4099
        %v4116 = vpack.c.bf16 %v4110, %v4107
        %v4118 = vsel %vm3104, %v3941, 0
        %v4121 = vsel %vm3104, %v3942, 0
        %v4124 = vsel %vm3104, %v3943, 0
        %v4127 = vsel %vm3104, %v3944, 0
        %v4130 = vsel %vm3104, %v4027, 0
        %v4133 = vsel %vm3104, %v4028, 0
        %v4136 = vsel %vm3104, %v4029, 0
        %v4139 = vsel %vm3104, %v4030, 0
        %4141 = vmatprep.subr.bf16.mxu0 0
        %4142 = vmatpush1.bf16.xpose.msra.mxu0 0
        %4143 = vmatprep.subr.bf16.mxu0 0
        %4144 = vmatpush1.bf16.xpose.msra.mxu0 0
        %4145 = vmatprep.subr.bf16.mxu0 0
        %4146 = vmatpush1.bf16.xpose.msra.mxu0 0
        %4147 = vmatprep.subr.bf16.mxu0 0
        %4148 = vmatpush1.bf16.xpose.msra.mxu0 0
        %4149 = vmatprep.subr.bf16.mxu0 0
        %4150 = vmatpush1.bf16.xpose.msra.mxu0 %v4139
        %4151 = vmatprep.subr.bf16.mxu0 0
        %4152 = vmatpush1.bf16.xpose.msra.mxu0 %v4136
        %4153 = vmatprep.subr.bf16.mxu0 0
        %4154 = vmatpush1.bf16.xpose.msra.mxu0 %v4133
        %4155 = vmatprep.subr.bf16.mxu0 0
        %4156 = vmatpush1.bf16.xpose.msra.mxu0 %v4130
        %4157 = vmatprep.subr.bf16.mxu0 0
        %4158 = vmatpush2.bf16.xpose.msra.mxu0 0
        %4159 = vmatprep.subr.bf16.mxu0 0
        %4160 = vmatpush2.bf16.xpose.msra.mxu0 0
        %4161 = vmatprep.subr.bf16.mxu0 0
        %4162 = vmatpush2.bf16.xpose.msra.mxu0 0
        %4163 = vmatprep.subr.bf16.mxu0 0
        %4164 = vmatpush2.bf16.xpose.msra.mxu0 0
        %4165 = vmatprep.subr.bf16.mxu0 0
        %4166 = vmatpush2.bf16.xpose.msra.mxu0 0
        %4167 = vmatprep.subr.bf16.mxu0 0
        %4168 = vmatpush2.bf16.xpose.msra.mxu0 0
        %4169 = vmatprep.subr.bf16.mxu0 0
        %4170 = vmatpush2.bf16.xpose.msra.mxu0 0
        %4171 = vmatprep.subr.bf16.mxu0 0
        %4172 = vmatpush2.bf16.xpose.msra.mxu0 0
        %4173 = vmatprep.mubr.bf16.mxu0 0
        %4174 = vmatmul.mubr.bf16.gmra.mxu0 %v4118
        %v4175 = vpop.f32.mrf.mxu0
        %v4176 = vadd.f32 0.0, %v4175
        %v4177 = vpop.f32.mrf.mxu0
        %v4178 = vpop.f32.mrf.mxu0
        %v4179 = vadd.f32 0.0, %v4178
        %v4180 = vpop.f32.mrf.mxu0
        %4181 = vmatprep.mubr.bf16.mxu0 0
        %4182 = vmatmul.mubr.bf16.gmra.mxu0 %v4121
        %v4183 = vpop.f32.mrf.mxu0
        %v4184 = vadd.f32 0.0, %v4183
        %v4185 = vpop.f32.mrf.mxu0
        %v4186 = vpop.f32.mrf.mxu0
        %v4187 = vadd.f32 0.0, %v4186
        %v4188 = vpop.f32.mrf.mxu0
        %4189 = vmatprep.mubr.bf16.mxu0 0
        %4190 = vmatmul.mubr.bf16.gmra.mxu0 %v4124
        %v4191 = vpop.f32.mrf.mxu0
        %v4192 = vadd.f32 0.0, %v4191
        %v4193 = vpop.f32.mrf.mxu0
        %v4194 = vpop.f32.mrf.mxu0
        %v4195 = vadd.f32 0.0, %v4194
        %v4196 = vpop.f32.mrf.mxu0
        %4197 = vmatprep.mubr.bf16.mxu0 0
        %4198 = vmatmul.mubr.bf16.gmra.mxu0 %v4127
        %v4199 = vpop.f32.mrf.mxu0
        %v4200 = vadd.f32 0.0, %v4199
        %v4201 = vpop.f32.mrf.mxu0
        %v4202 = vpop.f32.mrf.mxu0
        %v4203 = vadd.f32 0.0, %v4202
        %v4204 = vpop.f32.mrf.mxu0
        %4205 = vdwg.mxu0
        %vm4206 = vcmask 523264
        %v4207 = vsel %vm4206, %v4176, -inf
        %4208 = vmax.xlane.f32.xlu0 %v4207
        %v4209 = vpop.xlane.xlu0 %4208
        %v4210 = vsel %vm4206, %v4179, -inf
        %4211 = vmax.xlane.f32.xlu0 %v4210
        %v4212 = vpop.xlane.xlu0 %4211
        %v4213 = vsel %vm4206, %v4184, -inf
        %4214 = vmax.xlane.f32.xlu0 %v4213
        %v4215 = vpop.xlane.xlu0 %4214
        %v4216 = vsel %vm4206, %v4187, -inf
        %4217 = vmax.xlane.f32.xlu0 %v4216
        %v4218 = vpop.xlane.xlu0 %4217
        %v4219 = vsel %vm4206, %v4192, -inf
        %4220 = vmax.xlane.f32.xlu0 %v4219
        %v4221 = vpop.xlane.xlu0 %4220
        %v4222 = vsel %vm4206, %v4195, -inf
        %4223 = vmax.xlane.f32.xlu0 %v4222
        %v4224 = vpop.xlane.xlu0 %4223
        %v4225 = vsel %vm4206, %v4200, -inf
        %4226 = vmax.xlane.f32.xlu0 %v4225
        %v4227 = vpop.xlane.xlu0 %4226
        %v4228 = vsel %vm4206, %v4203, -inf
        %4229 = vmax.xlane.f32.xlu0 %v4228
        %v4230 = vpop.xlane.xlu0 %4229
        %v4231 = vsub.f32 %v4176, %v4209
        %v4232 = vsub.f32 %v4179, %v4212
        %v4233 = vsub.f32 %v4184, %v4215
        %v4234 = vsub.f32 %v4187, %v4218
        %v4235 = vsub.f32 %v4192, %v4221
        %v4236 = vsub.f32 %v4195, %v4224
        %v4237 = vsub.f32 %v4200, %v4227
        %v4238 = vsub.f32 %v4203, %v4230
        %v4239 = vmul.f32 %v4231, 1.442695
        %v4240 = vpow.pop %v4239
        %v4241 = vmul.f32 %v4232, 1.442695
        %v4242 = vpow.pop %v4241
        %v4243 = vmul.f32 %v4233, 1.442695
        %v4244 = vpow.pop %v4243
        %v4245 = vmul.f32 %v4234, 1.442695
        %v4246 = vpow.pop %v4245
        %v4247 = vmul.f32 %v4235, 1.442695
        %v4248 = vpow.pop %v4247
        %v4249 = vmul.f32 %v4236, 1.442695
        %v4250 = vpow.pop %v4249
        %v4251 = vmul.f32 %v4237, 1.442695
        %v4252 = vpow.pop %v4251
        %v4253 = vmul.f32 %v4238, 1.442695
        %v4254 = vpow.pop %v4253
        %v4255 = vsel %vm4206, %v4240, 0.0
        %4256 = vadd.xlane.f32.xlu0 %v4255
        %v4257 = vpop.xlane.xlu0 %4256
        %v4258 = vsel %vm4206, %v4242, 0.0
        %4259 = vadd.xlane.f32.xlu0 %v4258
        %v4260 = vpop.xlane.xlu0 %4259
        %v4261 = vsel %vm4206, %v4244, 0.0
        %4262 = vadd.xlane.f32.xlu0 %v4261
        %v4263 = vpop.xlane.xlu0 %4262
        %v4264 = vsel %vm4206, %v4246, 0.0
        %4265 = vadd.xlane.f32.xlu0 %v4264
        %v4266 = vpop.xlane.xlu0 %4265
        %v4267 = vsel %vm4206, %v4248, 0.0
        %4268 = vadd.xlane.f32.xlu0 %v4267
        %v4269 = vpop.xlane.xlu0 %4268
        %v4270 = vsel %vm4206, %v4250, 0.0
        %4271 = vadd.xlane.f32.xlu0 %v4270
        %v4272 = vpop.xlane.xlu0 %4271
        %v4273 = vsel %vm4206, %v4252, 0.0
        %4274 = vadd.xlane.f32.xlu0 %v4273
        %v4275 = vpop.xlane.xlu0 %4274
        %v4276 = vsel %vm4206, %v4254, 0.0
        %4277 = vadd.xlane.f32.xlu0 %v4276
        %v4278 = vpop.xlane.xlu0 %4277
        %v4279 = vpack.c.bf16 %v4242, %v4240
        %v4280 = vpack.c.bf16 %v4246, %v4244
        %v4281 = vpack.c.bf16 %v4250, %v4248
        %v4282 = vpack.c.bf16 %v4254, %v4252
        %v4284 = vsel %vm4206, %v4279, 0
        %v4287 = vsel %vm4206, %v4280, 0
        %v4290 = vsel %vm4206, %v4281, 0
        %v4293 = vsel %vm4206, %v4282, 0
        %4295 = vmatprep.subr.bf16.mxu0 0
        %4296 = vmatpush1.bf16.msra.mxu0 0
        %4297 = vmatprep.subr.bf16.mxu0 0
        %4298 = vmatpush1.bf16.msra.mxu0 0
        %4299 = vmatprep.subr.bf16.mxu0 0
        %4300 = vmatpush1.bf16.msra.mxu0 0
        %4301 = vmatprep.subr.bf16.mxu0 0
        %4302 = vmatpush1.bf16.msra.mxu0 0
        %4303 = vmatprep.subr.bf16.mxu0 0
        %4304 = vmatpush1.bf16.msra.mxu0 %v4116
        %4305 = vmatprep.subr.bf16.mxu0 0
        %4306 = vmatpush1.bf16.msra.mxu0 %v4115
        %4307 = vmatprep.subr.bf16.mxu0 0
        %4308 = vmatpush1.bf16.msra.mxu0 %v4114
        %4309 = vmatprep.subr.bf16.mxu0 0
        %4310 = vmatpush1.bf16.msra.mxu0 %v4113
        %4311 = vmatprep.subr.bf16.mxu0 0
        %4312 = vmatpush2.bf16.msra.mxu0 0
        %4313 = vmatprep.subr.bf16.mxu0 0
        %4314 = vmatpush2.bf16.msra.mxu0 0
        %4315 = vmatprep.subr.bf16.mxu0 0
        %4316 = vmatpush2.bf16.msra.mxu0 0
        %4317 = vmatprep.subr.bf16.mxu0 0
        %4318 = vmatpush2.bf16.msra.mxu0 0
        %4319 = vmatprep.subr.bf16.mxu0 0
        %4320 = vmatpush2.bf16.msra.mxu0 0
        %4321 = vmatprep.subr.bf16.mxu0 0
        %4322 = vmatpush2.bf16.msra.mxu0 0
        %4323 = vmatprep.subr.bf16.mxu0 0
        %4324 = vmatpush2.bf16.msra.mxu0 0
        %4325 = vmatprep.subr.bf16.mxu0 0
        %4326 = vmatpush2.bf16.msra.mxu0 0
        %4327 = vmatprep.mubr.bf16.mxu0 0
        %4328 = vmatmul.mubr.bf16.gmra.mxu0 %v4284
        %v4329 = vpop.f32.mrf.mxu0
        %v4330 = vadd.f32 0.0, %v4329
        %v4331 = vpop.f32.mrf.mxu0
        %v4332 = vpop.f32.mrf.mxu0
        %v4333 = vadd.f32 0.0, %v4332
        %v4334 = vpop.f32.mrf.mxu0
        %4335 = vmatprep.mubr.bf16.mxu0 0
        %4336 = vmatmul.mubr.bf16.gmra.mxu0 %v4287
        %v4337 = vpop.f32.mrf.mxu0
        %v4338 = vadd.f32 0.0, %v4337
        %v4339 = vpop.f32.mrf.mxu0
        %v4340 = vpop.f32.mrf.mxu0
        %v4341 = vadd.f32 0.0, %v4340
        %v4342 = vpop.f32.mrf.mxu0
        %4343 = vmatprep.mubr.bf16.mxu0 0
        %4344 = vmatmul.mubr.bf16.gmra.mxu0 %v4290
        %v4345 = vpop.f32.mrf.mxu0
        %v4346 = vadd.f32 0.0, %v4345
        %v4347 = vpop.f32.mrf.mxu0
        %v4348 = vpop.f32.mrf.mxu0
        %v4349 = vadd.f32 0.0, %v4348
        %v4350 = vpop.f32.mrf.mxu0
        %4351 = vmatprep.mubr.bf16.mxu0 0
        %4352 = vmatmul.mubr.bf16.gmra.mxu0 %v4293
        %v4353 = vpop.f32.mrf.mxu0
        %v4354 = vadd.f32 0.0, %v4353
        %v4355 = vpop.f32.mrf.mxu0
        %v4356 = vpop.f32.mrf.mxu0
        %v4357 = vadd.f32 0.0, %v4356
        %v4358 = vpop.f32.mrf.mxu0
        %4359 = vdwg.mxu0
        %v4360 = vrcp.pop %v4257
        %v4361 = vmul.f32 %v4330, %v4360
        %v4362 = vrcp.pop %v4260
        %v4363 = vmul.f32 %v4333, %v4362
        %v4364 = vrcp.pop %v4263
        %v4365 = vmul.f32 %v4338, %v4364
        %v4366 = vrcp.pop %v4266
        %v4367 = vmul.f32 %v4341, %v4366
        %v4368 = vrcp.pop %v4269
        %v4369 = vmul.f32 %v4346, %v4368
        %v4370 = vrcp.pop %v4272
        %v4371 = vmul.f32 %v4349, %v4370
        %v4372 = vrcp.pop %v4275
        %v4373 = vmul.f32 %v4354, %v4372
        %v4374 = vrcp.pop %v4278
        %v4375 = vmul.f32 %v4357, %v4374
        %v4376 = vpack.c.bf16 %v4363, %v4361
        %v4377 = vpack.c.bf16 %v4367, %v4365
        %v4378 = vpack.c.bf16 %v4371, %v4369
        %v4379 = vpack.c.bf16 %v4375, %v4373
        %v4380 = vld [vmem:[%s10] sm:$0xf]
        %v4381 = vld [vmem:[%s10 + $0x4] sm:$0xf]
        %v4382 = vld [vmem:[%s11] sm:$0x1]
        %v4384 = vlaneseq
        %v4385 = vshrl.u32 %v4384, 7
        %v4386 = vsub.s32 0, %v4385
        %v4387 = vrot.slane %v4382, %v4386
        %v4391 = vunpack.c.l.b16 %v4380
        %v4392 = vunpack.c.l.b16 %v4381
        %v4393 = vpack.c.b16 %v4392, %v4391
        %v4396 = vsel %vm3104, %v4376, 0
        %v4399 = vsel %vm3104, %v4377, 0
        %v4402 = vsel %vm3104, %v4378, 0
        %v4405 = vsel %vm3104, %v4379, 0
        %4407 = vmatprep.subr.bf16.mxu0 0
        %4408 = vmatpush1.bf16.msra.mxu0 0
        %4409 = vmatprep.subr.bf16.mxu0 0
        %4410 = vmatpush1.bf16.msra.mxu0 0
        %4411 = vmatprep.subr.bf16.mxu0 0
        %4412 = vmatpush1.bf16.msra.mxu0 0
        %4413 = vmatprep.subr.bf16.mxu0 0
        %4414 = vmatpush1.bf16.msra.mxu0 0
        %4415 = vmatprep.subr.bf16.mxu0 0
        %4416 = vmatpush1.bf16.msra.mxu0 0
        %4417 = vmatprep.subr.bf16.mxu0 0
        %4418 = vmatpush1.bf16.msra.mxu0 0
        %4419 = vmatprep.subr.bf16.mxu0 0
        %4420 = vmatpush1.bf16.msra.mxu0 0
        %4421 = vmatprep.subr.bf16.mxu0 0
        %4422 = vmatpush1.bf16.msra.mxu0 %v4393
        %4423 = vmatprep.subr.bf16.mxu0 0
        %4424 = vmatpush2.bf16.msra.mxu0 0
        %4425 = vmatprep.subr.bf16.mxu0 0
        %4426 = vmatpush2.bf16.msra.mxu0 0
        %4427 = vmatprep.subr.bf16.mxu0 0
        %4428 = vmatpush2.bf16.msra.mxu0 0
        %4429 = vmatprep.subr.bf16.mxu0 0
        %4430 = vmatpush2.bf16.msra.mxu0 0
        %4431 = vmatprep.subr.bf16.mxu0 0
        %4432 = vmatpush2.bf16.msra.mxu0 0
        %4433 = vmatprep.subr.bf16.mxu0 0
        %4434 = vmatpush2.bf16.msra.mxu0 0
        %4435 = vmatprep.subr.bf16.mxu0 0
        %4436 = vmatpush2.bf16.msra.mxu0 0
        %4437 = vmatprep.subr.bf16.mxu0 0
        %4438 = vmatpush2.bf16.msra.mxu0 0
        %4439 = vmatprep.mubr.bf16.mxu0 0
        %4440 = vmatmul.mubr.bf16.gmra.mxu0 %v4396
        %v4441 = vpop.f32.mrf.mxu0
        %v4442 = vadd.f32 %v4387, %v4441
        %v4443 = vpop.f32.mrf.mxu0
        %v4444 = vpop.f32.mrf.mxu0
        %v4445 = vadd.f32 %v4387, %v4444
        %v4446 = vpop.f32.mrf.mxu0
        %4447 = vmatprep.mubr.bf16.mxu0 0
        %4448 = vmatmul.mubr.bf16.gmra.mxu0 %v4399
        %v4449 = vpop.f32.mrf.mxu0
        %v4450 = vadd.f32 %v4387, %v4449
        %v4451 = vpop.f32.mrf.mxu0
        %v4452 = vpop.f32.mrf.mxu0
        %v4453 = vadd.f32 %v4387, %v4452
        %v4454 = vpop.f32.mrf.mxu0
        %4455 = vmatprep.mubr.bf16.mxu0 0
        %4456 = vmatmul.mubr.bf16.gmra.mxu0 %v4402
        %v4457 = vpop.f32.mrf.mxu0
        %v4458 = vadd.f32 %v4387, %v4457
        %v4459 = vpop.f32.mrf.mxu0
        %v4460 = vpop.f32.mrf.mxu0
        %v4461 = vadd.f32 %v4387, %v4460
        %v4462 = vpop.f32.mrf.mxu0
        %4463 = vmatprep.mubr.bf16.mxu0 0
        %4464 = vmatmul.mubr.bf16.gmra.mxu0 %v4405
        %v4465 = vpop.f32.mrf.mxu0
        %v4466 = vadd.f32 %v4387, %v4465
        %v4467 = vpop.f32.mrf.mxu0
        %v4468 = vpop.f32.mrf.mxu0
        %v4469 = vadd.f32 %v4387, %v4468
        %v4470 = vpop.f32.mrf.mxu0
        %4471 = vdwg.mxu0
        %4472 = vst.msk [vmem:[%s797] sm:$0xff] %vm3104, %v4442
        %4473 = vst.msk [vmem:[%s797 + $0x8] sm:$0xff] %vm3104, %v4445
        %4474 = vst.msk [vmem:[%s797 + $0x10] sm:$0xff] %vm3104, %v4450
        %4475 = vst.msk [vmem:[%s797 + $0x18] sm:$0xff] %vm3104, %v4453
        %4476 = vst.msk [vmem:[%s797 + $0x20] sm:$0xff] %vm3104, %v4458
        %4477 = vst.msk [vmem:[%s797 + $0x28] sm:$0xff] %vm3104, %v4461
        %4478 = vst.msk [vmem:[%s797 + $0x30] sm:$0xff] %vm3104, %v4466
        %4479 = vst.msk [vmem:[%s797 + $0x38] sm:$0xff] %vm3104, %v4469
        %v4480 = vpack.c.bf16 %v4445, %v4442
        %v4481 = vpack.c.bf16 %v4453, %v4450
        %v4482 = vpack.c.bf16 %v4461, %v4458
        %v4483 = vpack.c.bf16 %v4469, %v4466
        %v4484 = vld [vmem:[%s12] sm:$0xf]
        %v4485 = vld [vmem:[%s12 + $0x4] sm:$0xf]
        %v4486 = vld [vmem:[%s12 + $0x8] sm:$0xf]
        %v4487 = vld [vmem:[%s12 + $0xc] sm:$0xf]
        %v4488 = vld [vmem:[%s12 + $0x10] sm:$0xf]
        %v4489 = vld [vmem:[%s12 + $0x14] sm:$0xf]
        %v4490 = vld [vmem:[%s12 + $0x18] sm:$0xf]
        %v4491 = vld [vmem:[%s12 + $0x1c] sm:$0xf]
        %v4500 = vunpack.c.l.b16 %v4484
        %v4501 = vunpack.c.l.b16 %v4485
        %v4502 = vunpack.c.l.b16 %v4486
        %v4503 = vunpack.c.l.b16 %v4487
        %v4504 = vunpack.c.l.b16 %v4488
        %v4505 = vunpack.c.l.b16 %v4489
        %v4506 = vunpack.c.l.b16 %v4490
        %v4507 = vunpack.c.l.b16 %v4491
        %v4508 = vpack.c.b16 %v4501, %v4500
        %v4509 = vpack.c.b16 %v4503, %v4502
        %v4510 = vpack.c.b16 %v4505, %v4504
        %v4511 = vpack.c.b16 %v4507, %v4506
        %v4513 = vsel %vm4206, %v4508, 0
        %v4516 = vsel %vm4206, %v4509, 0
        %v4519 = vsel %vm4206, %v4510, 0
        %v4522 = vsel %vm4206, %v4511, 0
        %4524 = vmatprep.subr.bf16.mxu0 0
        %4525 = vmatpush1.bf16.msra.mxu0 0
        %4526 = vmatprep.subr.bf16.mxu0 0
        %4527 = vmatpush1.bf16.msra.mxu0 0
        %4528 = vmatprep.subr.bf16.mxu0 0
        %4529 = vmatpush1.bf16.msra.mxu0 0
        %4530 = vmatprep.subr.bf16.mxu0 0
        %4531 = vmatpush1.bf16.msra.mxu0 0
        %4532 = vmatprep.subr.bf16.mxu0 0
        %4533 = vmatpush1.bf16.msra.mxu0 %v4483
        %4534 = vmatprep.subr.bf16.mxu0 0
        %4535 = vmatpush1.bf16.msra.mxu0 %v4482
        %4536 = vmatprep.subr.bf16.mxu0 0
        %4537 = vmatpush1.bf16.msra.mxu0 %v4481
        %4538 = vmatprep.subr.bf16.mxu0 0
        %4539 = vmatpush1.bf16.msra.mxu0 %v4480
        %4540 = vmatprep.subr.bf16.mxu0 0
        %4541 = vmatpush2.bf16.msra.mxu0 0
        %4542 = vmatprep.subr.bf16.mxu0 0
        %4543 = vmatpush2.bf16.msra.mxu0 0
        %4544 = vmatprep.subr.bf16.mxu0 0
        %4545 = vmatpush2.bf16.msra.mxu0 0
        %4546 = vmatprep.subr.bf16.mxu0 0
        %4547 = vmatpush2.bf16.msra.mxu0 0
        %4548 = vmatprep.subr.bf16.mxu0 0
        %4549 = vmatpush2.bf16.msra.mxu0 0
        %4550 = vmatprep.subr.bf16.mxu0 0
        %4551 = vmatpush2.bf16.msra.mxu0 0
        %4552 = vmatprep.subr.bf16.mxu0 0
        %4553 = vmatpush2.bf16.msra.mxu0 0
        %4554 = vmatprep.subr.bf16.mxu0 0
        %4555 = vmatpush2.bf16.msra.mxu0 0
        %4556 = vmatprep.mubr.bf16.mxu0 0
        %4557 = vmatmul.mubr.bf16.gmra.mxu0 %v4513
        %v4558 = vpop.f32.mrf.mxu0
        %v4559 = vadd.f32 0.0, %v4558
        %v4560 = vpop.f32.mrf.mxu0
        %v4561 = vpop.f32.mrf.mxu0
        %v4562 = vadd.f32 0.0, %v4561
        %v4563 = vpop.f32.mrf.mxu0
        %4564 = vmatprep.mubr.bf16.mxu0 0
        %4565 = vmatmul.mubr.bf16.gmra.mxu0 %v4516
        %v4566 = vpop.f32.mrf.mxu0
        %v4567 = vadd.f32 0.0, %v4566
        %v4568 = vpop.f32.mrf.mxu0
        %v4569 = vpop.f32.mrf.mxu0
        %v4570 = vadd.f32 0.0, %v4569
        %v4571 = vpop.f32.mrf.mxu0
        %4572 = vmatprep.mubr.bf16.mxu0 0
        %4573 = vmatmul.mubr.bf16.gmra.mxu0 %v4519
        %v4574 = vpop.f32.mrf.mxu0
        %v4575 = vadd.f32 0.0, %v4574
        %v4576 = vpop.f32.mrf.mxu0
        %v4577 = vpop.f32.mrf.mxu0
        %v4578 = vadd.f32 0.0, %v4577
        %v4579 = vpop.f32.mrf.mxu0
        %4580 = vmatprep.mubr.bf16.mxu0 0
        %4581 = vmatmul.mubr.bf16.gmra.mxu0 %v4522
        %v4582 = vpop.f32.mrf.mxu0
        %v4583 = vadd.f32 0.0, %v4582
        %v4584 = vpop.f32.mrf.mxu0
        %v4585 = vpop.f32.mrf.mxu0
        %v4586 = vadd.f32 0.0, %v4585
        %v4587 = vpop.f32.mrf.mxu0
        %4588 = vdwg.mxu0
        %v4589 = vld [vmem:[%s13] sm:$0xf]
        %v4590 = vld [vmem:[%s13 + $0x4] sm:$0xf]
        %v4591 = vld [vmem:[%s13 + $0x8] sm:$0xf]
        %v4592 = vld [vmem:[%s13 + $0xc] sm:$0xf]
        %v4593 = vld [vmem:[%s13 + $0x10] sm:$0xf]
        %v4594 = vld [vmem:[%s13 + $0x14] sm:$0xf]
        %v4595 = vld [vmem:[%s13 + $0x18] sm:$0xf]
        %v4596 = vld [vmem:[%s13 + $0x1c] sm:$0xf]
        %v4597 = vunpack.c.l.bf16 %v4589
        %v4598 = vunpack.c.l.bf16 %v4590
        %v4599 = vunpack.c.l.bf16 %v4591
        %v4600 = vunpack.c.l.bf16 %v4592
        %v4601 = vunpack.c.l.bf16 %v4593
        %v4602 = vunpack.c.l.bf16 %v4594
        %v4603 = vunpack.c.l.bf16 %v4595
        %v4604 = vunpack.c.l.bf16 %v4596
        %vm4605 = vcmask 261120
        %v4606 = vsel %vm4605, %v4597, 0.0
        %v4607 = vsel %vm4605, %v4598, 0.0
        %v4608 = vadd.f32 %v4606, %v4607
        %v4609 = vsel %vm4605, %v4599, 0.0
        %v4610 = vadd.f32 %v4608, %v4609
        %v4611 = vsel %vm4605, %v4600, 0.0
        %v4612 = vadd.f32 %v4610, %v4611
        %v4613 = vsel %vm4605, %v4601, 0.0
        %v4614 = vadd.f32 %v4612, %v4613
        %v4615 = vsel %vm4605, %v4602, 0.0
        %v4616 = vadd.f32 %v4614, %v4615
        %v4617 = vsel %vm4605, %v4603, 0.0
        %v4618 = vadd.f32 %v4616, %v4617
        %v4619 = vsel %vm4605, %v4604, 0.0
        %v4620 = vadd.f32 %v4618, %v4619
        %v4621 = vrot.slane %v4620, 4
        %v4622 = vadd.f32 %v4620, %v4621
        %v4623 = vrot.slane %v4622, 2
        %v4624 = vadd.f32 %v4622, %v4623
        %v4625 = vrot.slane %v4624, 1
        %v4626 = vadd.f32 %v4624, %v4625
        %v4627 = vsel %vm3104, %v4559, 0.0
        %4628 = vadd.xlane.f32.xlu0 %v4627
        %v4629 = vpop.xlane.xlu0 %4628
        %v4630 = vsel %vm3104, %v4562, 0.0
        %4631 = vadd.xlane.f32.xlu0 %v4630
        %v4632 = vpop.xlane.xlu0 %4631
        %v4633 = vadd.f32 %v4629, 0.0
        %v4634 = vadd.f32 %v4632, 0.0
        %v4635 = vmul.f32 %v4559, %v4559
        %v4636 = vmul.f32 %v4562, %v4562
        %v4637 = vsel %vm3104, %v4635, 0.0
        %4638 = vadd.xlane.f32.xlu0 %v4637
        %v4639 = vpop.xlane.xlu0 %4638
        %v4640 = vsel %vm3104, %v4636, 0.0
        %4641 = vadd.xlane.f32.xlu0 %v4640
        %v4642 = vpop.xlane.xlu0 %4641
        %v4643 = vadd.f32 %v4639, 0.0
        %v4644 = vadd.f32 %v4642, 0.0
        %v4645 = vpack.c.bf16 %v4562, %v4559
        %v4646 = vsel %vm3104, %v4567, 0.0
        %4647 = vadd.xlane.f32.xlu0 %v4646
        %v4648 = vpop.xlane.xlu0 %4647
        %v4649 = vsel %vm3104, %v4570, 0.0
        %4650 = vadd.xlane.f32.xlu0 %v4649
        %v4651 = vpop.xlane.xlu0 %4650
        %v4652 = vadd.f32 %v4633, %v4648
        %v4653 = vadd.f32 %v4634, %v4651
        %v4654 = vmul.f32 %v4567, %v4567
        %v4655 = vmul.f32 %v4570, %v4570
        %v4656 = vsel %vm3104, %v4654, 0.0
        %4657 = vadd.xlane.f32.xlu0 %v4656
        %v4658 = vpop.xlane.xlu0 %4657
        %v4659 = vsel %vm3104, %v4655, 0.0
        %4660 = vadd.xlane.f32.xlu0 %v4659
        %v4661 = vpop.xlane.xlu0 %4660
        %v4662 = vadd.f32 %v4643, %v4658
        %v4663 = vadd.f32 %v4644, %v4661
        %v4664 = vpack.c.bf16 %v4570, %v4567
        %v4667 = vunpack.c.l.b16 %v4591
        %v4668 = vunpack.c.l.b16 %v4592
        %v4669 = vpack.c.b16 %v4668, %v4667
        %v4672 = vsel %vm3104, %v4664, 0
        %4674 = vmatprep.subr.bf16.mxu0 0
        %4675 = vmatpush1.bf16.msra.mxu0 0
        %4676 = vmatprep.subr.bf16.mxu0 0
        %4677 = vmatpush1.bf16.msra.mxu0 0
        %4678 = vmatprep.subr.bf16.mxu0 0
        %4679 = vmatpush1.bf16.msra.mxu0 0
        %4680 = vmatprep.subr.bf16.mxu0 0
        %4681 = vmatpush1.bf16.msra.mxu0 0
        %4682 = vmatprep.subr.bf16.mxu0 0
        %4683 = vmatpush1.bf16.msra.mxu0 0
        %4684 = vmatprep.subr.bf16.mxu0 0
        %4685 = vmatpush1.bf16.msra.mxu0 0
        %4686 = vmatprep.subr.bf16.mxu0 0
        %4687 = vmatpush1.bf16.msra.mxu0 0
        %4688 = vmatprep.subr.bf16.mxu0 0
        %4689 = vmatpush1.bf16.msra.mxu0 %v4669
        %4690 = vmatprep.subr.bf16.mxu0 0
        %4691 = vmatpush2.bf16.msra.mxu0 0
        %4692 = vmatprep.subr.bf16.mxu0 0
        %4693 = vmatpush2.bf16.msra.mxu0 0
        %4694 = vmatprep.subr.bf16.mxu0 0
        %4695 = vmatpush2.bf16.msra.mxu0 0
        %4696 = vmatprep.subr.bf16.mxu0 0
        %4697 = vmatpush2.bf16.msra.mxu0 0
        %4698 = vmatprep.subr.bf16.mxu0 0
        %4699 = vmatpush2.bf16.msra.mxu0 0
        %4700 = vmatprep.subr.bf16.mxu0 0
        %4701 = vmatpush2.bf16.msra.mxu0 0
        %4702 = vmatprep.subr.bf16.mxu0 0
        %4703 = vmatpush2.bf16.msra.mxu0 0
        %4704 = vmatprep.subr.bf16.mxu0 0
        %4705 = vmatpush2.bf16.msra.mxu0 0
        %4706 = vmatprep.mubr.bf16.mxu0 0
        %4707 = vmatmul.mubr.bf16.gmra.mxu0 %v4672
        %v4708 = vpop.f32.mrf.mxu0
        %v4709 = vadd.f32 0.0, %v4708
        %v4710 = vpop.f32.mrf.mxu0
        %v4711 = vpop.f32.mrf.mxu0
        %v4712 = vadd.f32 0.0, %v4711
        %v4713 = vpop.f32.mrf.mxu0
        %4714 = vdwg.mxu0
        %v4717 = vunpack.c.l.b16 %v4589
        %v4718 = vunpack.c.l.b16 %v4590
        %v4719 = vpack.c.b16 %v4718, %v4717
        %v4722 = vsel %vm3104, %v4645, 0
        %4724 = vmatprep.subr.bf16.mxu0 0
        %4725 = vmatpush1.bf16.msra.mxu0 0
        %4726 = vmatprep.subr.bf16.mxu0 0
        %4727 = vmatpush1.bf16.msra.mxu0 0
        %4728 = vmatprep.subr.bf16.mxu0 0
        %4729 = vmatpush1.bf16.msra.mxu0 0
        %4730 = vmatprep.subr.bf16.mxu0 0
        %4731 = vmatpush1.bf16.msra.mxu0 0
        %4732 = vmatprep.subr.bf16.mxu0 0
        %4733 = vmatpush1.bf16.msra.mxu0 0
        %4734 = vmatprep.subr.bf16.mxu0 0
        %4735 = vmatpush1.bf16.msra.mxu0 0
        %4736 = vmatprep.subr.bf16.mxu0 0
        %4737 = vmatpush1.bf16.msra.mxu0 0
        %4738 = vmatprep.subr.bf16.mxu0 0
        %4739 = vmatpush1.bf16.msra.mxu0 %v4719
        %4740 = vmatprep.subr.bf16.mxu0 0
        %4741 = vmatpush2.bf16.msra.mxu0 0
        %4742 = vmatprep.subr.bf16.mxu0 0
        %4743 = vmatpush2.bf16.msra.mxu0 0
        %4744 = vmatprep.subr.bf16.mxu0 0
        %4745 = vmatpush2.bf16.msra.mxu0 0
        %4746 = vmatprep.subr.bf16.mxu0 0
        %4747 = vmatpush2.bf16.msra.mxu0 0
        %4748 = vmatprep.subr.bf16.mxu0 0
        %4749 = vmatpush2.bf16.msra.mxu0 0
        %4750 = vmatprep.subr.bf16.mxu0 0
        %4751 = vmatpush2.bf16.msra.mxu0 0
        %4752 = vmatprep.subr.bf16.mxu0 0
        %4753 = vmatpush2.bf16.msra.mxu0 0
        %4754 = vmatprep.subr.bf16.mxu0 0
        %4755 = vmatpush2.bf16.msra.mxu0 0
        %4756 = vmatprep.mubr.bf16.mxu0 0
        %4757 = vmatmul.mubr.bf16.gmra.mxu0 %v4722
        %v4758 = vpop.f32.mrf.mxu0
        %v4759 = vadd.f32 %v4709, %v4758
        %v4760 = vpop.f32.mrf.mxu0
        %v4761 = vpop.f32.mrf.mxu0
        %v4762 = vadd.f32 %v4712, %v4761
        %v4763 = vpop.f32.mrf.mxu0
        %4764 = vdwg.mxu0
        %v4765 = vsel %vm3104, %v4575, 0.0
        %4766 = vadd.xlane.f32.xlu0 %v4765
        %v4767 = vpop.xlane.xlu0 %4766
        %v4768 = vsel %vm3104, %v4578, 0.0
        %4769 = vadd.xlane.f32.xlu0 %v4768
        %v4770 = vpop.xlane.xlu0 %4769
        %v4771 = vadd.f32 %v4652, %v4767
        %v4772 = vadd.f32 %v4653, %v4770
        %v4773 = vmul.f32 %v4575, %v4575
        %v4774 = vmul.f32 %v4578, %v4578
        %v4775 = vsel %vm3104, %v4773, 0.0
        %4776 = vadd.xlane.f32.xlu0 %v4775
        %v4777 = vpop.xlane.xlu0 %4776
        %v4778 = vsel %vm3104, %v4774, 0.0
        %4779 = vadd.xlane.f32.xlu0 %v4778
        %v4780 = vpop.xlane.xlu0 %4779
        %v4781 = vadd.f32 %v4662, %v4777
        %v4782 = vadd.f32 %v4663, %v4780
        %v4783 = vpack.c.bf16 %v4578, %v4575
        %v4786 = vunpack.c.l.b16 %v4593
        %v4787 = vunpack.c.l.b16 %v4594
        %v4788 = vpack.c.b16 %v4787, %v4786
        %v4791 = vsel %vm3104, %v4783, 0
        %4793 = vmatprep.subr.bf16.mxu0 0
        %4794 = vmatpush1.bf16.msra.mxu0 0
        %4795 = vmatprep.subr.bf16.mxu0 0
        %4796 = vmatpush1.bf16.msra.mxu0 0
        %4797 = vmatprep.subr.bf16.mxu0 0
        %4798 = vmatpush1.bf16.msra.mxu0 0
        %4799 = vmatprep.subr.bf16.mxu0 0
        %4800 = vmatpush1.bf16.msra.mxu0 0
        %4801 = vmatprep.subr.bf16.mxu0 0
        %4802 = vmatpush1.bf16.msra.mxu0 0
        %4803 = vmatprep.subr.bf16.mxu0 0
        %4804 = vmatpush1.bf16.msra.mxu0 0
        %4805 = vmatprep.subr.bf16.mxu0 0
        %4806 = vmatpush1.bf16.msra.mxu0 0
        %4807 = vmatprep.subr.bf16.mxu0 0
        %4808 = vmatpush1.bf16.msra.mxu0 %v4788
        %4809 = vmatprep.subr.bf16.mxu0 0
        %4810 = vmatpush2.bf16.msra.mxu0 0
        %4811 = vmatprep.subr.bf16.mxu0 0
        %4812 = vmatpush2.bf16.msra.mxu0 0
        %4813 = vmatprep.subr.bf16.mxu0 0
        %4814 = vmatpush2.bf16.msra.mxu0 0
        %4815 = vmatprep.subr.bf16.mxu0 0
        %4816 = vmatpush2.bf16.msra.mxu0 0
        %4817 = vmatprep.subr.bf16.mxu0 0
        %4818 = vmatpush2.bf16.msra.mxu0 0
        %4819 = vmatprep.subr.bf16.mxu0 0
        %4820 = vmatpush2.bf16.msra.mxu0 0
        %4821 = vmatprep.subr.bf16.mxu0 0
        %4822 = vmatpush2.bf16.msra.mxu0 0
        %4823 = vmatprep.subr.bf16.mxu0 0
        %4824 = vmatpush2.bf16.msra.mxu0 0
        %4825 = vmatprep.mubr.bf16.mxu0 0
        %4826 = vmatmul.mubr.bf16.gmra.mxu0 %v4791
        %v4827 = vpop.f32.mrf.mxu0
        %v4828 = vadd.f32 0.0, %v4827
        %v4829 = vpop.f32.mrf.mxu0
        %v4830 = vpop.f32.mrf.mxu0
        %v4831 = vadd.f32 0.0, %v4830
        %v4832 = vpop.f32.mrf.mxu0
        %4833 = vdwg.mxu0
        %v4834 = vadd.f32 %v4759, %v4828
        %v4835 = vadd.f32 %v4762, %v4831
        %v4836 = vsel %vm3104, %v4583, 0.0
        %4837 = vadd.xlane.f32.xlu0 %v4836
        %v4838 = vpop.xlane.xlu0 %4837
        %v4839 = vsel %vm3104, %v4586, 0.0
        %4840 = vadd.xlane.f32.xlu0 %v4839
        %v4841 = vpop.xlane.xlu0 %4840
        %v4842 = vadd.f32 %v4771, %v4838
        %v4843 = vadd.f32 %v4772, %v4841
        %v4844 = vmul.f32 %v4583, %v4583
        %v4845 = vmul.f32 %v4586, %v4586
        %v4846 = vsel %vm3104, %v4844, 0.0
        %4847 = vadd.xlane.f32.xlu0 %v4846
        %v4848 = vpop.xlane.xlu0 %4847
        %v4849 = vsel %vm3104, %v4845, 0.0
        %4850 = vadd.xlane.f32.xlu0 %v4849
        %v4851 = vpop.xlane.xlu0 %4850
        %v4852 = vadd.f32 %v4781, %v4848
        %v4853 = vadd.f32 %v4782, %v4851
        %v4854 = vpack.c.bf16 %v4586, %v4583
        %v4857 = vunpack.c.l.b16 %v4595
        %v4858 = vunpack.c.l.b16 %v4596
        %v4859 = vpack.c.b16 %v4858, %v4857
        %v4862 = vsel %vm3104, %v4854, 0
        %4864 = vmatprep.subr.bf16.mxu0 0
        %4865 = vmatpush1.bf16.msra.mxu0 0
        %4866 = vmatprep.subr.bf16.mxu0 0
        %4867 = vmatpush1.bf16.msra.mxu0 0
        %4868 = vmatprep.subr.bf16.mxu0 0
        %4869 = vmatpush1.bf16.msra.mxu0 0
        %4870 = vmatprep.subr.bf16.mxu0 0
        %4871 = vmatpush1.bf16.msra.mxu0 0
        %4872 = vmatprep.subr.bf16.mxu0 0
        %4873 = vmatpush1.bf16.msra.mxu0 0
        %4874 = vmatprep.subr.bf16.mxu0 0
        %4875 = vmatpush1.bf16.msra.mxu0 0
        %4876 = vmatprep.subr.bf16.mxu0 0
        %4877 = vmatpush1.bf16.msra.mxu0 0
        %4878 = vmatprep.subr.bf16.mxu0 0
        %4879 = vmatpush1.bf16.msra.mxu0 %v4859
        %4880 = vmatprep.subr.bf16.mxu0 0
        %4881 = vmatpush2.bf16.msra.mxu0 0
        %4882 = vmatprep.subr.bf16.mxu0 0
        %4883 = vmatpush2.bf16.msra.mxu0 0
        %4884 = vmatprep.subr.bf16.mxu0 0
        %4885 = vmatpush2.bf16.msra.mxu0 0
        %4886 = vmatprep.subr.bf16.mxu0 0
        %4887 = vmatpush2.bf16.msra.mxu0 0
        %4888 = vmatprep.subr.bf16.mxu0 0
        %4889 = vmatpush2.bf16.msra.mxu0 0
        %4890 = vmatprep.subr.bf16.mxu0 0
        %4891 = vmatpush2.bf16.msra.mxu0 0
        %4892 = vmatprep.subr.bf16.mxu0 0
        %4893 = vmatpush2.bf16.msra.mxu0 0
        %4894 = vmatprep.subr.bf16.mxu0 0
        %4895 = vmatpush2.bf16.msra.mxu0 0
        %4896 = vmatprep.mubr.bf16.mxu0 0
        %4897 = vmatmul.mubr.bf16.gmra.mxu0 %v4862
        %v4898 = vpop.f32.mrf.mxu0
        %v4899 = vadd.f32 0.0, %v4898
        %v4900 = vpop.f32.mrf.mxu0
        %v4901 = vpop.f32.mrf.mxu0
        %v4902 = vadd.f32 0.0, %v4901
        %v4903 = vpop.f32.mrf.mxu0
        %4904 = vdwg.mxu0
        %v4905 = vadd.f32 %v4834, %v4899
        %v4906 = vadd.f32 %v4835, %v4902
        %v4907 = vmul.f32 %v4842, 0.015625
        %v4908 = vmul.f32 %v4843, 0.015625
        %v4909 = vmul.f32 %v4852, 0.015625
        %v4910 = vmul.f32 %v4853, 0.015625
        %v4911 = vmul.f32 %v4907, %v4907
        %v4912 = vmul.f32 %v4908, %v4908
        %v4913 = vsub.f32 %v4909, %v4911
        %v4914 = vsub.f32 %v4910, %v4912
        %v4915 = vadd.f32 %v4913, 1e-05
        %v4916 = vadd.f32 %v4914, 1e-05
        %v4917 = vrsqrt.pop %v4915
        %v4918 = vrsqrt.pop %v4916
        %v4919 = vmul.f32 %v4907, %v4626
        %v4920 = vmul.f32 %v4908, %v4626
        %v4921 = vsub.f32 %v4905, %v4919
        %v4922 = vsub.f32 %v4906, %v4920
        %v4923 = vmul.f32 %v4917, %v4921
        %v4924 = vmul.f32 %v4918, %v4922
        %v4925 = vld [vmem:[%s14] sm:$0x1]
        %v4927 = vlaneseq
        %v4928 = vshrl.u32 %v4927, 7
        %v4929 = vsub.s32 0, %v4928
        %v4930 = vrot.slane %v4925, %v4929
        %v4932 = vadd.f32 %v4923, %v4930
        %v4933 = vadd.f32 %v4924, %v4930
        %v4934 = vpack.c.bf16 %v4933, %v4932
        %v4935 = vld [vmem:[%s15] sm:$0xf]
        %v4936 = vld [vmem:[%s15 + $0x4] sm:$0xf]
        %v4937 = vld [vmem:[%s15 + $0x8] sm:$0xf]
        %v4938 = vld [vmem:[%s15 + $0xc] sm:$0xf]
        %v4939 = vld [vmem:[%s16] sm:$0x1]
        %v4941 = vlaneseq
        %v4942 = vshrl.u32 %v4941, 7
        %v4943 = vsub.s32 0, %v4942
        %v4944 = vrot.slane %v4939, %v4943
        %v4950 = vunpack.c.l.b16 %v4935
        %v4951 = vunpack.c.l.b16 %v4936
        %v4952 = vunpack.c.l.b16 %v4937
        %v4953 = vunpack.c.l.b16 %v4938
        %v4954 = vpack.c.b16 %v4951, %v4950
        %v4955 = vpack.c.b16 %v4953, %v4952
        %v4959 = vsel %vm4605, %v4934, 0
        %4961 = vmatprep.subr.bf16.mxu0 0
        %4962 = vmatpush1.bf16.msra.mxu0 0
        %4963 = vmatprep.subr.bf16.mxu0 0
        %4964 = vmatpush1.bf16.msra.mxu0 0
        %4965 = vmatprep.subr.bf16.mxu0 0
        %4966 = vmatpush1.bf16.msra.mxu0 0
        %4967 = vmatprep.subr.bf16.mxu0 0
        %4968 = vmatpush1.bf16.msra.mxu0 0
        %4969 = vmatprep.subr.bf16.mxu0 0
        %4970 = vmatpush1.bf16.msra.mxu0 0
        %4971 = vmatprep.subr.bf16.mxu0 0
        %4972 = vmatpush1.bf16.msra.mxu0 0
        %4973 = vmatprep.subr.bf16.mxu0 0
        %4974 = vmatpush1.bf16.msra.mxu0 %v4955
        %4975 = vmatprep.subr.bf16.mxu0 0
        %4976 = vmatpush1.bf16.msra.mxu0 %v4954
        %4977 = vmatprep.subr.bf16.mxu0 0
        %4978 = vmatpush2.bf16.msra.mxu0 0
        %4979 = vmatprep.subr.bf16.mxu0 0
        %4980 = vmatpush2.bf16.msra.mxu0 0
        %4981 = vmatprep.subr.bf16.mxu0 0
        %4982 = vmatpush2.bf16.msra.mxu0 0
        %4983 = vmatprep.subr.bf16.mxu0 0
        %4984 = vmatpush2.bf16.msra.mxu0 0
        %4985 = vmatprep.subr.bf16.mxu0 0
        %4986 = vmatpush2.bf16.msra.mxu0 0
        %4987 = vmatprep.subr.bf16.mxu0 0
        %4988 = vmatpush2.bf16.msra.mxu0 0
        %4989 = vmatprep.subr.bf16.mxu0 0
        %4990 = vmatpush2.bf16.msra.mxu0 0
        %4991 = vmatprep.subr.bf16.mxu0 0
        %4992 = vmatpush2.bf16.msra.mxu0 0
        %4993 = vmatprep.mubr.bf16.mxu0 0
        %4994 = vmatmul.mubr.bf16.gmra.mxu0 %v4959
        %v4995 = vpop.f32.mrf.mxu0
        %v4996 = vadd.f32 %v4944, %v4995
        %v4997 = vpop.f32.mrf.mxu0
        %v4998 = vpop.f32.mrf.mxu0
        %v4999 = vadd.f32 %v4944, %v4998
        %v5000 = vpop.f32.mrf.mxu0
        %5001 = vdwg.mxu0
        %v5002 = vpack.c.bf16 %v4999, %v4996
        %s5003 = scalar_lea.vmem %s15, 16
        %v5004 = vld [vmem:[%s5003] sm:$0xf]
        %v5005 = vld [vmem:[%s5003 + $0x4] sm:$0xf]
        %v5006 = vld [vmem:[%s5003 + $0x8] sm:$0xf]
        %v5007 = vld [vmem:[%s5003 + $0xc] sm:$0xf]
        %s5008 = scalar_lea.vmem %s16, 1
        %v5009 = vld [vmem:[%s5008] sm:$0x1]
        %v5011 = vlaneseq
        %v5012 = vshrl.u32 %v5011, 7
        %v5013 = vsub.s32 0, %v5012
        %v5014 = vrot.slane %v5009, %v5013
        %v5020 = vunpack.c.l.b16 %v5004
        %v5021 = vunpack.c.l.b16 %v5005
        %v5022 = vunpack.c.l.b16 %v5006
        %v5023 = vunpack.c.l.b16 %v5007
        %v5024 = vpack.c.b16 %v5021, %v5020
        %v5025 = vpack.c.b16 %v5023, %v5022
        %5028 = vmatprep.subr.bf16.mxu0 0
        %5029 = vmatpush1.bf16.msra.mxu0 0
        %5030 = vmatprep.subr.bf16.mxu0 0
        %5031 = vmatpush1.bf16.msra.mxu0 0
        %5032 = vmatprep.subr.bf16.mxu0 0
        %5033 = vmatpush1.bf16.msra.mxu0 0
        %5034 = vmatprep.subr.bf16.mxu0 0
        %5035 = vmatpush1.bf16.msra.mxu0 0
        %5036 = vmatprep.subr.bf16.mxu0 0
        %5037 = vmatpush1.bf16.msra.mxu0 0
        %5038 = vmatprep.subr.bf16.mxu0 0
        %5039 = vmatpush1.bf16.msra.mxu0 0
        %5040 = vmatprep.subr.bf16.mxu0 0
        %5041 = vmatpush1.bf16.msra.mxu0 %v5025
        %5042 = vmatprep.subr.bf16.mxu0 0
        %5043 = vmatpush1.bf16.msra.mxu0 %v5024
        %5044 = vmatprep.subr.bf16.mxu0 0
        %5045 = vmatpush2.bf16.msra.mxu0 0
        %5046 = vmatprep.subr.bf16.mxu0 0
        %5047 = vmatpush2.bf16.msra.mxu0 0
        %5048 = vmatprep.subr.bf16.mxu0 0
        %5049 = vmatpush2.bf16.msra.mxu0 0
        %5050 = vmatprep.subr.bf16.mxu0 0
        %5051 = vmatpush2.bf16.msra.mxu0 0
        %5052 = vmatprep.subr.bf16.mxu0 0
        %5053 = vmatpush2.bf16.msra.mxu0 0
        %5054 = vmatprep.subr.bf16.mxu0 0
        %5055 = vmatpush2.bf16.msra.mxu0 0
        %5056 = vmatprep.subr.bf16.mxu0 0
        %5057 = vmatpush2.bf16.msra.mxu0 0
        %5058 = vmatprep.subr.bf16.mxu0 0
        %5059 = vmatpush2.bf16.msra.mxu0 0
        %5060 = vmatprep.mubr.bf16.mxu0 0
        %5061 = vmatmul.mubr.bf16.gmra.mxu0 %v4959
        %v5062 = vpop.f32.mrf.mxu0
        %v5063 = vadd.f32 %v5014, %v5062
        %v5064 = vpop.f32.mrf.mxu0
        %v5065 = vpop.f32.mrf.mxu0
        %v5066 = vadd.f32 %v5014, %v5065
        %v5067 = vpop.f32.mrf.mxu0
        %5068 = vdwg.mxu0
        %v5069 = vpack.c.bf16 %v5066, %v5063
        %s5070 = scalar_lea.vmem %s15, 32
        %v5071 = vld [vmem:[%s5070] sm:$0xf]
        %v5072 = vld [vmem:[%s5070 + $0x4] sm:$0xf]
        %v5073 = vld [vmem:[%s5070 + $0x8] sm:$0xf]
        %v5074 = vld [vmem:[%s5070 + $0xc] sm:$0xf]
        %s5075 = scalar_lea.vmem %s16, 2
        %v5076 = vld [vmem:[%s5075] sm:$0x1]
        %v5078 = vlaneseq
        %v5079 = vshrl.u32 %v5078, 7
        %v5080 = vsub.s32 0, %v5079
        %v5081 = vrot.slane %v5076, %v5080
        %v5087 = vunpack.c.l.b16 %v5071
        %v5088 = vunpack.c.l.b16 %v5072
        %v5089 = vunpack.c.l.b16 %v5073
        %v5090 = vunpack.c.l.b16 %v5074
        %v5091 = vpack.c.b16 %v5088, %v5087
        %v5092 = vpack.c.b16 %v5090, %v5089
        %5095 = vmatprep.subr.bf16.mxu0 0
        %5096 = vmatpush1.bf16.msra.mxu0 0
        %5097 = vmatprep.subr.bf16.mxu0 0
        %5098 = vmatpush1.bf16.msra.mxu0 0
        %5099 = vmatprep.subr.bf16.mxu0 0
        %5100 = vmatpush1.bf16.msra.mxu0 0
        %5101 = vmatprep.subr.bf16.mxu0 0
        %5102 = vmatpush1.bf16.msra.mxu0 0
        %5103 = vmatprep.subr.bf16.mxu0 0
        %5104 = vmatpush1.bf16.msra.mxu0 0
        %5105 = vmatprep.subr.bf16.mxu0 0
        %5106 = vmatpush1.bf16.msra.mxu0 0
        %5107 = vmatprep.subr.bf16.mxu0 0
        %5108 = vmatpush1.bf16.msra.mxu0 %v5092
        %5109 = vmatprep.subr.bf16.mxu0 0
        %5110 = vmatpush1.bf16.msra.mxu0 %v5091
        %5111 = vmatprep.subr.bf16.mxu0 0
        %5112 = vmatpush2.bf16.msra.mxu0 0
        %5113 = vmatprep.subr.bf16.mxu0 0
        %5114 = vmatpush2.bf16.msra.mxu0 0
        %5115 = vmatprep.subr.bf16.mxu0 0
        %5116 = vmatpush2.bf16.msra.mxu0 0
        %5117 = vmatprep.subr.bf16.mxu0 0
        %5118 = vmatpush2.bf16.msra.mxu0 0
        %5119 = vmatprep.subr.bf16.mxu0 0
        %5120 = vmatpush2.bf16.msra.mxu0 0
        %5121 = vmatprep.subr.bf16.mxu0 0
        %5122 = vmatpush2.bf16.msra.mxu0 0
        %5123 = vmatprep.subr.bf16.mxu0 0
        %5124 = vmatpush2.bf16.msra.mxu0 0
        %5125 = vmatprep.subr.bf16.mxu0 0
        %5126 = vmatpush2.bf16.msra.mxu0 0
        %5127 = vmatprep.mubr.bf16.mxu0 0
        %5128 = vmatmul.mubr.bf16.gmra.mxu0 %v4959
        %v5129 = vpop.f32.mrf.mxu0
        %v5130 = vadd.f32 %v5081, %v5129
        %v5131 = vpop.f32.mrf.mxu0
        %v5132 = vpop.f32.mrf.mxu0
        %v5133 = vadd.f32 %v5081, %v5132
        %v5134 = vpop.f32.mrf.mxu0
        %5135 = vdwg.mxu0
        %v5136 = vpack.c.bf16 %v5133, %v5130
        %v5138 = vsel %vm4605, %v5002, 0
        %v5141 = vsel %vm4605, %v5069, 0
        %5143 = vmatprep.subr.bf16.mxu0 0
        %5144 = vmatpush1.bf16.xpose.msra.mxu0 0
        %5145 = vmatprep.subr.bf16.mxu0 0
        %5146 = vmatpush1.bf16.xpose.msra.mxu0 0
        %5147 = vmatprep.subr.bf16.mxu0 0
        %5148 = vmatpush1.bf16.xpose.msra.mxu0 0
        %5149 = vmatprep.subr.bf16.mxu0 0
        %5150 = vmatpush1.bf16.xpose.msra.mxu0 0
        %5151 = vmatprep.subr.bf16.mxu0 0
        %5152 = vmatpush1.bf16.xpose.msra.mxu0 0
        %5153 = vmatprep.subr.bf16.mxu0 0
        %5154 = vmatpush1.bf16.xpose.msra.mxu0 0
        %5155 = vmatprep.subr.bf16.mxu0 0
        %5156 = vmatpush1.bf16.xpose.msra.mxu0 0
        %5157 = vmatprep.subr.bf16.mxu0 0
        %5158 = vmatpush1.bf16.xpose.msra.mxu0 %v5141
        %5159 = vmatprep.subr.bf16.mxu0 0
        %5160 = vmatpush2.bf16.xpose.msra.mxu0 0
        %5161 = vmatprep.subr.bf16.mxu0 0
        %5162 = vmatpush2.bf16.xpose.msra.mxu0 0
        %5163 = vmatprep.subr.bf16.mxu0 0
        %5164 = vmatpush2.bf16.xpose.msra.mxu0 0
        %5165 = vmatprep.subr.bf16.mxu0 0
        %5166 = vmatpush2.bf16.xpose.msra.mxu0 0
        %5167 = vmatprep.subr.bf16.mxu0 0
        %5168 = vmatpush2.bf16.xpose.msra.mxu0 0
        %5169 = vmatprep.subr.bf16.mxu0 0
        %5170 = vmatpush2.bf16.xpose.msra.mxu0 0
        %5171 = vmatprep.subr.bf16.mxu0 0
        %5172 = vmatpush2.bf16.xpose.msra.mxu0 0
        %5173 = vmatprep.subr.bf16.mxu0 0
        %5174 = vmatpush2.bf16.xpose.msra.mxu0 0
        %5175 = vmatprep.mubr.bf16.mxu0 0
        %5176 = vmatmul.mubr.bf16.gmra.mxu0 %v5138
        %v5177 = vpop.f32.mrf.mxu0
        %v5178 = vadd.f32 0.0, %v5177
        %v5179 = vpop.f32.mrf.mxu0
        %v5180 = vpop.f32.mrf.mxu0
        %v5181 = vadd.f32 0.0, %v5180
        %v5182 = vpop.f32.mrf.mxu0
        %5183 = vdwg.mxu0
        %v5184 = vsel %vm3104, %v5178, -inf
        %5185 = vmax.xlane.f32.xlu0 %v5184
        %v5186 = vpop.xlane.xlu0 %5185
        %v5187 = vsel %vm3104, %v5181, -inf
        %5188 = vmax.xlane.f32.xlu0 %v5187
        %v5189 = vpop.xlane.xlu0 %5188
        %v5190 = vsub.f32 %v5178, %v5186
        %v5191 = vsub.f32 %v5181, %v5189
        %v5192 = vmul.f32 %v5190, 1.442695
        %v5193 = vpow.pop %v5192
        %v5194 = vmul.f32 %v5191, 1.442695
        %v5195 = vpow.pop %v5194
        %v5196 = vsel %vm3104, %v5193, 0.0
        %5197 = vadd.xlane.f32.xlu0 %v5196
        %v5198 = vpop.xlane.xlu0 %5197
        %v5199 = vsel %vm3104, %v5195, 0.0
        %5200 = vadd.xlane.f32.xlu0 %v5199
        %v5201 = vpop.xlane.xlu0 %5200
        %v5202 = vpack.c.bf16 %v5195, %v5193
        %v5204 = vsel %vm3104, %v5202, 0
        %5206 = vmatprep.subr.bf16.mxu0 0
        %5207 = vmatpush1.bf16.msra.mxu0 0
        %5208 = vmatprep.subr.bf16.mxu0 0
        %5209 = vmatpush1.bf16.msra.mxu0 0
        %5210 = vmatprep.subr.bf16.mxu0 0
        %5211 = vmatpush1.bf16.msra.mxu0 0
        %5212 = vmatprep.subr.bf16.mxu0 0
        %5213 = vmatpush1.bf16.msra.mxu0 0
        %5214 = vmatprep.subr.bf16.mxu0 0
        %5215 = vmatpush1.bf16.msra.mxu0 0
        %5216 = vmatprep.subr.bf16.mxu0 0
        %5217 = vmatpush1.bf16.msra.mxu0 0
        %5218 = vmatprep.subr.bf16.mxu0 0
        %5219 = vmatpush1.bf16.msra.mxu0 0
        %5220 = vmatprep.subr.bf16.mxu0 0
        %5221 = vmatpush1.bf16.msra.mxu0 %v5136
        %5222 = vmatprep.subr.bf16.mxu0 0
        %5223 = vmatpush2.bf16.msra.mxu0 0
        %5224 = vmatprep.subr.bf16.mxu0 0
        %5225 = vmatpush2.bf16.msra.mxu0 0
        %5226 = vmatprep.subr.bf16.mxu0 0
        %5227 = vmatpush2.bf16.msra.mxu0 0
        %5228 = vmatprep.subr.bf16.mxu0 0
        %5229 = vmatpush2.bf16.msra.mxu0 0
        %5230 = vmatprep.subr.bf16.mxu0 0
        %5231 = vmatpush2.bf16.msra.mxu0 0
        %5232 = vmatprep.subr.bf16.mxu0 0
        %5233 = vmatpush2.bf16.msra.mxu0 0
        %5234 = vmatprep.subr.bf16.mxu0 0
        %5235 = vmatpush2.bf16.msra.mxu0 0
        %5236 = vmatprep.subr.bf16.mxu0 0
        %5237 = vmatpush2.bf16.msra.mxu0 0
        %5238 = vmatprep.mubr.bf16.mxu0 0
        %5239 = vmatmul.mubr.bf16.gmra.mxu0 %v5204
        %v5240 = vpop.f32.mrf.mxu0
        %v5241 = vadd.f32 0.0, %v5240
        %v5242 = vpop.f32.mrf.mxu0
        %v5243 = vpop.f32.mrf.mxu0
        %v5244 = vadd.f32 0.0, %v5243
        %v5245 = vpop.f32.mrf.mxu0
        %5246 = vdwg.mxu0
        %v5247 = vrcp.pop %v5198
        %v5248 = vmul.f32 %v5241, %v5247
        %v5249 = vrcp.pop %v5201
        %v5250 = vmul.f32 %v5244, %v5249
        %v5251 = vpack.c.bf16 %v5250, %v5248
        %v5252 = vld [vmem:[%s17] sm:$0xf]
        %v5253 = vld [vmem:[%s17 + $0x4] sm:$0xf]
        %v5254 = vld [vmem:[%s17 + $0x8] sm:$0xf]
        %v5255 = vld [vmem:[%s17 + $0xc] sm:$0xf]
        %v5256 = vld [vmem:[%s18] sm:$0x1]
        %v5258 = vlaneseq
        %v5259 = vshrl.u32 %v5258, 7
        %v5260 = vsub.s32 0, %v5259
        %v5261 = vrot.slane %v5256, %v5260
        %v5267 = vunpack.c.l.b16 %v5252
        %v5268 = vunpack.c.l.b16 %v5253
        %v5269 = vunpack.c.l.b16 %v5254
        %v5270 = vunpack.c.l.b16 %v5255
        %v5271 = vpack.c.b16 %v5268, %v5267
        %v5272 = vpack.c.b16 %v5270, %v5269
        %v5276 = vsel %vm4605, %v5251, 0
        %5278 = vmatprep.subr.bf16.mxu0 0
        %5279 = vmatpush1.bf16.msra.mxu0 0
        %5280 = vmatprep.subr.bf16.mxu0 0
        %5281 = vmatpush1.bf16.msra.mxu0 0
        %5282 = vmatprep.subr.bf16.mxu0 0
        %5283 = vmatpush1.bf16.msra.mxu0 0
        %5284 = vmatprep.subr.bf16.mxu0 0
        %5285 = vmatpush1.bf16.msra.mxu0 0
        %5286 = vmatprep.subr.bf16.mxu0 0
        %5287 = vmatpush1.bf16.msra.mxu0 0
        %5288 = vmatprep.subr.bf16.mxu0 0
        %5289 = vmatpush1.bf16.msra.mxu0 0
        %5290 = vmatprep.subr.bf16.mxu0 0
        %5291 = vmatpush1.bf16.msra.mxu0 %v5272
        %5292 = vmatprep.subr.bf16.mxu0 0
        %5293 = vmatpush1.bf16.msra.mxu0 %v5271
        %5294 = vmatprep.subr.bf16.mxu0 0
        %5295 = vmatpush2.bf16.msra.mxu0 0
        %5296 = vmatprep.subr.bf16.mxu0 0
        %5297 = vmatpush2.bf16.msra.mxu0 0
        %5298 = vmatprep.subr.bf16.mxu0 0
        %5299 = vmatpush2.bf16.msra.mxu0 0
        %5300 = vmatprep.subr.bf16.mxu0 0
        %5301 = vmatpush2.bf16.msra.mxu0 0
        %5302 = vmatprep.subr.bf16.mxu0 0
        %5303 = vmatpush2.bf16.msra.mxu0 0
        %5304 = vmatprep.subr.bf16.mxu0 0
        %5305 = vmatpush2.bf16.msra.mxu0 0
        %5306 = vmatprep.subr.bf16.mxu0 0
        %5307 = vmatpush2.bf16.msra.mxu0 0
        %5308 = vmatprep.subr.bf16.mxu0 0
        %5309 = vmatpush2.bf16.msra.mxu0 0
        %5310 = vmatprep.mubr.bf16.mxu0 0
        %5311 = vmatmul.mubr.bf16.gmra.mxu0 %v5276
        %v5312 = vpop.f32.mrf.mxu0
        %v5313 = vadd.f32 %v5261, %v5312
        %v5314 = vpop.f32.mrf.mxu0
        %v5315 = vpop.f32.mrf.mxu0
        %v5316 = vadd.f32 %v5261, %v5315
        %v5317 = vpop.f32.mrf.mxu0
        %5318 = vdwg.mxu0
        %5319 = vst.msk [vmem:[%s775] sm:$0xff] %vm4605, %v5313
        %5320 = vst.msk [vmem:[%s775 + $0x8] sm:$0xff] %vm4605, %v5316
        %v5321 = vpack.c.bf16 %v5316, %v5313
        %v5322 = vld [vmem:[%s19] sm:$0xf]
        %v5323 = vld [vmem:[%s19 + $0x4] sm:$0xf]
        %v5326 = vunpack.c.l.b16 %v5322
        %v5327 = vunpack.c.l.b16 %v5323
        %v5328 = vpack.c.b16 %v5327, %v5326
        %v5330 = vsel %vm3104, %v5328, 0
        %5332 = vmatprep.subr.bf16.mxu0 0
        %5333 = vmatpush1.bf16.msra.mxu0 0
        %5334 = vmatprep.subr.bf16.mxu0 0
        %5335 = vmatpush1.bf16.msra.mxu0 0
        %5336 = vmatprep.subr.bf16.mxu0 0
        %5337 = vmatpush1.bf16.msra.mxu0 0
        %5338 = vmatprep.subr.bf16.mxu0 0
        %5339 = vmatpush1.bf16.msra.mxu0 0
        %5340 = vmatprep.subr.bf16.mxu0 0
        %5341 = vmatpush1.bf16.msra.mxu0 0
        %5342 = vmatprep.subr.bf16.mxu0 0
        %5343 = vmatpush1.bf16.msra.mxu0 0
        %5344 = vmatprep.subr.bf16.mxu0 0
        %5345 = vmatpush1.bf16.msra.mxu0 0
        %5346 = vmatprep.subr.bf16.mxu0 0
        %5347 = vmatpush1.bf16.msra.mxu0 %v5321
        %5348 = vmatprep.subr.bf16.mxu0 0
        %5349 = vmatpush2.bf16.msra.mxu0 0
        %5350 = vmatprep.subr.bf16.mxu0 0
        %5351 = vmatpush2.bf16.msra.mxu0 0
        %5352 = vmatprep.subr.bf16.mxu0 0
        %5353 = vmatpush2.bf16.msra.mxu0 0
        %5354 = vmatprep.subr.bf16.mxu0 0
        %5355 = vmatpush2.bf16.msra.mxu0 0
        %5356 = vmatprep.subr.bf16.mxu0 0
        %5357 = vmatpush2.bf16.msra.mxu0 0
        %5358 = vmatprep.subr.bf16.mxu0 0
        %5359 = vmatpush2.bf16.msra.mxu0 0
        %5360 = vmatprep.subr.bf16.mxu0 0
        %5361 = vmatpush2.bf16.msra.mxu0 0
        %5362 = vmatprep.subr.bf16.mxu0 0
        %5363 = vmatpush2.bf16.msra.mxu0 0
        %5364 = vmatprep.mubr.bf16.mxu0 0
        %5365 = vmatmul.mubr.bf16.gmra.mxu0 %v5330
        %v5366 = vpop.f32.mrf.mxu0
        %v5367 = vadd.f32 0.0, %v5366
        %v5368 = vpop.f32.mrf.mxu0
        %v5369 = vpop.f32.mrf.mxu0
        %v5370 = vadd.f32 0.0, %v5369
        %v5371 = vpop.f32.mrf.mxu0
        %5372 = vdwg.mxu0
        %v5373 = vld [vmem:[%s20] sm:$0xf]
        %v5374 = vld [vmem:[%s20 + $0x4] sm:$0xf]
        %v5375 = vld [vmem:[%s20 + $0x8] sm:$0xf]
        %v5376 = vld [vmem:[%s20 + $0xc] sm:$0xf]
        %v5377 = vld [vmem:[%s20 + $0x10] sm:$0xf]
        %v5378 = vld [vmem:[%s20 + $0x14] sm:$0xf]
        %v5379 = vld [vmem:[%s20 + $0x18] sm:$0xf]
        %v5380 = vld [vmem:[%s20 + $0x1c] sm:$0xf]
        %v5381 = vld [vmem:[%s20 + $0x20] sm:$0xf]
        %v5382 = vld [vmem:[%s20 + $0x24] sm:$0xf]
        %v5383 = vld [vmem:[%s20 + $0x28] sm:$0xf]
        %v5384 = vld [vmem:[%s20 + $0x2c] sm:$0xf]
        %v5385 = vld [vmem:[%s20 + $0x30] sm:$0xf]
        %v5386 = vld [vmem:[%s20 + $0x34] sm:$0xf]
        %v5387 = vld [vmem:[%s20 + $0x38] sm:$0xf]
        %v5388 = vld [vmem:[%s20 + $0x3c] sm:$0xf]
        %v5389 = vunpack.c.l.bf16 %v5373
        %v5390 = vunpack.c.l.bf16 %v5374
        %v5391 = vunpack.c.l.bf16 %v5375
        %v5392 = vunpack.c.l.bf16 %v5376
        %v5393 = vunpack.c.l.bf16 %v5377
        %v5394 = vunpack.c.l.bf16 %v5378
        %v5395 = vunpack.c.l.bf16 %v5379
        %v5396 = vunpack.c.l.bf16 %v5380
        %v5397 = vunpack.c.l.bf16 %v5381
        %v5398 = vunpack.c.l.bf16 %v5382
        %v5399 = vunpack.c.l.bf16 %v5383
        %v5400 = vunpack.c.l.bf16 %v5384
        %v5401 = vunpack.c.l.bf16 %v5385
        %v5402 = vunpack.c.l.bf16 %v5386
        %v5403 = vunpack.c.l.bf16 %v5387
        %v5404 = vunpack.c.l.bf16 %v5388
        %v5405 = vsel %vm4206, %v5389, 0.0
        %v5406 = vsel %vm4206, %v5390, 0.0
        %v5407 = vadd.f32 %v5405, %v5406
        %v5408 = vsel %vm4206, %v5391, 0.0
        %v5409 = vadd.f32 %v5407, %v5408
        %v5410 = vsel %vm4206, %v5392, 0.0
        %v5411 = vadd.f32 %v5409, %v5410
        %v5412 = vsel %vm4206, %v5393, 0.0
        %v5413 = vadd.f32 %v5411, %v5412
        %v5414 = vsel %vm4206, %v5394, 0.0
        %v5415 = vadd.f32 %v5413, %v5414
        %v5416 = vsel %vm4206, %v5395, 0.0
        %v5417 = vadd.f32 %v5415, %v5416
        %v5418 = vsel %vm4206, %v5396, 0.0
        %v5419 = vadd.f32 %v5417, %v5418
        %v5420 = vsel %vm4206, %v5397, 0.0
        %v5421 = vadd.f32 %v5419, %v5420
        %v5422 = vsel %vm4206, %v5398, 0.0
        %v5423 = vadd.f32 %v5421, %v5422
        %v5424 = vsel %vm4206, %v5399, 0.0
        %v5425 = vadd.f32 %v5423, %v5424
        %v5426 = vsel %vm4206, %v5400, 0.0
        %v5427 = vadd.f32 %v5425, %v5426
        %v5428 = vsel %vm4206, %v5401, 0.0
        %v5429 = vadd.f32 %v5427, %v5428
        %v5430 = vsel %vm4206, %v5402, 0.0
        %v5431 = vadd.f32 %v5429, %v5430
        %v5432 = vsel %vm4206, %v5403, 0.0
        %v5433 = vadd.f32 %v5431, %v5432
        %v5434 = vsel %vm4206, %v5404, 0.0
        %v5435 = vadd.f32 %v5433, %v5434
        %v5436 = vrot.slane %v5435, 4
        %v5437 = vadd.f32 %v5435, %v5436
        %v5438 = vrot.slane %v5437, 2
        %v5439 = vadd.f32 %v5437, %v5438
        %v5440 = vrot.slane %v5439, 1
        %v5441 = vadd.f32 %v5439, %v5440
        %vm5442 = vcmask 257024
        %v5443 = vsel %vm5442, %v5367, 0.0
        %5444 = vadd.xlane.f32.xlu0 %v5443
        %v5445 = vpop.xlane.xlu0 %5444
        %v5446 = vadd.f32 %v5445, 0.0
        %v5447 = vmul.f32 %v5367, %v5367
        %v5448 = vsel %vm5442, %v5447, 0.0
        %5449 = vadd.xlane.f32.xlu0 %v5448
        %v5450 = vpop.xlane.xlu0 %5449
        %v5451 = vadd.f32 %v5450, 0.0
        %v5452 = vpack.c.bf16 %v5367, %v5367
        %vm5453 = vcmask 261124
        %v5454 = vsel %vm5453, %v5367, 0.0
        %5455 = vadd.xlane.f32.xlu0 %v5454
        %v5456 = vpop.xlane.xlu0 %5455
        %v5458 = vrot.slane %v5456, 4
        %v5460 = vadd.f32 %v5446, %v5458
        %v5461 = vsel %vm5453, %v5447, 0.0
        %5462 = vadd.xlane.f32.xlu0 %v5461
        %v5463 = vpop.xlane.xlu0 %5462
        %v5465 = vrot.slane %v5463, 4
        %v5467 = vadd.f32 %v5451, %v5465
        %v5469 = vrot.slane %v5452, 2
        %v5474 = vunpack.c.l.b16 %v5377
        %v5475 = vunpack.c.l.b16 %v5378
        %v5476 = vunpack.c.l.b16 %v5379
        %v5477 = vunpack.c.l.b16 %v5380
        %v5478 = vpack.c.b16 %v5475, %v5474
        %v5479 = vpack.c.b16 %v5477, %v5476
        %v5483 = vsel %vm4605, %v5469, 0
        %5485 = vmatprep.subr.bf16.mxu0 0
        %5486 = vmatpush1.bf16.msra.mxu0 0
        %5487 = vmatprep.subr.bf16.mxu0 0
        %5488 = vmatpush1.bf16.msra.mxu0 0
        %5489 = vmatprep.subr.bf16.mxu0 0
        %5490 = vmatpush1.bf16.msra.mxu0 0
        %5491 = vmatprep.subr.bf16.mxu0 0
        %5492 = vmatpush1.bf16.msra.mxu0 0
        %5493 = vmatprep.subr.bf16.mxu0 0
        %5494 = vmatpush1.bf16.msra.mxu0 0
        %5495 = vmatprep.subr.bf16.mxu0 0
        %5496 = vmatpush1.bf16.msra.mxu0 0
        %5497 = vmatprep.subr.bf16.mxu0 0
        %5498 = vmatpush1.bf16.msra.mxu0 %v5479
        %5499 = vmatprep.subr.bf16.mxu0 0
        %5500 = vmatpush1.bf16.msra.mxu0 %v5478
        %5501 = vmatprep.subr.bf16.mxu0 0
        %5502 = vmatpush2.bf16.msra.mxu0 0
        %5503 = vmatprep.subr.bf16.mxu0 0
        %5504 = vmatpush2.bf16.msra.mxu0 0
        %5505 = vmatprep.subr.bf16.mxu0 0
        %5506 = vmatpush2.bf16.msra.mxu0 0
        %5507 = vmatprep.subr.bf16.mxu0 0
        %5508 = vmatpush2.bf16.msra.mxu0 0
        %5509 = vmatprep.subr.bf16.mxu0 0
        %5510 = vmatpush2.bf16.msra.mxu0 0
        %5511 = vmatprep.subr.bf16.mxu0 0
        %5512 = vmatpush2.bf16.msra.mxu0 0
        %5513 = vmatprep.subr.bf16.mxu0 0
        %5514 = vmatpush2.bf16.msra.mxu0 0
        %5515 = vmatprep.subr.bf16.mxu0 0
        %5516 = vmatpush2.bf16.msra.mxu0 0
        %5517 = vmatprep.mubr.bf16.mxu0 0
        %5518 = vmatmul.mubr.bf16.gmra.mxu0 %v5483
        %v5519 = vpop.f32.mrf.mxu0
        %v5520 = vadd.f32 0.0, %v5519
        %v5521 = vpop.f32.mrf.mxu0
        %v5522 = vpop.f32.mrf.mxu0
        %v5523 = vpop.f32.mrf.mxu0
        %5524 = vdwg.mxu0
        %v5529 = vunpack.c.l.b16 %v5373
        %v5530 = vunpack.c.l.b16 %v5374
        %v5531 = vunpack.c.l.b16 %v5375
        %v5532 = vunpack.c.l.b16 %v5376
        %v5533 = vpack.c.b16 %v5530, %v5529
        %v5534 = vpack.c.b16 %v5532, %v5531
        %v5538 = vsel %vm4605, %v5452, 0
        %5540 = vmatprep.subr.bf16.mxu0 0
        %5541 = vmatpush1.bf16.msra.mxu0 0
        %5542 = vmatprep.subr.bf16.mxu0 0
        %5543 = vmatpush1.bf16.msra.mxu0 0
        %5544 = vmatprep.subr.bf16.mxu0 0
        %5545 = vmatpush1.bf16.msra.mxu0 0
        %5546 = vmatprep.subr.bf16.mxu0 0
        %5547 = vmatpush1.bf16.msra.mxu0 0
        %5548 = vmatprep.subr.bf16.mxu0 0
        %5549 = vmatpush1.bf16.msra.mxu0 0
        %5550 = vmatprep.subr.bf16.mxu0 0
        %5551 = vmatpush1.bf16.msra.mxu0 0
        %5552 = vmatprep.subr.bf16.mxu0 0
        %5553 = vmatpush1.bf16.msra.mxu0 %v5534
        %5554 = vmatprep.subr.bf16.mxu0 0
        %5555 = vmatpush1.bf16.msra.mxu0 %v5533
        %5556 = vmatprep.subr.bf16.mxu0 0
        %5557 = vmatpush2.bf16.msra.mxu0 0
        %5558 = vmatprep.subr.bf16.mxu0 0
        %5559 = vmatpush2.bf16.msra.mxu0 0
        %5560 = vmatprep.subr.bf16.mxu0 0
        %5561 = vmatpush2.bf16.msra.mxu0 0
        %5562 = vmatprep.subr.bf16.mxu0 0
        %5563 = vmatpush2.bf16.msra.mxu0 0
        %5564 = vmatprep.subr.bf16.mxu0 0
        %5565 = vmatpush2.bf16.msra.mxu0 0
        %5566 = vmatprep.subr.bf16.mxu0 0
        %5567 = vmatpush2.bf16.msra.mxu0 0
        %5568 = vmatprep.subr.bf16.mxu0 0
        %5569 = vmatpush2.bf16.msra.mxu0 0
        %5570 = vmatprep.subr.bf16.mxu0 0
        %5571 = vmatpush2.bf16.msra.mxu0 0
        %5572 = vmatprep.mubr.bf16.mxu0 0
        %5573 = vmatmul.mubr.bf16.gmra.mxu0 %v5538
        %v5574 = vpop.f32.mrf.mxu0
        %v5575 = vadd.f32 %v5520, %v5574
        %v5576 = vpop.f32.mrf.mxu0
        %v5577 = vpop.f32.mrf.mxu0
        %v5578 = vpop.f32.mrf.mxu0
        %5579 = vdwg.mxu0
        %v5580 = vsel %vm5442, %v5370, 0.0
        %5581 = vadd.xlane.f32.xlu0 %v5580
        %v5582 = vpop.xlane.xlu0 %5581
        %v5583 = vadd.f32 %v5460, %v5582
        %v5584 = vmul.f32 %v5370, %v5370
        %v5585 = vsel %vm5442, %v5584, 0.0
        %5586 = vadd.xlane.f32.xlu0 %v5585
        %v5587 = vpop.xlane.xlu0 %5586
        %v5588 = vadd.f32 %v5467, %v5587
        %v5589 = vpack.c.bf16 %v5370, %v5370
        %v5594 = vunpack.c.l.b16 %v5381
        %v5595 = vunpack.c.l.b16 %v5382
        %v5596 = vunpack.c.l.b16 %v5383
        %v5597 = vunpack.c.l.b16 %v5384
        %v5598 = vpack.c.b16 %v5595, %v5594
        %v5599 = vpack.c.b16 %v5597, %v5596
        %v5603 = vsel %vm4605, %v5589, 0
        %5605 = vmatprep.subr.bf16.mxu0 0
        %5606 = vmatpush1.bf16.msra.mxu0 0
        %5607 = vmatprep.subr.bf16.mxu0 0
        %5608 = vmatpush1.bf16.msra.mxu0 0
        %5609 = vmatprep.subr.bf16.mxu0 0
        %5610 = vmatpush1.bf16.msra.mxu0 0
        %5611 = vmatprep.subr.bf16.mxu0 0
        %5612 = vmatpush1.bf16.msra.mxu0 0
        %5613 = vmatprep.subr.bf16.mxu0 0
        %5614 = vmatpush1.bf16.msra.mxu0 0
        %5615 = vmatprep.subr.bf16.mxu0 0
        %5616 = vmatpush1.bf16.msra.mxu0 0
        %5617 = vmatprep.subr.bf16.mxu0 0
        %5618 = vmatpush1.bf16.msra.mxu0 %v5599
        %5619 = vmatprep.subr.bf16.mxu0 0
        %5620 = vmatpush1.bf16.msra.mxu0 %v5598
        %5621 = vmatprep.subr.bf16.mxu0 0
        %5622 = vmatpush2.bf16.msra.mxu0 0
        %5623 = vmatprep.subr.bf16.mxu0 0
        %5624 = vmatpush2.bf16.msra.mxu0 0
        %5625 = vmatprep.subr.bf16.mxu0 0
        %5626 = vmatpush2.bf16.msra.mxu0 0
        %5627 = vmatprep.subr.bf16.mxu0 0
        %5628 = vmatpush2.bf16.msra.mxu0 0
        %5629 = vmatprep.subr.bf16.mxu0 0
        %5630 = vmatpush2.bf16.msra.mxu0 0
        %5631 = vmatprep.subr.bf16.mxu0 0
        %5632 = vmatpush2.bf16.msra.mxu0 0
        %5633 = vmatprep.subr.bf16.mxu0 0
        %5634 = vmatpush2.bf16.msra.mxu0 0
        %5635 = vmatprep.subr.bf16.mxu0 0
        %5636 = vmatpush2.bf16.msra.mxu0 0
        %5637 = vmatprep.mubr.bf16.mxu0 0
        %5638 = vmatmul.mubr.bf16.gmra.mxu0 %v5603
        %v5639 = vpop.f32.mrf.mxu0
        %v5640 = vadd.f32 0.0, %v5639
        %v5641 = vpop.f32.mrf.mxu0
        %v5642 = vpop.f32.mrf.mxu0
        %v5643 = vpop.f32.mrf.mxu0
        %5644 = vdwg.mxu0
        %v5645 = vadd.f32 %v5575, %v5640
        %v5646 = vsel %vm5453, %v5370, 0.0
        %5647 = vadd.xlane.f32.xlu0 %v5646
        %v5648 = vpop.xlane.xlu0 %5647
        %v5650 = vrot.slane %v5648, 4
        %v5652 = vadd.f32 %v5583, %v5650
        %v5653 = vsel %vm5453, %v5584, 0.0
        %5654 = vadd.xlane.f32.xlu0 %v5653
        %v5655 = vpop.xlane.xlu0 %5654
        %v5657 = vrot.slane %v5655, 4
        %v5659 = vadd.f32 %v5588, %v5657
        %v5661 = vrot.slane %v5589, 2
        %v5666 = vunpack.c.l.b16 %v5385
        %v5667 = vunpack.c.l.b16 %v5386
        %v5668 = vunpack.c.l.b16 %v5387
        %v5669 = vunpack.c.l.b16 %v5388
        %v5670 = vpack.c.b16 %v5667, %v5666
        %v5671 = vpack.c.b16 %v5669, %v5668
        %v5675 = vsel %vm4605, %v5661, 0
        %5677 = vmatprep.subr.bf16.mxu0 0
        %5678 = vmatpush1.bf16.msra.mxu0 0
        %5679 = vmatprep.subr.bf16.mxu0 0
        %5680 = vmatpush1.bf16.msra.mxu0 0
        %5681 = vmatprep.subr.bf16.mxu0 0
        %5682 = vmatpush1.bf16.msra.mxu0 0
        %5683 = vmatprep.subr.bf16.mxu0 0
        %5684 = vmatpush1.bf16.msra.mxu0 0
        %5685 = vmatprep.subr.bf16.mxu0 0
        %5686 = vmatpush1.bf16.msra.mxu0 0
        %5687 = vmatprep.subr.bf16.mxu0 0
        %5688 = vmatpush1.bf16.msra.mxu0 0
        %5689 = vmatprep.subr.bf16.mxu0 0
        %5690 = vmatpush1.bf16.msra.mxu0 %v5671
        %5691 = vmatprep.subr.bf16.mxu0 0
        %5692 = vmatpush1.bf16.msra.mxu0 %v5670
        %5693 = vmatprep.subr.bf16.mxu0 0
        %5694 = vmatpush2.bf16.msra.mxu0 0
        %5695 = vmatprep.subr.bf16.mxu0 0
        %5696 = vmatpush2.bf16.msra.mxu0 0
        %5697 = vmatprep.subr.bf16.mxu0 0
        %5698 = vmatpush2.bf16.msra.mxu0 0
        %5699 = vmatprep.subr.bf16.mxu0 0
        %5700 = vmatpush2.bf16.msra.mxu0 0
        %5701 = vmatprep.subr.bf16.mxu0 0
        %5702 = vmatpush2.bf16.msra.mxu0 0
        %5703 = vmatprep.subr.bf16.mxu0 0
        %5704 = vmatpush2.bf16.msra.mxu0 0
        %5705 = vmatprep.subr.bf16.mxu0 0
        %5706 = vmatpush2.bf16.msra.mxu0 0
        %5707 = vmatprep.subr.bf16.mxu0 0
        %5708 = vmatpush2.bf16.msra.mxu0 0
        %5709 = vmatprep.mubr.bf16.mxu0 0
        %5710 = vmatmul.mubr.bf16.gmra.mxu0 %v5675
        %v5711 = vpop.f32.mrf.mxu0
        %v5712 = vadd.f32 0.0, %v5711
        %v5713 = vpop.f32.mrf.mxu0
        %v5714 = vpop.f32.mrf.mxu0
        %v5715 = vpop.f32.mrf.mxu0
        %5716 = vdwg.mxu0
        %v5717 = vadd.f32 %v5645, %v5712
        %v5718 = vmul.f32 %v5652, 0.0078125
        %v5719 = vmul.f32 %v5659, 0.0078125
        %v5720 = vmul.f32 %v5718, %v5718
        %v5721 = vsub.f32 %v5719, %v5720
        %v5722 = vadd.f32 %v5721, 1e-05
        %v5723 = vrsqrt.pop %v5722
        %5725 = vset.pattern.permute.xlu0 0
        %5726 = vperm.xlu0 %5725, %v5718
        %v5727 = vpop.permute.xlu0 %5726
        %v5729 = vmul.f32 %v5727, %v5441
        %v5730 = vsub.f32 %v5717, %v5729
        %5732 = vset.pattern.permute.xlu0 0
        %5733 = vperm.xlu0 %5732, %v5723
        %v5734 = vpop.permute.xlu0 %5733
        %v5736 = vmul.f32 %v5734, %v5730
        %v5737 = vld [vmem:[%s21] sm:$0x1]
        %v5739 = vlaneseq
        %v5740 = vshrl.u32 %v5739, 7
        %v5741 = vsub.s32 0, %v5740
        %v5742 = vrot.slane %v5737, %v5741
        %v5744 = vadd.f32 %v5736, %v5742
        %vm5745 = vcmask 519168
        %5746 = vst.msk [vmem:[%s782] sm:$0xf] %vm5745, %v5744
        %p5747 = scmp.lt.s32.totalorder %s43, 1
        %s5748 = scalar_select %p5747, %s43, 1
        %s5749 = smul.addr %s5748, 32
        %s5750 = smul.addr %s5749, 8
        %s5751 = scalar_lea.vmem %s22, %s5750
        %p5752 = scmp.lt.s32.totalorder %s43, 1
        %s5753 = scalar_select %p5752, %s43, 1
        %s5754 = smul.addr %s5753, 8
        %s5755 = smul.addr %s5754, 8
        %s5756 = scalar_lea.vmem %s23, %s5755
        %s5757 = sand.u32 %s570, 1
        %s5758 = scalar_lea.sflag [#allocation3], %s5757
        %s5759 = sand.u32 %s570, 1
        %s5760 = smul.addr %s5759, 16
        %s5761 = scalar_lea.vmem [#allocation2], %s5760
        %s5762 = sand.u32 %s596, 1
        %s5763 = scalar_lea.sflag [#allocation5], %s5762
        %s5764 = sand.u32 %s596, 1
        %s5765 = smul.addr %s5764, 4
        %s5766 = scalar_lea.vmem [#allocation4], %s5765
        // Predicated region
        $region109: #{_lambda_.1} parent=107 // pred_check
          %p5767 = pneg %p528
        $region110: #{_lambda_.1} parent=107 // pred_check_branch
          %5769 = sbr.rel (%p5767) target = $region112
        $region111: #{_lambda_.1} parent=107 // pred_region
          _
        $region112: #{_lambda_.1} parent=107 // pred_fallthru
          _
        // Predicated region
        $region113: #{_lambda_.1} parent=107 // pred_check
          %p5770 = pneg %p554
        $region114: #{_lambda_.1} parent=107 // pred_check_branch
          %5772 = sbr.rel (%p5770) target = $region116
        $region115: #{_lambda_.1} parent=107 // pred_region
          _
        $region116: #{_lambda_.1} parent=107 // pred_fallthru
          _
        // Predicated region
        $region117: #{_lambda_.1} parent=107 // pred_check
          %p5773 = pneg %p580
        $region118: #{_lambda_.1} parent=107 // pred_check_branch
          %5775 = sbr.rel (%p5773) target = $region120
        $region119: #{_lambda_.1} parent=107 // pred_region
          %s5777 = ssub.s32 256, 256
          %5778 = vsyncadd %s5758, %s5777
          %s5779 = smul.addr %s43, 2
          %s5780 = smul.addr %s5779, 128
          %s5781 = scalar_lea.hbm %s24, %s5780
          %s5782 = sshll.u32 %s5761, 4
          %s5783 = int_to_ptr.vmem [resolvable:$true] %s5782
          %5788 = dma.vmem_to_hbm [thread:$0]  %s5783, 256, %s5781, %s5758, 128, 128, 8
        $region120: #{_lambda_.1} parent=107 // pred_fallthru
          _
        // Predicated region
        $region121: #{_lambda_.1} parent=107 // pred_check
          %p5789 = pneg %p606
        $region122: #{_lambda_.1} parent=107 // pred_check_branch
          %5791 = sbr.rel (%p5789) target = $region124
        $region123: #{_lambda_.1} parent=107 // pred_region
          %s5793 = ssub.s32 64, 64
          %5794 = vsyncadd %s5763, %s5793
          %s5795 = smul.addr %s43, 64
          %s5796 = scalar_lea.hbm %s25, %s5795
          %s5798 = sshll.u32 %s5766, 4
          %s5799 = int_to_ptr.vmem [resolvable:$true] %s5798
          %5801 = dma.vmem_to_hbm [thread:$0]  %s5799, 64, %s5796, %s5763
        $region124: #{_lambda_.1} parent=107 // pred_fallthru
          _
      $region108: #{_lambda_.1} parent=5 // pred_fallthru
        _
      %p5802 = scmp.le.s32.totalorder 2, %s38
      // Predicated region
      $region125: #{_lambda_.1} parent=5 // pred_check
        %p5803 = pneg %p5802
      $region126: #{_lambda_.1} parent=5 // pred_check_branch
        %5805 = sbr.rel (%p5803) target = $region128
      $region127: #{_lambda_.1} parent=5 // pred_region
        %s5806 = ssub.s32 %s38, 2
        // Predicated region
        $region129: #{_lambda_.1} parent=127 // pred_check
          %p5807 = pneg %p534
        $region130: #{_lambda_.1} parent=127 // pred_check_branch
          %5809 = sbr.rel (%p5807) target = $region132
        $region131: #{_lambda_.1} parent=127 // pred_region
          %p5810 = scmp.lt.s32.totalorder %s44, 1
          %s5811 = scalar_select %p5810, %s44, 1
          %s5812 = smul.addr %s5811, 32
          %s5813 = smul.addr %s5812, 8
          %s5814 = scalar_lea.vmem %s22, %s5813
        $region132: #{_lambda_.1} parent=127 // pred_fallthru
          _
        // Predicated region
        $region133: #{_lambda_.1} parent=127 // pred_check
          %p5815 = pneg %p560
        $region134: #{_lambda_.1} parent=127 // pred_check_branch
          %5817 = sbr.rel (%p5815) target = $region136
        $region135: #{_lambda_.1} parent=127 // pred_region
          %p5818 = scmp.lt.s32.totalorder %s44, 1
          %s5819 = scalar_select %p5818, %s44, 1
          %s5820 = smul.addr %s5819, 8
          %s5821 = smul.addr %s5820, 8
          %s5822 = scalar_lea.vmem %s23, %s5821
        $region136: #{_lambda_.1} parent=127 // pred_fallthru
          _
        // Predicated region
        $region137: #{_lambda_.1} parent=127 // pred_check
          %p5823 = pneg %p586
        $region138: #{_lambda_.1} parent=127 // pred_check_branch
          %5825 = sbr.rel (%p5823) target = $region140
        $region139: #{_lambda_.1} parent=127 // pred_region
          %s5826 = sand.u32 %s571, 1
          %s5827 = scalar_lea.sflag [#allocation3], %s5826
          %s5828 = sand.u32 %s571, 1
          %s5829 = smul.addr %s5828, 16
          %s5830 = scalar_lea.vmem [#allocation2], %s5829
          %5831 = dma.done %s5827, 256
        $region140: #{_lambda_.1} parent=127 // pred_fallthru
          _
        // Predicated region
        $region141: #{_lambda_.1} parent=127 // pred_check
          %p5832 = pneg %p612
        $region142: #{_lambda_.1} parent=127 // pred_check_branch
          %5834 = sbr.rel (%p5832) target = $region144
        $region143: #{_lambda_.1} parent=127 // pred_region
          %s5835 = sand.u32 %s597, 1
          %s5836 = scalar_lea.sflag [#allocation5], %s5835
          %s5837 = sand.u32 %s597, 1
          %s5838 = smul.addr %s5837, 4
          %s5839 = scalar_lea.vmem [#allocation4], %s5838
          %5840 = dma.done %s5836, 64
        $region144: #{_lambda_.1} parent=127 // pred_fallthru
          _
      $region128: #{_lambda_.1} parent=5 // pred_fallthru
        _
    $region6: #{_lambda_.1} parent=1 // loop_footer
      %s42 = sadd.s32 1, %s38
    $region7: #{_lambda_.1} parent=1 // loop_footer_branch
      %37 = sbr.rel target = $region3
    $region8: #{_lambda_.1} parent=1 // loop_exit
      _
    %5841 = vsyncpa [#allocation3], 1
    %s5842 = scalar_lea.sflag [#allocation3], 1
    %5843 = vsyncpa %s5842, 1
    %5844 = vsyncpa [#allocation5], 1
    %s5845 = scalar_lea.sflag [#allocation5], 1
    %5846 = vsyncpa %s5845, 1

</llo_original>
